<compile_context>
chip_gen: v5e
topology: v5e:2x2
jax: 0.10.0
libtpu: 0.0.40
codegen_flags: <defaults>
</compile_context>

<pallas_src>
import numpy as np

import jax
import jax.numpy as jnp
from jax import lax
from jax.experimental import pallas as pl
from jax.experimental.pallas import tpu as pltpu


# ----------------------------------------------------------------------------
# Model dimensions (implied by fc1 = Linear(32*23*5, 128): input is (B,1,98,9))
# ----------------------------------------------------------------------------
H_IN, W_IN = 98, 9
OW1, OW2 = 7, 5          # conv1 / conv2 valid output widths
PH2 = 23                 # rows after conv2+pool2
LANE1 = 128              # padded lane width of one conv1/pool1 row (7*16 -> 128)
LANE2 = 256              # padded lane width of one conv2/pool2 row (5*32 -> 256)
FC1_OUT, FC2_OUT = 128, 3


# ----------------------------------------------------------------------------
# Fused Pallas kernel: conv1+pool1+conv2+pool2+fc1+fc2 for BB samples
# ----------------------------------------------------------------------------
def _fused_cnn_kernel(lhs1_ref, w1ab_ref, b1_ref, w2cd_ref, b2_ref,
                      wf1_ref, bf1_ref, wf2_ref, bf2_ref, out_ref):
    BB = lhs1_ref.shape[0] // 24          # samples per block (multiple of 16)

    # conv1 + ReLU: single banded matmul, M = 24*BB, K = 72 (both shifted row
    # windows lane-concatenated host-side), bf16 operands, f32 accumulation.
    c1 = jnp.dot(lhs1_ref[...], w1ab_ref[...],
                 preferred_element_type=jnp.float32)            # (24*BB, 512)
    c1 = jnp.maximum(c1 + b1_ref[...], 0.0)
    # maxpool(2,1) = lane-half max; result is already conv2's fold-by-2 layout.
    p1 = jnp.maximum(c1[:, :256], c1[:, 256:])                  # (24*BB, 256)

    # conv2 + ReLU: lane-concat of the two shifted row windows (shift = BB
    # rows -> sublane-tile aligned), single matmul, M = 23*BB, K = 512.
    p1b = p1.astype(jnp.bfloat16)
    lhs2 = jnp.concatenate([p1b[:23 * BB, :], p1b[BB:, :]], axis=-1)  # (23*BB,512)
    c2 = jnp.dot(lhs2, w2cd_ref[...], preferred_element_type=jnp.float32)
    c2 = jnp.maximum(c2 + b2_ref[...], 0.0)                     # (23*BB, 512)
    p2 = jnp.maximum(c2[:, :256], c2[:, 256:]).astype(jnp.bfloat16)   # (23*BB,256)

    # fc1 + ReLU: rows are (fold_row, sample)-major, so the flattened-image
    # contraction is 23 aligned (BB,256)@(256,128) block matmuls (the NCHW
    # flatten permutation + lane padding are folded into wf1 host-side).
    h = jnp.zeros((BB, FC1_OUT), jnp.float32)
    for t in range(PH2):
        h = h + jnp.dot(p2[t * BB:(t + 1) * BB, :], wf1_ref[t],
                        preferred_element_type=jnp.float32)
    h = jnp.maximum(h + bf1_ref[...], 0.0)

    # Dropout(p=0.5) is identity in eval mode.
    # TODO(synk): training-mode dropout would use pltpu.prng_seed/prng_random_bits.
    out_ref[...] = (jnp.dot(h, wf2_ref[...], preferred_element_type=jnp.float32)
                    + bf2_ref[...]).astype(out_ref.dtype)


# ----------------------------------------------------------------------------
# Parameter preparation (host-side, done once): banded conv matrices merged
# along K, lane-padded biases, flatten-permuted fc1 weight, bf16 weights.
# ----------------------------------------------------------------------------
def init_params(key):
    """Parameters in PyTorch layouts (conv: OIHW, fc: (out, in))."""
    ks = jax.random.split(key, 8)
    s = 0.05
    return {
        "conv1_w": s * jax.random.normal(ks[0], (16, 1, 3, 3), jnp.float32),
        "conv1_b": s * jax.random.normal(ks[1], (16,), jnp.float32),
        "conv2_w": s * jax.random.normal(ks[2], (32, 16, 3, 3), jnp.float32),
        "conv2_b": s * jax.random.normal(ks[3], (32,), jnp.float32),
        "fc1_w": s * jax.random.normal(ks[4], (128, 3680), jnp.float32),
        "fc1_b": s * jax.random.normal(ks[5], (128,), jnp.float32),
        "fc2_w": s * jax.random.normal(ks[6], (3, 128), jnp.float32),
        "fc2_b": s * jax.random.normal(ks[7], (3,), jnp.float32),
    }


def prepare_params(params):
    w1 = np.asarray(params["conv1_w"], np.float32)   # (16, 1, 3, 3)
    b1 = np.asarray(params["conv1_b"], np.float32)
    w2 = np.asarray(params["conv2_w"], np.float32)   # (32, 16, 3, 3)
    b2 = np.asarray(params["conv2_b"], np.float32)
    f1w = np.asarray(params["fc1_w"], np.float32)    # (128, 3680)
    f1b = np.asarray(params["fc1_b"], np.float32)
    f2w = np.asarray(params["fc2_w"], np.float32)    # (3, 128)
    f2b = np.asarray(params["fc2_b"], np.float32)

    # conv1 banding: c1[q, (j%2)*256 + (j//2)*128 + ow*16 + co]
    #   = sum_{kh,kw} x_pad[4q + j + kh, ow + kw] * w1[co, 0, kh, kw]
    w1a = np.zeros((36, 512), np.float32)            # from x4[q]
    w1b = np.zeros((36, 512), np.float32)            # from x4[q+1]
    for j in range(4):
        base = (j % 2) * 256 + (j // 2) * 128
        for kh in range(3):
            i = j + kh
            dst, irow = (w1a, i) if i <= 3 else (w1b, i - 4)
            for kw in range(3):
                for ow in range(OW1):
                    c0 = base + ow * 16
                    dst[irow * 9 + ow + kw, c0:c0 + 16] += w1[:, 0, kh, kw]
    w1ab = np.concatenate([w1a, w1b], axis=0)        # (72, 512) K-merged
    b1_row = np.concatenate(
        [np.tile(b1, OW1), np.zeros(LANE1 - OW1 * 16, np.float32)])
    b1t = np.tile(b1_row, 4)[None, :].astype(np.float32)     # (1, 512)

    # conv2 banding: c2[t, s*256 + ow*32 + co]
    #   = sum_{kh,kw,ci} pool1[ci, 2t + s + kh, ow + kw] * w2[co,ci,kh,kw]
    w2c = np.zeros((256, 512), np.float32)           # from p1[t]
    w2d = np.zeros((256, 512), np.float32)           # from p1[t+1]
    for s_ in range(2):
        for kh in range(3):
            rr = s_ + kh
            dst, irow = (w2c, rr) if rr <= 1 else (w2d, rr - 2)
            for kw in range(3):
                for ow in range(OW2):
                    r0 = irow * 128 + (ow + kw) * 16
                    c0 = s_ * 256 + ow * 32
                    dst[r0:r0 + 16, c0:c0 + 32] += w2[:, :, kh, kw].T  # (ci, co)
    w2cd = np.concatenate([w2c, w2d], axis=0)        # (512, 512) K-merged
    b2_row = np.concatenate(
        [np.tile(b2, OW2), np.zeros(LANE2 - OW2 * 32, np.float32)])
    b2t = np.tile(b2_row, 2)[None, :].astype(np.float32)     # (1, 512)

    # fc1: fold the NCHW flatten permutation + lane padding into the weight.
    # Our activation index is (h, w*32 + c); PyTorch's flat is c*115 + h*5 + w.
    wt = f1w.reshape(128, 32, 23, 5).transpose(2, 3, 1, 0)   # (h, w, c, f)
    wf1 = np.zeros((PH2, LANE2, FC1_OUT), np.float32)
    wf1[:, :OW2 * 32, :] = wt.reshape(PH2, OW2 * 32, FC1_OUT)

    bf16 = jnp.bfloat16
    return {
        "w1ab": jnp.asarray(w1ab, dtype=bf16), "b1t": jnp.asarray(b1t),
        "w2cd": jnp.asarray(w2cd, dtype=bf16), "b2t": jnp.asarray(b2t),
        "wf1": jnp.asarray(wf1, dtype=bf16), "bf1": jnp.asarray(f1b[None, :]),
        "wf2": jnp.asarray(np.ascontiguousarray(f2w.T)),
        "bf2": jnp.asarray(f2b[None, :]),
    }


# ----------------------------------------------------------------------------
# Forward pass (single fused pallas_call)
# ----------------------------------------------------------------------------
@jax.jit
def simple_cnn_forward(x_nchw, prep):
    B = x_nchw.shape[0]
    # Samples per grid step.  Multiple of 16 so every in-kernel bf16 slice is
    # sublane-tile aligned; whenever B > BB there are >=2 "parallel" grid
    # steps, which keeps both v7x TensorCores busy (no-op on v5e/v6e).
    BB = 16 if B <= 128 else 32
    nblk = pl.cdiv(B, BB)
    B_pad = nblk * BB

    # Host-side (XLA) prep, all tiny: fold input rows by 4, lane-concat the
    # two shifted row windows conv1 needs (K=72), and reorder rows to
    # (block, fold_row, sample) so the kernel's M dim is (fold_row, sample).
    x = x_nchw[:, 0, :, :].astype(jnp.float32)                     # (B, 98, 9)
    x = jnp.pad(x, ((0, B_pad - B), (0, 2), (0, 0)))               # (B_pad,100,9)
    x4 = x.reshape(B_pad, 25, 36)
    lhs1 = jnp.concatenate([x4[:, 0:24, :], x4[:, 1:25, :]], axis=-1)  # (B_pad,24,72)
    lhs1 = lhs1.reshape(nblk, BB, 24, 72).transpose(0, 2, 1, 3)
    lhs1 = lhs1.reshape(nblk * 24 * BB, 72).astype(jnp.bfloat16)

    flops = 2 * B_pad * (24 * 72 * 512 + PH2 * 512 * 512
                         + PH2 * LANE2 * FC1_OUT + FC1_OUT * FC2_OUT)
    bytes_accessed = (lhs1.size * 2
                      + prep["w1ab"].size * 2 + prep["w2cd"].size * 2
                      + prep["wf1"].size * 2
                      + 4 * (512 + 512 + FC1_OUT + FC2_OUT)        # biases, f32
                      + 4 * FC1_OUT * FC2_OUT                      # wf2, f32
                      + 4 * B_pad * FC2_OUT)                       # logits out

    out = pl.pallas_call(
        _fused_cnn_kernel,
        out_shape=jax.ShapeDtypeStruct((B_pad, FC2_OUT), jnp.float32),
        grid=(nblk,),
        in_specs=[
            pl.BlockSpec((24 * BB, 72), lambda i: (i, 0)),          # lhs1 (streamed)
            pl.BlockSpec((72, 512), lambda i: (0, 0)),              # w1ab (resident)
            pl.BlockSpec((1, 512), lambda i: (0, 0)),               # b1t
            pl.BlockSpec((512, 512), lambda i: (0, 0)),             # w2cd
            pl.BlockSpec((1, 512), lambda i: (0, 0)),               # b2t
            pl.BlockSpec((PH2, LANE2, FC1_OUT), lambda i: (0, 0, 0)),  # wf1
            pl.BlockSpec((1, FC1_OUT), lambda i: (0, 0)),           # bf1
            pl.BlockSpec((FC1_OUT, FC2_OUT), lambda i: (0, 0)),     # wf2
            pl.BlockSpec((1, FC2_OUT), lambda i: (0, 0)),           # bf2
        ],
        out_specs=pl.BlockSpec((BB, FC2_OUT), lambda i: (i, 0)),
        compiler_params=pltpu.CompilerParams(
            dimension_semantics=("parallel",),
            vmem_limit_bytes=32 * 1024 * 1024),
        cost_estimate=pl.CostEstimate(flops=flops, transcendentals=0,
                                      bytes_accessed=bytes_accessed),
    )(lhs1, prep["w1ab"], prep["b1t"], prep["w2cd"], prep["b2t"],
      prep["wf1"], prep["bf1"], prep["wf2"], prep["bf2"])
    return out[:B]


# ----------------------------------------------------------------------------
# Pure-JAX reference (PyTorch semantics) for a numerical sanity check
# ----------------------------------------------------------------------------
def reference_forward(x_nchw, params):
    hp = lax.Precision.HIGHEST
    x = x_nchw.astype(jnp.float32)
    y = lax.conv_general_dilated(x, params["conv1_w"], (1, 1), "VALID",
                                 dimension_numbers=("NCHW", "OIHW", "NCHW"),
                                 precision=hp)
    y = jnp.maximum(y + params["conv1_b"][None, :, None, None], 0.0)
    y = jnp.maximum(y[:, :, 0::2, :], y[:, :, 1::2, :])      # maxpool (2,1)
    y = lax.conv_general_dilated(y, params["conv2_w"], (1, 1), "VALID",
                                 dimension_numbers=("NCHW", "OIHW", "NCHW"),
                                 precision=hp)
    y = jnp.maximum(y + params["conv2_b"][None, :, None, None], 0.0)
    y = jnp.maximum(y[:, :, 0::2, :], y[:, :, 1::2, :])      # maxpool (2,1)
    flat = y.reshape(y.shape[0], -1)                         # NCHW flatten
    h = jnp.maximum(flat @ params["fc1_w"].T + params["fc1_b"], 0.0)
    return h @ params["fc2_w"].T + params["fc2_b"]


if __name__ == "__main__":
    key = jax.random.PRNGKey(0)
    kx, kp = jax.random.split(key)
    # Input shape implied by fc1 = Linear(32*23*5, 128): NCHW (B, 1, 98, 9)
    x = jax.random.normal(kx, (2, 1, H_IN, W_IN), jnp.float32)
    params = init_params(kp)
    prep = prepare_params(params)

    out = jax.block_until_ready(simple_cnn_forward(x, prep))
    ref = jax.block_until_ready(reference_forward(x, params))

    assert out.shape == (2, 3) and out.dtype == jnp.float32
    assert bool(jnp.all(jnp.isfinite(out)))
    assert bool(jnp.allclose(out, ref, rtol=2e-2, atol=2e-2)), (
        "max abs diff vs reference: %e" % float(jnp.max(jnp.abs(out - ref))))
    print("KERNEL_OK")
</pallas_src>

<mosaic_0001>
module attributes {stable_mosaic.version = 11 : i64} {
  func.func @_fused_cnn_kernel(%arg0: i32, %arg1: memref<384x72xbf16, #tpu.memory_space<vmem>>, %arg2: memref<72x512xbf16, #tpu.memory_space<vmem>>, %arg3: memref<1x512xf32, #tpu.memory_space<vmem>>, %arg4: memref<512x512xbf16, #tpu.memory_space<vmem>>, %arg5: memref<1x512xf32, #tpu.memory_space<vmem>>, %arg6: memref<23x256x128xbf16, #tpu.memory_space<vmem>>, %arg7: memref<1x128xf32, #tpu.memory_space<vmem>>, %arg8: memref<128x3xf32, #tpu.memory_space<vmem>>, %arg9: memref<1x3xf32, #tpu.memory_space<vmem>>, %arg10: memref<16x3xf32, #tpu.memory_space<vmem>>) attributes {dimension_semantics = [#tpu.dimension_semantics<parallel>], iteration_bounds = array<i64: 1>, scalar_prefetch = 0 : i64, scratch_operands = 0 : i64, tpu.core_type = #tpu.core_type<tc>, window_params = [{transform_indices = @transform_0, window_bounds = array<i64: 384, 72>}, {pipeline_mode = #tpu.pipeline_mode<synchronous>, transform_indices = @transform_1, window_bounds = array<i64: 72, 512>}, {pipeline_mode = #tpu.pipeline_mode<synchronous>, transform_indices = @transform_2, window_bounds = array<i64: 1, 512>}, {pipeline_mode = #tpu.pipeline_mode<synchronous>, transform_indices = @transform_3, window_bounds = array<i64: 512, 512>}, {pipeline_mode = #tpu.pipeline_mode<synchronous>, transform_indices = @transform_4, window_bounds = array<i64: 1, 512>}, {pipeline_mode = #tpu.pipeline_mode<synchronous>, transform_indices = @transform_5, window_bounds = array<i64: 23, 256, 128>}, {pipeline_mode = #tpu.pipeline_mode<synchronous>, transform_indices = @transform_6, window_bounds = array<i64: 1, 128>}, {pipeline_mode = #tpu.pipeline_mode<synchronous>, transform_indices = @transform_7, window_bounds = array<i64: 128, 3>}, {pipeline_mode = #tpu.pipeline_mode<synchronous>, transform_indices = @transform_8, window_bounds = array<i64: 1, 3>}, {transform_indices = @transform_9, window_bounds = array<i64: 16, 3>}]} {
    %c0 = arith.constant 0 : index
    %c0_0 = arith.constant 0 : index
    %0 = vector.load %arg1[%c0, %c0_0] : memref<384x72xbf16, #tpu.memory_space<vmem>>, vector<384x72xbf16>
    %c0_1 = arith.constant 0 : index
    %c0_2 = arith.constant 0 : index
    %1 = vector.load %arg2[%c0_1, %c0_2] : memref<72x512xbf16, #tpu.memory_space<vmem>>, vector<72x512xbf16>
    %cst = arith.constant dense<0.000000e+00> : vector<384x512xf32>
    %2 = tpu.matmul %0, %1, %cst {dimension_numbers = #tpu.dot_dimension_numbers<[1], [0], [0], [1], [0, 0, 1, 1], [], []>} : vector<384x72xbf16>, vector<72x512xbf16>, vector<384x512xf32> -> vector<384x512xf32>
    %c0_3 = arith.constant 0 : index
    %c0_4 = arith.constant 0 : index
    %3 = vector.load %arg3[%c0_3, %c0_4] : memref<1x512xf32, #tpu.memory_space<vmem>>, vector<1x512xf32>
    %4 = vector.broadcast %3 : vector<1x512xf32> to vector<384x512xf32>
    %5 = arith.addf %2, %4 : vector<384x512xf32>
    %cst_5 = arith.constant 0.000000e+00 : f32
    %6 = vector.broadcast %cst_5 : f32 to vector<384x512xf32>
    %7 = arith.maximumf %5, %6 : vector<384x512xf32>
    %8 = vector.extract_strided_slice %7 {offsets = [0, 0], sizes = [384, 256], strides = [1, 1]} : vector<384x512xf32> to vector<384x256xf32>
    %9 = vector.extract_strided_slice %7 {offsets = [0, 256], sizes = [384, 256], strides = [1, 1]} : vector<384x512xf32> to vector<384x256xf32>
    %10 = arith.maximumf %8, %9 : vector<384x256xf32>
    %11 = arith.truncf %10 : vector<384x256xf32> to vector<384x256xbf16>
    %12 = vector.extract_strided_slice %11 {offsets = [0, 0], sizes = [368, 256], strides = [1, 1]} : vector<384x256xbf16> to vector<368x256xbf16>
    %13 = vector.extract_strided_slice %11 {offsets = [16, 0], sizes = [368, 256], strides = [1, 1]} : vector<384x256xbf16> to vector<368x256xbf16>
    %14 = tpu.concatenate %12, %13 in 1 : vector<368x256xbf16>, vector<368x256xbf16> -> vector<368x512xbf16>
    %c0_6 = arith.constant 0 : index
    %c0_7 = arith.constant 0 : index
    %15 = vector.load %arg4[%c0_6, %c0_7] : memref<512x512xbf16, #tpu.memory_space<vmem>>, vector<512x512xbf16>
    %cst_8 = arith.constant dense<0.000000e+00> : vector<368x512xf32>
    %16 = tpu.matmul %14, %15, %cst_8 {dimension_numbers = #tpu.dot_dimension_numbers<[1], [0], [0], [1], [0, 0, 1, 1], [], []>} : vector<368x512xbf16>, vector<512x512xbf16>, vector<368x512xf32> -> vector<368x512xf32>
    %c0_9 = arith.constant 0 : index
    %c0_10 = arith.constant 0 : index
    %17 = vector.load %arg5[%c0_9, %c0_10] : memref<1x512xf32, #tpu.memory_space<vmem>>, vector<1x512xf32>
    %18 = vector.broadcast %17 : vector<1x512xf32> to vector<368x512xf32>
    %19 = arith.addf %16, %18 : vector<368x512xf32>
    %cst_11 = arith.constant 0.000000e+00 : f32
    %20 = vector.broadcast %cst_11 : f32 to vector<368x512xf32>
    %21 = arith.maximumf %19, %20 : vector<368x512xf32>
    %22 = vector.extract_strided_slice %21 {offsets = [0, 0], sizes = [368, 256], strides = [1, 1]} : vector<368x512xf32> to vector<368x256xf32>
    %23 = vector.extract_strided_slice %21 {offsets = [0, 256], sizes = [368, 256], strides = [1, 1]} : vector<368x512xf32> to vector<368x256xf32>
    %24 = arith.maximumf %22, %23 : vector<368x256xf32>
    %25 = arith.truncf %24 : vector<368x256xf32> to vector<368x256xbf16>
    %cst_12 = arith.constant 0.000000e+00 : f32
    %26 = vector.broadcast %cst_12 : f32 to vector<16x128xf32>
    %27 = vector.extract_strided_slice %25 {offsets = [0, 0], sizes = [16, 256], strides = [1, 1]} : vector<368x256xbf16> to vector<16x256xbf16>
    %c0_13 = arith.constant 0 : index
    %c0_14 = arith.constant 0 : index
    %c0_15 = arith.constant 0 : index
    %28 = vector.load %arg6[%c0_13, %c0_14, %c0_15] : memref<23x256x128xbf16, #tpu.memory_space<vmem>>, vector<1x256x128xbf16>
    %29 = vector.shape_cast %28 : vector<1x256x128xbf16> to vector<256x128xbf16>
    %cst_16 = arith.constant dense<0.000000e+00> : vector<16x128xf32>
    %30 = tpu.matmul %27, %29, %cst_16 {dimension_numbers = #tpu.dot_dimension_numbers<[1], [0], [0], [1], [0, 0, 1, 1], [], []>} : vector<16x256xbf16>, vector<256x128xbf16>, vector<16x128xf32> -> vector<16x128xf32>
    %31 = arith.addf %26, %30 : vector<16x128xf32>
    %32 = vector.extract_strided_slice %25 {offsets = [16, 0], sizes = [16, 256], strides = [1, 1]} : vector<368x256xbf16> to vector<16x256xbf16>
    %c1 = arith.constant 1 : index
    %c0_17 = arith.constant 0 : index
    %c0_18 = arith.constant 0 : index
    %33 = vector.load %arg6[%c1, %c0_17, %c0_18] : memref<23x256x128xbf16, #tpu.memory_space<vmem>>, vector<1x256x128xbf16>
    %34 = vector.shape_cast %33 : vector<1x256x128xbf16> to vector<256x128xbf16>
    %cst_19 = arith.constant dense<0.000000e+00> : vector<16x128xf32>
    %35 = tpu.matmul %32, %34, %cst_19 {dimension_numbers = #tpu.dot_dimension_numbers<[1], [0], [0], [1], [0, 0, 1, 1], [], []>} : vector<16x256xbf16>, vector<256x128xbf16>, vector<16x128xf32> -> vector<16x128xf32>
    %36 = arith.addf %31, %35 : vector<16x128xf32>
    %37 = vector.extract_strided_slice %25 {offsets = [32, 0], sizes = [16, 256], strides = [1, 1]} : vector<368x256xbf16> to vector<16x256xbf16>
    %c2 = arith.constant 2 : index
    %c0_20 = arith.constant 0 : index
    %c0_21 = arith.constant 0 : index
    %38 = vector.load %arg6[%c2, %c0_20, %c0_21] : memref<23x256x128xbf16, #tpu.memory_space<vmem>>, vector<1x256x128xbf16>
    %39 = vector.shape_cast %38 : vector<1x256x128xbf16> to vector<256x128xbf16>
    %cst_22 = arith.constant dense<0.000000e+00> : vector<16x128xf32>
    %40 = tpu.matmul %37, %39, %cst_22 {dimension_numbers = #tpu.dot_dimension_numbers<[1], [0], [0], [1], [0, 0, 1, 1], [], []>} : vector<16x256xbf16>, vector<256x128xbf16>, vector<16x128xf32> -> vector<16x128xf32>
    %41 = arith.addf %36, %40 : vector<16x128xf32>
    %42 = vector.extract_strided_slice %25 {offsets = [48, 0], sizes = [16, 256], strides = [1, 1]} : vector<368x256xbf16> to vector<16x256xbf16>
    %c3 = arith.constant 3 : index
    %c0_23 = arith.constant 0 : index
    %c0_24 = arith.constant 0 : index
    %43 = vector.load %arg6[%c3, %c0_23, %c0_24] : memref<23x256x128xbf16, #tpu.memory_space<vmem>>, vector<1x256x128xbf16>
    %44 = vector.shape_cast %43 : vector<1x256x128xbf16> to vector<256x128xbf16>
    %cst_25 = arith.constant dense<0.000000e+00> : vector<16x128xf32>
    %45 = tpu.matmul %42, %44, %cst_25 {dimension_numbers = #tpu.dot_dimension_numbers<[1], [0], [0], [1], [0, 0, 1, 1], [], []>} : vector<16x256xbf16>, vector<256x128xbf16>, vector<16x128xf32> -> vector<16x128xf32>
    %46 = arith.addf %41, %45 : vector<16x128xf32>
    %47 = vector.extract_strided_slice %25 {offsets = [64, 0], sizes = [16, 256], strides = [1, 1]} : vector<368x256xbf16> to vector<16x256xbf16>
    %c4 = arith.constant 4 : index
    %c0_26 = arith.constant 0 : index
    %c0_27 = arith.constant 0 : index
    %48 = vector.load %arg6[%c4, %c0_26, %c0_27] : memref<23x256x128xbf16, #tpu.memory_space<vmem>>, vector<1x256x128xbf16>
    %49 = vector.shape_cast %48 : vector<1x256x128xbf16> to vector<256x128xbf16>
    %cst_28 = arith.constant dense<0.000000e+00> : vector<16x128xf32>
    %50 = tpu.matmul %47, %49, %cst_28 {dimension_numbers = #tpu.dot_dimension_numbers<[1], [0], [0], [1], [0, 0, 1, 1], [], []>} : vector<16x256xbf16>, vector<256x128xbf16>, vector<16x128xf32> -> vector<16x128xf32>
    %51 = arith.addf %46, %50 : vector<16x128xf32>
    %52 = vector.extract_strided_slice %25 {offsets = [80, 0], sizes = [16, 256], strides = [1, 1]} : vector<368x256xbf16> to vector<16x256xbf16>
    %c5 = arith.constant 5 : index
    %c0_29 = arith.constant 0 : index
    %c0_30 = arith.constant 0 : index
    %53 = vector.load %arg6[%c5, %c0_29, %c0_30] : memref<23x256x128xbf16, #tpu.memory_space<vmem>>, vector<1x256x128xbf16>
    %54 = vector.shape_cast %53 : vector<1x256x128xbf16> to vector<256x128xbf16>
    %cst_31 = arith.constant dense<0.000000e+00> : vector<16x128xf32>
    %55 = tpu.matmul %52, %54, %cst_31 {dimension_numbers = #tpu.dot_dimension_numbers<[1], [0], [0], [1], [0, 0, 1, 1], [], []>} : vector<16x256xbf16>, vector<256x128xbf16>, vector<16x128xf32> -> vector<16x128xf32>
    %56 = arith.addf %51, %55 : vector<16x128xf32>
    %57 = vector.extract_strided_slice %25 {offsets = [96, 0], sizes = [16, 256], strides = [1, 1]} : vector<368x256xbf16> to vector<16x256xbf16>
    %c6 = arith.constant 6 : index
    %c0_32 = arith.constant 0 : index
    %c0_33 = arith.constant 0 : index
    %58 = vector.load %arg6[%c6, %c0_32, %c0_33] : memref<23x256x128xbf16, #tpu.memory_space<vmem>>, vector<1x256x128xbf16>
    %59 = vector.shape_cast %58 : vector<1x256x128xbf16> to vector<256x128xbf16>
    %cst_34 = arith.constant dense<0.000000e+00> : vector<16x128xf32>
    %60 = tpu.matmul %57, %59, %cst_34 {dimension_numbers = #tpu.dot_dimension_numbers<[1], [0], [0], [1], [0, 0, 1, 1], [], []>} : vector<16x256xbf16>, vector<256x128xbf16>, vector<16x128xf32> -> vector<16x128xf32>
    %61 = arith.addf %56, %60 : vector<16x128xf32>
    %62 = vector.extract_strided_slice %25 {offsets = [112, 0], sizes = [16, 256], strides = [1, 1]} : vector<368x256xbf16> to vector<16x256xbf16>
    %c7 = arith.constant 7 : index
    %c0_35 = arith.constant 0 : index
    %c0_36 = arith.constant 0 : index
    %63 = vector.load %arg6[%c7, %c0_35, %c0_36] : memref<23x256x128xbf16, #tpu.memory_space<vmem>>, vector<1x256x128xbf16>
    %64 = vector.shape_cast %63 : vector<1x256x128xbf16> to vector<256x128xbf16>
    %cst_37 = arith.constant dense<0.000000e+00> : vector<16x128xf32>
    %65 = tpu.matmul %62, %64, %cst_37 {dimension_numbers = #tpu.dot_dimension_numbers<[1], [0], [0], [1], [0, 0, 1, 1], [], []>} : vector<16x256xbf16>, vector<256x128xbf16>, vector<16x128xf32> -> vector<16x128xf32>
    %66 = arith.addf %61, %65 : vector<16x128xf32>
    %67 = vector.extract_strided_slice %25 {offsets = [128, 0], sizes = [16, 256], strides = [1, 1]} : vector<368x256xbf16> to vector<16x256xbf16>
    %c8 = arith.constant 8 : index
    %c0_38 = arith.constant 0 : index
    %c0_39 = arith.constant 0 : index
    %68 = vector.load %arg6[%c8, %c0_38, %c0_39] : memref<23x256x128xbf16, #tpu.memory_space<vmem>>, vector<1x256x128xbf16>
    %69 = vector.shape_cast %68 : vector<1x256x128xbf16> to vector<256x128xbf16>
    %cst_40 = arith.constant dense<0.000000e+00> : vector<16x128xf32>
    %70 = tpu.matmul %67, %69, %cst_40 {dimension_numbers = #tpu.dot_dimension_numbers<[1], [0], [0], [1], [0, 0, 1, 1], [], []>} : vector<16x256xbf16>, vector<256x128xbf16>, vector<16x128xf32> -> vector<16x128xf32>
    %71 = arith.addf %66, %70 : vector<16x128xf32>
    %72 = vector.extract_strided_slice %25 {offsets = [144, 0], sizes = [16, 256], strides = [1, 1]} : vector<368x256xbf16> to vector<16x256xbf16>
    %c9 = arith.constant 9 : index
    %c0_41 = arith.constant 0 : index
    %c0_42 = arith.constant 0 : index
    %73 = vector.load %arg6[%c9, %c0_41, %c0_42] : memref<23x256x128xbf16, #tpu.memory_space<vmem>>, vector<1x256x128xbf16>
    %74 = vector.shape_cast %73 : vector<1x256x128xbf16> to vector<256x128xbf16>
    %cst_43 = arith.constant dense<0.000000e+00> : vector<16x128xf32>
    %75 = tpu.matmul %72, %74, %cst_43 {dimension_numbers = #tpu.dot_dimension_numbers<[1], [0], [0], [1], [0, 0, 1, 1], [], []>} : vector<16x256xbf16>, vector<256x128xbf16>, vector<16x128xf32> -> vector<16x128xf32>
    %76 = arith.addf %71, %75 : vector<16x128xf32>
    %77 = vector.extract_strided_slice %25 {offsets = [160, 0], sizes = [16, 256], strides = [1, 1]} : vector<368x256xbf16> to vector<16x256xbf16>
    %c10 = arith.constant 10 : index
    %c0_44 = arith.constant 0 : index
    %c0_45 = arith.constant 0 : index
    %78 = vector.load %arg6[%c10, %c0_44, %c0_45] : memref<23x256x128xbf16, #tpu.memory_space<vmem>>, vector<1x256x128xbf16>
    %79 = vector.shape_cast %78 : vector<1x256x128xbf16> to vector<256x128xbf16>
    %cst_46 = arith.constant dense<0.000000e+00> : vector<16x128xf32>
    %80 = tpu.matmul %77, %79, %cst_46 {dimension_numbers = #tpu.dot_dimension_numbers<[1], [0], [0], [1], [0, 0, 1, 1], [], []>} : vector<16x256xbf16>, vector<256x128xbf16>, vector<16x128xf32> -> vector<16x128xf32>
    %81 = arith.addf %76, %80 : vector<16x128xf32>
    %82 = vector.extract_strided_slice %25 {offsets = [176, 0], sizes = [16, 256], strides = [1, 1]} : vector<368x256xbf16> to vector<16x256xbf16>
    %c11 = arith.constant 11 : index
    %c0_47 = arith.constant 0 : index
    %c0_48 = arith.constant 0 : index
    %83 = vector.load %arg6[%c11, %c0_47, %c0_48] : memref<23x256x128xbf16, #tpu.memory_space<vmem>>, vector<1x256x128xbf16>
    %84 = vector.shape_cast %83 : vector<1x256x128xbf16> to vector<256x128xbf16>
    %cst_49 = arith.constant dense<0.000000e+00> : vector<16x128xf32>
    %85 = tpu.matmul %82, %84, %cst_49 {dimension_numbers = #tpu.dot_dimension_numbers<[1], [0], [0], [1], [0, 0, 1, 1], [], []>} : vector<16x256xbf16>, vector<256x128xbf16>, vector<16x128xf32> -> vector<16x128xf32>
    %86 = arith.addf %81, %85 : vector<16x128xf32>
    %87 = vector.extract_strided_slice %25 {offsets = [192, 0], sizes = [16, 256], strides = [1, 1]} : vector<368x256xbf16> to vector<16x256xbf16>
    %c12 = arith.constant 12 : index
    %c0_50 = arith.constant 0 : index
    %c0_51 = arith.constant 0 : index
    %88 = vector.load %arg6[%c12, %c0_50, %c0_51] : memref<23x256x128xbf16, #tpu.memory_space<vmem>>, vector<1x256x128xbf16>
    %89 = vector.shape_cast %88 : vector<1x256x128xbf16> to vector<256x128xbf16>
    %cst_52 = arith.constant dense<0.000000e+00> : vector<16x128xf32>
    %90 = tpu.matmul %87, %89, %cst_52 {dimension_numbers = #tpu.dot_dimension_numbers<[1], [0], [0], [1], [0, 0, 1, 1], [], []>} : vector<16x256xbf16>, vector<256x128xbf16>, vector<16x128xf32> -> vector<16x128xf32>
    %91 = arith.addf %86, %90 : vector<16x128xf32>
    %92 = vector.extract_strided_slice %25 {offsets = [208, 0], sizes = [16, 256], strides = [1, 1]} : vector<368x256xbf16> to vector<16x256xbf16>
    %c13 = arith.constant 13 : index
    %c0_53 = arith.constant 0 : index
    %c0_54 = arith.constant 0 : index
    %93 = vector.load %arg6[%c13, %c0_53, %c0_54] : memref<23x256x128xbf16, #tpu.memory_space<vmem>>, vector<1x256x128xbf16>
    %94 = vector.shape_cast %93 : vector<1x256x128xbf16> to vector<256x128xbf16>
    %cst_55 = arith.constant dense<0.000000e+00> : vector<16x128xf32>
    %95 = tpu.matmul %92, %94, %cst_55 {dimension_numbers = #tpu.dot_dimension_numbers<[1], [0], [0], [1], [0, 0, 1, 1], [], []>} : vector<16x256xbf16>, vector<256x128xbf16>, vector<16x128xf32> -> vector<16x128xf32>
    %96 = arith.addf %91, %95 : vector<16x128xf32>
    %97 = vector.extract_strided_slice %25 {offsets = [224, 0], sizes = [16, 256], strides = [1, 1]} : vector<368x256xbf16> to vector<16x256xbf16>
    %c14 = arith.constant 14 : index
    %c0_56 = arith.constant 0 : index
    %c0_57 = arith.constant 0 : index
    %98 = vector.load %arg6[%c14, %c0_56, %c0_57] : memref<23x256x128xbf16, #tpu.memory_space<vmem>>, vector<1x256x128xbf16>
    %99 = vector.shape_cast %98 : vector<1x256x128xbf16> to vector<256x128xbf16>
    %cst_58 = arith.constant dense<0.000000e+00> : vector<16x128xf32>
    %100 = tpu.matmul %97, %99, %cst_58 {dimension_numbers = #tpu.dot_dimension_numbers<[1], [0], [0], [1], [0, 0, 1, 1], [], []>} : vector<16x256xbf16>, vector<256x128xbf16>, vector<16x128xf32> -> vector<16x128xf32>
    %101 = arith.addf %96, %100 : vector<16x128xf32>
    %102 = vector.extract_strided_slice %25 {offsets = [240, 0], sizes = [16, 256], strides = [1, 1]} : vector<368x256xbf16> to vector<16x256xbf16>
    %c15 = arith.constant 15 : index
    %c0_59 = arith.constant 0 : index
    %c0_60 = arith.constant 0 : index
    %103 = vector.load %arg6[%c15, %c0_59, %c0_60] : memref<23x256x128xbf16, #tpu.memory_space<vmem>>, vector<1x256x128xbf16>
    %104 = vector.shape_cast %103 : vector<1x256x128xbf16> to vector<256x128xbf16>
    %cst_61 = arith.constant dense<0.000000e+00> : vector<16x128xf32>
    %105 = tpu.matmul %102, %104, %cst_61 {dimension_numbers = #tpu.dot_dimension_numbers<[1], [0], [0], [1], [0, 0, 1, 1], [], []>} : vector<16x256xbf16>, vector<256x128xbf16>, vector<16x128xf32> -> vector<16x128xf32>
    %106 = arith.addf %101, %105 : vector<16x128xf32>
    %107 = vector.extract_strided_slice %25 {offsets = [256, 0], sizes = [16, 256], strides = [1, 1]} : vector<368x256xbf16> to vector<16x256xbf16>
    %c16 = arith.constant 16 : index
    %c0_62 = arith.constant 0 : index
    %c0_63 = arith.constant 0 : index
    %108 = vector.load %arg6[%c16, %c0_62, %c0_63] : memref<23x256x128xbf16, #tpu.memory_space<vmem>>, vector<1x256x128xbf16>
    %109 = vector.shape_cast %108 : vector<1x256x128xbf16> to vector<256x128xbf16>
    %cst_64 = arith.constant dense<0.000000e+00> : vector<16x128xf32>
    %110 = tpu.matmul %107, %109, %cst_64 {dimension_numbers = #tpu.dot_dimension_numbers<[1], [0], [0], [1], [0, 0, 1, 1], [], []>} : vector<16x256xbf16>, vector<256x128xbf16>, vector<16x128xf32> -> vector<16x128xf32>
    %111 = arith.addf %106, %110 : vector<16x128xf32>
    %112 = vector.extract_strided_slice %25 {offsets = [272, 0], sizes = [16, 256], strides = [1, 1]} : vector<368x256xbf16> to vector<16x256xbf16>
    %c17 = arith.constant 17 : index
    %c0_65 = arith.constant 0 : index
    %c0_66 = arith.constant 0 : index
    %113 = vector.load %arg6[%c17, %c0_65, %c0_66] : memref<23x256x128xbf16, #tpu.memory_space<vmem>>, vector<1x256x128xbf16>
    %114 = vector.shape_cast %113 : vector<1x256x128xbf16> to vector<256x128xbf16>
    %cst_67 = arith.constant dense<0.000000e+00> : vector<16x128xf32>
    %115 = tpu.matmul %112, %114, %cst_67 {dimension_numbers = #tpu.dot_dimension_numbers<[1], [0], [0], [1], [0, 0, 1, 1], [], []>} : vector<16x256xbf16>, vector<256x128xbf16>, vector<16x128xf32> -> vector<16x128xf32>
    %116 = arith.addf %111, %115 : vector<16x128xf32>
    %117 = vector.extract_strided_slice %25 {offsets = [288, 0], sizes = [16, 256], strides = [1, 1]} : vector<368x256xbf16> to vector<16x256xbf16>
    %c18 = arith.constant 18 : index
    %c0_68 = arith.constant 0 : index
    %c0_69 = arith.constant 0 : index
    %118 = vector.load %arg6[%c18, %c0_68, %c0_69] : memref<23x256x128xbf16, #tpu.memory_space<vmem>>, vector<1x256x128xbf16>
    %119 = vector.shape_cast %118 : vector<1x256x128xbf16> to vector<256x128xbf16>
    %cst_70 = arith.constant dense<0.000000e+00> : vector<16x128xf32>
    %120 = tpu.matmul %117, %119, %cst_70 {dimension_numbers = #tpu.dot_dimension_numbers<[1], [0], [0], [1], [0, 0, 1, 1], [], []>} : vector<16x256xbf16>, vector<256x128xbf16>, vector<16x128xf32> -> vector<16x128xf32>
    %121 = arith.addf %116, %120 : vector<16x128xf32>
    %122 = vector.extract_strided_slice %25 {offsets = [304, 0], sizes = [16, 256], strides = [1, 1]} : vector<368x256xbf16> to vector<16x256xbf16>
    %c19 = arith.constant 19 : index
    %c0_71 = arith.constant 0 : index
    %c0_72 = arith.constant 0 : index
    %123 = vector.load %arg6[%c19, %c0_71, %c0_72] : memref<23x256x128xbf16, #tpu.memory_space<vmem>>, vector<1x256x128xbf16>
    %124 = vector.shape_cast %123 : vector<1x256x128xbf16> to vector<256x128xbf16>
    %cst_73 = arith.constant dense<0.000000e+00> : vector<16x128xf32>
    %125 = tpu.matmul %122, %124, %cst_73 {dimension_numbers = #tpu.dot_dimension_numbers<[1], [0], [0], [1], [0, 0, 1, 1], [], []>} : vector<16x256xbf16>, vector<256x128xbf16>, vector<16x128xf32> -> vector<16x128xf32>
    %126 = arith.addf %121, %125 : vector<16x128xf32>
    %127 = vector.extract_strided_slice %25 {offsets = [320, 0], sizes = [16, 256], strides = [1, 1]} : vector<368x256xbf16> to vector<16x256xbf16>
    %c20 = arith.constant 20 : index
    %c0_74 = arith.constant 0 : index
    %c0_75 = arith.constant 0 : index
    %128 = vector.load %arg6[%c20, %c0_74, %c0_75] : memref<23x256x128xbf16, #tpu.memory_space<vmem>>, vector<1x256x128xbf16>
    %129 = vector.shape_cast %128 : vector<1x256x128xbf16> to vector<256x128xbf16>
    %cst_76 = arith.constant dense<0.000000e+00> : vector<16x128xf32>
    %130 = tpu.matmul %127, %129, %cst_76 {dimension_numbers = #tpu.dot_dimension_numbers<[1], [0], [0], [1], [0, 0, 1, 1], [], []>} : vector<16x256xbf16>, vector<256x128xbf16>, vector<16x128xf32> -> vector<16x128xf32>
    %131 = arith.addf %126, %130 : vector<16x128xf32>
    %132 = vector.extract_strided_slice %25 {offsets = [336, 0], sizes = [16, 256], strides = [1, 1]} : vector<368x256xbf16> to vector<16x256xbf16>
    %c21 = arith.constant 21 : index
    %c0_77 = arith.constant 0 : index
    %c0_78 = arith.constant 0 : index
    %133 = vector.load %arg6[%c21, %c0_77, %c0_78] : memref<23x256x128xbf16, #tpu.memory_space<vmem>>, vector<1x256x128xbf16>
    %134 = vector.shape_cast %133 : vector<1x256x128xbf16> to vector<256x128xbf16>
    %cst_79 = arith.constant dense<0.000000e+00> : vector<16x128xf32>
    %135 = tpu.matmul %132, %134, %cst_79 {dimension_numbers = #tpu.dot_dimension_numbers<[1], [0], [0], [1], [0, 0, 1, 1], [], []>} : vector<16x256xbf16>, vector<256x128xbf16>, vector<16x128xf32> -> vector<16x128xf32>
    %136 = arith.addf %131, %135 : vector<16x128xf32>
    %137 = vector.extract_strided_slice %25 {offsets = [352, 0], sizes = [16, 256], strides = [1, 1]} : vector<368x256xbf16> to vector<16x256xbf16>
    %c22 = arith.constant 22 : index
    %c0_80 = arith.constant 0 : index
    %c0_81 = arith.constant 0 : index
    %138 = vector.load %arg6[%c22, %c0_80, %c0_81] : memref<23x256x128xbf16, #tpu.memory_space<vmem>>, vector<1x256x128xbf16>
    %139 = vector.shape_cast %138 : vector<1x256x128xbf16> to vector<256x128xbf16>
    %cst_82 = arith.constant dense<0.000000e+00> : vector<16x128xf32>
    %140 = tpu.matmul %137, %139, %cst_82 {dimension_numbers = #tpu.dot_dimension_numbers<[1], [0], [0], [1], [0, 0, 1, 1], [], []>} : vector<16x256xbf16>, vector<256x128xbf16>, vector<16x128xf32> -> vector<16x128xf32>
    %141 = arith.addf %136, %140 : vector<16x128xf32>
    %c0_83 = arith.constant 0 : index
    %c0_84 = arith.constant 0 : index
    %142 = vector.load %arg7[%c0_83, %c0_84] : memref<1x128xf32, #tpu.memory_space<vmem>>, vector<1x128xf32>
    %143 = vector.broadcast %142 : vector<1x128xf32> to vector<16x128xf32>
    %144 = arith.addf %141, %143 : vector<16x128xf32>
    %cst_85 = arith.constant 0.000000e+00 : f32
    %145 = vector.broadcast %cst_85 : f32 to vector<16x128xf32>
    %146 = arith.maximumf %144, %145 : vector<16x128xf32>
    %c0_86 = arith.constant 0 : index
    %c0_87 = arith.constant 0 : index
    %147 = vector.load %arg8[%c0_86, %c0_87] : memref<128x3xf32, #tpu.memory_space<vmem>>, vector<128x3xf32>
    %cst_88 = arith.constant dense<0.000000e+00> : vector<16x3xf32>
    %148 = tpu.matmul %146, %147, %cst_88 {dimension_numbers = #tpu.dot_dimension_numbers<[1], [0], [0], [1], [0, 0, 1, 1], [], []>} : vector<16x128xf32>, vector<128x3xf32>, vector<16x3xf32> -> vector<16x3xf32>
    %c0_89 = arith.constant 0 : index
    %c0_90 = arith.constant 0 : index
    %149 = vector.load %arg9[%c0_89, %c0_90] : memref<1x3xf32, #tpu.memory_space<vmem>>, vector<1x3xf32>
    %150 = vector.broadcast %149 : vector<1x3xf32> to vector<16x3xf32>
    %151 = arith.addf %148, %150 : vector<16x3xf32>
    %c0_91 = arith.constant 0 : index
    %c0_92 = arith.constant 0 : index
    %152 = vector.load %arg10[%c0_91, %c0_92] : memref<16x3xf32, #tpu.memory_space<vmem>>, vector<16x3xf32>
    tpu.vector_store %arg10[%c0_91, %c0_92], %151 {strides = array<i32>} : memref<16x3xf32, #tpu.memory_space<vmem>>, vector<16x3xf32>,
    return
  }
  func.func @transform_0(%arg0: i32) -> (i32, i32) {
    %c0_i32 = arith.constant 0 : i32
    %c0_i32_0 = arith.constant 0 : i32
    return %arg0, %c0_i32 : i32, i32
  }
  func.func @transform_1(%arg0: i32) -> (i32, i32) {
    %c0_i32 = arith.constant 0 : i32
    %c0_i32_0 = arith.constant 0 : i32
    %c0_i32_1 = arith.constant 0 : i32
    return %c0_i32, %c0_i32_0 : i32, i32
  }
  func.func @transform_2(%arg0: i32) -> (i32, i32) {
    %c0_i32 = arith.constant 0 : i32
    %c0_i32_0 = arith.constant 0 : i32
    %c0_i32_1 = arith.constant 0 : i32
    return %c0_i32, %c0_i32_0 : i32, i32
  }
  func.func @transform_3(%arg0: i32) -> (i32, i32) {
    %c0_i32 = arith.constant 0 : i32
    %c0_i32_0 = arith.constant 0 : i32
    %c0_i32_1 = arith.constant 0 : i32
    return %c0_i32, %c0_i32_0 : i32, i32
  }
  func.func @transform_4(%arg0: i32) -> (i32, i32) {
    %c0_i32 = arith.constant 0 : i32
    %c0_i32_0 = arith.constant 0 : i32
    %c0_i32_1 = arith.constant 0 : i32
    return %c0_i32, %c0_i32_0 : i32, i32
  }
  func.func @transform_5(%arg0: i32) -> (i32, i32, i32) {
    %c0_i32 = arith.constant 0 : i32
    %c0_i32_0 = arith.constant 0 : i32
    %c0_i32_1 = arith.constant 0 : i32
    %c0_i32_2 = arith.constant 0 : i32
    return %c0_i32, %c0_i32_0, %c0_i32_1 : i32, i32, i32
  }
  func.func @transform_6(%arg0: i32) -> (i32, i32) {
    %c0_i32 = arith.constant 0 : i32
    %c0_i32_0 = arith.constant 0 : i32
    %c0_i32_1 = arith.constant 0 : i32
    return %c0_i32, %c0_i32_0 : i32, i32
  }
  func.func @transform_7(%arg0: i32) -> (i32, i32) {
    %c0_i32 = arith.constant 0 : i32
    %c0_i32_0 = arith.constant 0 : i32
    %c0_i32_1 = arith.constant 0 : i32
    return %c0_i32, %c0_i32_0 : i32, i32
  }
  func.func @transform_8(%arg0: i32) -> (i32, i32) {
    %c0_i32 = arith.constant 0 : i32
    %c0_i32_0 = arith.constant 0 : i32
    %c0_i32_1 = arith.constant 0 : i32
    return %c0_i32, %c0_i32_0 : i32, i32
  }
  func.func @transform_9(%arg0: i32) -> (i32, i32) {
    %c0_i32 = arith.constant 0 : i32
    %c0_i32_0 = arith.constant 0 : i32
    return %arg0, %c0_i32 : i32, i32
  }
}

</mosaic_0001>

<llo_original>
// kernel: simple_cnn_forward.1
$region0: #{simple_cnn_forward.1}
  #allocation0 [shape = 'u32[]', space=smem, size = 0x4, offset = 0x4, fixed_abs, tag = 'smem constant byte address 0x4 - core index']
  #allocation1 [shape = 'u32[72,128]{1,0:T(1,128)}', space=vmem, size = 0x9000, scoped, tag = 'internal scratch']
  %s0 = inlined_call_operand.vmem [shape: bf16[384,72], index: 0, kind: input, shape index: {}]
  %s1 = inlined_call_operand.vmem [shape: bf16[72,512], index: 1, kind: input, shape index: {}]
  %s2 = inlined_call_operand.vmem [shape: f32[1,512], index: 2, kind: input, shape index: {}]
  %s3 = inlined_call_operand.hbm [shape: bf16[512,512], index: 3, kind: input, shape index: {}]
  %s4 = inlined_call_operand.vmem [shape: f32[1,512], index: 4, kind: input, shape index: {}]
  %s5 = inlined_call_operand.vmem [shape: bf16[23,256,128], index: 5, kind: input, shape index: {}]
  %s6 = inlined_call_operand.vmem [shape: f32[1,128], index: 6, kind: input, shape index: {}]
  %s7 = inlined_call_operand.vmem [shape: f32[128,3], index: 7, kind: input, shape index: {}]
  %s8 = inlined_call_operand.vmem [shape: f32[1,3], index: 8, kind: input, shape index: {}]
  %s9 = inlined_call_operand.vmem [shape: f32[16,3], index: 9, kind: output, shape index: {}]
  %s10 = sld [smem:[#allocation0]]
  $region50: #{simple_cnn_forward.1} parent=0
    _
  %s12 = ssub.s32 1, %s10
  %s13 = scalar_select 0, %s12, %s10
  $region1: #{simple_cnn_forward.1} parent=0
    #allocation2 [shape = 'u8[524288]{0}', space=vmem, size = 0x80000, scoped, tag = 'input window, operand 3, single buffered']
    #allocation3 [shape = 's32[1]{0}', space=sflag, size = 0x4, scoped, tag = 'scoped memory for simple_cnn_forward.1']
    %14 = vsyncpa [#allocation3], 0
    // Predicated region
    $region2: #{simple_cnn_forward.1} parent=1 // pred_check
      _
    $region3: #{simple_cnn_forward.1} parent=1 // pred_check_branch
      %16 = sbr.rel (0) target = $region5
    $region4: #{simple_cnn_forward.1} parent=1 // pred_region
      _
    $region5: #{simple_cnn_forward.1} parent=1 // pred_fallthru
      _
    // Predicated region
    $region6: #{simple_cnn_forward.1} parent=1 // pred_check
      _
    $region7: #{simple_cnn_forward.1} parent=1 // pred_check_branch
      %18 = sbr.rel (0) target = $region9
    $region8: #{simple_cnn_forward.1} parent=1 // pred_region
      _
    $region9: #{simple_cnn_forward.1} parent=1 // pred_fallthru
      _
    // Predicated region
    $region10: #{simple_cnn_forward.1} parent=1 // pred_check
      _
    $region11: #{simple_cnn_forward.1} parent=1 // pred_check_branch
      %20 = sbr.rel (0) target = $region13
    $region12: #{simple_cnn_forward.1} parent=1 // pred_region
      _
    $region13: #{simple_cnn_forward.1} parent=1 // pred_fallthru
      _
    // Predicated region
    $region14: #{simple_cnn_forward.1} parent=1 // pred_check
      _
    $region15: #{simple_cnn_forward.1} parent=1 // pred_check_branch
      %22 = sbr.rel (0) target = $region17
    $region16: #{simple_cnn_forward.1} parent=1 // pred_region
      %24 = vsyncadd [#allocation3], 0
      %s25 = sshll.u32 %s3, 4
      %s26 = int_to_ptr.hbm [resolvable:$true] %s25
      %s27 = sshll.u32 [#allocation2], 4
      %s28 = int_to_ptr.vmem [resolvable:$true] %s27
      %33 = dma.hbm_to_vmem [thread:$0]  %s26, 16384, %s28, [#allocation3], 256, 256, 16
    $region17: #{simple_cnn_forward.1} parent=1 // pred_fallthru
      _
    // Predicated region
    $region18: #{simple_cnn_forward.1} parent=1 // pred_check
      _
    $region19: #{simple_cnn_forward.1} parent=1 // pred_check_branch
      %35 = sbr.rel (0) target = $region21
    $region20: #{simple_cnn_forward.1} parent=1 // pred_region
      _
    $region21: #{simple_cnn_forward.1} parent=1 // pred_fallthru
      _
    // Predicated region
    $region22: #{simple_cnn_forward.1} parent=1 // pred_check
      _
    $region23: #{simple_cnn_forward.1} parent=1 // pred_check_branch
      %37 = sbr.rel (0) target = $region25
    $region24: #{simple_cnn_forward.1} parent=1 // pred_region
      _
    $region25: #{simple_cnn_forward.1} parent=1 // pred_fallthru
      _
    // Predicated region
    $region26: #{simple_cnn_forward.1} parent=1 // pred_check
      _
    $region27: #{simple_cnn_forward.1} parent=1 // pred_check_branch
      %39 = sbr.rel (0) target = $region29
    $region28: #{simple_cnn_forward.1} parent=1 // pred_region
      _
    $region29: #{simple_cnn_forward.1} parent=1 // pred_fallthru
      _
    // Predicated region
    $region30: #{simple_cnn_forward.1} parent=1 // pred_check
      _
    $region31: #{simple_cnn_forward.1} parent=1 // pred_check_branch
      %41 = sbr.rel (0) target = $region33
    $region32: #{simple_cnn_forward.1} parent=1 // pred_region
      _
    $region33: #{simple_cnn_forward.1} parent=1 // pred_fallthru
      _
    // Predicated region
    $region34: #{simple_cnn_forward.1} parent=1 // pred_check
      _
    $region35: #{simple_cnn_forward.1} parent=1 // pred_check_branch
      %43 = sbr.rel (0) target = $region37
    $region36: #{simple_cnn_forward.1} parent=1 // pred_region
      _
    $region37: #{simple_cnn_forward.1} parent=1 // pred_fallthru
      _
    // Predicated region
    $region38: #{simple_cnn_forward.1} parent=1 // pred_check
      _
    $region39: #{simple_cnn_forward.1} parent=1 // pred_check_branch
      %45 = sbr.rel (0) target = $region41
    $region40: #{simple_cnn_forward.1} parent=1 // pred_region
      %47 = dma.done [#allocation3], 16384
    $region41: #{simple_cnn_forward.1} parent=1 // pred_fallthru
      _
    %v49 = vld [vmem:[%s0] sm:$0xf]
    %v50 = vld [vmem:[%s0 + $0x4] sm:$0xf]
    %v51 = vld [vmem:[%s0 + $0x8] sm:$0xf]
    %v52 = vld [vmem:[%s0 + $0xc] sm:$0xf]
    %v53 = vld [vmem:[%s0 + $0x10] sm:$0xf]
    %v54 = vld [vmem:[%s0 + $0x14] sm:$0xf]
    %v55 = vld [vmem:[%s0 + $0x18] sm:$0xf]
    %v56 = vld [vmem:[%s0 + $0x1c] sm:$0xf]
    %v57 = vld [vmem:[%s0 + $0x20] sm:$0xf]
    %v58 = vld [vmem:[%s0 + $0x24] sm:$0xf]
    %v59 = vld [vmem:[%s0 + $0x28] sm:$0xf]
    %v60 = vld [vmem:[%s0 + $0x2c] sm:$0xf]
    %v61 = vld [vmem:[%s0 + $0x30] sm:$0xf]
    %v62 = vld [vmem:[%s0 + $0x34] sm:$0xf]
    %v63 = vld [vmem:[%s0 + $0x38] sm:$0xf]
    %v64 = vld [vmem:[%s0 + $0x3c] sm:$0xf]
    %v65 = vld [vmem:[%s0 + $0x40] sm:$0xf]
    %v66 = vld [vmem:[%s0 + $0x44] sm:$0xf]
    %v67 = vld [vmem:[%s0 + $0x48] sm:$0xf]
    %v68 = vld [vmem:[%s0 + $0x4c] sm:$0xf]
    %v69 = vld [vmem:[%s0 + $0x50] sm:$0xf]
    %v70 = vld [vmem:[%s0 + $0x54] sm:$0xf]
    %v71 = vld [vmem:[%s0 + $0x58] sm:$0xf]
    %v72 = vld [vmem:[%s0 + $0x5c] sm:$0xf]
    %v73 = vld [vmem:[%s0 + $0x60] sm:$0xf]
    %v74 = vld [vmem:[%s0 + $0x64] sm:$0xf]
    %v75 = vld [vmem:[%s0 + $0x68] sm:$0xf]
    %v76 = vld [vmem:[%s0 + $0x6c] sm:$0xf]
    %v77 = vld [vmem:[%s0 + $0x70] sm:$0xf]
    %v78 = vld [vmem:[%s0 + $0x74] sm:$0xf]
    %v79 = vld [vmem:[%s0 + $0x78] sm:$0xf]
    %v80 = vld [vmem:[%s0 + $0x7c] sm:$0xf]
    %v81 = vld [vmem:[%s0 + $0x80] sm:$0xf]
    %v82 = vld [vmem:[%s0 + $0x84] sm:$0xf]
    %v83 = vld [vmem:[%s0 + $0x88] sm:$0xf]
    %v84 = vld [vmem:[%s0 + $0x8c] sm:$0xf]
    %v85 = vld [vmem:[%s0 + $0x90] sm:$0xf]
    %v86 = vld [vmem:[%s0 + $0x94] sm:$0xf]
    %v87 = vld [vmem:[%s0 + $0x98] sm:$0xf]
    %v88 = vld [vmem:[%s0 + $0x9c] sm:$0xf]
    %v89 = vld [vmem:[%s0 + $0xa0] sm:$0xf]
    %v90 = vld [vmem:[%s0 + $0xa4] sm:$0xf]
    %v91 = vld [vmem:[%s0 + $0xa8] sm:$0xf]
    %v92 = vld [vmem:[%s0 + $0xac] sm:$0xf]
    %v93 = vld [vmem:[%s0 + $0xb0] sm:$0xf]
    %v94 = vld [vmem:[%s0 + $0xb4] sm:$0xf]
    %v95 = vld [vmem:[%s0 + $0xb8] sm:$0xf]
    %v96 = vld [vmem:[%s0 + $0xbc] sm:$0xf]
    %v97 = vld [vmem:[%s1] sm:$0xff]
    %v98 = vld [vmem:[%s1 + $0x8] sm:$0xff]
    %v99 = vld [vmem:[%s1 + $0x10] sm:$0xff]
    %v100 = vld [vmem:[%s1 + $0x18] sm:$0xff]
    %v101 = vld [vmem:[%s1 + $0x20] sm:$0xff]
    %v102 = vld [vmem:[%s1 + $0x28] sm:$0xff]
    %v103 = vld [vmem:[%s1 + $0x30] sm:$0xff]
    %v104 = vld [vmem:[%s1 + $0x38] sm:$0xff]
    %v105 = vld [vmem:[%s1 + $0x40] sm:$0xff]
    %v106 = vld [vmem:[%s1 + $0x48] sm:$0xff]
    %v107 = vld [vmem:[%s1 + $0x50] sm:$0xff]
    %v108 = vld [vmem:[%s1 + $0x58] sm:$0xff]
    %v109 = vld [vmem:[%s1 + $0x60] sm:$0xff]
    %v110 = vld [vmem:[%s1 + $0x68] sm:$0xff]
    %v111 = vld [vmem:[%s1 + $0x70] sm:$0xff]
    %v112 = vld [vmem:[%s1 + $0x78] sm:$0xff]
    %v113 = vld [vmem:[%s1 + $0x80] sm:$0xff]
    %v114 = vld [vmem:[%s1 + $0x88] sm:$0xff]
    %v115 = vld [vmem:[%s2] sm:$0xf]
    %v117 = vperm.slane %v115, 0
    %v118 = vperm.slane %v115, 1
    %v119 = vperm.slane %v115, 2
    %v120 = vperm.slane %v115, 3
    %v173 = vunpack.c.l.b16 %v49
    %v174 = vunpack.c.l.b16 %v50
    %v175 = vunpack.c.l.b16 %v51
    %v176 = vunpack.c.l.b16 %v52
    %v177 = vunpack.c.l.b16 %v53
    %v178 = vunpack.c.l.b16 %v54
    %v179 = vunpack.c.l.b16 %v55
    %v180 = vunpack.c.l.b16 %v56
    %v181 = vunpack.c.l.b16 %v57
    %v182 = vunpack.c.l.b16 %v58
    %v183 = vunpack.c.l.b16 %v59
    %v184 = vunpack.c.l.b16 %v60
    %v185 = vunpack.c.l.b16 %v61
    %v186 = vunpack.c.l.b16 %v62
    %v187 = vunpack.c.l.b16 %v63
    %v188 = vunpack.c.l.b16 %v64
    %v189 = vunpack.c.l.b16 %v65
    %v190 = vunpack.c.l.b16 %v66
    %v191 = vunpack.c.l.b16 %v67
    %v192 = vunpack.c.l.b16 %v68
    %v193 = vunpack.c.l.b16 %v69
    %v194 = vunpack.c.l.b16 %v70
    %v195 = vunpack.c.l.b16 %v71
    %v196 = vunpack.c.l.b16 %v72
    %v197 = vunpack.c.l.b16 %v73
    %v198 = vunpack.c.l.b16 %v74
    %v199 = vunpack.c.l.b16 %v75
    %v200 = vunpack.c.l.b16 %v76
    %v201 = vunpack.c.l.b16 %v77
    %v202 = vunpack.c.l.b16 %v78
    %v203 = vunpack.c.l.b16 %v79
    %v204 = vunpack.c.l.b16 %v80
    %v205 = vunpack.c.l.b16 %v81
    %v206 = vunpack.c.l.b16 %v82
    %v207 = vunpack.c.l.b16 %v83
    %v208 = vunpack.c.l.b16 %v84
    %v209 = vunpack.c.l.b16 %v85
    %v210 = vunpack.c.l.b16 %v86
    %v211 = vunpack.c.l.b16 %v87
    %v212 = vunpack.c.l.b16 %v88
    %v213 = vunpack.c.l.b16 %v89
    %v214 = vunpack.c.l.b16 %v90
    %v215 = vunpack.c.l.b16 %v91
    %v216 = vunpack.c.l.b16 %v92
    %v217 = vunpack.c.l.b16 %v93
    %v218 = vunpack.c.l.b16 %v94
    %v219 = vunpack.c.l.b16 %v95
    %v220 = vunpack.c.l.b16 %v96
    %v221 = vpack.c.b16 %v174, %v173
    %v222 = vpack.c.b16 %v176, %v175
    %v223 = vpack.c.b16 %v178, %v177
    %v224 = vpack.c.b16 %v180, %v179
    %v225 = vpack.c.b16 %v182, %v181
    %v226 = vpack.c.b16 %v184, %v183
    %v227 = vpack.c.b16 %v186, %v185
    %v228 = vpack.c.b16 %v188, %v187
    %v229 = vpack.c.b16 %v190, %v189
    %v230 = vpack.c.b16 %v192, %v191
    %v231 = vpack.c.b16 %v194, %v193
    %v232 = vpack.c.b16 %v196, %v195
    %v233 = vpack.c.b16 %v198, %v197
    %v234 = vpack.c.b16 %v200, %v199
    %v235 = vpack.c.b16 %v202, %v201
    %v236 = vpack.c.b16 %v204, %v203
    %v237 = vpack.c.b16 %v206, %v205
    %v238 = vpack.c.b16 %v208, %v207
    %v239 = vpack.c.b16 %v210, %v209
    %v240 = vpack.c.b16 %v212, %v211
    %v241 = vpack.c.b16 %v214, %v213
    %v242 = vpack.c.b16 %v216, %v215
    %v243 = vpack.c.b16 %v218, %v217
    %v244 = vpack.c.b16 %v220, %v219
    %v263 = vunpack.c.l.b16 %v97
    %v264 = vunpack.c.h.b16 %v97
    %v265 = vunpack.c.l.b16 %v98
    %v266 = vunpack.c.h.b16 %v98
    %v267 = vunpack.c.l.b16 %v99
    %v268 = vunpack.c.h.b16 %v99
    %v269 = vunpack.c.l.b16 %v100
    %v270 = vunpack.c.h.b16 %v100
    %v271 = vunpack.c.l.b16 %v101
    %v272 = vunpack.c.h.b16 %v101
    %v273 = vunpack.c.l.b16 %v102
    %v274 = vunpack.c.h.b16 %v102
    %v275 = vunpack.c.l.b16 %v103
    %v276 = vunpack.c.h.b16 %v103
    %v277 = vunpack.c.l.b16 %v104
    %v278 = vunpack.c.h.b16 %v104
    %v279 = vunpack.c.l.b16 %v105
    %v280 = vunpack.c.h.b16 %v105
    %v281 = vunpack.c.l.b16 %v106
    %v282 = vunpack.c.h.b16 %v106
    %v283 = vunpack.c.l.b16 %v107
    %v284 = vunpack.c.h.b16 %v107
    %v285 = vunpack.c.l.b16 %v108
    %v286 = vunpack.c.h.b16 %v108
    %v287 = vunpack.c.l.b16 %v109
    %v288 = vunpack.c.h.b16 %v109
    %v289 = vunpack.c.l.b16 %v110
    %v290 = vunpack.c.h.b16 %v110
    %v291 = vunpack.c.l.b16 %v111
    %v292 = vunpack.c.h.b16 %v111
    %v293 = vunpack.c.l.b16 %v112
    %v294 = vunpack.c.h.b16 %v112
    %v295 = vunpack.c.l.b16 %v113
    %v296 = vunpack.c.h.b16 %v113
    %v297 = vunpack.c.l.b16 %v114
    %v298 = vunpack.c.h.b16 %v114
    %v299 = vpack.c.b16 %v267, %v263
    %v300 = vpack.c.b16 %v268, %v264
    %v301 = vpack.c.b16 %v269, %v265
    %v302 = vpack.c.b16 %v270, %v266
    %v303 = vpack.c.b16 %v275, %v271
    %v304 = vpack.c.b16 %v276, %v272
    %v305 = vpack.c.b16 %v277, %v273
    %v306 = vpack.c.b16 %v278, %v274
    %v307 = vpack.c.b16 %v283, %v279
    %v308 = vpack.c.b16 %v284, %v280
    %v309 = vpack.c.b16 %v285, %v281
    %v310 = vpack.c.b16 %v286, %v282
    %v311 = vpack.c.b16 %v291, %v287
    %v312 = vpack.c.b16 %v292, %v288
    %v313 = vpack.c.b16 %v293, %v289
    %v314 = vpack.c.b16 %v294, %v290
    %v315 = vpack.c.b16 %v295, %v295
    %v316 = vpack.c.b16 %v296, %v296
    %v317 = vpack.c.b16 %v297, %v297
    %v318 = vpack.c.b16 %v298, %v298
    %vm335 = vcmask 588800
    %v337 = vsel %vm335, %v221, 0
    %v340 = vsel %vm335, %v222, 0
    %v343 = vsel %vm335, %v223, 0
    %v346 = vsel %vm335, %v224, 0
    %v349 = vsel %vm335, %v225, 0
    %v352 = vsel %vm335, %v226, 0
    %v355 = vsel %vm335, %v227, 0
    %v358 = vsel %vm335, %v228, 0
    %v361 = vsel %vm335, %v229, 0
    %v364 = vsel %vm335, %v230, 0
    %v367 = vsel %vm335, %v231, 0
    %v370 = vsel %vm335, %v232, 0
    %v373 = vsel %vm335, %v233, 0
    %v376 = vsel %vm335, %v234, 0
    %v379 = vsel %vm335, %v235, 0
    %v382 = vsel %vm335, %v236, 0
    %v385 = vsel %vm335, %v237, 0
    %v388 = vsel %vm335, %v238, 0
    %v391 = vsel %vm335, %v239, 0
    %v394 = vsel %vm335, %v240, 0
    %v397 = vsel %vm335, %v241, 0
    %v400 = vsel %vm335, %v242, 0
    %v403 = vsel %vm335, %v243, 0
    %v406 = vsel %vm335, %v244, 0
    %vm408 = vcmask 1043456
    %v410 = vsel %vm408, %v315, 0
    %v413 = vsel %vm408, %v316, 0
    %v416 = vsel %vm408, %v317, 0
    %v419 = vsel %vm408, %v318, 0
    %421 = vmatpush.bf16.msra.mxu0 0
    %422 = vmatpush.bf16.msra.mxu0 0
    %423 = vmatpush.bf16.msra.mxu0 0
    %424 = vmatpush.bf16.msra.mxu0 %v410
    %425 = vmatpush.bf16.msra.mxu0 %v311
    %426 = vmatpush.bf16.msra.mxu0 %v307
    %427 = vmatpush.bf16.msra.mxu0 %v303
    %428 = vmatpush.bf16.msra.mxu0 %v299
    %429 = vmatmul.bf16.gmra.mxu0 %v337
    %v430 = vpop.f32.mrf.mxu0
    %v431 = vadd.f32 %v117, %v430
    %v432 = vpop.f32.mrf.mxu0
    %v433 = vadd.f32 %v117, %v432
    %434 = vmatmul.bf16.gmra.mxu0 %v340
    %v435 = vpop.f32.mrf.mxu0
    %v436 = vadd.f32 %v117, %v435
    %v437 = vpop.f32.mrf.mxu0
    %v438 = vadd.f32 %v117, %v437
    %439 = vmatmul.bf16.gmra.mxu0 %v343
    %v440 = vpop.f32.mrf.mxu0
    %v441 = vadd.f32 %v117, %v440
    %v442 = vpop.f32.mrf.mxu0
    %v443 = vadd.f32 %v117, %v442
    %444 = vmatmul.bf16.gmra.mxu0 %v346
    %v445 = vpop.f32.mrf.mxu0
    %v446 = vadd.f32 %v117, %v445
    %v447 = vpop.f32.mrf.mxu0
    %v448 = vadd.f32 %v117, %v447
    %449 = vmatmul.bf16.gmra.mxu0 %v349
    %v450 = vpop.f32.mrf.mxu0
    %v451 = vadd.f32 %v117, %v450
    %v452 = vpop.f32.mrf.mxu0
    %v453 = vadd.f32 %v117, %v452
    %454 = vmatmul.bf16.gmra.mxu0 %v352
    %v455 = vpop.f32.mrf.mxu0
    %v456 = vadd.f32 %v117, %v455
    %v457 = vpop.f32.mrf.mxu0
    %v458 = vadd.f32 %v117, %v457
    %459 = vmatmul.bf16.gmra.mxu0 %v355
    %v460 = vpop.f32.mrf.mxu0
    %v461 = vadd.f32 %v117, %v460
    %v462 = vpop.f32.mrf.mxu0
    %v463 = vadd.f32 %v117, %v462
    %464 = vmatmul.bf16.gmra.mxu0 %v358
    %v465 = vpop.f32.mrf.mxu0
    %v466 = vadd.f32 %v117, %v465
    %v467 = vpop.f32.mrf.mxu0
    %v468 = vadd.f32 %v117, %v467
    %469 = vmatmul.bf16.gmra.mxu0 %v361
    %v470 = vpop.f32.mrf.mxu0
    %v471 = vadd.f32 %v117, %v470
    %v472 = vpop.f32.mrf.mxu0
    %v473 = vadd.f32 %v117, %v472
    %474 = vmatmul.bf16.gmra.mxu0 %v364
    %v475 = vpop.f32.mrf.mxu0
    %v476 = vadd.f32 %v117, %v475
    %v477 = vpop.f32.mrf.mxu0
    %v478 = vadd.f32 %v117, %v477
    %479 = vmatmul.bf16.gmra.mxu0 %v367
    %v480 = vpop.f32.mrf.mxu0
    %v481 = vadd.f32 %v117, %v480
    %v482 = vpop.f32.mrf.mxu0
    %v483 = vadd.f32 %v117, %v482
    %484 = vmatmul.bf16.gmra.mxu0 %v370
    %v485 = vpop.f32.mrf.mxu0
    %v486 = vadd.f32 %v117, %v485
    %v487 = vpop.f32.mrf.mxu0
    %v488 = vadd.f32 %v117, %v487
    %489 = vmatmul.bf16.gmra.mxu0 %v373
    %v490 = vpop.f32.mrf.mxu0
    %v491 = vadd.f32 %v117, %v490
    %v492 = vpop.f32.mrf.mxu0
    %v493 = vadd.f32 %v117, %v492
    %494 = vmatmul.bf16.gmra.mxu0 %v376
    %v495 = vpop.f32.mrf.mxu0
    %v496 = vadd.f32 %v117, %v495
    %v497 = vpop.f32.mrf.mxu0
    %v498 = vadd.f32 %v117, %v497
    %499 = vmatmul.bf16.gmra.mxu0 %v379
    %v500 = vpop.f32.mrf.mxu0
    %v501 = vadd.f32 %v117, %v500
    %v502 = vpop.f32.mrf.mxu0
    %v503 = vadd.f32 %v117, %v502
    %504 = vmatmul.bf16.gmra.mxu0 %v382
    %v505 = vpop.f32.mrf.mxu0
    %v506 = vadd.f32 %v117, %v505
    %v507 = vpop.f32.mrf.mxu0
    %v508 = vadd.f32 %v117, %v507
    %509 = vmatmul.bf16.gmra.mxu0 %v385
    %v510 = vpop.f32.mrf.mxu0
    %v511 = vadd.f32 %v117, %v510
    %v512 = vpop.f32.mrf.mxu0
    %v513 = vadd.f32 %v117, %v512
    %514 = vmatmul.bf16.gmra.mxu0 %v388
    %v515 = vpop.f32.mrf.mxu0
    %v516 = vadd.f32 %v117, %v515
    %v517 = vpop.f32.mrf.mxu0
    %v518 = vadd.f32 %v117, %v517
    %519 = vmatmul.bf16.gmra.mxu0 %v391
    %v520 = vpop.f32.mrf.mxu0
    %v521 = vadd.f32 %v117, %v520
    %v522 = vpop.f32.mrf.mxu0
    %v523 = vadd.f32 %v117, %v522
    %524 = vmatmul.bf16.gmra.mxu0 %v394
    %v525 = vpop.f32.mrf.mxu0
    %v526 = vadd.f32 %v117, %v525
    %v527 = vpop.f32.mrf.mxu0
    %v528 = vadd.f32 %v117, %v527
    %529 = vmatmul.bf16.gmra.mxu0 %v397
    %v530 = vpop.f32.mrf.mxu0
    %v531 = vadd.f32 %v117, %v530
    %v532 = vpop.f32.mrf.mxu0
    %v533 = vadd.f32 %v117, %v532
    %534 = vmatmul.bf16.gmra.mxu0 %v400
    %v535 = vpop.f32.mrf.mxu0
    %v536 = vadd.f32 %v117, %v535
    %v537 = vpop.f32.mrf.mxu0
    %v538 = vadd.f32 %v117, %v537
    %539 = vmatmul.bf16.gmra.mxu0 %v403
    %v540 = vpop.f32.mrf.mxu0
    %v541 = vadd.f32 %v117, %v540
    %v542 = vpop.f32.mrf.mxu0
    %v543 = vadd.f32 %v117, %v542
    %544 = vmatmul.bf16.gmra.mxu0 %v406
    %v545 = vpop.f32.mrf.mxu0
    %v546 = vadd.f32 %v117, %v545
    %v547 = vpop.f32.mrf.mxu0
    %v548 = vadd.f32 %v117, %v547
    %549 = vdwg.mxu0
    %550 = vmatpush.bf16.msra.mxu0 0
    %551 = vmatpush.bf16.msra.mxu0 0
    %552 = vmatpush.bf16.msra.mxu0 0
    %553 = vmatpush.bf16.msra.mxu0 %v413
    %554 = vmatpush.bf16.msra.mxu0 %v312
    %555 = vmatpush.bf16.msra.mxu0 %v308
    %556 = vmatpush.bf16.msra.mxu0 %v304
    %557 = vmatpush.bf16.msra.mxu0 %v300
    %558 = vmatmul.bf16.gmra.mxu0 %v337
    %v559 = vpop.f32.mrf.mxu0
    %v560 = vadd.f32 %v118, %v559
    %v561 = vpop.f32.mrf.mxu0
    %v562 = vadd.f32 %v118, %v561
    %563 = vmatmul.bf16.gmra.mxu0 %v340
    %v564 = vpop.f32.mrf.mxu0
    %v565 = vadd.f32 %v118, %v564
    %v566 = vpop.f32.mrf.mxu0
    %v567 = vadd.f32 %v118, %v566
    %568 = vmatmul.bf16.gmra.mxu0 %v343
    %v569 = vpop.f32.mrf.mxu0
    %v570 = vadd.f32 %v118, %v569
    %v571 = vpop.f32.mrf.mxu0
    %v572 = vadd.f32 %v118, %v571
    %573 = vmatmul.bf16.gmra.mxu0 %v346
    %v574 = vpop.f32.mrf.mxu0
    %v575 = vadd.f32 %v118, %v574
    %v576 = vpop.f32.mrf.mxu0
    %v577 = vadd.f32 %v118, %v576
    %578 = vmatmul.bf16.gmra.mxu0 %v349
    %v579 = vpop.f32.mrf.mxu0
    %v580 = vadd.f32 %v118, %v579
    %v581 = vpop.f32.mrf.mxu0
    %v582 = vadd.f32 %v118, %v581
    %583 = vmatmul.bf16.gmra.mxu0 %v352
    %v584 = vpop.f32.mrf.mxu0
    %v585 = vadd.f32 %v118, %v584
    %v586 = vpop.f32.mrf.mxu0
    %v587 = vadd.f32 %v118, %v586
    %588 = vmatmul.bf16.gmra.mxu0 %v355
    %v589 = vpop.f32.mrf.mxu0
    %v590 = vadd.f32 %v118, %v589
    %v591 = vpop.f32.mrf.mxu0
    %v592 = vadd.f32 %v118, %v591
    %593 = vmatmul.bf16.gmra.mxu0 %v358
    %v594 = vpop.f32.mrf.mxu0
    %v595 = vadd.f32 %v118, %v594
    %v596 = vpop.f32.mrf.mxu0
    %v597 = vadd.f32 %v118, %v596
    %598 = vmatmul.bf16.gmra.mxu0 %v361
    %v599 = vpop.f32.mrf.mxu0
    %v600 = vadd.f32 %v118, %v599
    %v601 = vpop.f32.mrf.mxu0
    %v602 = vadd.f32 %v118, %v601
    %603 = vmatmul.bf16.gmra.mxu0 %v364
    %v604 = vpop.f32.mrf.mxu0
    %v605 = vadd.f32 %v118, %v604
    %v606 = vpop.f32.mrf.mxu0
    %v607 = vadd.f32 %v118, %v606
    %608 = vmatmul.bf16.gmra.mxu0 %v367
    %v609 = vpop.f32.mrf.mxu0
    %v610 = vadd.f32 %v118, %v609
    %v611 = vpop.f32.mrf.mxu0
    %v612 = vadd.f32 %v118, %v611
    %613 = vmatmul.bf16.gmra.mxu0 %v370
    %v614 = vpop.f32.mrf.mxu0
    %v615 = vadd.f32 %v118, %v614
    %v616 = vpop.f32.mrf.mxu0
    %v617 = vadd.f32 %v118, %v616
    %618 = vmatmul.bf16.gmra.mxu0 %v373
    %v619 = vpop.f32.mrf.mxu0
    %v620 = vadd.f32 %v118, %v619
    %v621 = vpop.f32.mrf.mxu0
    %v622 = vadd.f32 %v118, %v621
    %623 = vmatmul.bf16.gmra.mxu0 %v376
    %v624 = vpop.f32.mrf.mxu0
    %v625 = vadd.f32 %v118, %v624
    %v626 = vpop.f32.mrf.mxu0
    %v627 = vadd.f32 %v118, %v626
    %628 = vmatmul.bf16.gmra.mxu0 %v379
    %v629 = vpop.f32.mrf.mxu0
    %v630 = vadd.f32 %v118, %v629
    %v631 = vpop.f32.mrf.mxu0
    %v632 = vadd.f32 %v118, %v631
    %633 = vmatmul.bf16.gmra.mxu0 %v382
    %v634 = vpop.f32.mrf.mxu0
    %v635 = vadd.f32 %v118, %v634
    %v636 = vpop.f32.mrf.mxu0
    %v637 = vadd.f32 %v118, %v636
    %638 = vmatmul.bf16.gmra.mxu0 %v385
    %v639 = vpop.f32.mrf.mxu0
    %v640 = vadd.f32 %v118, %v639
    %v641 = vpop.f32.mrf.mxu0
    %v642 = vadd.f32 %v118, %v641
    %643 = vmatmul.bf16.gmra.mxu0 %v388
    %v644 = vpop.f32.mrf.mxu0
    %v645 = vadd.f32 %v118, %v644
    %v646 = vpop.f32.mrf.mxu0
    %v647 = vadd.f32 %v118, %v646
    %648 = vmatmul.bf16.gmra.mxu0 %v391
    %v649 = vpop.f32.mrf.mxu0
    %v650 = vadd.f32 %v118, %v649
    %v651 = vpop.f32.mrf.mxu0
    %v652 = vadd.f32 %v118, %v651
    %653 = vmatmul.bf16.gmra.mxu0 %v394
    %v654 = vpop.f32.mrf.mxu0
    %v655 = vadd.f32 %v118, %v654
    %v656 = vpop.f32.mrf.mxu0
    %v657 = vadd.f32 %v118, %v656
    %658 = vmatmul.bf16.gmra.mxu0 %v397
    %v659 = vpop.f32.mrf.mxu0
    %v660 = vadd.f32 %v118, %v659
    %v661 = vpop.f32.mrf.mxu0
    %v662 = vadd.f32 %v118, %v661
    %663 = vmatmul.bf16.gmra.mxu0 %v400
    %v664 = vpop.f32.mrf.mxu0
    %v665 = vadd.f32 %v118, %v664
    %v666 = vpop.f32.mrf.mxu0
    %v667 = vadd.f32 %v118, %v666
    %668 = vmatmul.bf16.gmra.mxu0 %v403
    %v669 = vpop.f32.mrf.mxu0
    %v670 = vadd.f32 %v118, %v669
    %v671 = vpop.f32.mrf.mxu0
    %v672 = vadd.f32 %v118, %v671
    %673 = vmatmul.bf16.gmra.mxu0 %v406
    %v674 = vpop.f32.mrf.mxu0
    %v675 = vadd.f32 %v118, %v674
    %v676 = vpop.f32.mrf.mxu0
    %v677 = vadd.f32 %v118, %v676
    %678 = vdwg.mxu0
    %679 = vmatpush.bf16.msra.mxu0 0
    %680 = vmatpush.bf16.msra.mxu0 0
    %681 = vmatpush.bf16.msra.mxu0 0
    %682 = vmatpush.bf16.msra.mxu0 %v416
    %683 = vmatpush.bf16.msra.mxu0 %v313
    %684 = vmatpush.bf16.msra.mxu0 %v309
    %685 = vmatpush.bf16.msra.mxu0 %v305
    %686 = vmatpush.bf16.msra.mxu0 %v301
    %687 = vmatmul.bf16.gmra.mxu0 %v337
    %v688 = vpop.f32.mrf.mxu0
    %v689 = vadd.f32 %v119, %v688
    %v690 = vpop.f32.mrf.mxu0
    %v691 = vadd.f32 %v119, %v690
    %692 = vmatmul.bf16.gmra.mxu0 %v340
    %v693 = vpop.f32.mrf.mxu0
    %v694 = vadd.f32 %v119, %v693
    %v695 = vpop.f32.mrf.mxu0
    %v696 = vadd.f32 %v119, %v695
    %697 = vmatmul.bf16.gmra.mxu0 %v343
    %v698 = vpop.f32.mrf.mxu0
    %v699 = vadd.f32 %v119, %v698
    %v700 = vpop.f32.mrf.mxu0
    %v701 = vadd.f32 %v119, %v700
    %702 = vmatmul.bf16.gmra.mxu0 %v346
    %v703 = vpop.f32.mrf.mxu0
    %v704 = vadd.f32 %v119, %v703
    %v705 = vpop.f32.mrf.mxu0
    %v706 = vadd.f32 %v119, %v705
    %707 = vmatmul.bf16.gmra.mxu0 %v349
    %v708 = vpop.f32.mrf.mxu0
    %v709 = vadd.f32 %v119, %v708
    %v710 = vpop.f32.mrf.mxu0
    %v711 = vadd.f32 %v119, %v710
    %712 = vmatmul.bf16.gmra.mxu0 %v352
    %v713 = vpop.f32.mrf.mxu0
    %v714 = vadd.f32 %v119, %v713
    %v715 = vpop.f32.mrf.mxu0
    %v716 = vadd.f32 %v119, %v715
    %717 = vmatmul.bf16.gmra.mxu0 %v355
    %v718 = vpop.f32.mrf.mxu0
    %v719 = vadd.f32 %v119, %v718
    %v720 = vpop.f32.mrf.mxu0
    %v721 = vadd.f32 %v119, %v720
    %722 = vmatmul.bf16.gmra.mxu0 %v358
    %v723 = vpop.f32.mrf.mxu0
    %v724 = vadd.f32 %v119, %v723
    %v725 = vpop.f32.mrf.mxu0
    %v726 = vadd.f32 %v119, %v725
    %727 = vmatmul.bf16.gmra.mxu0 %v361
    %v728 = vpop.f32.mrf.mxu0
    %v729 = vadd.f32 %v119, %v728
    %v730 = vpop.f32.mrf.mxu0
    %v731 = vadd.f32 %v119, %v730
    %732 = vmatmul.bf16.gmra.mxu0 %v364
    %v733 = vpop.f32.mrf.mxu0
    %v734 = vadd.f32 %v119, %v733
    %v735 = vpop.f32.mrf.mxu0
    %v736 = vadd.f32 %v119, %v735
    %737 = vmatmul.bf16.gmra.mxu0 %v367
    %v738 = vpop.f32.mrf.mxu0
    %v739 = vadd.f32 %v119, %v738
    %v740 = vpop.f32.mrf.mxu0
    %v741 = vadd.f32 %v119, %v740
    %742 = vmatmul.bf16.gmra.mxu0 %v370
    %v743 = vpop.f32.mrf.mxu0
    %v744 = vadd.f32 %v119, %v743
    %v745 = vpop.f32.mrf.mxu0
    %v746 = vadd.f32 %v119, %v745
    %747 = vmatmul.bf16.gmra.mxu0 %v373
    %v748 = vpop.f32.mrf.mxu0
    %v749 = vadd.f32 %v119, %v748
    %v750 = vpop.f32.mrf.mxu0
    %v751 = vadd.f32 %v119, %v750
    %752 = vmatmul.bf16.gmra.mxu0 %v376
    %v753 = vpop.f32.mrf.mxu0
    %v754 = vadd.f32 %v119, %v753
    %v755 = vpop.f32.mrf.mxu0
    %v756 = vadd.f32 %v119, %v755
    %757 = vmatmul.bf16.gmra.mxu0 %v379
    %v758 = vpop.f32.mrf.mxu0
    %v759 = vadd.f32 %v119, %v758
    %v760 = vpop.f32.mrf.mxu0
    %v761 = vadd.f32 %v119, %v760
    %762 = vmatmul.bf16.gmra.mxu0 %v382
    %v763 = vpop.f32.mrf.mxu0
    %v764 = vadd.f32 %v119, %v763
    %v765 = vpop.f32.mrf.mxu0
    %v766 = vadd.f32 %v119, %v765
    %767 = vmatmul.bf16.gmra.mxu0 %v385
    %v768 = vpop.f32.mrf.mxu0
    %v769 = vadd.f32 %v119, %v768
    %v770 = vpop.f32.mrf.mxu0
    %v771 = vadd.f32 %v119, %v770
    %772 = vmatmul.bf16.gmra.mxu0 %v388
    %v773 = vpop.f32.mrf.mxu0
    %v774 = vadd.f32 %v119, %v773
    %v775 = vpop.f32.mrf.mxu0
    %v776 = vadd.f32 %v119, %v775
    %777 = vmatmul.bf16.gmra.mxu0 %v391
    %v778 = vpop.f32.mrf.mxu0
    %v779 = vadd.f32 %v119, %v778
    %v780 = vpop.f32.mrf.mxu0
    %v781 = vadd.f32 %v119, %v780
    %782 = vmatmul.bf16.gmra.mxu0 %v394
    %v783 = vpop.f32.mrf.mxu0
    %v784 = vadd.f32 %v119, %v783
    %v785 = vpop.f32.mrf.mxu0
    %v786 = vadd.f32 %v119, %v785
    %787 = vmatmul.bf16.gmra.mxu0 %v397
    %v788 = vpop.f32.mrf.mxu0
    %v789 = vadd.f32 %v119, %v788
    %v790 = vpop.f32.mrf.mxu0
    %v791 = vadd.f32 %v119, %v790
    %792 = vmatmul.bf16.gmra.mxu0 %v400
    %v793 = vpop.f32.mrf.mxu0
    %v794 = vadd.f32 %v119, %v793
    %v795 = vpop.f32.mrf.mxu0
    %v796 = vadd.f32 %v119, %v795
    %797 = vmatmul.bf16.gmra.mxu0 %v403
    %v798 = vpop.f32.mrf.mxu0
    %v799 = vadd.f32 %v119, %v798
    %v800 = vpop.f32.mrf.mxu0
    %v801 = vadd.f32 %v119, %v800
    %802 = vmatmul.bf16.gmra.mxu0 %v406
    %v803 = vpop.f32.mrf.mxu0
    %v804 = vadd.f32 %v119, %v803
    %v805 = vpop.f32.mrf.mxu0
    %v806 = vadd.f32 %v119, %v805
    %807 = vdwg.mxu0
    %808 = vmatpush.bf16.msra.mxu0 0
    %809 = vmatpush.bf16.msra.mxu0 0
    %810 = vmatpush.bf16.msra.mxu0 0
    %811 = vmatpush.bf16.msra.mxu0 %v419
    %812 = vmatpush.bf16.msra.mxu0 %v314
    %813 = vmatpush.bf16.msra.mxu0 %v310
    %814 = vmatpush.bf16.msra.mxu0 %v306
    %815 = vmatpush.bf16.msra.mxu0 %v302
    %816 = vmatmul.bf16.gmra.mxu0 %v337
    %v817 = vpop.f32.mrf.mxu0
    %v818 = vadd.f32 %v120, %v817
    %v819 = vpop.f32.mrf.mxu0
    %v820 = vadd.f32 %v120, %v819
    %821 = vmatmul.bf16.gmra.mxu0 %v340
    %v822 = vpop.f32.mrf.mxu0
    %v823 = vadd.f32 %v120, %v822
    %v824 = vpop.f32.mrf.mxu0
    %v825 = vadd.f32 %v120, %v824
    %826 = vmatmul.bf16.gmra.mxu0 %v343
    %v827 = vpop.f32.mrf.mxu0
    %v828 = vadd.f32 %v120, %v827
    %v829 = vpop.f32.mrf.mxu0
    %v830 = vadd.f32 %v120, %v829
    %831 = vmatmul.bf16.gmra.mxu0 %v346
    %v832 = vpop.f32.mrf.mxu0
    %v833 = vadd.f32 %v120, %v832
    %v834 = vpop.f32.mrf.mxu0
    %v835 = vadd.f32 %v120, %v834
    %836 = vmatmul.bf16.gmra.mxu0 %v349
    %v837 = vpop.f32.mrf.mxu0
    %v838 = vadd.f32 %v120, %v837
    %v839 = vpop.f32.mrf.mxu0
    %v840 = vadd.f32 %v120, %v839
    %841 = vmatmul.bf16.gmra.mxu0 %v352
    %v842 = vpop.f32.mrf.mxu0
    %v843 = vadd.f32 %v120, %v842
    %v844 = vpop.f32.mrf.mxu0
    %v845 = vadd.f32 %v120, %v844
    %846 = vmatmul.bf16.gmra.mxu0 %v355
    %v847 = vpop.f32.mrf.mxu0
    %v848 = vadd.f32 %v120, %v847
    %v849 = vpop.f32.mrf.mxu0
    %v850 = vadd.f32 %v120, %v849
    %851 = vmatmul.bf16.gmra.mxu0 %v358
    %v852 = vpop.f32.mrf.mxu0
    %v853 = vadd.f32 %v120, %v852
    %v854 = vpop.f32.mrf.mxu0
    %v855 = vadd.f32 %v120, %v854
    %856 = vmatmul.bf16.gmra.mxu0 %v361
    %v857 = vpop.f32.mrf.mxu0
    %v858 = vadd.f32 %v120, %v857
    %v859 = vpop.f32.mrf.mxu0
    %v860 = vadd.f32 %v120, %v859
    %861 = vmatmul.bf16.gmra.mxu0 %v364
    %v862 = vpop.f32.mrf.mxu0
    %v863 = vadd.f32 %v120, %v862
    %v864 = vpop.f32.mrf.mxu0
    %v865 = vadd.f32 %v120, %v864
    %866 = vmatmul.bf16.gmra.mxu0 %v367
    %v867 = vpop.f32.mrf.mxu0
    %v868 = vadd.f32 %v120, %v867
    %v869 = vpop.f32.mrf.mxu0
    %v870 = vadd.f32 %v120, %v869
    %871 = vmatmul.bf16.gmra.mxu0 %v370
    %v872 = vpop.f32.mrf.mxu0
    %v873 = vadd.f32 %v120, %v872
    %v874 = vpop.f32.mrf.mxu0
    %v875 = vadd.f32 %v120, %v874
    %876 = vmatmul.bf16.gmra.mxu0 %v373
    %v877 = vpop.f32.mrf.mxu0
    %v878 = vadd.f32 %v120, %v877
    %v879 = vpop.f32.mrf.mxu0
    %v880 = vadd.f32 %v120, %v879
    %881 = vmatmul.bf16.gmra.mxu0 %v376
    %v882 = vpop.f32.mrf.mxu0
    %v883 = vadd.f32 %v120, %v882
    %v884 = vpop.f32.mrf.mxu0
    %v885 = vadd.f32 %v120, %v884
    %886 = vmatmul.bf16.gmra.mxu0 %v379
    %v887 = vpop.f32.mrf.mxu0
    %v888 = vadd.f32 %v120, %v887
    %v889 = vpop.f32.mrf.mxu0
    %v890 = vadd.f32 %v120, %v889
    %891 = vmatmul.bf16.gmra.mxu0 %v382
    %v892 = vpop.f32.mrf.mxu0
    %v893 = vadd.f32 %v120, %v892
    %v894 = vpop.f32.mrf.mxu0
    %v895 = vadd.f32 %v120, %v894
    %896 = vmatmul.bf16.gmra.mxu0 %v385
    %v897 = vpop.f32.mrf.mxu0
    %v898 = vadd.f32 %v120, %v897
    %v899 = vpop.f32.mrf.mxu0
    %v900 = vadd.f32 %v120, %v899
    %901 = vmatmul.bf16.gmra.mxu0 %v388
    %v902 = vpop.f32.mrf.mxu0
    %v903 = vadd.f32 %v120, %v902
    %v904 = vpop.f32.mrf.mxu0
    %v905 = vadd.f32 %v120, %v904
    %906 = vmatmul.bf16.gmra.mxu0 %v391
    %v907 = vpop.f32.mrf.mxu0
    %v908 = vadd.f32 %v120, %v907
    %v909 = vpop.f32.mrf.mxu0
    %v910 = vadd.f32 %v120, %v909
    %911 = vmatmul.bf16.gmra.mxu0 %v394
    %v912 = vpop.f32.mrf.mxu0
    %v913 = vadd.f32 %v120, %v912
    %v914 = vpop.f32.mrf.mxu0
    %v915 = vadd.f32 %v120, %v914
    %916 = vmatmul.bf16.gmra.mxu0 %v397
    %v917 = vpop.f32.mrf.mxu0
    %v918 = vadd.f32 %v120, %v917
    %v919 = vpop.f32.mrf.mxu0
    %v920 = vadd.f32 %v120, %v919
    %921 = vmatmul.bf16.gmra.mxu0 %v400
    %v922 = vpop.f32.mrf.mxu0
    %v923 = vadd.f32 %v120, %v922
    %v924 = vpop.f32.mrf.mxu0
    %v925 = vadd.f32 %v120, %v924
    %926 = vmatmul.bf16.gmra.mxu0 %v403
    %v927 = vpop.f32.mrf.mxu0
    %v928 = vadd.f32 %v120, %v927
    %v929 = vpop.f32.mrf.mxu0
    %v930 = vadd.f32 %v120, %v929
    %931 = vmatmul.bf16.gmra.mxu0 %v406
    %v932 = vpop.f32.mrf.mxu0
    %v933 = vadd.f32 %v120, %v932
    %v934 = vpop.f32.mrf.mxu0
    %v935 = vadd.f32 %v120, %v934
    %936 = vdwg.mxu0
    %v937 = vmax.f32 %v431, 0.0
    %v938 = vmax.f32 %v560, 0.0
    %v939 = vmax.f32 %v689, 0.0
    %v940 = vmax.f32 %v818, 0.0
    %v941 = vmax.f32 %v433, 0.0
    %v942 = vmax.f32 %v562, 0.0
    %v943 = vmax.f32 %v691, 0.0
    %v944 = vmax.f32 %v820, 0.0
    %v945 = vmax.f32 %v436, 0.0
    %v946 = vmax.f32 %v565, 0.0
    %v947 = vmax.f32 %v694, 0.0
    %v948 = vmax.f32 %v823, 0.0
    %v949 = vmax.f32 %v438, 0.0
    %v950 = vmax.f32 %v567, 0.0
    %v951 = vmax.f32 %v696, 0.0
    %v952 = vmax.f32 %v825, 0.0
    %v953 = vmax.f32 %v441, 0.0
    %v954 = vmax.f32 %v570, 0.0
    %v955 = vmax.f32 %v699, 0.0
    %v956 = vmax.f32 %v828, 0.0
    %v957 = vmax.f32 %v443, 0.0
    %v958 = vmax.f32 %v572, 0.0
    %v959 = vmax.f32 %v701, 0.0
    %v960 = vmax.f32 %v830, 0.0
    %v961 = vmax.f32 %v446, 0.0
    %v962 = vmax.f32 %v575, 0.0
    %v963 = vmax.f32 %v704, 0.0
    %v964 = vmax.f32 %v833, 0.0
    %v965 = vmax.f32 %v448, 0.0
    %v966 = vmax.f32 %v577, 0.0
    %v967 = vmax.f32 %v706, 0.0
    %v968 = vmax.f32 %v835, 0.0
    %v969 = vmax.f32 %v451, 0.0
    %v970 = vmax.f32 %v580, 0.0
    %v971 = vmax.f32 %v709, 0.0
    %v972 = vmax.f32 %v838, 0.0
    %v973 = vmax.f32 %v453, 0.0
    %v974 = vmax.f32 %v582, 0.0
    %v975 = vmax.f32 %v711, 0.0
    %v976 = vmax.f32 %v840, 0.0
    %v977 = vmax.f32 %v456, 0.0
    %v978 = vmax.f32 %v585, 0.0
    %v979 = vmax.f32 %v714, 0.0
    %v980 = vmax.f32 %v843, 0.0
    %v981 = vmax.f32 %v458, 0.0
    %v982 = vmax.f32 %v587, 0.0
    %v983 = vmax.f32 %v716, 0.0
    %v984 = vmax.f32 %v845, 0.0
    %v985 = vmax.f32 %v461, 0.0
    %v986 = vmax.f32 %v590, 0.0
    %v987 = vmax.f32 %v719, 0.0
    %v988 = vmax.f32 %v848, 0.0
    %v989 = vmax.f32 %v463, 0.0
    %v990 = vmax.f32 %v592, 0.0
    %v991 = vmax.f32 %v721, 0.0
    %v992 = vmax.f32 %v850, 0.0
    %v993 = vmax.f32 %v466, 0.0
    %v994 = vmax.f32 %v595, 0.0
    %v995 = vmax.f32 %v724, 0.0
    %v996 = vmax.f32 %v853, 0.0
    %v997 = vmax.f32 %v468, 0.0
    %v998 = vmax.f32 %v597, 0.0
    %v999 = vmax.f32 %v726, 0.0
    %v1000 = vmax.f32 %v855, 0.0
    %v1001 = vmax.f32 %v471, 0.0
    %v1002 = vmax.f32 %v600, 0.0
    %v1003 = vmax.f32 %v729, 0.0
    %v1004 = vmax.f32 %v858, 0.0
    %v1005 = vmax.f32 %v473, 0.0
    %v1006 = vmax.f32 %v602, 0.0
    %v1007 = vmax.f32 %v731, 0.0
    %v1008 = vmax.f32 %v860, 0.0
    %v1009 = vmax.f32 %v476, 0.0
    %v1010 = vmax.f32 %v605, 0.0
    %v1011 = vmax.f32 %v734, 0.0
    %v1012 = vmax.f32 %v863, 0.0
    %v1013 = vmax.f32 %v478, 0.0
    %v1014 = vmax.f32 %v607, 0.0
    %v1015 = vmax.f32 %v736, 0.0
    %v1016 = vmax.f32 %v865, 0.0
    %v1017 = vmax.f32 %v481, 0.0
    %v1018 = vmax.f32 %v610, 0.0
    %v1019 = vmax.f32 %v739, 0.0
    %v1020 = vmax.f32 %v868, 0.0
    %v1021 = vmax.f32 %v483, 0.0
    %v1022 = vmax.f32 %v612, 0.0
    %v1023 = vmax.f32 %v741, 0.0
    %v1024 = vmax.f32 %v870, 0.0
    %v1025 = vmax.f32 %v486, 0.0
    %v1026 = vmax.f32 %v615, 0.0
    %v1027 = vmax.f32 %v744, 0.0
    %v1028 = vmax.f32 %v873, 0.0
    %v1029 = vmax.f32 %v488, 0.0
    %v1030 = vmax.f32 %v617, 0.0
    %v1031 = vmax.f32 %v746, 0.0
    %v1032 = vmax.f32 %v875, 0.0
    %v1033 = vmax.f32 %v491, 0.0
    %v1034 = vmax.f32 %v620, 0.0
    %v1035 = vmax.f32 %v749, 0.0
    %v1036 = vmax.f32 %v878, 0.0
    %v1037 = vmax.f32 %v493, 0.0
    %v1038 = vmax.f32 %v622, 0.0
    %v1039 = vmax.f32 %v751, 0.0
    %v1040 = vmax.f32 %v880, 0.0
    %v1041 = vmax.f32 %v496, 0.0
    %v1042 = vmax.f32 %v625, 0.0
    %v1043 = vmax.f32 %v754, 0.0
    %v1044 = vmax.f32 %v883, 0.0
    %v1045 = vmax.f32 %v498, 0.0
    %v1046 = vmax.f32 %v627, 0.0
    %v1047 = vmax.f32 %v756, 0.0
    %v1048 = vmax.f32 %v885, 0.0
    %v1049 = vmax.f32 %v501, 0.0
    %v1050 = vmax.f32 %v630, 0.0
    %v1051 = vmax.f32 %v759, 0.0
    %v1052 = vmax.f32 %v888, 0.0
    %v1053 = vmax.f32 %v503, 0.0
    %v1054 = vmax.f32 %v632, 0.0
    %v1055 = vmax.f32 %v761, 0.0
    %v1056 = vmax.f32 %v890, 0.0
    %v1057 = vmax.f32 %v506, 0.0
    %v1058 = vmax.f32 %v635, 0.0
    %v1059 = vmax.f32 %v764, 0.0
    %v1060 = vmax.f32 %v893, 0.0
    %v1061 = vmax.f32 %v508, 0.0
    %v1062 = vmax.f32 %v637, 0.0
    %v1063 = vmax.f32 %v766, 0.0
    %v1064 = vmax.f32 %v895, 0.0
    %v1065 = vmax.f32 %v511, 0.0
    %v1066 = vmax.f32 %v640, 0.0
    %v1067 = vmax.f32 %v769, 0.0
    %v1068 = vmax.f32 %v898, 0.0
    %v1069 = vmax.f32 %v513, 0.0
    %v1070 = vmax.f32 %v642, 0.0
    %v1071 = vmax.f32 %v771, 0.0
    %v1072 = vmax.f32 %v900, 0.0
    %v1073 = vmax.f32 %v516, 0.0
    %v1074 = vmax.f32 %v645, 0.0
    %v1075 = vmax.f32 %v774, 0.0
    %v1076 = vmax.f32 %v903, 0.0
    %v1077 = vmax.f32 %v518, 0.0
    %v1078 = vmax.f32 %v647, 0.0
    %v1079 = vmax.f32 %v776, 0.0
    %v1080 = vmax.f32 %v905, 0.0
    %v1081 = vmax.f32 %v521, 0.0
    %v1082 = vmax.f32 %v650, 0.0
    %v1083 = vmax.f32 %v779, 0.0
    %v1084 = vmax.f32 %v908, 0.0
    %v1085 = vmax.f32 %v523, 0.0
    %v1086 = vmax.f32 %v652, 0.0
    %v1087 = vmax.f32 %v781, 0.0
    %v1088 = vmax.f32 %v910, 0.0
    %v1089 = vmax.f32 %v526, 0.0
    %v1090 = vmax.f32 %v655, 0.0
    %v1091 = vmax.f32 %v784, 0.0
    %v1092 = vmax.f32 %v913, 0.0
    %v1093 = vmax.f32 %v528, 0.0
    %v1094 = vmax.f32 %v657, 0.0
    %v1095 = vmax.f32 %v786, 0.0
    %v1096 = vmax.f32 %v915, 0.0
    %v1097 = vmax.f32 %v531, 0.0
    %v1098 = vmax.f32 %v660, 0.0
    %v1099 = vmax.f32 %v789, 0.0
    %v1100 = vmax.f32 %v918, 0.0
    %v1101 = vmax.f32 %v533, 0.0
    %v1102 = vmax.f32 %v662, 0.0
    %v1103 = vmax.f32 %v791, 0.0
    %v1104 = vmax.f32 %v920, 0.0
    %v1105 = vmax.f32 %v536, 0.0
    %v1106 = vmax.f32 %v665, 0.0
    %v1107 = vmax.f32 %v794, 0.0
    %v1108 = vmax.f32 %v923, 0.0
    %v1109 = vmax.f32 %v538, 0.0
    %v1110 = vmax.f32 %v667, 0.0
    %v1111 = vmax.f32 %v796, 0.0
    %v1112 = vmax.f32 %v925, 0.0
    %v1113 = vmax.f32 %v541, 0.0
    %v1114 = vmax.f32 %v670, 0.0
    %v1115 = vmax.f32 %v799, 0.0
    %v1116 = vmax.f32 %v928, 0.0
    %v1117 = vmax.f32 %v543, 0.0
    %v1118 = vmax.f32 %v672, 0.0
    %v1119 = vmax.f32 %v801, 0.0
    %v1120 = vmax.f32 %v930, 0.0
    %v1121 = vmax.f32 %v546, 0.0
    %v1122 = vmax.f32 %v675, 0.0
    %v1123 = vmax.f32 %v804, 0.0
    %v1124 = vmax.f32 %v933, 0.0
    %v1125 = vmax.f32 %v548, 0.0
    %v1126 = vmax.f32 %v677, 0.0
    %v1127 = vmax.f32 %v806, 0.0
    %v1128 = vmax.f32 %v935, 0.0
    %v1129 = vmax.f32 %v937, %v939
    %v1130 = vmax.f32 %v938, %v940
    %v1131 = vmax.f32 %v941, %v943
    %v1132 = vmax.f32 %v942, %v944
    %v1133 = vmax.f32 %v945, %v947
    %v1134 = vmax.f32 %v946, %v948
    %v1135 = vmax.f32 %v949, %v951
    %v1136 = vmax.f32 %v950, %v952
    %v1137 = vmax.f32 %v953, %v955
    %v1138 = vmax.f32 %v954, %v956
    %v1139 = vmax.f32 %v957, %v959
    %v1140 = vmax.f32 %v958, %v960
    %v1141 = vmax.f32 %v961, %v963
    %v1142 = vmax.f32 %v962, %v964
    %v1143 = vmax.f32 %v965, %v967
    %v1144 = vmax.f32 %v966, %v968
    %v1145 = vmax.f32 %v969, %v971
    %v1146 = vmax.f32 %v970, %v972
    %v1147 = vmax.f32 %v973, %v975
    %v1148 = vmax.f32 %v974, %v976
    %v1149 = vmax.f32 %v977, %v979
    %v1150 = vmax.f32 %v978, %v980
    %v1151 = vmax.f32 %v981, %v983
    %v1152 = vmax.f32 %v982, %v984
    %v1153 = vmax.f32 %v985, %v987
    %v1154 = vmax.f32 %v986, %v988
    %v1155 = vmax.f32 %v989, %v991
    %v1156 = vmax.f32 %v990, %v992
    %v1157 = vmax.f32 %v993, %v995
    %v1158 = vmax.f32 %v994, %v996
    %v1159 = vmax.f32 %v997, %v999
    %v1160 = vmax.f32 %v998, %v1000
    %v1161 = vmax.f32 %v1001, %v1003
    %v1162 = vmax.f32 %v1002, %v1004
    %v1163 = vmax.f32 %v1005, %v1007
    %v1164 = vmax.f32 %v1006, %v1008
    %v1165 = vmax.f32 %v1009, %v1011
    %v1166 = vmax.f32 %v1010, %v1012
    %v1167 = vmax.f32 %v1013, %v1015
    %v1168 = vmax.f32 %v1014, %v1016
    %v1169 = vmax.f32 %v1017, %v1019
    %v1170 = vmax.f32 %v1018, %v1020
    %v1171 = vmax.f32 %v1021, %v1023
    %v1172 = vmax.f32 %v1022, %v1024
    %v1173 = vmax.f32 %v1025, %v1027
    %v1174 = vmax.f32 %v1026, %v1028
    %v1175 = vmax.f32 %v1029, %v1031
    %v1176 = vmax.f32 %v1030, %v1032
    %v1177 = vmax.f32 %v1033, %v1035
    %v1178 = vmax.f32 %v1034, %v1036
    %v1179 = vmax.f32 %v1037, %v1039
    %v1180 = vmax.f32 %v1038, %v1040
    %v1181 = vmax.f32 %v1041, %v1043
    %v1182 = vmax.f32 %v1042, %v1044
    %v1183 = vmax.f32 %v1045, %v1047
    %v1184 = vmax.f32 %v1046, %v1048
    %v1185 = vmax.f32 %v1049, %v1051
    %v1186 = vmax.f32 %v1050, %v1052
    %v1187 = vmax.f32 %v1053, %v1055
    %v1188 = vmax.f32 %v1054, %v1056
    %v1189 = vmax.f32 %v1057, %v1059
    %v1190 = vmax.f32 %v1058, %v1060
    %v1191 = vmax.f32 %v1061, %v1063
    %v1192 = vmax.f32 %v1062, %v1064
    %v1193 = vmax.f32 %v1065, %v1067
    %v1194 = vmax.f32 %v1066, %v1068
    %v1195 = vmax.f32 %v1069, %v1071
    %v1196 = vmax.f32 %v1070, %v1072
    %v1197 = vmax.f32 %v1073, %v1075
    %v1198 = vmax.f32 %v1074, %v1076
    %v1199 = vmax.f32 %v1077, %v1079
    %v1200 = vmax.f32 %v1078, %v1080
    %v1201 = vmax.f32 %v1081, %v1083
    %v1202 = vmax.f32 %v1082, %v1084
    %v1203 = vmax.f32 %v1085, %v1087
    %v1204 = vmax.f32 %v1086, %v1088
    %v1205 = vmax.f32 %v1089, %v1091
    %v1206 = vmax.f32 %v1090, %v1092
    %v1207 = vmax.f32 %v1093, %v1095
    %v1208 = vmax.f32 %v1094, %v1096
    %v1209 = vmax.f32 %v1097, %v1099
    %v1210 = vmax.f32 %v1098, %v1100
    %v1211 = vmax.f32 %v1101, %v1103
    %v1212 = vmax.f32 %v1102, %v1104
    %v1213 = vmax.f32 %v1105, %v1107
    %v1214 = vmax.f32 %v1106, %v1108
    %v1215 = vmax.f32 %v1109, %v1111
    %v1216 = vmax.f32 %v1110, %v1112
    %v1217 = vmax.f32 %v1113, %v1115
    %v1218 = vmax.f32 %v1114, %v1116
    %v1219 = vmax.f32 %v1117, %v1119
    %v1220 = vmax.f32 %v1118, %v1120
    %v1221 = vmax.f32 %v1121, %v1123
    %v1222 = vmax.f32 %v1122, %v1124
    %v1223 = vmax.f32 %v1125, %v1127
    %v1224 = vmax.f32 %v1126, %v1128
    %v1225 = vpack.c.bf16 %v1130, %v1129
    %v1226 = vpack.c.bf16 %v1132, %v1131
    %v1227 = vpack.c.bf16 %v1134, %v1133
    %v1228 = vpack.c.bf16 %v1136, %v1135
    %v1229 = vpack.c.bf16 %v1138, %v1137
    %v1230 = vpack.c.bf16 %v1140, %v1139
    %v1231 = vpack.c.bf16 %v1142, %v1141
    %v1232 = vpack.c.bf16 %v1144, %v1143
    %v1233 = vpack.c.bf16 %v1146, %v1145
    %v1234 = vpack.c.bf16 %v1148, %v1147
    %v1235 = vpack.c.bf16 %v1150, %v1149
    %v1236 = vpack.c.bf16 %v1152, %v1151
    %v1237 = vpack.c.bf16 %v1154, %v1153
    %v1238 = vpack.c.bf16 %v1156, %v1155
    %v1239 = vpack.c.bf16 %v1158, %v1157
    %v1240 = vpack.c.bf16 %v1160, %v1159
    %v1241 = vpack.c.bf16 %v1162, %v1161
    %v1242 = vpack.c.bf16 %v1164, %v1163
    %v1243 = vpack.c.bf16 %v1166, %v1165
    %v1244 = vpack.c.bf16 %v1168, %v1167
    %v1245 = vpack.c.bf16 %v1170, %v1169
    %v1246 = vpack.c.bf16 %v1172, %v1171
    %v1247 = vpack.c.bf16 %v1174, %v1173
    %v1248 = vpack.c.bf16 %v1176, %v1175
    %v1249 = vpack.c.bf16 %v1178, %v1177
    %v1250 = vpack.c.bf16 %v1180, %v1179
    %v1251 = vpack.c.bf16 %v1182, %v1181
    %v1252 = vpack.c.bf16 %v1184, %v1183
    %v1253 = vpack.c.bf16 %v1186, %v1185
    %v1254 = vpack.c.bf16 %v1188, %v1187
    %v1255 = vpack.c.bf16 %v1190, %v1189
    %v1256 = vpack.c.bf16 %v1192, %v1191
    %v1257 = vpack.c.bf16 %v1194, %v1193
    %v1258 = vpack.c.bf16 %v1196, %v1195
    %v1259 = vpack.c.bf16 %v1198, %v1197
    %v1260 = vpack.c.bf16 %v1200, %v1199
    %v1261 = vpack.c.bf16 %v1202, %v1201
    %v1262 = vpack.c.bf16 %v1204, %v1203
    %v1263 = vpack.c.bf16 %v1206, %v1205
    %v1264 = vpack.c.bf16 %v1208, %v1207
    %v1265 = vpack.c.bf16 %v1210, %v1209
    %v1266 = vpack.c.bf16 %v1212, %v1211
    %v1267 = vpack.c.bf16 %v1214, %v1213
    %v1268 = vpack.c.bf16 %v1216, %v1215
    %v1269 = vpack.c.bf16 %v1218, %v1217
    %v1270 = vpack.c.bf16 %v1220, %v1219
    %v1271 = vpack.c.bf16 %v1222, %v1221
    %v1272 = vpack.c.bf16 %v1224, %v1223
    %v1319 = vunpack.c.l.b16 %v1225
    %v1320 = vunpack.c.h.b16 %v1225
    %v1321 = vunpack.c.l.b16 %v1226
    %v1322 = vunpack.c.h.b16 %v1226
    %v1323 = vunpack.c.l.b16 %v1227
    %v1324 = vunpack.c.h.b16 %v1227
    %v1325 = vunpack.c.l.b16 %v1228
    %v1326 = vunpack.c.h.b16 %v1228
    %v1327 = vunpack.c.l.b16 %v1229
    %v1328 = vunpack.c.h.b16 %v1229
    %v1329 = vunpack.c.l.b16 %v1230
    %v1330 = vunpack.c.h.b16 %v1230
    %v1331 = vunpack.c.l.b16 %v1231
    %v1332 = vunpack.c.h.b16 %v1231
    %v1333 = vunpack.c.l.b16 %v1232
    %v1334 = vunpack.c.h.b16 %v1232
    %v1335 = vunpack.c.l.b16 %v1233
    %v1336 = vunpack.c.h.b16 %v1233
    %v1337 = vunpack.c.l.b16 %v1234
    %v1338 = vunpack.c.h.b16 %v1234
    %v1339 = vunpack.c.l.b16 %v1235
    %v1340 = vunpack.c.h.b16 %v1235
    %v1341 = vunpack.c.l.b16 %v1236
    %v1342 = vunpack.c.h.b16 %v1236
    %v1343 = vunpack.c.l.b16 %v1237
    %v1344 = vunpack.c.h.b16 %v1237
    %v1345 = vunpack.c.l.b16 %v1238
    %v1346 = vunpack.c.h.b16 %v1238
    %v1347 = vunpack.c.l.b16 %v1239
    %v1348 = vunpack.c.h.b16 %v1239
    %v1349 = vunpack.c.l.b16 %v1240
    %v1350 = vunpack.c.h.b16 %v1240
    %v1351 = vunpack.c.l.b16 %v1241
    %v1352 = vunpack.c.h.b16 %v1241
    %v1353 = vunpack.c.l.b16 %v1242
    %v1354 = vunpack.c.h.b16 %v1242
    %v1355 = vunpack.c.l.b16 %v1243
    %v1356 = vunpack.c.h.b16 %v1243
    %v1357 = vunpack.c.l.b16 %v1244
    %v1358 = vunpack.c.h.b16 %v1244
    %v1359 = vunpack.c.l.b16 %v1245
    %v1360 = vunpack.c.h.b16 %v1245
    %v1361 = vunpack.c.l.b16 %v1246
    %v1362 = vunpack.c.h.b16 %v1246
    %v1363 = vunpack.c.l.b16 %v1247
    %v1364 = vunpack.c.h.b16 %v1247
    %v1365 = vunpack.c.l.b16 %v1248
    %v1366 = vunpack.c.h.b16 %v1248
    %v1367 = vunpack.c.l.b16 %v1249
    %v1368 = vunpack.c.h.b16 %v1249
    %v1369 = vunpack.c.l.b16 %v1250
    %v1370 = vunpack.c.h.b16 %v1250
    %v1371 = vunpack.c.l.b16 %v1251
    %v1372 = vunpack.c.h.b16 %v1251
    %v1373 = vunpack.c.l.b16 %v1252
    %v1374 = vunpack.c.h.b16 %v1252
    %v1375 = vunpack.c.l.b16 %v1253
    %v1376 = vunpack.c.h.b16 %v1253
    %v1377 = vunpack.c.l.b16 %v1254
    %v1378 = vunpack.c.h.b16 %v1254
    %v1379 = vunpack.c.l.b16 %v1255
    %v1380 = vunpack.c.h.b16 %v1255
    %v1381 = vunpack.c.l.b16 %v1256
    %v1382 = vunpack.c.h.b16 %v1256
    %v1383 = vunpack.c.l.b16 %v1257
    %v1384 = vunpack.c.h.b16 %v1257
    %v1385 = vunpack.c.l.b16 %v1258
    %v1386 = vunpack.c.h.b16 %v1258
    %v1387 = vunpack.c.l.b16 %v1259
    %v1388 = vunpack.c.h.b16 %v1259
    %v1389 = vunpack.c.l.b16 %v1260
    %v1390 = vunpack.c.h.b16 %v1260
    %v1391 = vunpack.c.l.b16 %v1261
    %v1392 = vunpack.c.h.b16 %v1261
    %v1393 = vunpack.c.l.b16 %v1262
    %v1394 = vunpack.c.h.b16 %v1262
    %v1395 = vunpack.c.l.b16 %v1263
    %v1396 = vunpack.c.h.b16 %v1263
    %v1397 = vunpack.c.l.b16 %v1264
    %v1398 = vunpack.c.h.b16 %v1264
    %v1399 = vunpack.c.l.b16 %v1265
    %v1400 = vunpack.c.h.b16 %v1265
    %v1401 = vunpack.c.l.b16 %v1266
    %v1402 = vunpack.c.h.b16 %v1266
    %v1403 = vunpack.c.l.b16 %v1267
    %v1404 = vunpack.c.h.b16 %v1267
    %v1405 = vunpack.c.l.b16 %v1268
    %v1406 = vunpack.c.h.b16 %v1268
    %v1407 = vunpack.c.l.b16 %v1269
    %v1408 = vunpack.c.h.b16 %v1269
    %v1409 = vunpack.c.l.b16 %v1270
    %v1410 = vunpack.c.h.b16 %v1270
    %v1411 = vpack.c.b16 %v1321, %v1319
    %v1412 = vpack.c.b16 %v1322, %v1320
    %v1413 = vpack.c.b16 %v1325, %v1323
    %v1414 = vpack.c.b16 %v1326, %v1324
    %v1415 = vpack.c.b16 %v1329, %v1327
    %v1416 = vpack.c.b16 %v1330, %v1328
    %v1417 = vpack.c.b16 %v1333, %v1331
    %v1418 = vpack.c.b16 %v1334, %v1332
    %v1419 = vpack.c.b16 %v1337, %v1335
    %v1420 = vpack.c.b16 %v1338, %v1336
    %v1421 = vpack.c.b16 %v1341, %v1339
    %v1422 = vpack.c.b16 %v1342, %v1340
    %v1423 = vpack.c.b16 %v1345, %v1343
    %v1424 = vpack.c.b16 %v1346, %v1344
    %v1425 = vpack.c.b16 %v1349, %v1347
    %v1426 = vpack.c.b16 %v1350, %v1348
    %v1427 = vpack.c.b16 %v1353, %v1351
    %v1428 = vpack.c.b16 %v1354, %v1352
    %v1429 = vpack.c.b16 %v1357, %v1355
    %v1430 = vpack.c.b16 %v1358, %v1356
    %v1431 = vpack.c.b16 %v1361, %v1359
    %v1432 = vpack.c.b16 %v1362, %v1360
    %v1433 = vpack.c.b16 %v1365, %v1363
    %v1434 = vpack.c.b16 %v1366, %v1364
    %v1435 = vpack.c.b16 %v1369, %v1367
    %v1436 = vpack.c.b16 %v1370, %v1368
    %v1437 = vpack.c.b16 %v1373, %v1371
    %v1438 = vpack.c.b16 %v1374, %v1372
    %v1439 = vpack.c.b16 %v1377, %v1375
    %v1440 = vpack.c.b16 %v1378, %v1376
    %v1441 = vpack.c.b16 %v1381, %v1379
    %v1442 = vpack.c.b16 %v1382, %v1380
    %v1443 = vpack.c.b16 %v1385, %v1383
    %v1444 = vpack.c.b16 %v1386, %v1384
    %v1445 = vpack.c.b16 %v1389, %v1387
    %v1446 = vpack.c.b16 %v1390, %v1388
    %v1447 = vpack.c.b16 %v1393, %v1391
    %v1448 = vpack.c.b16 %v1394, %v1392
    %v1449 = vpack.c.b16 %v1397, %v1395
    %v1450 = vpack.c.b16 %v1398, %v1396
    %v1451 = vpack.c.b16 %v1401, %v1399
    %v1452 = vpack.c.b16 %v1402, %v1400
    %v1453 = vpack.c.b16 %v1405, %v1403
    %v1454 = vpack.c.b16 %v1406, %v1404
    %v1455 = vpack.c.b16 %v1409, %v1407
    %v1456 = vpack.c.b16 %v1410, %v1408
    %v1505 = vunpack.c.l.b16 %v1271
    %v1506 = vunpack.c.h.b16 %v1271
    %v1507 = vunpack.c.l.b16 %v1272
    %v1508 = vunpack.c.h.b16 %v1272
    %v1509 = vpack.c.b16 %v1507, %v1505
    %v1510 = vpack.c.b16 %v1508, %v1506
    %v1513 = vld [vmem:[#allocation2] sm:$0xff]
    %v1514 = vld [vmem:[#allocation2 + $0x8] sm:$0xff]
    %v1515 = vld [vmem:[#allocation2 + $0x10] sm:$0xff]
    %v1516 = vld [vmem:[#allocation2 + $0x18] sm:$0xff]
    %v1517 = vld [vmem:[#allocation2 + $0x20] sm:$0xff]
    %v1518 = vld [vmem:[#allocation2 + $0x28] sm:$0xff]
    %v1519 = vld [vmem:[#allocation2 + $0x30] sm:$0xff]
    %v1520 = vld [vmem:[#allocation2 + $0x38] sm:$0xff]
    %v1521 = vld [vmem:[#allocation2 + $0x40] sm:$0xff]
    %v1522 = vld [vmem:[#allocation2 + $0x48] sm:$0xff]
    %v1523 = vld [vmem:[#allocation2 + $0x50] sm:$0xff]
    %v1524 = vld [vmem:[#allocation2 + $0x58] sm:$0xff]
    %v1525 = vld [vmem:[#allocation2 + $0x60] sm:$0xff]
    %v1526 = vld [vmem:[#allocation2 + $0x68] sm:$0xff]
    %v1527 = vld [vmem:[#allocation2 + $0x70] sm:$0xff]
    %v1528 = vld [vmem:[#allocation2 + $0x78] sm:$0xff]
    %v1529 = vld [vmem:[#allocation2 + $0x80] sm:$0xff]
    %v1530 = vld [vmem:[#allocation2 + $0x88] sm:$0xff]
    %v1531 = vld [vmem:[#allocation2 + $0x90] sm:$0xff]
    %v1532 = vld [vmem:[#allocation2 + $0x98] sm:$0xff]
    %v1533 = vld [vmem:[#allocation2 + $0xa0] sm:$0xff]
    %v1534 = vld [vmem:[#allocation2 + $0xa8] sm:$0xff]
    %v1535 = vld [vmem:[#allocation2 + $0xb0] sm:$0xff]
    %v1536 = vld [vmem:[#allocation2 + $0xb8] sm:$0xff]
    %v1537 = vld [vmem:[#allocation2 + $0xc0] sm:$0xff]
    %v1538 = vld [vmem:[#allocation2 + $0xc8] sm:$0xff]
    %v1539 = vld [vmem:[#allocation2 + $0xd0] sm:$0xff]
    %v1540 = vld [vmem:[#allocation2 + $0xd8] sm:$0xff]
    %v1541 = vld [vmem:[#allocation2 + $0xe0] sm:$0xff]
    %v1542 = vld [vmem:[#allocation2 + $0xe8] sm:$0xff]
    %v1543 = vld [vmem:[#allocation2 + $0xf0] sm:$0xff]
    %v1544 = vld [vmem:[#allocation2 + $0xf8] sm:$0xff]
    %v1545 = vld [vmem:[#allocation2 + $0x100] sm:$0xff]
    %v1546 = vld [vmem:[#allocation2 + $0x108] sm:$0xff]
    %v1547 = vld [vmem:[#allocation2 + $0x110] sm:$0xff]
    %v1548 = vld [vmem:[#allocation2 + $0x118] sm:$0xff]
    %v1549 = vld [vmem:[#allocation2 + $0x120] sm:$0xff]
    %v1550 = vld [vmem:[#allocation2 + $0x128] sm:$0xff]
    %v1551 = vld [vmem:[#allocation2 + $0x130] sm:$0xff]
    %v1552 = vld [vmem:[#allocation2 + $0x138] sm:$0xff]
    %v1553 = vld [vmem:[#allocation2 + $0x140] sm:$0xff]
    %v1554 = vld [vmem:[#allocation2 + $0x148] sm:$0xff]
    %v1555 = vld [vmem:[#allocation2 + $0x150] sm:$0xff]
    %v1556 = vld [vmem:[#allocation2 + $0x158] sm:$0xff]
    %v1557 = vld [vmem:[#allocation2 + $0x160] sm:$0xff]
    %v1558 = vld [vmem:[#allocation2 + $0x168] sm:$0xff]
    %v1559 = vld [vmem:[#allocation2 + $0x170] sm:$0xff]
    %v1560 = vld [vmem:[#allocation2 + $0x178] sm:$0xff]
    %v1561 = vld [vmem:[#allocation2 + $0x180] sm:$0xff]
    %v1562 = vld [vmem:[#allocation2 + $0x188] sm:$0xff]
    %v1563 = vld [vmem:[#allocation2 + $0x190] sm:$0xff]
    %v1564 = vld [vmem:[#allocation2 + $0x198] sm:$0xff]
    %v1565 = vld [vmem:[#allocation2 + $0x1a0] sm:$0xff]
    %v1566 = vld [vmem:[#allocation2 + $0x1a8] sm:$0xff]
    %v1567 = vld [vmem:[#allocation2 + $0x1b0] sm:$0xff]
    %v1568 = vld [vmem:[#allocation2 + $0x1b8] sm:$0xff]
    %v1569 = vld [vmem:[#allocation2 + $0x1c0] sm:$0xff]
    %v1570 = vld [vmem:[#allocation2 + $0x1c8] sm:$0xff]
    %v1571 = vld [vmem:[#allocation2 + $0x1d0] sm:$0xff]
    %v1572 = vld [vmem:[#allocation2 + $0x1d8] sm:$0xff]
    %v1573 = vld [vmem:[#allocation2 + $0x1e0] sm:$0xff]
    %v1574 = vld [vmem:[#allocation2 + $0x1e8] sm:$0xff]
    %v1575 = vld [vmem:[#allocation2 + $0x1f0] sm:$0xff]
    %v1576 = vld [vmem:[#allocation2 + $0x1f8] sm:$0xff]
    %v1577 = vld [vmem:[#allocation2 + $0x200] sm:$0xff]
    %v1578 = vld [vmem:[#allocation2 + $0x208] sm:$0xff]
    %v1579 = vld [vmem:[#allocation2 + $0x210] sm:$0xff]
    %v1580 = vld [vmem:[#allocation2 + $0x218] sm:$0xff]
    %v1581 = vld [vmem:[#allocation2 + $0x220] sm:$0xff]
    %v1582 = vld [vmem:[#allocation2 + $0x228] sm:$0xff]
    %v1583 = vld [vmem:[#allocation2 + $0x230] sm:$0xff]
    %v1584 = vld [vmem:[#allocation2 + $0x238] sm:$0xff]
    %v1585 = vld [vmem:[#allocation2 + $0x240] sm:$0xff]
    %v1586 = vld [vmem:[#allocation2 + $0x248] sm:$0xff]
    %v1587 = vld [vmem:[#allocation2 + $0x250] sm:$0xff]
    %v1588 = vld [vmem:[#allocation2 + $0x258] sm:$0xff]
    %v1589 = vld [vmem:[#allocation2 + $0x260] sm:$0xff]
    %v1590 = vld [vmem:[#allocation2 + $0x268] sm:$0xff]
    %v1591 = vld [vmem:[#allocation2 + $0x270] sm:$0xff]
    %v1592 = vld [vmem:[#allocation2 + $0x278] sm:$0xff]
    %v1593 = vld [vmem:[#allocation2 + $0x280] sm:$0xff]
    %v1594 = vld [vmem:[#allocation2 + $0x288] sm:$0xff]
    %v1595 = vld [vmem:[#allocation2 + $0x290] sm:$0xff]
    %v1596 = vld [vmem:[#allocation2 + $0x298] sm:$0xff]
    %v1597 = vld [vmem:[#allocation2 + $0x2a0] sm:$0xff]
    %v1598 = vld [vmem:[#allocation2 + $0x2a8] sm:$0xff]
    %v1599 = vld [vmem:[#allocation2 + $0x2b0] sm:$0xff]
    %v1600 = vld [vmem:[#allocation2 + $0x2b8] sm:$0xff]
    %v1601 = vld [vmem:[#allocation2 + $0x2c0] sm:$0xff]
    %v1602 = vld [vmem:[#allocation2 + $0x2c8] sm:$0xff]
    %v1603 = vld [vmem:[#allocation2 + $0x2d0] sm:$0xff]
    %v1604 = vld [vmem:[#allocation2 + $0x2d8] sm:$0xff]
    %v1605 = vld [vmem:[#allocation2 + $0x2e0] sm:$0xff]
    %v1606 = vld [vmem:[#allocation2 + $0x2e8] sm:$0xff]
    %v1607 = vld [vmem:[#allocation2 + $0x2f0] sm:$0xff]
    %v1608 = vld [vmem:[#allocation2 + $0x2f8] sm:$0xff]
    %v1609 = vld [vmem:[#allocation2 + $0x300] sm:$0xff]
    %v1610 = vld [vmem:[#allocation2 + $0x308] sm:$0xff]
    %v1611 = vld [vmem:[#allocation2 + $0x310] sm:$0xff]
    %v1612 = vld [vmem:[#allocation2 + $0x318] sm:$0xff]
    %v1613 = vld [vmem:[#allocation2 + $0x320] sm:$0xff]
    %v1614 = vld [vmem:[#allocation2 + $0x328] sm:$0xff]
    %v1615 = vld [vmem:[#allocation2 + $0x330] sm:$0xff]
    %v1616 = vld [vmem:[#allocation2 + $0x338] sm:$0xff]
    %v1617 = vld [vmem:[#allocation2 + $0x340] sm:$0xff]
    %v1618 = vld [vmem:[#allocation2 + $0x348] sm:$0xff]
    %v1619 = vld [vmem:[#allocation2 + $0x350] sm:$0xff]
    %v1620 = vld [vmem:[#allocation2 + $0x358] sm:$0xff]
    %v1621 = vld [vmem:[#allocation2 + $0x360] sm:$0xff]
    %v1622 = vld [vmem:[#allocation2 + $0x368] sm:$0xff]
    %v1623 = vld [vmem:[#allocation2 + $0x370] sm:$0xff]
    %v1624 = vld [vmem:[#allocation2 + $0x378] sm:$0xff]
    %v1625 = vld [vmem:[#allocation2 + $0x380] sm:$0xff]
    %v1626 = vld [vmem:[#allocation2 + $0x388] sm:$0xff]
    %v1627 = vld [vmem:[#allocation2 + $0x390] sm:$0xff]
    %v1628 = vld [vmem:[#allocation2 + $0x398] sm:$0xff]
    %v1629 = vld [vmem:[#allocation2 + $0x3a0] sm:$0xff]
    %v1630 = vld [vmem:[#allocation2 + $0x3a8] sm:$0xff]
    %v1631 = vld [vmem:[#allocation2 + $0x3b0] sm:$0xff]
    %v1632 = vld [vmem:[#allocation2 + $0x3b8] sm:$0xff]
    %v1633 = vld [vmem:[#allocation2 + $0x3c0] sm:$0xff]
    %v1634 = vld [vmem:[#allocation2 + $0x3c8] sm:$0xff]
    %v1635 = vld [vmem:[#allocation2 + $0x3d0] sm:$0xff]
    %v1636 = vld [vmem:[#allocation2 + $0x3d8] sm:$0xff]
    %v1637 = vld [vmem:[#allocation2 + $0x3e0] sm:$0xff]
    %v1638 = vld [vmem:[#allocation2 + $0x3e8] sm:$0xff]
    %v1639 = vld [vmem:[#allocation2 + $0x3f0] sm:$0xff]
    %v1640 = vld [vmem:[#allocation2 + $0x3f8] sm:$0xff]
    %v1641 = vld [vmem:[%s4] sm:$0xf]
    %v1643 = vperm.slane %v1641, 0
    %v1644 = vperm.slane %v1641, 1
    %v1645 = vperm.slane %v1641, 2
    %v1646 = vperm.slane %v1641, 3
    %v1779 = vunpack.c.l.b16 %v1513
    %v1780 = vunpack.c.h.b16 %v1513
    %v1781 = vunpack.c.l.b16 %v1514
    %v1782 = vunpack.c.h.b16 %v1514
    %v1783 = vunpack.c.l.b16 %v1515
    %v1784 = vunpack.c.h.b16 %v1515
    %v1785 = vunpack.c.l.b16 %v1516
    %v1786 = vunpack.c.h.b16 %v1516
    %v1787 = vunpack.c.l.b16 %v1517
    %v1788 = vunpack.c.h.b16 %v1517
    %v1789 = vunpack.c.l.b16 %v1518
    %v1790 = vunpack.c.h.b16 %v1518
    %v1791 = vunpack.c.l.b16 %v1519
    %v1792 = vunpack.c.h.b16 %v1519
    %v1793 = vunpack.c.l.b16 %v1520
    %v1794 = vunpack.c.h.b16 %v1520
    %v1795 = vunpack.c.l.b16 %v1521
    %v1796 = vunpack.c.h.b16 %v1521
    %v1797 = vunpack.c.l.b16 %v1522
    %v1798 = vunpack.c.h.b16 %v1522
    %v1799 = vunpack.c.l.b16 %v1523
    %v1800 = vunpack.c.h.b16 %v1523
    %v1801 = vunpack.c.l.b16 %v1524
    %v1802 = vunpack.c.h.b16 %v1524
    %v1803 = vunpack.c.l.b16 %v1525
    %v1804 = vunpack.c.h.b16 %v1525
    %v1805 = vunpack.c.l.b16 %v1526
    %v1806 = vunpack.c.h.b16 %v1526
    %v1807 = vunpack.c.l.b16 %v1527
    %v1808 = vunpack.c.h.b16 %v1527
    %v1809 = vunpack.c.l.b16 %v1528
    %v1810 = vunpack.c.h.b16 %v1528
    %v1811 = vunpack.c.l.b16 %v1529
    %v1812 = vunpack.c.h.b16 %v1529
    %v1813 = vunpack.c.l.b16 %v1530
    %v1814 = vunpack.c.h.b16 %v1530
    %v1815 = vunpack.c.l.b16 %v1531
    %v1816 = vunpack.c.h.b16 %v1531
    %v1817 = vunpack.c.l.b16 %v1532
    %v1818 = vunpack.c.h.b16 %v1532
    %v1819 = vunpack.c.l.b16 %v1533
    %v1820 = vunpack.c.h.b16 %v1533
    %v1821 = vunpack.c.l.b16 %v1534
    %v1822 = vunpack.c.h.b16 %v1534
    %v1823 = vunpack.c.l.b16 %v1535
    %v1824 = vunpack.c.h.b16 %v1535
    %v1825 = vunpack.c.l.b16 %v1536
    %v1826 = vunpack.c.h.b16 %v1536
    %v1827 = vunpack.c.l.b16 %v1537
    %v1828 = vunpack.c.h.b16 %v1537
    %v1829 = vunpack.c.l.b16 %v1538
    %v1830 = vunpack.c.h.b16 %v1538
    %v1831 = vunpack.c.l.b16 %v1539
    %v1832 = vunpack.c.h.b16 %v1539
    %v1833 = vunpack.c.l.b16 %v1540
    %v1834 = vunpack.c.h.b16 %v1540
    %v1835 = vunpack.c.l.b16 %v1541
    %v1836 = vunpack.c.h.b16 %v1541
    %v1837 = vunpack.c.l.b16 %v1542
    %v1838 = vunpack.c.h.b16 %v1542
    %v1839 = vunpack.c.l.b16 %v1543
    %v1840 = vunpack.c.h.b16 %v1543
    %v1841 = vunpack.c.l.b16 %v1544
    %v1842 = vunpack.c.h.b16 %v1544
    %v1843 = vunpack.c.l.b16 %v1545
    %v1844 = vunpack.c.h.b16 %v1545
    %v1845 = vunpack.c.l.b16 %v1546
    %v1846 = vunpack.c.h.b16 %v1546
    %v1847 = vunpack.c.l.b16 %v1547
    %v1848 = vunpack.c.h.b16 %v1547
    %v1849 = vunpack.c.l.b16 %v1548
    %v1850 = vunpack.c.h.b16 %v1548
    %v1851 = vunpack.c.l.b16 %v1549
    %v1852 = vunpack.c.h.b16 %v1549
    %v1853 = vunpack.c.l.b16 %v1550
    %v1854 = vunpack.c.h.b16 %v1550
    %v1855 = vunpack.c.l.b16 %v1551
    %v1856 = vunpack.c.h.b16 %v1551
    %v1857 = vunpack.c.l.b16 %v1552
    %v1858 = vunpack.c.h.b16 %v1552
    %v1859 = vunpack.c.l.b16 %v1553
    %v1860 = vunpack.c.h.b16 %v1553
    %v1861 = vunpack.c.l.b16 %v1554
    %v1862 = vunpack.c.h.b16 %v1554
    %v1863 = vunpack.c.l.b16 %v1555
    %v1864 = vunpack.c.h.b16 %v1555
    %v1865 = vunpack.c.l.b16 %v1556
    %v1866 = vunpack.c.h.b16 %v1556
    %v1867 = vunpack.c.l.b16 %v1557
    %v1868 = vunpack.c.h.b16 %v1557
    %v1869 = vunpack.c.l.b16 %v1558
    %v1870 = vunpack.c.h.b16 %v1558
    %v1871 = vunpack.c.l.b16 %v1559
    %v1872 = vunpack.c.h.b16 %v1559
    %v1873 = vunpack.c.l.b16 %v1560
    %v1874 = vunpack.c.h.b16 %v1560
    %v1875 = vunpack.c.l.b16 %v1561
    %v1876 = vunpack.c.h.b16 %v1561
    %v1877 = vunpack.c.l.b16 %v1562
    %v1878 = vunpack.c.h.b16 %v1562
    %v1879 = vunpack.c.l.b16 %v1563
    %v1880 = vunpack.c.h.b16 %v1563
    %v1881 = vunpack.c.l.b16 %v1564
    %v1882 = vunpack.c.h.b16 %v1564
    %v1883 = vunpack.c.l.b16 %v1565
    %v1884 = vunpack.c.h.b16 %v1565
    %v1885 = vunpack.c.l.b16 %v1566
    %v1886 = vunpack.c.h.b16 %v1566
    %v1887 = vunpack.c.l.b16 %v1567
    %v1888 = vunpack.c.h.b16 %v1567
    %v1889 = vunpack.c.l.b16 %v1568
    %v1890 = vunpack.c.h.b16 %v1568
    %v1891 = vunpack.c.l.b16 %v1569
    %v1892 = vunpack.c.h.b16 %v1569
    %v1893 = vunpack.c.l.b16 %v1570
    %v1894 = vunpack.c.h.b16 %v1570
    %v1895 = vunpack.c.l.b16 %v1571
    %v1896 = vunpack.c.h.b16 %v1571
    %v1897 = vunpack.c.l.b16 %v1572
    %v1898 = vunpack.c.h.b16 %v1572
    %v1899 = vunpack.c.l.b16 %v1573
    %v1900 = vunpack.c.h.b16 %v1573
    %v1901 = vunpack.c.l.b16 %v1574
    %v1902 = vunpack.c.h.b16 %v1574
    %v1903 = vunpack.c.l.b16 %v1575
    %v1904 = vunpack.c.h.b16 %v1575
    %v1905 = vunpack.c.l.b16 %v1576
    %v1906 = vunpack.c.h.b16 %v1576
    %v1907 = vunpack.c.l.b16 %v1577
    %v1908 = vunpack.c.h.b16 %v1577
    %v1909 = vunpack.c.l.b16 %v1578
    %v1910 = vunpack.c.h.b16 %v1578
    %v1911 = vunpack.c.l.b16 %v1579
    %v1912 = vunpack.c.h.b16 %v1579
    %v1913 = vunpack.c.l.b16 %v1580
    %v1914 = vunpack.c.h.b16 %v1580
    %v1915 = vunpack.c.l.b16 %v1581
    %v1916 = vunpack.c.h.b16 %v1581
    %v1917 = vunpack.c.l.b16 %v1582
    %v1918 = vunpack.c.h.b16 %v1582
    %v1919 = vunpack.c.l.b16 %v1583
    %v1920 = vunpack.c.h.b16 %v1583
    %v1921 = vunpack.c.l.b16 %v1584
    %v1922 = vunpack.c.h.b16 %v1584
    %v1923 = vunpack.c.l.b16 %v1585
    %v1924 = vunpack.c.h.b16 %v1585
    %v1925 = vunpack.c.l.b16 %v1586
    %v1926 = vunpack.c.h.b16 %v1586
    %v1927 = vunpack.c.l.b16 %v1587
    %v1928 = vunpack.c.h.b16 %v1587
    %v1929 = vunpack.c.l.b16 %v1588
    %v1930 = vunpack.c.h.b16 %v1588
    %v1931 = vunpack.c.l.b16 %v1589
    %v1932 = vunpack.c.h.b16 %v1589
    %v1933 = vunpack.c.l.b16 %v1590
    %v1934 = vunpack.c.h.b16 %v1590
    %v1935 = vunpack.c.l.b16 %v1591
    %v1936 = vunpack.c.h.b16 %v1591
    %v1937 = vunpack.c.l.b16 %v1592
    %v1938 = vunpack.c.h.b16 %v1592
    %v1939 = vunpack.c.l.b16 %v1593
    %v1940 = vunpack.c.h.b16 %v1593
    %v1941 = vunpack.c.l.b16 %v1594
    %v1942 = vunpack.c.h.b16 %v1594
    %v1943 = vunpack.c.l.b16 %v1595
    %v1944 = vunpack.c.h.b16 %v1595
    %v1945 = vunpack.c.l.b16 %v1596
    %v1946 = vunpack.c.h.b16 %v1596
    %v1947 = vunpack.c.l.b16 %v1597
    %v1948 = vunpack.c.h.b16 %v1597
    %v1949 = vunpack.c.l.b16 %v1598
    %v1950 = vunpack.c.h.b16 %v1598
    %v1951 = vunpack.c.l.b16 %v1599
    %v1952 = vunpack.c.h.b16 %v1599
    %v1953 = vunpack.c.l.b16 %v1600
    %v1954 = vunpack.c.h.b16 %v1600
    %v1955 = vunpack.c.l.b16 %v1601
    %v1956 = vunpack.c.h.b16 %v1601
    %v1957 = vunpack.c.l.b16 %v1602
    %v1958 = vunpack.c.h.b16 %v1602
    %v1959 = vunpack.c.l.b16 %v1603
    %v1960 = vunpack.c.h.b16 %v1603
    %v1961 = vunpack.c.l.b16 %v1604
    %v1962 = vunpack.c.h.b16 %v1604
    %v1963 = vunpack.c.l.b16 %v1605
    %v1964 = vunpack.c.h.b16 %v1605
    %v1965 = vunpack.c.l.b16 %v1606
    %v1966 = vunpack.c.h.b16 %v1606
    %v1967 = vunpack.c.l.b16 %v1607
    %v1968 = vunpack.c.h.b16 %v1607
    %v1969 = vunpack.c.l.b16 %v1608
    %v1970 = vunpack.c.h.b16 %v1608
    %v1971 = vunpack.c.l.b16 %v1609
    %v1972 = vunpack.c.h.b16 %v1609
    %v1973 = vunpack.c.l.b16 %v1610
    %v1974 = vunpack.c.h.b16 %v1610
    %v1975 = vunpack.c.l.b16 %v1611
    %v1976 = vunpack.c.h.b16 %v1611
    %v1977 = vunpack.c.l.b16 %v1612
    %v1978 = vunpack.c.h.b16 %v1612
    %v1979 = vunpack.c.l.b16 %v1613
    %v1980 = vunpack.c.h.b16 %v1613
    %v1981 = vunpack.c.l.b16 %v1614
    %v1982 = vunpack.c.h.b16 %v1614
    %v1983 = vunpack.c.l.b16 %v1615
    %v1984 = vunpack.c.h.b16 %v1615
    %v1985 = vunpack.c.l.b16 %v1616
    %v1986 = vunpack.c.h.b16 %v1616
    %v1987 = vunpack.c.l.b16 %v1617
    %v1988 = vunpack.c.h.b16 %v1617
    %v1989 = vunpack.c.l.b16 %v1618
    %v1990 = vunpack.c.h.b16 %v1618
    %v1991 = vunpack.c.l.b16 %v1619
    %v1992 = vunpack.c.h.b16 %v1619
    %v1993 = vunpack.c.l.b16 %v1620
    %v1994 = vunpack.c.h.b16 %v1620
    %v1995 = vunpack.c.l.b16 %v1621
    %v1996 = vunpack.c.h.b16 %v1621
    %v1997 = vunpack.c.l.b16 %v1622
    %v1998 = vunpack.c.h.b16 %v1622
    %v1999 = vunpack.c.l.b16 %v1623
    %v2000 = vunpack.c.h.b16 %v1623
    %v2001 = vunpack.c.l.b16 %v1624
    %v2002 = vunpack.c.h.b16 %v1624
    %v2003 = vunpack.c.l.b16 %v1625
    %v2004 = vunpack.c.h.b16 %v1625
    %v2005 = vunpack.c.l.b16 %v1626
    %v2006 = vunpack.c.h.b16 %v1626
    %v2007 = vunpack.c.l.b16 %v1627
    %v2008 = vunpack.c.h.b16 %v1627
    %v2009 = vunpack.c.l.b16 %v1628
    %v2010 = vunpack.c.h.b16 %v1628
    %v2011 = vunpack.c.l.b16 %v1629
    %v2012 = vunpack.c.h.b16 %v1629
    %v2013 = vunpack.c.l.b16 %v1630
    %v2014 = vunpack.c.h.b16 %v1630
    %v2015 = vunpack.c.l.b16 %v1631
    %v2016 = vunpack.c.h.b16 %v1631
    %v2017 = vunpack.c.l.b16 %v1632
    %v2018 = vunpack.c.h.b16 %v1632
    %v2019 = vunpack.c.l.b16 %v1633
    %v2020 = vunpack.c.h.b16 %v1633
    %v2021 = vunpack.c.l.b16 %v1634
    %v2022 = vunpack.c.h.b16 %v1634
    %v2023 = vunpack.c.l.b16 %v1635
    %v2024 = vunpack.c.h.b16 %v1635
    %v2025 = vunpack.c.l.b16 %v1636
    %v2026 = vunpack.c.h.b16 %v1636
    %v2027 = vunpack.c.l.b16 %v1637
    %v2028 = vunpack.c.h.b16 %v1637
    %v2029 = vunpack.c.l.b16 %v1638
    %v2030 = vunpack.c.h.b16 %v1638
    %v2031 = vunpack.c.l.b16 %v1639
    %v2032 = vunpack.c.h.b16 %v1639
    %v2033 = vunpack.c.l.b16 %v1640
    %v2034 = vunpack.c.h.b16 %v1640
    %v2035 = vpack.c.b16 %v1783, %v1779
    %v2036 = vpack.c.b16 %v1784, %v1780
    %v2037 = vpack.c.b16 %v1785, %v1781
    %v2038 = vpack.c.b16 %v1786, %v1782
    %v2039 = vpack.c.b16 %v1791, %v1787
    %v2040 = vpack.c.b16 %v1792, %v1788
    %v2041 = vpack.c.b16 %v1793, %v1789
    %v2042 = vpack.c.b16 %v1794, %v1790
    %v2043 = vpack.c.b16 %v1799, %v1795
    %v2044 = vpack.c.b16 %v1800, %v1796
    %v2045 = vpack.c.b16 %v1801, %v1797
    %v2046 = vpack.c.b16 %v1802, %v1798
    %v2047 = vpack.c.b16 %v1807, %v1803
    %v2048 = vpack.c.b16 %v1808, %v1804
    %v2049 = vpack.c.b16 %v1809, %v1805
    %v2050 = vpack.c.b16 %v1810, %v1806
    %v2051 = vpack.c.b16 %v1815, %v1811
    %v2052 = vpack.c.b16 %v1816, %v1812
    %v2053 = vpack.c.b16 %v1817, %v1813
    %v2054 = vpack.c.b16 %v1818, %v1814
    %v2055 = vpack.c.b16 %v1823, %v1819
    %v2056 = vpack.c.b16 %v1824, %v1820
    %v2057 = vpack.c.b16 %v1825, %v1821
    %v2058 = vpack.c.b16 %v1826, %v1822
    %v2059 = vpack.c.b16 %v1831, %v1827
    %v2060 = vpack.c.b16 %v1832, %v1828
    %v2061 = vpack.c.b16 %v1833, %v1829
    %v2062 = vpack.c.b16 %v1834, %v1830
    %v2063 = vpack.c.b16 %v1839, %v1835
    %v2064 = vpack.c.b16 %v1840, %v1836
    %v2065 = vpack.c.b16 %v1841, %v1837
    %v2066 = vpack.c.b16 %v1842, %v1838
    %v2067 = vpack.c.b16 %v1847, %v1843
    %v2068 = vpack.c.b16 %v1848, %v1844
    %v2069 = vpack.c.b16 %v1849, %v1845
    %v2070 = vpack.c.b16 %v1850, %v1846
    %v2071 = vpack.c.b16 %v1855, %v1851
    %v2072 = vpack.c.b16 %v1856, %v1852
    %v2073 = vpack.c.b16 %v1857, %v1853
    %v2074 = vpack.c.b16 %v1858, %v1854
    %v2075 = vpack.c.b16 %v1863, %v1859
    %v2076 = vpack.c.b16 %v1864, %v1860
    %v2077 = vpack.c.b16 %v1865, %v1861
    %v2078 = vpack.c.b16 %v1866, %v1862
    %v2079 = vpack.c.b16 %v1871, %v1867
    %v2080 = vpack.c.b16 %v1872, %v1868
    %v2081 = vpack.c.b16 %v1873, %v1869
    %v2082 = vpack.c.b16 %v1874, %v1870
    %v2083 = vpack.c.b16 %v1879, %v1875
    %v2084 = vpack.c.b16 %v1880, %v1876
    %v2085 = vpack.c.b16 %v1881, %v1877
    %v2086 = vpack.c.b16 %v1882, %v1878
    %v2087 = vpack.c.b16 %v1887, %v1883
    %v2088 = vpack.c.b16 %v1888, %v1884
    %v2089 = vpack.c.b16 %v1889, %v1885
    %v2090 = vpack.c.b16 %v1890, %v1886
    %v2091 = vpack.c.b16 %v1895, %v1891
    %v2092 = vpack.c.b16 %v1896, %v1892
    %v2093 = vpack.c.b16 %v1897, %v1893
    %v2094 = vpack.c.b16 %v1898, %v1894
    %v2095 = vpack.c.b16 %v1903, %v1899
    %v2096 = vpack.c.b16 %v1904, %v1900
    %v2097 = vpack.c.b16 %v1905, %v1901
    %v2098 = vpack.c.b16 %v1906, %v1902
    %v2099 = vpack.c.b16 %v1911, %v1907
    %v2100 = vpack.c.b16 %v1912, %v1908
    %v2101 = vpack.c.b16 %v1913, %v1909
    %v2102 = vpack.c.b16 %v1914, %v1910
    %v2103 = vpack.c.b16 %v1919, %v1915
    %v2104 = vpack.c.b16 %v1920, %v1916
    %v2105 = vpack.c.b16 %v1921, %v1917
    %v2106 = vpack.c.b16 %v1922, %v1918
    %v2107 = vpack.c.b16 %v1927, %v1923
    %v2108 = vpack.c.b16 %v1928, %v1924
    %v2109 = vpack.c.b16 %v1929, %v1925
    %v2110 = vpack.c.b16 %v1930, %v1926
    %v2111 = vpack.c.b16 %v1935, %v1931
    %v2112 = vpack.c.b16 %v1936, %v1932
    %v2113 = vpack.c.b16 %v1937, %v1933
    %v2114 = vpack.c.b16 %v1938, %v1934
    %v2115 = vpack.c.b16 %v1943, %v1939
    %v2116 = vpack.c.b16 %v1944, %v1940
    %v2117 = vpack.c.b16 %v1945, %v1941
    %v2118 = vpack.c.b16 %v1946, %v1942
    %v2119 = vpack.c.b16 %v1951, %v1947
    %v2120 = vpack.c.b16 %v1952, %v1948
    %v2121 = vpack.c.b16 %v1953, %v1949
    %v2122 = vpack.c.b16 %v1954, %v1950
    %v2123 = vpack.c.b16 %v1959, %v1955
    %v2124 = vpack.c.b16 %v1960, %v1956
    %v2125 = vpack.c.b16 %v1961, %v1957
    %v2126 = vpack.c.b16 %v1962, %v1958
    %v2127 = vpack.c.b16 %v1967, %v1963
    %v2128 = vpack.c.b16 %v1968, %v1964
    %v2129 = vpack.c.b16 %v1969, %v1965
    %v2130 = vpack.c.b16 %v1970, %v1966
    %v2131 = vpack.c.b16 %v1975, %v1971
    %v2132 = vpack.c.b16 %v1976, %v1972
    %v2133 = vpack.c.b16 %v1977, %v1973
    %v2134 = vpack.c.b16 %v1978, %v1974
    %v2135 = vpack.c.b16 %v1983, %v1979
    %v2136 = vpack.c.b16 %v1984, %v1980
    %v2137 = vpack.c.b16 %v1985, %v1981
    %v2138 = vpack.c.b16 %v1986, %v1982
    %v2139 = vpack.c.b16 %v1991, %v1987
    %v2140 = vpack.c.b16 %v1992, %v1988
    %v2141 = vpack.c.b16 %v1993, %v1989
    %v2142 = vpack.c.b16 %v1994, %v1990
    %v2143 = vpack.c.b16 %v1999, %v1995
    %v2144 = vpack.c.b16 %v2000, %v1996
    %v2145 = vpack.c.b16 %v2001, %v1997
    %v2146 = vpack.c.b16 %v2002, %v1998
    %v2147 = vpack.c.b16 %v2007, %v2003
    %v2148 = vpack.c.b16 %v2008, %v2004
    %v2149 = vpack.c.b16 %v2009, %v2005
    %v2150 = vpack.c.b16 %v2010, %v2006
    %v2151 = vpack.c.b16 %v2015, %v2011
    %v2152 = vpack.c.b16 %v2016, %v2012
    %v2153 = vpack.c.b16 %v2017, %v2013
    %v2154 = vpack.c.b16 %v2018, %v2014
    %v2155 = vpack.c.b16 %v2023, %v2019
    %v2156 = vpack.c.b16 %v2024, %v2020
    %v2157 = vpack.c.b16 %v2025, %v2021
    %v2158 = vpack.c.b16 %v2026, %v2022
    %v2159 = vpack.c.b16 %v2031, %v2027
    %v2160 = vpack.c.b16 %v2032, %v2028
    %v2161 = vpack.c.b16 %v2033, %v2029
    %v2162 = vpack.c.b16 %v2034, %v2030
    %2291 = vmatpush.bf16.msra.mxu0 %v2063
    %2292 = vmatpush.bf16.msra.mxu0 %v2059
    %2293 = vmatpush.bf16.msra.mxu0 %v2055
    %2294 = vmatpush.bf16.msra.mxu0 %v2051
    %2295 = vmatpush.bf16.msra.mxu0 %v2047
    %2296 = vmatpush.bf16.msra.mxu0 %v2043
    %2297 = vmatpush.bf16.msra.mxu0 %v2039
    %2298 = vmatpush.bf16.msra.mxu0 %v2035
    %2299 = vmatmul.bf16.gmra.mxu0 %v1411
    %v2300 = vpop.f32.mrf.mxu0
    %v2301 = vadd.f32 %v1643, %v2300
    %v2302 = vpop.f32.mrf.mxu0
    %v2303 = vadd.f32 %v1643, %v2302
    %2304 = vmatmul.bf16.gmra.mxu0 %v1413
    %v2305 = vpop.f32.mrf.mxu0
    %v2306 = vadd.f32 %v1643, %v2305
    %v2307 = vpop.f32.mrf.mxu0
    %v2308 = vadd.f32 %v1643, %v2307
    %2309 = vmatmul.bf16.gmra.mxu0 %v1415
    %v2310 = vpop.f32.mrf.mxu0
    %v2311 = vadd.f32 %v1643, %v2310
    %v2312 = vpop.f32.mrf.mxu0
    %v2313 = vadd.f32 %v1643, %v2312
    %2314 = vmatmul.bf16.gmra.mxu0 %v1417
    %v2315 = vpop.f32.mrf.mxu0
    %v2316 = vadd.f32 %v1643, %v2315
    %v2317 = vpop.f32.mrf.mxu0
    %v2318 = vadd.f32 %v1643, %v2317
    %2319 = vmatmul.bf16.gmra.mxu0 %v1419
    %v2320 = vpop.f32.mrf.mxu0
    %v2321 = vadd.f32 %v1643, %v2320
    %v2322 = vpop.f32.mrf.mxu0
    %v2323 = vadd.f32 %v1643, %v2322
    %2324 = vmatmul.bf16.gmra.mxu0 %v1421
    %v2325 = vpop.f32.mrf.mxu0
    %v2326 = vadd.f32 %v1643, %v2325
    %v2327 = vpop.f32.mrf.mxu0
    %v2328 = vadd.f32 %v1643, %v2327
    %2329 = vmatmul.bf16.gmra.mxu0 %v1423
    %v2330 = vpop.f32.mrf.mxu0
    %v2331 = vadd.f32 %v1643, %v2330
    %v2332 = vpop.f32.mrf.mxu0
    %v2333 = vadd.f32 %v1643, %v2332
    %2334 = vmatmul.bf16.gmra.mxu0 %v1425
    %v2335 = vpop.f32.mrf.mxu0
    %v2336 = vadd.f32 %v1643, %v2335
    %v2337 = vpop.f32.mrf.mxu0
    %v2338 = vadd.f32 %v1643, %v2337
    %2339 = vmatmul.bf16.gmra.mxu0 %v1427
    %v2340 = vpop.f32.mrf.mxu0
    %v2341 = vadd.f32 %v1643, %v2340
    %v2342 = vpop.f32.mrf.mxu0
    %v2343 = vadd.f32 %v1643, %v2342
    %2344 = vmatmul.bf16.gmra.mxu0 %v1429
    %v2345 = vpop.f32.mrf.mxu0
    %v2346 = vadd.f32 %v1643, %v2345
    %v2347 = vpop.f32.mrf.mxu0
    %v2348 = vadd.f32 %v1643, %v2347
    %2349 = vmatmul.bf16.gmra.mxu0 %v1431
    %v2350 = vpop.f32.mrf.mxu0
    %v2351 = vadd.f32 %v1643, %v2350
    %v2352 = vpop.f32.mrf.mxu0
    %v2353 = vadd.f32 %v1643, %v2352
    %2354 = vmatmul.bf16.gmra.mxu0 %v1433
    %v2355 = vpop.f32.mrf.mxu0
    %v2356 = vadd.f32 %v1643, %v2355
    %v2357 = vpop.f32.mrf.mxu0
    %v2358 = vadd.f32 %v1643, %v2357
    %2359 = vmatmul.bf16.gmra.mxu0 %v1435
    %v2360 = vpop.f32.mrf.mxu0
    %v2361 = vadd.f32 %v1643, %v2360
    %v2362 = vpop.f32.mrf.mxu0
    %v2363 = vadd.f32 %v1643, %v2362
    %2364 = vmatmul.bf16.gmra.mxu0 %v1437
    %v2365 = vpop.f32.mrf.mxu0
    %v2366 = vadd.f32 %v1643, %v2365
    %v2367 = vpop.f32.mrf.mxu0
    %v2368 = vadd.f32 %v1643, %v2367
    %2369 = vmatmul.bf16.gmra.mxu0 %v1439
    %v2370 = vpop.f32.mrf.mxu0
    %v2371 = vadd.f32 %v1643, %v2370
    %v2372 = vpop.f32.mrf.mxu0
    %v2373 = vadd.f32 %v1643, %v2372
    %2374 = vmatmul.bf16.gmra.mxu0 %v1441
    %v2375 = vpop.f32.mrf.mxu0
    %v2376 = vadd.f32 %v1643, %v2375
    %v2377 = vpop.f32.mrf.mxu0
    %v2378 = vadd.f32 %v1643, %v2377
    %2379 = vmatmul.bf16.gmra.mxu0 %v1443
    %v2380 = vpop.f32.mrf.mxu0
    %v2381 = vadd.f32 %v1643, %v2380
    %v2382 = vpop.f32.mrf.mxu0
    %v2383 = vadd.f32 %v1643, %v2382
    %2384 = vmatmul.bf16.gmra.mxu0 %v1445
    %v2385 = vpop.f32.mrf.mxu0
    %v2386 = vadd.f32 %v1643, %v2385
    %v2387 = vpop.f32.mrf.mxu0
    %v2388 = vadd.f32 %v1643, %v2387
    %2389 = vmatmul.bf16.gmra.mxu0 %v1447
    %v2390 = vpop.f32.mrf.mxu0
    %v2391 = vadd.f32 %v1643, %v2390
    %v2392 = vpop.f32.mrf.mxu0
    %v2393 = vadd.f32 %v1643, %v2392
    %2394 = vmatmul.bf16.gmra.mxu0 %v1449
    %v2395 = vpop.f32.mrf.mxu0
    %v2396 = vadd.f32 %v1643, %v2395
    %v2397 = vpop.f32.mrf.mxu0
    %v2398 = vadd.f32 %v1643, %v2397
    %2399 = vmatmul.bf16.gmra.mxu0 %v1451
    %v2400 = vpop.f32.mrf.mxu0
    %v2401 = vadd.f32 %v1643, %v2400
    %v2402 = vpop.f32.mrf.mxu0
    %v2403 = vadd.f32 %v1643, %v2402
    %2404 = vmatmul.bf16.gmra.mxu0 %v1453
    %v2405 = vpop.f32.mrf.mxu0
    %v2406 = vadd.f32 %v1643, %v2405
    %v2407 = vpop.f32.mrf.mxu0
    %v2408 = vadd.f32 %v1643, %v2407
    %2409 = vmatmul.bf16.gmra.mxu0 %v1455
    %v2410 = vpop.f32.mrf.mxu0
    %v2411 = vadd.f32 %v1643, %v2410
    %v2412 = vpop.f32.mrf.mxu0
    %v2413 = vadd.f32 %v1643, %v2412
    %2414 = vdwg.mxu0
    %2415 = vmatpush.bf16.msra.mxu0 %v2095
    %2416 = vmatpush.bf16.msra.mxu0 %v2091
    %2417 = vmatpush.bf16.msra.mxu0 %v2087
    %2418 = vmatpush.bf16.msra.mxu0 %v2083
    %2419 = vmatpush.bf16.msra.mxu0 %v2079
    %2420 = vmatpush.bf16.msra.mxu0 %v2075
    %2421 = vmatpush.bf16.msra.mxu0 %v2071
    %2422 = vmatpush.bf16.msra.mxu0 %v2067
    %2423 = vmatmul.bf16.gmra.mxu0 %v1412
    %v2424 = vpop.f32.mrf.mxu0
    %v2425 = vadd.f32 %v2301, %v2424
    %v2426 = vpop.f32.mrf.mxu0
    %v2427 = vadd.f32 %v2303, %v2426
    %2428 = vmatmul.bf16.gmra.mxu0 %v1414
    %v2429 = vpop.f32.mrf.mxu0
    %v2430 = vadd.f32 %v2306, %v2429
    %v2431 = vpop.f32.mrf.mxu0
    %v2432 = vadd.f32 %v2308, %v2431
    %2433 = vmatmul.bf16.gmra.mxu0 %v1416
    %v2434 = vpop.f32.mrf.mxu0
    %v2435 = vadd.f32 %v2311, %v2434
    %v2436 = vpop.f32.mrf.mxu0
    %v2437 = vadd.f32 %v2313, %v2436
    %2438 = vmatmul.bf16.gmra.mxu0 %v1418
    %v2439 = vpop.f32.mrf.mxu0
    %v2440 = vadd.f32 %v2316, %v2439
    %v2441 = vpop.f32.mrf.mxu0
    %v2442 = vadd.f32 %v2318, %v2441
    %2443 = vmatmul.bf16.gmra.mxu0 %v1420
    %v2444 = vpop.f32.mrf.mxu0
    %v2445 = vadd.f32 %v2321, %v2444
    %v2446 = vpop.f32.mrf.mxu0
    %v2447 = vadd.f32 %v2323, %v2446
    %2448 = vmatmul.bf16.gmra.mxu0 %v1422
    %v2449 = vpop.f32.mrf.mxu0
    %v2450 = vadd.f32 %v2326, %v2449
    %v2451 = vpop.f32.mrf.mxu0
    %v2452 = vadd.f32 %v2328, %v2451
    %2453 = vmatmul.bf16.gmra.mxu0 %v1424
    %v2454 = vpop.f32.mrf.mxu0
    %v2455 = vadd.f32 %v2331, %v2454
    %v2456 = vpop.f32.mrf.mxu0
    %v2457 = vadd.f32 %v2333, %v2456
    %2458 = vmatmul.bf16.gmra.mxu0 %v1426
    %v2459 = vpop.f32.mrf.mxu0
    %v2460 = vadd.f32 %v2336, %v2459
    %v2461 = vpop.f32.mrf.mxu0
    %v2462 = vadd.f32 %v2338, %v2461
    %2463 = vmatmul.bf16.gmra.mxu0 %v1428
    %v2464 = vpop.f32.mrf.mxu0
    %v2465 = vadd.f32 %v2341, %v2464
    %v2466 = vpop.f32.mrf.mxu0
    %v2467 = vadd.f32 %v2343, %v2466
    %2468 = vmatmul.bf16.gmra.mxu0 %v1430
    %v2469 = vpop.f32.mrf.mxu0
    %v2470 = vadd.f32 %v2346, %v2469
    %v2471 = vpop.f32.mrf.mxu0
    %v2472 = vadd.f32 %v2348, %v2471
    %2473 = vmatmul.bf16.gmra.mxu0 %v1432
    %v2474 = vpop.f32.mrf.mxu0
    %v2475 = vadd.f32 %v2351, %v2474
    %v2476 = vpop.f32.mrf.mxu0
    %v2477 = vadd.f32 %v2353, %v2476
    %2478 = vmatmul.bf16.gmra.mxu0 %v1434
    %v2479 = vpop.f32.mrf.mxu0
    %v2480 = vadd.f32 %v2356, %v2479
    %v2481 = vpop.f32.mrf.mxu0
    %v2482 = vadd.f32 %v2358, %v2481
    %2483 = vmatmul.bf16.gmra.mxu0 %v1436
    %v2484 = vpop.f32.mrf.mxu0
    %v2485 = vadd.f32 %v2361, %v2484
    %v2486 = vpop.f32.mrf.mxu0
    %v2487 = vadd.f32 %v2363, %v2486
    %2488 = vmatmul.bf16.gmra.mxu0 %v1438
    %v2489 = vpop.f32.mrf.mxu0
    %v2490 = vadd.f32 %v2366, %v2489
    %v2491 = vpop.f32.mrf.mxu0
    %v2492 = vadd.f32 %v2368, %v2491
    %2493 = vmatmul.bf16.gmra.mxu0 %v1440
    %v2494 = vpop.f32.mrf.mxu0
    %v2495 = vadd.f32 %v2371, %v2494
    %v2496 = vpop.f32.mrf.mxu0
    %v2497 = vadd.f32 %v2373, %v2496
    %2498 = vmatmul.bf16.gmra.mxu0 %v1442
    %v2499 = vpop.f32.mrf.mxu0
    %v2500 = vadd.f32 %v2376, %v2499
    %v2501 = vpop.f32.mrf.mxu0
    %v2502 = vadd.f32 %v2378, %v2501
    %2503 = vmatmul.bf16.gmra.mxu0 %v1444
    %v2504 = vpop.f32.mrf.mxu0
    %v2505 = vadd.f32 %v2381, %v2504
    %v2506 = vpop.f32.mrf.mxu0
    %v2507 = vadd.f32 %v2383, %v2506
    %2508 = vmatmul.bf16.gmra.mxu0 %v1446
    %v2509 = vpop.f32.mrf.mxu0
    %v2510 = vadd.f32 %v2386, %v2509
    %v2511 = vpop.f32.mrf.mxu0
    %v2512 = vadd.f32 %v2388, %v2511
    %2513 = vmatmul.bf16.gmra.mxu0 %v1448
    %v2514 = vpop.f32.mrf.mxu0
    %v2515 = vadd.f32 %v2391, %v2514
    %v2516 = vpop.f32.mrf.mxu0
    %v2517 = vadd.f32 %v2393, %v2516
    %2518 = vmatmul.bf16.gmra.mxu0 %v1450
    %v2519 = vpop.f32.mrf.mxu0
    %v2520 = vadd.f32 %v2396, %v2519
    %v2521 = vpop.f32.mrf.mxu0
    %v2522 = vadd.f32 %v2398, %v2521
    %2523 = vmatmul.bf16.gmra.mxu0 %v1452
    %v2524 = vpop.f32.mrf.mxu0
    %v2525 = vadd.f32 %v2401, %v2524
    %v2526 = vpop.f32.mrf.mxu0
    %v2527 = vadd.f32 %v2403, %v2526
    %2528 = vmatmul.bf16.gmra.mxu0 %v1454
    %v2529 = vpop.f32.mrf.mxu0
    %v2530 = vadd.f32 %v2406, %v2529
    %v2531 = vpop.f32.mrf.mxu0
    %v2532 = vadd.f32 %v2408, %v2531
    %2533 = vmatmul.bf16.gmra.mxu0 %v1456
    %v2534 = vpop.f32.mrf.mxu0
    %v2535 = vadd.f32 %v2411, %v2534
    %v2536 = vpop.f32.mrf.mxu0
    %v2537 = vadd.f32 %v2413, %v2536
    %2538 = vdwg.mxu0
    %2539 = vmatpush.bf16.msra.mxu0 %v2127
    %2540 = vmatpush.bf16.msra.mxu0 %v2123
    %2541 = vmatpush.bf16.msra.mxu0 %v2119
    %2542 = vmatpush.bf16.msra.mxu0 %v2115
    %2543 = vmatpush.bf16.msra.mxu0 %v2111
    %2544 = vmatpush.bf16.msra.mxu0 %v2107
    %2545 = vmatpush.bf16.msra.mxu0 %v2103
    %2546 = vmatpush.bf16.msra.mxu0 %v2099
    %2547 = vmatmul.bf16.gmra.mxu0 %v1413
    %v2548 = vpop.f32.mrf.mxu0
    %v2549 = vadd.f32 %v2425, %v2548
    %v2550 = vpop.f32.mrf.mxu0
    %v2551 = vadd.f32 %v2427, %v2550
    %2552 = vmatmul.bf16.gmra.mxu0 %v1415
    %v2553 = vpop.f32.mrf.mxu0
    %v2554 = vadd.f32 %v2430, %v2553
    %v2555 = vpop.f32.mrf.mxu0
    %v2556 = vadd.f32 %v2432, %v2555
    %2557 = vmatmul.bf16.gmra.mxu0 %v1417
    %v2558 = vpop.f32.mrf.mxu0
    %v2559 = vadd.f32 %v2435, %v2558
    %v2560 = vpop.f32.mrf.mxu0
    %v2561 = vadd.f32 %v2437, %v2560
    %2562 = vmatmul.bf16.gmra.mxu0 %v1419
    %v2563 = vpop.f32.mrf.mxu0
    %v2564 = vadd.f32 %v2440, %v2563
    %v2565 = vpop.f32.mrf.mxu0
    %v2566 = vadd.f32 %v2442, %v2565
    %2567 = vmatmul.bf16.gmra.mxu0 %v1421
    %v2568 = vpop.f32.mrf.mxu0
    %v2569 = vadd.f32 %v2445, %v2568
    %v2570 = vpop.f32.mrf.mxu0
    %v2571 = vadd.f32 %v2447, %v2570
    %2572 = vmatmul.bf16.gmra.mxu0 %v1423
    %v2573 = vpop.f32.mrf.mxu0
    %v2574 = vadd.f32 %v2450, %v2573
    %v2575 = vpop.f32.mrf.mxu0
    %v2576 = vadd.f32 %v2452, %v2575
    %2577 = vmatmul.bf16.gmra.mxu0 %v1425
    %v2578 = vpop.f32.mrf.mxu0
    %v2579 = vadd.f32 %v2455, %v2578
    %v2580 = vpop.f32.mrf.mxu0
    %v2581 = vadd.f32 %v2457, %v2580
    %2582 = vmatmul.bf16.gmra.mxu0 %v1427
    %v2583 = vpop.f32.mrf.mxu0
    %v2584 = vadd.f32 %v2460, %v2583
    %v2585 = vpop.f32.mrf.mxu0
    %v2586 = vadd.f32 %v2462, %v2585
    %2587 = vmatmul.bf16.gmra.mxu0 %v1429
    %v2588 = vpop.f32.mrf.mxu0
    %v2589 = vadd.f32 %v2465, %v2588
    %v2590 = vpop.f32.mrf.mxu0
    %v2591 = vadd.f32 %v2467, %v2590
    %2592 = vmatmul.bf16.gmra.mxu0 %v1431
    %v2593 = vpop.f32.mrf.mxu0
    %v2594 = vadd.f32 %v2470, %v2593
    %v2595 = vpop.f32.mrf.mxu0
    %v2596 = vadd.f32 %v2472, %v2595
    %2597 = vmatmul.bf16.gmra.mxu0 %v1433
    %v2598 = vpop.f32.mrf.mxu0
    %v2599 = vadd.f32 %v2475, %v2598
    %v2600 = vpop.f32.mrf.mxu0
    %v2601 = vadd.f32 %v2477, %v2600
    %2602 = vmatmul.bf16.gmra.mxu0 %v1435
    %v2603 = vpop.f32.mrf.mxu0
    %v2604 = vadd.f32 %v2480, %v2603
    %v2605 = vpop.f32.mrf.mxu0
    %v2606 = vadd.f32 %v2482, %v2605
    %2607 = vmatmul.bf16.gmra.mxu0 %v1437
    %v2608 = vpop.f32.mrf.mxu0
    %v2609 = vadd.f32 %v2485, %v2608
    %v2610 = vpop.f32.mrf.mxu0
    %v2611 = vadd.f32 %v2487, %v2610
    %2612 = vmatmul.bf16.gmra.mxu0 %v1439
    %v2613 = vpop.f32.mrf.mxu0
    %v2614 = vadd.f32 %v2490, %v2613
    %v2615 = vpop.f32.mrf.mxu0
    %v2616 = vadd.f32 %v2492, %v2615
    %2617 = vmatmul.bf16.gmra.mxu0 %v1441
    %v2618 = vpop.f32.mrf.mxu0
    %v2619 = vadd.f32 %v2495, %v2618
    %v2620 = vpop.f32.mrf.mxu0
    %v2621 = vadd.f32 %v2497, %v2620
    %2622 = vmatmul.bf16.gmra.mxu0 %v1443
    %v2623 = vpop.f32.mrf.mxu0
    %v2624 = vadd.f32 %v2500, %v2623
    %v2625 = vpop.f32.mrf.mxu0
    %v2626 = vadd.f32 %v2502, %v2625
    %2627 = vmatmul.bf16.gmra.mxu0 %v1445
    %v2628 = vpop.f32.mrf.mxu0
    %v2629 = vadd.f32 %v2505, %v2628
    %v2630 = vpop.f32.mrf.mxu0
    %v2631 = vadd.f32 %v2507, %v2630
    %2632 = vmatmul.bf16.gmra.mxu0 %v1447
    %v2633 = vpop.f32.mrf.mxu0
    %v2634 = vadd.f32 %v2510, %v2633
    %v2635 = vpop.f32.mrf.mxu0
    %v2636 = vadd.f32 %v2512, %v2635
    %2637 = vmatmul.bf16.gmra.mxu0 %v1449
    %v2638 = vpop.f32.mrf.mxu0
    %v2639 = vadd.f32 %v2515, %v2638
    %v2640 = vpop.f32.mrf.mxu0
    %v2641 = vadd.f32 %v2517, %v2640
    %2642 = vmatmul.bf16.gmra.mxu0 %v1451
    %v2643 = vpop.f32.mrf.mxu0
    %v2644 = vadd.f32 %v2520, %v2643
    %v2645 = vpop.f32.mrf.mxu0
    %v2646 = vadd.f32 %v2522, %v2645
    %2647 = vmatmul.bf16.gmra.mxu0 %v1453
    %v2648 = vpop.f32.mrf.mxu0
    %v2649 = vadd.f32 %v2525, %v2648
    %v2650 = vpop.f32.mrf.mxu0
    %v2651 = vadd.f32 %v2527, %v2650
    %2652 = vmatmul.bf16.gmra.mxu0 %v1455
    %v2653 = vpop.f32.mrf.mxu0
    %v2654 = vadd.f32 %v2530, %v2653
    %v2655 = vpop.f32.mrf.mxu0
    %v2656 = vadd.f32 %v2532, %v2655
    %2657 = vmatmul.bf16.gmra.mxu0 %v1509
    %v2658 = vpop.f32.mrf.mxu0
    %v2659 = vadd.f32 %v2535, %v2658
    %v2660 = vpop.f32.mrf.mxu0
    %v2661 = vadd.f32 %v2537, %v2660
    %2662 = vdwg.mxu0
    %2663 = vmatpush.bf16.msra.mxu0 %v2159
    %2664 = vmatpush.bf16.msra.mxu0 %v2155
    %2665 = vmatpush.bf16.msra.mxu0 %v2151
    %2666 = vmatpush.bf16.msra.mxu0 %v2147
    %2667 = vmatpush.bf16.msra.mxu0 %v2143
    %2668 = vmatpush.bf16.msra.mxu0 %v2139
    %2669 = vmatpush.bf16.msra.mxu0 %v2135
    %2670 = vmatpush.bf16.msra.mxu0 %v2131
    %2671 = vmatmul.bf16.gmra.mxu0 %v1414
    %v2672 = vpop.f32.mrf.mxu0
    %v2673 = vadd.f32 %v2549, %v2672
    %v2674 = vpop.f32.mrf.mxu0
    %v2675 = vadd.f32 %v2551, %v2674
    %2676 = vmatmul.bf16.gmra.mxu0 %v1416
    %v2677 = vpop.f32.mrf.mxu0
    %v2678 = vadd.f32 %v2554, %v2677
    %v2679 = vpop.f32.mrf.mxu0
    %v2680 = vadd.f32 %v2556, %v2679
    %2681 = vmatmul.bf16.gmra.mxu0 %v1418
    %v2682 = vpop.f32.mrf.mxu0
    %v2683 = vadd.f32 %v2559, %v2682
    %v2684 = vpop.f32.mrf.mxu0
    %v2685 = vadd.f32 %v2561, %v2684
    %2686 = vmatmul.bf16.gmra.mxu0 %v1420
    %v2687 = vpop.f32.mrf.mxu0
    %v2688 = vadd.f32 %v2564, %v2687
    %v2689 = vpop.f32.mrf.mxu0
    %v2690 = vadd.f32 %v2566, %v2689
    %2691 = vmatmul.bf16.gmra.mxu0 %v1422
    %v2692 = vpop.f32.mrf.mxu0
    %v2693 = vadd.f32 %v2569, %v2692
    %v2694 = vpop.f32.mrf.mxu0
    %v2695 = vadd.f32 %v2571, %v2694
    %2696 = vmatmul.bf16.gmra.mxu0 %v1424
    %v2697 = vpop.f32.mrf.mxu0
    %v2698 = vadd.f32 %v2574, %v2697
    %v2699 = vpop.f32.mrf.mxu0
    %v2700 = vadd.f32 %v2576, %v2699
    %2701 = vmatmul.bf16.gmra.mxu0 %v1426
    %v2702 = vpop.f32.mrf.mxu0
    %v2703 = vadd.f32 %v2579, %v2702
    %v2704 = vpop.f32.mrf.mxu0
    %v2705 = vadd.f32 %v2581, %v2704
    %2706 = vmatmul.bf16.gmra.mxu0 %v1428
    %v2707 = vpop.f32.mrf.mxu0
    %v2708 = vadd.f32 %v2584, %v2707
    %v2709 = vpop.f32.mrf.mxu0
    %v2710 = vadd.f32 %v2586, %v2709
    %2711 = vmatmul.bf16.gmra.mxu0 %v1430
    %v2712 = vpop.f32.mrf.mxu0
    %v2713 = vadd.f32 %v2589, %v2712
    %v2714 = vpop.f32.mrf.mxu0
    %v2715 = vadd.f32 %v2591, %v2714
    %2716 = vmatmul.bf16.gmra.mxu0 %v1432
    %v2717 = vpop.f32.mrf.mxu0
    %v2718 = vadd.f32 %v2594, %v2717
    %v2719 = vpop.f32.mrf.mxu0
    %v2720 = vadd.f32 %v2596, %v2719
    %2721 = vmatmul.bf16.gmra.mxu0 %v1434
    %v2722 = vpop.f32.mrf.mxu0
    %v2723 = vadd.f32 %v2599, %v2722
    %v2724 = vpop.f32.mrf.mxu0
    %v2725 = vadd.f32 %v2601, %v2724
    %2726 = vmatmul.bf16.gmra.mxu0 %v1436
    %v2727 = vpop.f32.mrf.mxu0
    %v2728 = vadd.f32 %v2604, %v2727
    %v2729 = vpop.f32.mrf.mxu0
    %v2730 = vadd.f32 %v2606, %v2729
    %2731 = vmatmul.bf16.gmra.mxu0 %v1438
    %v2732 = vpop.f32.mrf.mxu0
    %v2733 = vadd.f32 %v2609, %v2732
    %v2734 = vpop.f32.mrf.mxu0
    %v2735 = vadd.f32 %v2611, %v2734
    %2736 = vmatmul.bf16.gmra.mxu0 %v1440
    %v2737 = vpop.f32.mrf.mxu0
    %v2738 = vadd.f32 %v2614, %v2737
    %v2739 = vpop.f32.mrf.mxu0
    %v2740 = vadd.f32 %v2616, %v2739
    %2741 = vmatmul.bf16.gmra.mxu0 %v1442
    %v2742 = vpop.f32.mrf.mxu0
    %v2743 = vadd.f32 %v2619, %v2742
    %v2744 = vpop.f32.mrf.mxu0
    %v2745 = vadd.f32 %v2621, %v2744
    %2746 = vmatmul.bf16.gmra.mxu0 %v1444
    %v2747 = vpop.f32.mrf.mxu0
    %v2748 = vadd.f32 %v2624, %v2747
    %v2749 = vpop.f32.mrf.mxu0
    %v2750 = vadd.f32 %v2626, %v2749
    %2751 = vmatmul.bf16.gmra.mxu0 %v1446
    %v2752 = vpop.f32.mrf.mxu0
    %v2753 = vadd.f32 %v2629, %v2752
    %v2754 = vpop.f32.mrf.mxu0
    %v2755 = vadd.f32 %v2631, %v2754
    %2756 = vmatmul.bf16.gmra.mxu0 %v1448
    %v2757 = vpop.f32.mrf.mxu0
    %v2758 = vadd.f32 %v2634, %v2757
    %v2759 = vpop.f32.mrf.mxu0
    %v2760 = vadd.f32 %v2636, %v2759
    %2761 = vmatmul.bf16.gmra.mxu0 %v1450
    %v2762 = vpop.f32.mrf.mxu0
    %v2763 = vadd.f32 %v2639, %v2762
    %v2764 = vpop.f32.mrf.mxu0
    %v2765 = vadd.f32 %v2641, %v2764
    %2766 = vmatmul.bf16.gmra.mxu0 %v1452
    %v2767 = vpop.f32.mrf.mxu0
    %v2768 = vadd.f32 %v2644, %v2767
    %v2769 = vpop.f32.mrf.mxu0
    %v2770 = vadd.f32 %v2646, %v2769
    %2771 = vmatmul.bf16.gmra.mxu0 %v1454
    %v2772 = vpop.f32.mrf.mxu0
    %v2773 = vadd.f32 %v2649, %v2772
    %v2774 = vpop.f32.mrf.mxu0
    %v2775 = vadd.f32 %v2651, %v2774
    %2776 = vmatmul.bf16.gmra.mxu0 %v1456
    %v2777 = vpop.f32.mrf.mxu0
    %v2778 = vadd.f32 %v2654, %v2777
    %v2779 = vpop.f32.mrf.mxu0
    %v2780 = vadd.f32 %v2656, %v2779
    %2781 = vmatmul.bf16.gmra.mxu0 %v1510
    %v2782 = vpop.f32.mrf.mxu0
    %v2783 = vadd.f32 %v2659, %v2782
    %v2784 = vpop.f32.mrf.mxu0
    %v2785 = vadd.f32 %v2661, %v2784
    %2786 = vdwg.mxu0
    %2787 = vmatpush.bf16.msra.mxu0 %v2064
    %2788 = vmatpush.bf16.msra.mxu0 %v2060
    %2789 = vmatpush.bf16.msra.mxu0 %v2056
    %2790 = vmatpush.bf16.msra.mxu0 %v2052
    %2791 = vmatpush.bf16.msra.mxu0 %v2048
    %2792 = vmatpush.bf16.msra.mxu0 %v2044
    %2793 = vmatpush.bf16.msra.mxu0 %v2040
    %2794 = vmatpush.bf16.msra.mxu0 %v2036
    %2795 = vmatmul.bf16.gmra.mxu0 %v1411
    %v2796 = vpop.f32.mrf.mxu0
    %v2797 = vadd.f32 %v1644, %v2796
    %v2798 = vpop.f32.mrf.mxu0
    %v2799 = vadd.f32 %v1644, %v2798
    %2800 = vmatmul.bf16.gmra.mxu0 %v1413
    %v2801 = vpop.f32.mrf.mxu0
    %v2802 = vadd.f32 %v1644, %v2801
    %v2803 = vpop.f32.mrf.mxu0
    %v2804 = vadd.f32 %v1644, %v2803
    %2805 = vmatmul.bf16.gmra.mxu0 %v1415
    %v2806 = vpop.f32.mrf.mxu0
    %v2807 = vadd.f32 %v1644, %v2806
    %v2808 = vpop.f32.mrf.mxu0
    %v2809 = vadd.f32 %v1644, %v2808
    %2810 = vmatmul.bf16.gmra.mxu0 %v1417
    %v2811 = vpop.f32.mrf.mxu0
    %v2812 = vadd.f32 %v1644, %v2811
    %v2813 = vpop.f32.mrf.mxu0
    %v2814 = vadd.f32 %v1644, %v2813
    %2815 = vmatmul.bf16.gmra.mxu0 %v1419
    %v2816 = vpop.f32.mrf.mxu0
    %v2817 = vadd.f32 %v1644, %v2816
    %v2818 = vpop.f32.mrf.mxu0
    %v2819 = vadd.f32 %v1644, %v2818
    %2820 = vmatmul.bf16.gmra.mxu0 %v1421
    %v2821 = vpop.f32.mrf.mxu0
    %v2822 = vadd.f32 %v1644, %v2821
    %v2823 = vpop.f32.mrf.mxu0
    %v2824 = vadd.f32 %v1644, %v2823
    %2825 = vmatmul.bf16.gmra.mxu0 %v1423
    %v2826 = vpop.f32.mrf.mxu0
    %v2827 = vadd.f32 %v1644, %v2826
    %v2828 = vpop.f32.mrf.mxu0
    %v2829 = vadd.f32 %v1644, %v2828
    %2830 = vmatmul.bf16.gmra.mxu0 %v1425
    %v2831 = vpop.f32.mrf.mxu0
    %v2832 = vadd.f32 %v1644, %v2831
    %v2833 = vpop.f32.mrf.mxu0
    %v2834 = vadd.f32 %v1644, %v2833
    %2835 = vmatmul.bf16.gmra.mxu0 %v1427
    %v2836 = vpop.f32.mrf.mxu0
    %v2837 = vadd.f32 %v1644, %v2836
    %v2838 = vpop.f32.mrf.mxu0
    %v2839 = vadd.f32 %v1644, %v2838
    %2840 = vmatmul.bf16.gmra.mxu0 %v1429
    %v2841 = vpop.f32.mrf.mxu0
    %v2842 = vadd.f32 %v1644, %v2841
    %v2843 = vpop.f32.mrf.mxu0
    %v2844 = vadd.f32 %v1644, %v2843
    %2845 = vmatmul.bf16.gmra.mxu0 %v1431
    %v2846 = vpop.f32.mrf.mxu0
    %v2847 = vadd.f32 %v1644, %v2846
    %v2848 = vpop.f32.mrf.mxu0
    %v2849 = vadd.f32 %v1644, %v2848
    %2850 = vmatmul.bf16.gmra.mxu0 %v1433
    %v2851 = vpop.f32.mrf.mxu0
    %v2852 = vadd.f32 %v1644, %v2851
    %v2853 = vpop.f32.mrf.mxu0
    %v2854 = vadd.f32 %v1644, %v2853
    %2855 = vmatmul.bf16.gmra.mxu0 %v1435
    %v2856 = vpop.f32.mrf.mxu0
    %v2857 = vadd.f32 %v1644, %v2856
    %v2858 = vpop.f32.mrf.mxu0
    %v2859 = vadd.f32 %v1644, %v2858
    %2860 = vmatmul.bf16.gmra.mxu0 %v1437
    %v2861 = vpop.f32.mrf.mxu0
    %v2862 = vadd.f32 %v1644, %v2861
    %v2863 = vpop.f32.mrf.mxu0
    %v2864 = vadd.f32 %v1644, %v2863
    %2865 = vmatmul.bf16.gmra.mxu0 %v1439
    %v2866 = vpop.f32.mrf.mxu0
    %v2867 = vadd.f32 %v1644, %v2866
    %v2868 = vpop.f32.mrf.mxu0
    %v2869 = vadd.f32 %v1644, %v2868
    %2870 = vmatmul.bf16.gmra.mxu0 %v1441
    %v2871 = vpop.f32.mrf.mxu0
    %v2872 = vadd.f32 %v1644, %v2871
    %v2873 = vpop.f32.mrf.mxu0
    %v2874 = vadd.f32 %v1644, %v2873
    %2875 = vmatmul.bf16.gmra.mxu0 %v1443
    %v2876 = vpop.f32.mrf.mxu0
    %v2877 = vadd.f32 %v1644, %v2876
    %v2878 = vpop.f32.mrf.mxu0
    %v2879 = vadd.f32 %v1644, %v2878
    %2880 = vmatmul.bf16.gmra.mxu0 %v1445
    %v2881 = vpop.f32.mrf.mxu0
    %v2882 = vadd.f32 %v1644, %v2881
    %v2883 = vpop.f32.mrf.mxu0
    %v2884 = vadd.f32 %v1644, %v2883
    %2885 = vmatmul.bf16.gmra.mxu0 %v1447
    %v2886 = vpop.f32.mrf.mxu0
    %v2887 = vadd.f32 %v1644, %v2886
    %v2888 = vpop.f32.mrf.mxu0
    %v2889 = vadd.f32 %v1644, %v2888
    %2890 = vmatmul.bf16.gmra.mxu0 %v1449
    %v2891 = vpop.f32.mrf.mxu0
    %v2892 = vadd.f32 %v1644, %v2891
    %v2893 = vpop.f32.mrf.mxu0
    %v2894 = vadd.f32 %v1644, %v2893
    %2895 = vmatmul.bf16.gmra.mxu0 %v1451
    %v2896 = vpop.f32.mrf.mxu0
    %v2897 = vadd.f32 %v1644, %v2896
    %v2898 = vpop.f32.mrf.mxu0
    %v2899 = vadd.f32 %v1644, %v2898
    %2900 = vmatmul.bf16.gmra.mxu0 %v1453
    %v2901 = vpop.f32.mrf.mxu0
    %v2902 = vadd.f32 %v1644, %v2901
    %v2903 = vpop.f32.mrf.mxu0
    %v2904 = vadd.f32 %v1644, %v2903
    %2905 = vmatmul.bf16.gmra.mxu0 %v1455
    %v2906 = vpop.f32.mrf.mxu0
    %v2907 = vadd.f32 %v1644, %v2906
    %v2908 = vpop.f32.mrf.mxu0
    %v2909 = vadd.f32 %v1644, %v2908
    %2910 = vdwg.mxu0
    %2911 = vmatpush.bf16.msra.mxu0 %v2096
    %2912 = vmatpush.bf16.msra.mxu0 %v2092
    %2913 = vmatpush.bf16.msra.mxu0 %v2088
    %2914 = vmatpush.bf16.msra.mxu0 %v2084
    %2915 = vmatpush.bf16.msra.mxu0 %v2080
    %2916 = vmatpush.bf16.msra.mxu0 %v2076
    %2917 = vmatpush.bf16.msra.mxu0 %v2072
    %2918 = vmatpush.bf16.msra.mxu0 %v2068
    %2919 = vmatmul.bf16.gmra.mxu0 %v1412
    %v2920 = vpop.f32.mrf.mxu0
    %v2921 = vadd.f32 %v2797, %v2920
    %v2922 = vpop.f32.mrf.mxu0
    %v2923 = vadd.f32 %v2799, %v2922
    %2924 = vmatmul.bf16.gmra.mxu0 %v1414
    %v2925 = vpop.f32.mrf.mxu0
    %v2926 = vadd.f32 %v2802, %v2925
    %v2927 = vpop.f32.mrf.mxu0
    %v2928 = vadd.f32 %v2804, %v2927
    %2929 = vmatmul.bf16.gmra.mxu0 %v1416
    %v2930 = vpop.f32.mrf.mxu0
    %v2931 = vadd.f32 %v2807, %v2930
    %v2932 = vpop.f32.mrf.mxu0
    %v2933 = vadd.f32 %v2809, %v2932
    %2934 = vmatmul.bf16.gmra.mxu0 %v1418
    %v2935 = vpop.f32.mrf.mxu0
    %v2936 = vadd.f32 %v2812, %v2935
    %v2937 = vpop.f32.mrf.mxu0
    %v2938 = vadd.f32 %v2814, %v2937
    %2939 = vmatmul.bf16.gmra.mxu0 %v1420
    %v2940 = vpop.f32.mrf.mxu0
    %v2941 = vadd.f32 %v2817, %v2940
    %v2942 = vpop.f32.mrf.mxu0
    %v2943 = vadd.f32 %v2819, %v2942
    %2944 = vmatmul.bf16.gmra.mxu0 %v1422
    %v2945 = vpop.f32.mrf.mxu0
    %v2946 = vadd.f32 %v2822, %v2945
    %v2947 = vpop.f32.mrf.mxu0
    %v2948 = vadd.f32 %v2824, %v2947
    %2949 = vmatmul.bf16.gmra.mxu0 %v1424
    %v2950 = vpop.f32.mrf.mxu0
    %v2951 = vadd.f32 %v2827, %v2950
    %v2952 = vpop.f32.mrf.mxu0
    %v2953 = vadd.f32 %v2829, %v2952
    %2954 = vmatmul.bf16.gmra.mxu0 %v1426
    %v2955 = vpop.f32.mrf.mxu0
    %v2956 = vadd.f32 %v2832, %v2955
    %v2957 = vpop.f32.mrf.mxu0
    %v2958 = vadd.f32 %v2834, %v2957
    %2959 = vmatmul.bf16.gmra.mxu0 %v1428
    %v2960 = vpop.f32.mrf.mxu0
    %v2961 = vadd.f32 %v2837, %v2960
    %v2962 = vpop.f32.mrf.mxu0
    %v2963 = vadd.f32 %v2839, %v2962
    %2964 = vmatmul.bf16.gmra.mxu0 %v1430
    %v2965 = vpop.f32.mrf.mxu0
    %v2966 = vadd.f32 %v2842, %v2965
    %v2967 = vpop.f32.mrf.mxu0
    %v2968 = vadd.f32 %v2844, %v2967
    %2969 = vmatmul.bf16.gmra.mxu0 %v1432
    %v2970 = vpop.f32.mrf.mxu0
    %v2971 = vadd.f32 %v2847, %v2970
    %v2972 = vpop.f32.mrf.mxu0
    %v2973 = vadd.f32 %v2849, %v2972
    %2974 = vmatmul.bf16.gmra.mxu0 %v1434
    %v2975 = vpop.f32.mrf.mxu0
    %v2976 = vadd.f32 %v2852, %v2975
    %v2977 = vpop.f32.mrf.mxu0
    %v2978 = vadd.f32 %v2854, %v2977
    %2979 = vmatmul.bf16.gmra.mxu0 %v1436
    %v2980 = vpop.f32.mrf.mxu0
    %v2981 = vadd.f32 %v2857, %v2980
    %v2982 = vpop.f32.mrf.mxu0
    %v2983 = vadd.f32 %v2859, %v2982
    %2984 = vmatmul.bf16.gmra.mxu0 %v1438
    %v2985 = vpop.f32.mrf.mxu0
    %v2986 = vadd.f32 %v2862, %v2985
    %v2987 = vpop.f32.mrf.mxu0
    %v2988 = vadd.f32 %v2864, %v2987
    %2989 = vmatmul.bf16.gmra.mxu0 %v1440
    %v2990 = vpop.f32.mrf.mxu0
    %v2991 = vadd.f32 %v2867, %v2990
    %v2992 = vpop.f32.mrf.mxu0
    %v2993 = vadd.f32 %v2869, %v2992
    %2994 = vmatmul.bf16.gmra.mxu0 %v1442
    %v2995 = vpop.f32.mrf.mxu0
    %v2996 = vadd.f32 %v2872, %v2995
    %v2997 = vpop.f32.mrf.mxu0
    %v2998 = vadd.f32 %v2874, %v2997
    %2999 = vmatmul.bf16.gmra.mxu0 %v1444
    %v3000 = vpop.f32.mrf.mxu0
    %v3001 = vadd.f32 %v2877, %v3000
    %v3002 = vpop.f32.mrf.mxu0
    %v3003 = vadd.f32 %v2879, %v3002
    %3004 = vmatmul.bf16.gmra.mxu0 %v1446
    %v3005 = vpop.f32.mrf.mxu0
    %v3006 = vadd.f32 %v2882, %v3005
    %v3007 = vpop.f32.mrf.mxu0
    %v3008 = vadd.f32 %v2884, %v3007
    %3009 = vmatmul.bf16.gmra.mxu0 %v1448
    %v3010 = vpop.f32.mrf.mxu0
    %v3011 = vadd.f32 %v2887, %v3010
    %v3012 = vpop.f32.mrf.mxu0
    %v3013 = vadd.f32 %v2889, %v3012
    %3014 = vmatmul.bf16.gmra.mxu0 %v1450
    %v3015 = vpop.f32.mrf.mxu0
    %v3016 = vadd.f32 %v2892, %v3015
    %v3017 = vpop.f32.mrf.mxu0
    %v3018 = vadd.f32 %v2894, %v3017
    %3019 = vmatmul.bf16.gmra.mxu0 %v1452
    %v3020 = vpop.f32.mrf.mxu0
    %v3021 = vadd.f32 %v2897, %v3020
    %v3022 = vpop.f32.mrf.mxu0
    %v3023 = vadd.f32 %v2899, %v3022
    %3024 = vmatmul.bf16.gmra.mxu0 %v1454
    %v3025 = vpop.f32.mrf.mxu0
    %v3026 = vadd.f32 %v2902, %v3025
    %v3027 = vpop.f32.mrf.mxu0
    %v3028 = vadd.f32 %v2904, %v3027
    %3029 = vmatmul.bf16.gmra.mxu0 %v1456
    %v3030 = vpop.f32.mrf.mxu0
    %v3031 = vadd.f32 %v2907, %v3030
    %v3032 = vpop.f32.mrf.mxu0
    %v3033 = vadd.f32 %v2909, %v3032
    %3034 = vdwg.mxu0
    %3035 = vmatpush.bf16.msra.mxu0 %v2128
    %3036 = vmatpush.bf16.msra.mxu0 %v2124
    %3037 = vmatpush.bf16.msra.mxu0 %v2120
    %3038 = vmatpush.bf16.msra.mxu0 %v2116
    %3039 = vmatpush.bf16.msra.mxu0 %v2112
    %3040 = vmatpush.bf16.msra.mxu0 %v2108
    %3041 = vmatpush.bf16.msra.mxu0 %v2104
    %3042 = vmatpush.bf16.msra.mxu0 %v2100
    %3043 = vmatmul.bf16.gmra.mxu0 %v1413
    %v3044 = vpop.f32.mrf.mxu0
    %v3045 = vadd.f32 %v2921, %v3044
    %v3046 = vpop.f32.mrf.mxu0
    %v3047 = vadd.f32 %v2923, %v3046
    %3048 = vmatmul.bf16.gmra.mxu0 %v1415
    %v3049 = vpop.f32.mrf.mxu0
    %v3050 = vadd.f32 %v2926, %v3049
    %v3051 = vpop.f32.mrf.mxu0
    %v3052 = vadd.f32 %v2928, %v3051
    %3053 = vmatmul.bf16.gmra.mxu0 %v1417
    %v3054 = vpop.f32.mrf.mxu0
    %v3055 = vadd.f32 %v2931, %v3054
    %v3056 = vpop.f32.mrf.mxu0
    %v3057 = vadd.f32 %v2933, %v3056
    %3058 = vmatmul.bf16.gmra.mxu0 %v1419
    %v3059 = vpop.f32.mrf.mxu0
    %v3060 = vadd.f32 %v2936, %v3059
    %v3061 = vpop.f32.mrf.mxu0
    %v3062 = vadd.f32 %v2938, %v3061
    %3063 = vmatmul.bf16.gmra.mxu0 %v1421
    %v3064 = vpop.f32.mrf.mxu0
    %v3065 = vadd.f32 %v2941, %v3064
    %v3066 = vpop.f32.mrf.mxu0
    %v3067 = vadd.f32 %v2943, %v3066
    %3068 = vmatmul.bf16.gmra.mxu0 %v1423
    %v3069 = vpop.f32.mrf.mxu0
    %v3070 = vadd.f32 %v2946, %v3069
    %v3071 = vpop.f32.mrf.mxu0
    %v3072 = vadd.f32 %v2948, %v3071
    %3073 = vmatmul.bf16.gmra.mxu0 %v1425
    %v3074 = vpop.f32.mrf.mxu0
    %v3075 = vadd.f32 %v2951, %v3074
    %v3076 = vpop.f32.mrf.mxu0
    %v3077 = vadd.f32 %v2953, %v3076
    %3078 = vmatmul.bf16.gmra.mxu0 %v1427
    %v3079 = vpop.f32.mrf.mxu0
    %v3080 = vadd.f32 %v2956, %v3079
    %v3081 = vpop.f32.mrf.mxu0
    %v3082 = vadd.f32 %v2958, %v3081
    %3083 = vmatmul.bf16.gmra.mxu0 %v1429
    %v3084 = vpop.f32.mrf.mxu0
    %v3085 = vadd.f32 %v2961, %v3084
    %v3086 = vpop.f32.mrf.mxu0
    %v3087 = vadd.f32 %v2963, %v3086
    %3088 = vmatmul.bf16.gmra.mxu0 %v1431
    %v3089 = vpop.f32.mrf.mxu0
    %v3090 = vadd.f32 %v2966, %v3089
    %v3091 = vpop.f32.mrf.mxu0
    %v3092 = vadd.f32 %v2968, %v3091
    %3093 = vmatmul.bf16.gmra.mxu0 %v1433
    %v3094 = vpop.f32.mrf.mxu0
    %v3095 = vadd.f32 %v2971, %v3094
    %v3096 = vpop.f32.mrf.mxu0
    %v3097 = vadd.f32 %v2973, %v3096
    %3098 = vmatmul.bf16.gmra.mxu0 %v1435
    %v3099 = vpop.f32.mrf.mxu0
    %v3100 = vadd.f32 %v2976, %v3099
    %v3101 = vpop.f32.mrf.mxu0
    %v3102 = vadd.f32 %v2978, %v3101
    %3103 = vmatmul.bf16.gmra.mxu0 %v1437
    %v3104 = vpop.f32.mrf.mxu0
    %v3105 = vadd.f32 %v2981, %v3104
    %v3106 = vpop.f32.mrf.mxu0
    %v3107 = vadd.f32 %v2983, %v3106
    %3108 = vmatmul.bf16.gmra.mxu0 %v1439
    %v3109 = vpop.f32.mrf.mxu0
    %v3110 = vadd.f32 %v2986, %v3109
    %v3111 = vpop.f32.mrf.mxu0
    %v3112 = vadd.f32 %v2988, %v3111
    %3113 = vmatmul.bf16.gmra.mxu0 %v1441
    %v3114 = vpop.f32.mrf.mxu0
    %v3115 = vadd.f32 %v2991, %v3114
    %v3116 = vpop.f32.mrf.mxu0
    %v3117 = vadd.f32 %v2993, %v3116
    %3118 = vmatmul.bf16.gmra.mxu0 %v1443
    %v3119 = vpop.f32.mrf.mxu0
    %v3120 = vadd.f32 %v2996, %v3119
    %v3121 = vpop.f32.mrf.mxu0
    %v3122 = vadd.f32 %v2998, %v3121
    %3123 = vmatmul.bf16.gmra.mxu0 %v1445
    %v3124 = vpop.f32.mrf.mxu0
    %v3125 = vadd.f32 %v3001, %v3124
    %v3126 = vpop.f32.mrf.mxu0
    %v3127 = vadd.f32 %v3003, %v3126
    %3128 = vmatmul.bf16.gmra.mxu0 %v1447
    %v3129 = vpop.f32.mrf.mxu0
    %v3130 = vadd.f32 %v3006, %v3129
    %v3131 = vpop.f32.mrf.mxu0
    %v3132 = vadd.f32 %v3008, %v3131
    %3133 = vmatmul.bf16.gmra.mxu0 %v1449
    %v3134 = vpop.f32.mrf.mxu0
    %v3135 = vadd.f32 %v3011, %v3134
    %v3136 = vpop.f32.mrf.mxu0
    %v3137 = vadd.f32 %v3013, %v3136
    %3138 = vmatmul.bf16.gmra.mxu0 %v1451
    %v3139 = vpop.f32.mrf.mxu0
    %v3140 = vadd.f32 %v3016, %v3139
    %v3141 = vpop.f32.mrf.mxu0
    %v3142 = vadd.f32 %v3018, %v3141
    %3143 = vmatmul.bf16.gmra.mxu0 %v1453
    %v3144 = vpop.f32.mrf.mxu0
    %v3145 = vadd.f32 %v3021, %v3144
    %v3146 = vpop.f32.mrf.mxu0
    %v3147 = vadd.f32 %v3023, %v3146
    %3148 = vmatmul.bf16.gmra.mxu0 %v1455
    %v3149 = vpop.f32.mrf.mxu0
    %v3150 = vadd.f32 %v3026, %v3149
    %v3151 = vpop.f32.mrf.mxu0
    %v3152 = vadd.f32 %v3028, %v3151
    %3153 = vmatmul.bf16.gmra.mxu0 %v1509
    %v3154 = vpop.f32.mrf.mxu0
    %v3155 = vadd.f32 %v3031, %v3154
    %v3156 = vpop.f32.mrf.mxu0
    %v3157 = vadd.f32 %v3033, %v3156
    %3158 = vdwg.mxu0
    %3159 = vmatpush.bf16.msra.mxu0 %v2160
    %3160 = vmatpush.bf16.msra.mxu0 %v2156
    %3161 = vmatpush.bf16.msra.mxu0 %v2152
    %3162 = vmatpush.bf16.msra.mxu0 %v2148
    %3163 = vmatpush.bf16.msra.mxu0 %v2144
    %3164 = vmatpush.bf16.msra.mxu0 %v2140
    %3165 = vmatpush.bf16.msra.mxu0 %v2136
    %3166 = vmatpush.bf16.msra.mxu0 %v2132
    %3167 = vmatmul.bf16.gmra.mxu0 %v1414
    %v3168 = vpop.f32.mrf.mxu0
    %v3169 = vadd.f32 %v3045, %v3168
    %v3170 = vpop.f32.mrf.mxu0
    %v3171 = vadd.f32 %v3047, %v3170
    %3172 = vmatmul.bf16.gmra.mxu0 %v1416
    %v3173 = vpop.f32.mrf.mxu0
    %v3174 = vadd.f32 %v3050, %v3173
    %v3175 = vpop.f32.mrf.mxu0
    %v3176 = vadd.f32 %v3052, %v3175
    %3177 = vmatmul.bf16.gmra.mxu0 %v1418
    %v3178 = vpop.f32.mrf.mxu0
    %v3179 = vadd.f32 %v3055, %v3178
    %v3180 = vpop.f32.mrf.mxu0
    %v3181 = vadd.f32 %v3057, %v3180
    %3182 = vmatmul.bf16.gmra.mxu0 %v1420
    %v3183 = vpop.f32.mrf.mxu0
    %v3184 = vadd.f32 %v3060, %v3183
    %v3185 = vpop.f32.mrf.mxu0
    %v3186 = vadd.f32 %v3062, %v3185
    %3187 = vmatmul.bf16.gmra.mxu0 %v1422
    %v3188 = vpop.f32.mrf.mxu0
    %v3189 = vadd.f32 %v3065, %v3188
    %v3190 = vpop.f32.mrf.mxu0
    %v3191 = vadd.f32 %v3067, %v3190
    %3192 = vmatmul.bf16.gmra.mxu0 %v1424
    %v3193 = vpop.f32.mrf.mxu0
    %v3194 = vadd.f32 %v3070, %v3193
    %v3195 = vpop.f32.mrf.mxu0
    %v3196 = vadd.f32 %v3072, %v3195
    %3197 = vmatmul.bf16.gmra.mxu0 %v1426
    %v3198 = vpop.f32.mrf.mxu0
    %v3199 = vadd.f32 %v3075, %v3198
    %v3200 = vpop.f32.mrf.mxu0
    %v3201 = vadd.f32 %v3077, %v3200
    %3202 = vmatmul.bf16.gmra.mxu0 %v1428
    %v3203 = vpop.f32.mrf.mxu0
    %v3204 = vadd.f32 %v3080, %v3203
    %v3205 = vpop.f32.mrf.mxu0
    %v3206 = vadd.f32 %v3082, %v3205
    %3207 = vmatmul.bf16.gmra.mxu0 %v1430
    %v3208 = vpop.f32.mrf.mxu0
    %v3209 = vadd.f32 %v3085, %v3208
    %v3210 = vpop.f32.mrf.mxu0
    %v3211 = vadd.f32 %v3087, %v3210
    %3212 = vmatmul.bf16.gmra.mxu0 %v1432
    %v3213 = vpop.f32.mrf.mxu0
    %v3214 = vadd.f32 %v3090, %v3213
    %v3215 = vpop.f32.mrf.mxu0
    %v3216 = vadd.f32 %v3092, %v3215
    %3217 = vmatmul.bf16.gmra.mxu0 %v1434
    %v3218 = vpop.f32.mrf.mxu0
    %v3219 = vadd.f32 %v3095, %v3218
    %v3220 = vpop.f32.mrf.mxu0
    %v3221 = vadd.f32 %v3097, %v3220
    %3222 = vmatmul.bf16.gmra.mxu0 %v1436
    %v3223 = vpop.f32.mrf.mxu0
    %v3224 = vadd.f32 %v3100, %v3223
    %v3225 = vpop.f32.mrf.mxu0
    %v3226 = vadd.f32 %v3102, %v3225
    %3227 = vmatmul.bf16.gmra.mxu0 %v1438
    %v3228 = vpop.f32.mrf.mxu0
    %v3229 = vadd.f32 %v3105, %v3228
    %v3230 = vpop.f32.mrf.mxu0
    %v3231 = vadd.f32 %v3107, %v3230
    %3232 = vmatmul.bf16.gmra.mxu0 %v1440
    %v3233 = vpop.f32.mrf.mxu0
    %v3234 = vadd.f32 %v3110, %v3233
    %v3235 = vpop.f32.mrf.mxu0
    %v3236 = vadd.f32 %v3112, %v3235
    %3237 = vmatmul.bf16.gmra.mxu0 %v1442
    %v3238 = vpop.f32.mrf.mxu0
    %v3239 = vadd.f32 %v3115, %v3238
    %v3240 = vpop.f32.mrf.mxu0
    %v3241 = vadd.f32 %v3117, %v3240
    %3242 = vmatmul.bf16.gmra.mxu0 %v1444
    %v3243 = vpop.f32.mrf.mxu0
    %v3244 = vadd.f32 %v3120, %v3243
    %v3245 = vpop.f32.mrf.mxu0
    %v3246 = vadd.f32 %v3122, %v3245
    %3247 = vmatmul.bf16.gmra.mxu0 %v1446
    %v3248 = vpop.f32.mrf.mxu0
    %v3249 = vadd.f32 %v3125, %v3248
    %v3250 = vpop.f32.mrf.mxu0
    %v3251 = vadd.f32 %v3127, %v3250
    %3252 = vmatmul.bf16.gmra.mxu0 %v1448
    %v3253 = vpop.f32.mrf.mxu0
    %v3254 = vadd.f32 %v3130, %v3253
    %v3255 = vpop.f32.mrf.mxu0
    %v3256 = vadd.f32 %v3132, %v3255
    %3257 = vmatmul.bf16.gmra.mxu0 %v1450
    %v3258 = vpop.f32.mrf.mxu0
    %v3259 = vadd.f32 %v3135, %v3258
    %v3260 = vpop.f32.mrf.mxu0
    %v3261 = vadd.f32 %v3137, %v3260
    %3262 = vmatmul.bf16.gmra.mxu0 %v1452
    %v3263 = vpop.f32.mrf.mxu0
    %v3264 = vadd.f32 %v3140, %v3263
    %v3265 = vpop.f32.mrf.mxu0
    %v3266 = vadd.f32 %v3142, %v3265
    %3267 = vmatmul.bf16.gmra.mxu0 %v1454
    %v3268 = vpop.f32.mrf.mxu0
    %v3269 = vadd.f32 %v3145, %v3268
    %v3270 = vpop.f32.mrf.mxu0
    %v3271 = vadd.f32 %v3147, %v3270
    %3272 = vmatmul.bf16.gmra.mxu0 %v1456
    %v3273 = vpop.f32.mrf.mxu0
    %v3274 = vadd.f32 %v3150, %v3273
    %v3275 = vpop.f32.mrf.mxu0
    %v3276 = vadd.f32 %v3152, %v3275
    %3277 = vmatmul.bf16.gmra.mxu0 %v1510
    %v3278 = vpop.f32.mrf.mxu0
    %v3279 = vadd.f32 %v3155, %v3278
    %v3280 = vpop.f32.mrf.mxu0
    %v3281 = vadd.f32 %v3157, %v3280
    %3282 = vdwg.mxu0
    %3283 = vmatpush.bf16.msra.mxu0 %v2065
    %3284 = vmatpush.bf16.msra.mxu0 %v2061
    %3285 = vmatpush.bf16.msra.mxu0 %v2057
    %3286 = vmatpush.bf16.msra.mxu0 %v2053
    %3287 = vmatpush.bf16.msra.mxu0 %v2049
    %3288 = vmatpush.bf16.msra.mxu0 %v2045
    %3289 = vmatpush.bf16.msra.mxu0 %v2041
    %3290 = vmatpush.bf16.msra.mxu0 %v2037
    %3291 = vmatmul.bf16.gmra.mxu0 %v1411
    %v3292 = vpop.f32.mrf.mxu0
    %v3293 = vadd.f32 %v1645, %v3292
    %v3294 = vpop.f32.mrf.mxu0
    %v3295 = vadd.f32 %v1645, %v3294
    %3296 = vmatmul.bf16.gmra.mxu0 %v1413
    %v3297 = vpop.f32.mrf.mxu0
    %v3298 = vadd.f32 %v1645, %v3297
    %v3299 = vpop.f32.mrf.mxu0
    %v3300 = vadd.f32 %v1645, %v3299
    %3301 = vmatmul.bf16.gmra.mxu0 %v1415
    %v3302 = vpop.f32.mrf.mxu0
    %v3303 = vadd.f32 %v1645, %v3302
    %v3304 = vpop.f32.mrf.mxu0
    %v3305 = vadd.f32 %v1645, %v3304
    %3306 = vmatmul.bf16.gmra.mxu0 %v1417
    %v3307 = vpop.f32.mrf.mxu0
    %v3308 = vadd.f32 %v1645, %v3307
    %v3309 = vpop.f32.mrf.mxu0
    %v3310 = vadd.f32 %v1645, %v3309
    %3311 = vmatmul.bf16.gmra.mxu0 %v1419
    %v3312 = vpop.f32.mrf.mxu0
    %v3313 = vadd.f32 %v1645, %v3312
    %v3314 = vpop.f32.mrf.mxu0
    %v3315 = vadd.f32 %v1645, %v3314
    %3316 = vmatmul.bf16.gmra.mxu0 %v1421
    %v3317 = vpop.f32.mrf.mxu0
    %v3318 = vadd.f32 %v1645, %v3317
    %v3319 = vpop.f32.mrf.mxu0
    %v3320 = vadd.f32 %v1645, %v3319
    %3321 = vmatmul.bf16.gmra.mxu0 %v1423
    %v3322 = vpop.f32.mrf.mxu0
    %v3323 = vadd.f32 %v1645, %v3322
    %v3324 = vpop.f32.mrf.mxu0
    %v3325 = vadd.f32 %v1645, %v3324
    %3326 = vmatmul.bf16.gmra.mxu0 %v1425
    %v3327 = vpop.f32.mrf.mxu0
    %v3328 = vadd.f32 %v1645, %v3327
    %v3329 = vpop.f32.mrf.mxu0
    %v3330 = vadd.f32 %v1645, %v3329
    %3331 = vmatmul.bf16.gmra.mxu0 %v1427
    %v3332 = vpop.f32.mrf.mxu0
    %v3333 = vadd.f32 %v1645, %v3332
    %v3334 = vpop.f32.mrf.mxu0
    %v3335 = vadd.f32 %v1645, %v3334
    %3336 = vmatmul.bf16.gmra.mxu0 %v1429
    %v3337 = vpop.f32.mrf.mxu0
    %v3338 = vadd.f32 %v1645, %v3337
    %v3339 = vpop.f32.mrf.mxu0
    %v3340 = vadd.f32 %v1645, %v3339
    %3341 = vmatmul.bf16.gmra.mxu0 %v1431
    %v3342 = vpop.f32.mrf.mxu0
    %v3343 = vadd.f32 %v1645, %v3342
    %v3344 = vpop.f32.mrf.mxu0
    %v3345 = vadd.f32 %v1645, %v3344
    %3346 = vmatmul.bf16.gmra.mxu0 %v1433
    %v3347 = vpop.f32.mrf.mxu0
    %v3348 = vadd.f32 %v1645, %v3347
    %v3349 = vpop.f32.mrf.mxu0
    %v3350 = vadd.f32 %v1645, %v3349
    %3351 = vmatmul.bf16.gmra.mxu0 %v1435
    %v3352 = vpop.f32.mrf.mxu0
    %v3353 = vadd.f32 %v1645, %v3352
    %v3354 = vpop.f32.mrf.mxu0
    %v3355 = vadd.f32 %v1645, %v3354
    %3356 = vmatmul.bf16.gmra.mxu0 %v1437
    %v3357 = vpop.f32.mrf.mxu0
    %v3358 = vadd.f32 %v1645, %v3357
    %v3359 = vpop.f32.mrf.mxu0
    %v3360 = vadd.f32 %v1645, %v3359
    %3361 = vmatmul.bf16.gmra.mxu0 %v1439
    %v3362 = vpop.f32.mrf.mxu0
    %v3363 = vadd.f32 %v1645, %v3362
    %v3364 = vpop.f32.mrf.mxu0
    %v3365 = vadd.f32 %v1645, %v3364
    %3366 = vmatmul.bf16.gmra.mxu0 %v1441
    %v3367 = vpop.f32.mrf.mxu0
    %v3368 = vadd.f32 %v1645, %v3367
    %v3369 = vpop.f32.mrf.mxu0
    %v3370 = vadd.f32 %v1645, %v3369
    %3371 = vmatmul.bf16.gmra.mxu0 %v1443
    %v3372 = vpop.f32.mrf.mxu0
    %v3373 = vadd.f32 %v1645, %v3372
    %v3374 = vpop.f32.mrf.mxu0
    %v3375 = vadd.f32 %v1645, %v3374
    %3376 = vmatmul.bf16.gmra.mxu0 %v1445
    %v3377 = vpop.f32.mrf.mxu0
    %v3378 = vadd.f32 %v1645, %v3377
    %v3379 = vpop.f32.mrf.mxu0
    %v3380 = vadd.f32 %v1645, %v3379
    %3381 = vmatmul.bf16.gmra.mxu0 %v1447
    %v3382 = vpop.f32.mrf.mxu0
    %v3383 = vadd.f32 %v1645, %v3382
    %v3384 = vpop.f32.mrf.mxu0
    %v3385 = vadd.f32 %v1645, %v3384
    %3386 = vmatmul.bf16.gmra.mxu0 %v1449
    %v3387 = vpop.f32.mrf.mxu0
    %v3388 = vadd.f32 %v1645, %v3387
    %v3389 = vpop.f32.mrf.mxu0
    %v3390 = vadd.f32 %v1645, %v3389
    %3391 = vmatmul.bf16.gmra.mxu0 %v1451
    %v3392 = vpop.f32.mrf.mxu0
    %v3393 = vadd.f32 %v1645, %v3392
    %v3394 = vpop.f32.mrf.mxu0
    %v3395 = vadd.f32 %v1645, %v3394
    %3396 = vmatmul.bf16.gmra.mxu0 %v1453
    %v3397 = vpop.f32.mrf.mxu0
    %v3398 = vadd.f32 %v1645, %v3397
    %v3399 = vpop.f32.mrf.mxu0
    %v3400 = vadd.f32 %v1645, %v3399
    %3401 = vmatmul.bf16.gmra.mxu0 %v1455
    %v3402 = vpop.f32.mrf.mxu0
    %v3403 = vadd.f32 %v1645, %v3402
    %v3404 = vpop.f32.mrf.mxu0
    %v3405 = vadd.f32 %v1645, %v3404
    %3406 = vdwg.mxu0
    %3407 = vmatpush.bf16.msra.mxu0 %v2097
    %3408 = vmatpush.bf16.msra.mxu0 %v2093
    %3409 = vmatpush.bf16.msra.mxu0 %v2089
    %3410 = vmatpush.bf16.msra.mxu0 %v2085
    %3411 = vmatpush.bf16.msra.mxu0 %v2081
    %3412 = vmatpush.bf16.msra.mxu0 %v2077
    %3413 = vmatpush.bf16.msra.mxu0 %v2073
    %3414 = vmatpush.bf16.msra.mxu0 %v2069
    %3415 = vmatmul.bf16.gmra.mxu0 %v1412
    %v3416 = vpop.f32.mrf.mxu0
    %v3417 = vadd.f32 %v3293, %v3416
    %v3418 = vpop.f32.mrf.mxu0
    %v3419 = vadd.f32 %v3295, %v3418
    %3420 = vmatmul.bf16.gmra.mxu0 %v1414
    %v3421 = vpop.f32.mrf.mxu0
    %v3422 = vadd.f32 %v3298, %v3421
    %v3423 = vpop.f32.mrf.mxu0
    %v3424 = vadd.f32 %v3300, %v3423
    %3425 = vmatmul.bf16.gmra.mxu0 %v1416
    %v3426 = vpop.f32.mrf.mxu0
    %v3427 = vadd.f32 %v3303, %v3426
    %v3428 = vpop.f32.mrf.mxu0
    %v3429 = vadd.f32 %v3305, %v3428
    %3430 = vmatmul.bf16.gmra.mxu0 %v1418
    %v3431 = vpop.f32.mrf.mxu0
    %v3432 = vadd.f32 %v3308, %v3431
    %v3433 = vpop.f32.mrf.mxu0
    %v3434 = vadd.f32 %v3310, %v3433
    %3435 = vmatmul.bf16.gmra.mxu0 %v1420
    %v3436 = vpop.f32.mrf.mxu0
    %v3437 = vadd.f32 %v3313, %v3436
    %v3438 = vpop.f32.mrf.mxu0
    %v3439 = vadd.f32 %v3315, %v3438
    %3440 = vmatmul.bf16.gmra.mxu0 %v1422
    %v3441 = vpop.f32.mrf.mxu0
    %v3442 = vadd.f32 %v3318, %v3441
    %v3443 = vpop.f32.mrf.mxu0
    %v3444 = vadd.f32 %v3320, %v3443
    %3445 = vmatmul.bf16.gmra.mxu0 %v1424
    %v3446 = vpop.f32.mrf.mxu0
    %v3447 = vadd.f32 %v3323, %v3446
    %v3448 = vpop.f32.mrf.mxu0
    %v3449 = vadd.f32 %v3325, %v3448
    %3450 = vmatmul.bf16.gmra.mxu0 %v1426
    %v3451 = vpop.f32.mrf.mxu0
    %v3452 = vadd.f32 %v3328, %v3451
    %v3453 = vpop.f32.mrf.mxu0
    %v3454 = vadd.f32 %v3330, %v3453
    %3455 = vmatmul.bf16.gmra.mxu0 %v1428
    %v3456 = vpop.f32.mrf.mxu0
    %v3457 = vadd.f32 %v3333, %v3456
    %v3458 = vpop.f32.mrf.mxu0
    %v3459 = vadd.f32 %v3335, %v3458
    %3460 = vmatmul.bf16.gmra.mxu0 %v1430
    %v3461 = vpop.f32.mrf.mxu0
    %v3462 = vadd.f32 %v3338, %v3461
    %v3463 = vpop.f32.mrf.mxu0
    %v3464 = vadd.f32 %v3340, %v3463
    %3465 = vmatmul.bf16.gmra.mxu0 %v1432
    %v3466 = vpop.f32.mrf.mxu0
    %v3467 = vadd.f32 %v3343, %v3466
    %v3468 = vpop.f32.mrf.mxu0
    %v3469 = vadd.f32 %v3345, %v3468
    %3470 = vmatmul.bf16.gmra.mxu0 %v1434
    %v3471 = vpop.f32.mrf.mxu0
    %v3472 = vadd.f32 %v3348, %v3471
    %v3473 = vpop.f32.mrf.mxu0
    %v3474 = vadd.f32 %v3350, %v3473
    %3475 = vmatmul.bf16.gmra.mxu0 %v1436
    %v3476 = vpop.f32.mrf.mxu0
    %v3477 = vadd.f32 %v3353, %v3476
    %v3478 = vpop.f32.mrf.mxu0
    %v3479 = vadd.f32 %v3355, %v3478
    %3480 = vmatmul.bf16.gmra.mxu0 %v1438
    %v3481 = vpop.f32.mrf.mxu0
    %v3482 = vadd.f32 %v3358, %v3481
    %v3483 = vpop.f32.mrf.mxu0
    %v3484 = vadd.f32 %v3360, %v3483
    %3485 = vmatmul.bf16.gmra.mxu0 %v1440
    %v3486 = vpop.f32.mrf.mxu0
    %v3487 = vadd.f32 %v3363, %v3486
    %v3488 = vpop.f32.mrf.mxu0
    %v3489 = vadd.f32 %v3365, %v3488
    %3490 = vmatmul.bf16.gmra.mxu0 %v1442
    %v3491 = vpop.f32.mrf.mxu0
    %v3492 = vadd.f32 %v3368, %v3491
    %v3493 = vpop.f32.mrf.mxu0
    %v3494 = vadd.f32 %v3370, %v3493
    %3495 = vmatmul.bf16.gmra.mxu0 %v1444
    %v3496 = vpop.f32.mrf.mxu0
    %v3497 = vadd.f32 %v3373, %v3496
    %v3498 = vpop.f32.mrf.mxu0
    %v3499 = vadd.f32 %v3375, %v3498
    %3500 = vmatmul.bf16.gmra.mxu0 %v1446
    %v3501 = vpop.f32.mrf.mxu0
    %v3502 = vadd.f32 %v3378, %v3501
    %v3503 = vpop.f32.mrf.mxu0
    %v3504 = vadd.f32 %v3380, %v3503
    %3505 = vmatmul.bf16.gmra.mxu0 %v1448
    %v3506 = vpop.f32.mrf.mxu0
    %v3507 = vadd.f32 %v3383, %v3506
    %v3508 = vpop.f32.mrf.mxu0
    %v3509 = vadd.f32 %v3385, %v3508
    %3510 = vmatmul.bf16.gmra.mxu0 %v1450
    %v3511 = vpop.f32.mrf.mxu0
    %v3512 = vadd.f32 %v3388, %v3511
    %v3513 = vpop.f32.mrf.mxu0
    %v3514 = vadd.f32 %v3390, %v3513
    %3515 = vmatmul.bf16.gmra.mxu0 %v1452
    %v3516 = vpop.f32.mrf.mxu0
    %v3517 = vadd.f32 %v3393, %v3516
    %v3518 = vpop.f32.mrf.mxu0
    %v3519 = vadd.f32 %v3395, %v3518
    %3520 = vmatmul.bf16.gmra.mxu0 %v1454
    %v3521 = vpop.f32.mrf.mxu0
    %v3522 = vadd.f32 %v3398, %v3521
    %v3523 = vpop.f32.mrf.mxu0
    %v3524 = vadd.f32 %v3400, %v3523
    %3525 = vmatmul.bf16.gmra.mxu0 %v1456
    %v3526 = vpop.f32.mrf.mxu0
    %v3527 = vadd.f32 %v3403, %v3526
    %v3528 = vpop.f32.mrf.mxu0
    %v3529 = vadd.f32 %v3405, %v3528
    %3530 = vdwg.mxu0
    %3531 = vmatpush.bf16.msra.mxu0 %v2129
    %3532 = vmatpush.bf16.msra.mxu0 %v2125
    %3533 = vmatpush.bf16.msra.mxu0 %v2121
    %3534 = vmatpush.bf16.msra.mxu0 %v2117
    %3535 = vmatpush.bf16.msra.mxu0 %v2113
    %3536 = vmatpush.bf16.msra.mxu0 %v2109
    %3537 = vmatpush.bf16.msra.mxu0 %v2105
    %3538 = vmatpush.bf16.msra.mxu0 %v2101
    %3539 = vmatmul.bf16.gmra.mxu0 %v1413
    %v3540 = vpop.f32.mrf.mxu0
    %v3541 = vadd.f32 %v3417, %v3540
    %v3542 = vpop.f32.mrf.mxu0
    %v3543 = vadd.f32 %v3419, %v3542
    %3544 = vmatmul.bf16.gmra.mxu0 %v1415
    %v3545 = vpop.f32.mrf.mxu0
    %v3546 = vadd.f32 %v3422, %v3545
    %v3547 = vpop.f32.mrf.mxu0
    %v3548 = vadd.f32 %v3424, %v3547
    %3549 = vmatmul.bf16.gmra.mxu0 %v1417
    %v3550 = vpop.f32.mrf.mxu0
    %v3551 = vadd.f32 %v3427, %v3550
    %v3552 = vpop.f32.mrf.mxu0
    %v3553 = vadd.f32 %v3429, %v3552
    %3554 = vmatmul.bf16.gmra.mxu0 %v1419
    %v3555 = vpop.f32.mrf.mxu0
    %v3556 = vadd.f32 %v3432, %v3555
    %v3557 = vpop.f32.mrf.mxu0
    %v3558 = vadd.f32 %v3434, %v3557
    %3559 = vmatmul.bf16.gmra.mxu0 %v1421
    %v3560 = vpop.f32.mrf.mxu0
    %v3561 = vadd.f32 %v3437, %v3560
    %v3562 = vpop.f32.mrf.mxu0
    %v3563 = vadd.f32 %v3439, %v3562
    %3564 = vmatmul.bf16.gmra.mxu0 %v1423
    %v3565 = vpop.f32.mrf.mxu0
    %v3566 = vadd.f32 %v3442, %v3565
    %v3567 = vpop.f32.mrf.mxu0
    %v3568 = vadd.f32 %v3444, %v3567
    %3569 = vmatmul.bf16.gmra.mxu0 %v1425
    %v3570 = vpop.f32.mrf.mxu0
    %v3571 = vadd.f32 %v3447, %v3570
    %v3572 = vpop.f32.mrf.mxu0
    %v3573 = vadd.f32 %v3449, %v3572
    %3574 = vmatmul.bf16.gmra.mxu0 %v1427
    %v3575 = vpop.f32.mrf.mxu0
    %v3576 = vadd.f32 %v3452, %v3575
    %v3577 = vpop.f32.mrf.mxu0
    %v3578 = vadd.f32 %v3454, %v3577
    %3579 = vmatmul.bf16.gmra.mxu0 %v1429
    %v3580 = vpop.f32.mrf.mxu0
    %v3581 = vadd.f32 %v3457, %v3580
    %v3582 = vpop.f32.mrf.mxu0
    %v3583 = vadd.f32 %v3459, %v3582
    %3584 = vmatmul.bf16.gmra.mxu0 %v1431
    %v3585 = vpop.f32.mrf.mxu0
    %v3586 = vadd.f32 %v3462, %v3585
    %v3587 = vpop.f32.mrf.mxu0
    %v3588 = vadd.f32 %v3464, %v3587
    %3589 = vmatmul.bf16.gmra.mxu0 %v1433
    %v3590 = vpop.f32.mrf.mxu0
    %v3591 = vadd.f32 %v3467, %v3590
    %v3592 = vpop.f32.mrf.mxu0
    %v3593 = vadd.f32 %v3469, %v3592
    %3594 = vmatmul.bf16.gmra.mxu0 %v1435
    %v3595 = vpop.f32.mrf.mxu0
    %v3596 = vadd.f32 %v3472, %v3595
    %v3597 = vpop.f32.mrf.mxu0
    %v3598 = vadd.f32 %v3474, %v3597
    %3599 = vmatmul.bf16.gmra.mxu0 %v1437
    %v3600 = vpop.f32.mrf.mxu0
    %v3601 = vadd.f32 %v3477, %v3600
    %v3602 = vpop.f32.mrf.mxu0
    %v3603 = vadd.f32 %v3479, %v3602
    %3604 = vmatmul.bf16.gmra.mxu0 %v1439
    %v3605 = vpop.f32.mrf.mxu0
    %v3606 = vadd.f32 %v3482, %v3605
    %v3607 = vpop.f32.mrf.mxu0
    %v3608 = vadd.f32 %v3484, %v3607
    %3609 = vmatmul.bf16.gmra.mxu0 %v1441
    %v3610 = vpop.f32.mrf.mxu0
    %v3611 = vadd.f32 %v3487, %v3610
    %v3612 = vpop.f32.mrf.mxu0
    %v3613 = vadd.f32 %v3489, %v3612
    %3614 = vmatmul.bf16.gmra.mxu0 %v1443
    %v3615 = vpop.f32.mrf.mxu0
    %v3616 = vadd.f32 %v3492, %v3615
    %v3617 = vpop.f32.mrf.mxu0
    %v3618 = vadd.f32 %v3494, %v3617
    %3619 = vmatmul.bf16.gmra.mxu0 %v1445
    %v3620 = vpop.f32.mrf.mxu0
    %v3621 = vadd.f32 %v3497, %v3620
    %v3622 = vpop.f32.mrf.mxu0
    %v3623 = vadd.f32 %v3499, %v3622
    %3624 = vmatmul.bf16.gmra.mxu0 %v1447
    %v3625 = vpop.f32.mrf.mxu0
    %v3626 = vadd.f32 %v3502, %v3625
    %v3627 = vpop.f32.mrf.mxu0
    %v3628 = vadd.f32 %v3504, %v3627
    %3629 = vmatmul.bf16.gmra.mxu0 %v1449
    %v3630 = vpop.f32.mrf.mxu0
    %v3631 = vadd.f32 %v3507, %v3630
    %v3632 = vpop.f32.mrf.mxu0
    %v3633 = vadd.f32 %v3509, %v3632
    %3634 = vmatmul.bf16.gmra.mxu0 %v1451
    %v3635 = vpop.f32.mrf.mxu0
    %v3636 = vadd.f32 %v3512, %v3635
    %v3637 = vpop.f32.mrf.mxu0
    %v3638 = vadd.f32 %v3514, %v3637
    %3639 = vmatmul.bf16.gmra.mxu0 %v1453
    %v3640 = vpop.f32.mrf.mxu0
    %v3641 = vadd.f32 %v3517, %v3640
    %v3642 = vpop.f32.mrf.mxu0
    %v3643 = vadd.f32 %v3519, %v3642
    %3644 = vmatmul.bf16.gmra.mxu0 %v1455
    %v3645 = vpop.f32.mrf.mxu0
    %v3646 = vadd.f32 %v3522, %v3645
    %v3647 = vpop.f32.mrf.mxu0
    %v3648 = vadd.f32 %v3524, %v3647
    %3649 = vmatmul.bf16.gmra.mxu0 %v1509
    %v3650 = vpop.f32.mrf.mxu0
    %v3651 = vadd.f32 %v3527, %v3650
    %v3652 = vpop.f32.mrf.mxu0
    %v3653 = vadd.f32 %v3529, %v3652
    %3654 = vdwg.mxu0
    %3655 = vmatpush.bf16.msra.mxu0 %v2161
    %3656 = vmatpush.bf16.msra.mxu0 %v2157
    %3657 = vmatpush.bf16.msra.mxu0 %v2153
    %3658 = vmatpush.bf16.msra.mxu0 %v2149
    %3659 = vmatpush.bf16.msra.mxu0 %v2145
    %3660 = vmatpush.bf16.msra.mxu0 %v2141
    %3661 = vmatpush.bf16.msra.mxu0 %v2137
    %3662 = vmatpush.bf16.msra.mxu0 %v2133
    %3663 = vmatmul.bf16.gmra.mxu0 %v1414
    %v3664 = vpop.f32.mrf.mxu0
    %v3665 = vadd.f32 %v3541, %v3664
    %v3666 = vpop.f32.mrf.mxu0
    %v3667 = vadd.f32 %v3543, %v3666
    %3668 = vmatmul.bf16.gmra.mxu0 %v1416
    %v3669 = vpop.f32.mrf.mxu0
    %v3670 = vadd.f32 %v3546, %v3669
    %v3671 = vpop.f32.mrf.mxu0
    %v3672 = vadd.f32 %v3548, %v3671
    %3673 = vmatmul.bf16.gmra.mxu0 %v1418
    %v3674 = vpop.f32.mrf.mxu0
    %v3675 = vadd.f32 %v3551, %v3674
    %v3676 = vpop.f32.mrf.mxu0
    %v3677 = vadd.f32 %v3553, %v3676
    %3678 = vmatmul.bf16.gmra.mxu0 %v1420
    %v3679 = vpop.f32.mrf.mxu0
    %v3680 = vadd.f32 %v3556, %v3679
    %v3681 = vpop.f32.mrf.mxu0
    %v3682 = vadd.f32 %v3558, %v3681
    %3683 = vmatmul.bf16.gmra.mxu0 %v1422
    %v3684 = vpop.f32.mrf.mxu0
    %v3685 = vadd.f32 %v3561, %v3684
    %v3686 = vpop.f32.mrf.mxu0
    %v3687 = vadd.f32 %v3563, %v3686
    %3688 = vmatmul.bf16.gmra.mxu0 %v1424
    %v3689 = vpop.f32.mrf.mxu0
    %v3690 = vadd.f32 %v3566, %v3689
    %v3691 = vpop.f32.mrf.mxu0
    %v3692 = vadd.f32 %v3568, %v3691
    %3693 = vmatmul.bf16.gmra.mxu0 %v1426
    %v3694 = vpop.f32.mrf.mxu0
    %v3695 = vadd.f32 %v3571, %v3694
    %v3696 = vpop.f32.mrf.mxu0
    %v3697 = vadd.f32 %v3573, %v3696
    %3698 = vmatmul.bf16.gmra.mxu0 %v1428
    %v3699 = vpop.f32.mrf.mxu0
    %v3700 = vadd.f32 %v3576, %v3699
    %v3701 = vpop.f32.mrf.mxu0
    %v3702 = vadd.f32 %v3578, %v3701
    %3703 = vmatmul.bf16.gmra.mxu0 %v1430
    %v3704 = vpop.f32.mrf.mxu0
    %v3705 = vadd.f32 %v3581, %v3704
    %v3706 = vpop.f32.mrf.mxu0
    %v3707 = vadd.f32 %v3583, %v3706
    %3708 = vmatmul.bf16.gmra.mxu0 %v1432
    %v3709 = vpop.f32.mrf.mxu0
    %v3710 = vadd.f32 %v3586, %v3709
    %v3711 = vpop.f32.mrf.mxu0
    %v3712 = vadd.f32 %v3588, %v3711
    %3713 = vmatmul.bf16.gmra.mxu0 %v1434
    %v3714 = vpop.f32.mrf.mxu0
    %v3715 = vadd.f32 %v3591, %v3714
    %v3716 = vpop.f32.mrf.mxu0
    %v3717 = vadd.f32 %v3593, %v3716
    %3718 = vmatmul.bf16.gmra.mxu0 %v1436
    %v3719 = vpop.f32.mrf.mxu0
    %v3720 = vadd.f32 %v3596, %v3719
    %v3721 = vpop.f32.mrf.mxu0
    %v3722 = vadd.f32 %v3598, %v3721
    %3723 = vmatmul.bf16.gmra.mxu0 %v1438
    %v3724 = vpop.f32.mrf.mxu0
    %v3725 = vadd.f32 %v3601, %v3724
    %v3726 = vpop.f32.mrf.mxu0
    %v3727 = vadd.f32 %v3603, %v3726
    %3728 = vmatmul.bf16.gmra.mxu0 %v1440
    %v3729 = vpop.f32.mrf.mxu0
    %v3730 = vadd.f32 %v3606, %v3729
    %v3731 = vpop.f32.mrf.mxu0
    %v3732 = vadd.f32 %v3608, %v3731
    %3733 = vmatmul.bf16.gmra.mxu0 %v1442
    %v3734 = vpop.f32.mrf.mxu0
    %v3735 = vadd.f32 %v3611, %v3734
    %v3736 = vpop.f32.mrf.mxu0
    %v3737 = vadd.f32 %v3613, %v3736
    %3738 = vmatmul.bf16.gmra.mxu0 %v1444
    %v3739 = vpop.f32.mrf.mxu0
    %v3740 = vadd.f32 %v3616, %v3739
    %v3741 = vpop.f32.mrf.mxu0
    %v3742 = vadd.f32 %v3618, %v3741
    %3743 = vmatmul.bf16.gmra.mxu0 %v1446
    %v3744 = vpop.f32.mrf.mxu0
    %v3745 = vadd.f32 %v3621, %v3744
    %v3746 = vpop.f32.mrf.mxu0
    %v3747 = vadd.f32 %v3623, %v3746
    %3748 = vmatmul.bf16.gmra.mxu0 %v1448
    %v3749 = vpop.f32.mrf.mxu0
    %v3750 = vadd.f32 %v3626, %v3749
    %v3751 = vpop.f32.mrf.mxu0
    %v3752 = vadd.f32 %v3628, %v3751
    %3753 = vmatmul.bf16.gmra.mxu0 %v1450
    %v3754 = vpop.f32.mrf.mxu0
    %v3755 = vadd.f32 %v3631, %v3754
    %v3756 = vpop.f32.mrf.mxu0
    %v3757 = vadd.f32 %v3633, %v3756
    %3758 = vmatmul.bf16.gmra.mxu0 %v1452
    %v3759 = vpop.f32.mrf.mxu0
    %v3760 = vadd.f32 %v3636, %v3759
    %v3761 = vpop.f32.mrf.mxu0
    %v3762 = vadd.f32 %v3638, %v3761
    %3763 = vmatmul.bf16.gmra.mxu0 %v1454
    %v3764 = vpop.f32.mrf.mxu0
    %v3765 = vadd.f32 %v3641, %v3764
    %v3766 = vpop.f32.mrf.mxu0
    %v3767 = vadd.f32 %v3643, %v3766
    %3768 = vmatmul.bf16.gmra.mxu0 %v1456
    %v3769 = vpop.f32.mrf.mxu0
    %v3770 = vadd.f32 %v3646, %v3769
    %v3771 = vpop.f32.mrf.mxu0
    %v3772 = vadd.f32 %v3648, %v3771
    %3773 = vmatmul.bf16.gmra.mxu0 %v1510
    %v3774 = vpop.f32.mrf.mxu0
    %v3775 = vadd.f32 %v3651, %v3774
    %v3776 = vpop.f32.mrf.mxu0
    %v3777 = vadd.f32 %v3653, %v3776
    %3778 = vdwg.mxu0
    %3779 = vmatpush.bf16.msra.mxu0 %v2066
    %3780 = vmatpush.bf16.msra.mxu0 %v2062
    %3781 = vmatpush.bf16.msra.mxu0 %v2058
    %3782 = vmatpush.bf16.msra.mxu0 %v2054
    %3783 = vmatpush.bf16.msra.mxu0 %v2050
    %3784 = vmatpush.bf16.msra.mxu0 %v2046
    %3785 = vmatpush.bf16.msra.mxu0 %v2042
    %3786 = vmatpush.bf16.msra.mxu0 %v2038
    %3787 = vmatmul.bf16.gmra.mxu0 %v1411
    %v3788 = vpop.f32.mrf.mxu0
    %v3789 = vadd.f32 %v1646, %v3788
    %v3790 = vpop.f32.mrf.mxu0
    %v3791 = vadd.f32 %v1646, %v3790
    %3792 = vmatmul.bf16.gmra.mxu0 %v1413
    %v3793 = vpop.f32.mrf.mxu0
    %v3794 = vadd.f32 %v1646, %v3793
    %v3795 = vpop.f32.mrf.mxu0
    %v3796 = vadd.f32 %v1646, %v3795
    %3797 = vmatmul.bf16.gmra.mxu0 %v1415
    %v3798 = vpop.f32.mrf.mxu0
    %v3799 = vadd.f32 %v1646, %v3798
    %v3800 = vpop.f32.mrf.mxu0
    %v3801 = vadd.f32 %v1646, %v3800
    %3802 = vmatmul.bf16.gmra.mxu0 %v1417
    %v3803 = vpop.f32.mrf.mxu0
    %v3804 = vadd.f32 %v1646, %v3803
    %v3805 = vpop.f32.mrf.mxu0
    %v3806 = vadd.f32 %v1646, %v3805
    %3807 = vmatmul.bf16.gmra.mxu0 %v1419
    %v3808 = vpop.f32.mrf.mxu0
    %v3809 = vadd.f32 %v1646, %v3808
    %v3810 = vpop.f32.mrf.mxu0
    %v3811 = vadd.f32 %v1646, %v3810
    %3812 = vmatmul.bf16.gmra.mxu0 %v1421
    %v3813 = vpop.f32.mrf.mxu0
    %v3814 = vadd.f32 %v1646, %v3813
    %v3815 = vpop.f32.mrf.mxu0
    %v3816 = vadd.f32 %v1646, %v3815
    %3817 = vmatmul.bf16.gmra.mxu0 %v1423
    %v3818 = vpop.f32.mrf.mxu0
    %v3819 = vadd.f32 %v1646, %v3818
    %v3820 = vpop.f32.mrf.mxu0
    %v3821 = vadd.f32 %v1646, %v3820
    %3822 = vmatmul.bf16.gmra.mxu0 %v1425
    %v3823 = vpop.f32.mrf.mxu0
    %v3824 = vadd.f32 %v1646, %v3823
    %v3825 = vpop.f32.mrf.mxu0
    %v3826 = vadd.f32 %v1646, %v3825
    %3827 = vmatmul.bf16.gmra.mxu0 %v1427
    %v3828 = vpop.f32.mrf.mxu0
    %v3829 = vadd.f32 %v1646, %v3828
    %v3830 = vpop.f32.mrf.mxu0
    %v3831 = vadd.f32 %v1646, %v3830
    %3832 = vmatmul.bf16.gmra.mxu0 %v1429
    %v3833 = vpop.f32.mrf.mxu0
    %v3834 = vadd.f32 %v1646, %v3833
    %v3835 = vpop.f32.mrf.mxu0
    %v3836 = vadd.f32 %v1646, %v3835
    %3837 = vmatmul.bf16.gmra.mxu0 %v1431
    %v3838 = vpop.f32.mrf.mxu0
    %v3839 = vadd.f32 %v1646, %v3838
    %v3840 = vpop.f32.mrf.mxu0
    %v3841 = vadd.f32 %v1646, %v3840
    %3842 = vmatmul.bf16.gmra.mxu0 %v1433
    %v3843 = vpop.f32.mrf.mxu0
    %v3844 = vadd.f32 %v1646, %v3843
    %v3845 = vpop.f32.mrf.mxu0
    %v3846 = vadd.f32 %v1646, %v3845
    %3847 = vmatmul.bf16.gmra.mxu0 %v1435
    %v3848 = vpop.f32.mrf.mxu0
    %v3849 = vadd.f32 %v1646, %v3848
    %v3850 = vpop.f32.mrf.mxu0
    %v3851 = vadd.f32 %v1646, %v3850
    %3852 = vmatmul.bf16.gmra.mxu0 %v1437
    %v3853 = vpop.f32.mrf.mxu0
    %v3854 = vadd.f32 %v1646, %v3853
    %v3855 = vpop.f32.mrf.mxu0
    %v3856 = vadd.f32 %v1646, %v3855
    %3857 = vmatmul.bf16.gmra.mxu0 %v1439
    %v3858 = vpop.f32.mrf.mxu0
    %v3859 = vadd.f32 %v1646, %v3858
    %v3860 = vpop.f32.mrf.mxu0
    %v3861 = vadd.f32 %v1646, %v3860
    %3862 = vmatmul.bf16.gmra.mxu0 %v1441
    %v3863 = vpop.f32.mrf.mxu0
    %v3864 = vadd.f32 %v1646, %v3863
    %v3865 = vpop.f32.mrf.mxu0
    %v3866 = vadd.f32 %v1646, %v3865
    %3867 = vmatmul.bf16.gmra.mxu0 %v1443
    %v3868 = vpop.f32.mrf.mxu0
    %v3869 = vadd.f32 %v1646, %v3868
    %v3870 = vpop.f32.mrf.mxu0
    %v3871 = vadd.f32 %v1646, %v3870
    %3872 = vmatmul.bf16.gmra.mxu0 %v1445
    %v3873 = vpop.f32.mrf.mxu0
    %v3874 = vadd.f32 %v1646, %v3873
    %v3875 = vpop.f32.mrf.mxu0
    %v3876 = vadd.f32 %v1646, %v3875
    %3877 = vmatmul.bf16.gmra.mxu0 %v1447
    %v3878 = vpop.f32.mrf.mxu0
    %v3879 = vadd.f32 %v1646, %v3878
    %v3880 = vpop.f32.mrf.mxu0
    %v3881 = vadd.f32 %v1646, %v3880
    %3882 = vmatmul.bf16.gmra.mxu0 %v1449
    %v3883 = vpop.f32.mrf.mxu0
    %v3884 = vadd.f32 %v1646, %v3883
    %v3885 = vpop.f32.mrf.mxu0
    %v3886 = vadd.f32 %v1646, %v3885
    %3887 = vmatmul.bf16.gmra.mxu0 %v1451
    %v3888 = vpop.f32.mrf.mxu0
    %v3889 = vadd.f32 %v1646, %v3888
    %v3890 = vpop.f32.mrf.mxu0
    %v3891 = vadd.f32 %v1646, %v3890
    %3892 = vmatmul.bf16.gmra.mxu0 %v1453
    %v3893 = vpop.f32.mrf.mxu0
    %v3894 = vadd.f32 %v1646, %v3893
    %v3895 = vpop.f32.mrf.mxu0
    %v3896 = vadd.f32 %v1646, %v3895
    %3897 = vmatmul.bf16.gmra.mxu0 %v1455
    %v3898 = vpop.f32.mrf.mxu0
    %v3899 = vadd.f32 %v1646, %v3898
    %v3900 = vpop.f32.mrf.mxu0
    %v3901 = vadd.f32 %v1646, %v3900
    %3902 = vdwg.mxu0
    %3903 = vmatpush.bf16.msra.mxu0 %v2098
    %3904 = vmatpush.bf16.msra.mxu0 %v2094
    %3905 = vmatpush.bf16.msra.mxu0 %v2090
    %3906 = vmatpush.bf16.msra.mxu0 %v2086
    %3907 = vmatpush.bf16.msra.mxu0 %v2082
    %3908 = vmatpush.bf16.msra.mxu0 %v2078
    %3909 = vmatpush.bf16.msra.mxu0 %v2074
    %3910 = vmatpush.bf16.msra.mxu0 %v2070
    %3911 = vmatmul.bf16.gmra.mxu0 %v1412
    %v3912 = vpop.f32.mrf.mxu0
    %v3913 = vadd.f32 %v3789, %v3912
    %v3914 = vpop.f32.mrf.mxu0
    %v3915 = vadd.f32 %v3791, %v3914
    %3916 = vmatmul.bf16.gmra.mxu0 %v1414
    %v3917 = vpop.f32.mrf.mxu0
    %v3918 = vadd.f32 %v3794, %v3917
    %v3919 = vpop.f32.mrf.mxu0
    %v3920 = vadd.f32 %v3796, %v3919
    %3921 = vmatmul.bf16.gmra.mxu0 %v1416
    %v3922 = vpop.f32.mrf.mxu0
    %v3923 = vadd.f32 %v3799, %v3922
    %v3924 = vpop.f32.mrf.mxu0
    %v3925 = vadd.f32 %v3801, %v3924
    %3926 = vmatmul.bf16.gmra.mxu0 %v1418
    %v3927 = vpop.f32.mrf.mxu0
    %v3928 = vadd.f32 %v3804, %v3927
    %v3929 = vpop.f32.mrf.mxu0
    %v3930 = vadd.f32 %v3806, %v3929
    %3931 = vmatmul.bf16.gmra.mxu0 %v1420
    %v3932 = vpop.f32.mrf.mxu0
    %v3933 = vadd.f32 %v3809, %v3932
    %v3934 = vpop.f32.mrf.mxu0
    %v3935 = vadd.f32 %v3811, %v3934
    %3936 = vmatmul.bf16.gmra.mxu0 %v1422
    %v3937 = vpop.f32.mrf.mxu0
    %v3938 = vadd.f32 %v3814, %v3937
    %v3939 = vpop.f32.mrf.mxu0
    %v3940 = vadd.f32 %v3816, %v3939
    %3941 = vmatmul.bf16.gmra.mxu0 %v1424
    %v3942 = vpop.f32.mrf.mxu0
    %v3943 = vadd.f32 %v3819, %v3942
    %v3944 = vpop.f32.mrf.mxu0
    %v3945 = vadd.f32 %v3821, %v3944
    %3946 = vmatmul.bf16.gmra.mxu0 %v1426
    %v3947 = vpop.f32.mrf.mxu0
    %v3948 = vadd.f32 %v3824, %v3947
    %v3949 = vpop.f32.mrf.mxu0
    %v3950 = vadd.f32 %v3826, %v3949
    %3951 = vmatmul.bf16.gmra.mxu0 %v1428
    %v3952 = vpop.f32.mrf.mxu0
    %v3953 = vadd.f32 %v3829, %v3952
    %v3954 = vpop.f32.mrf.mxu0
    %v3955 = vadd.f32 %v3831, %v3954
    %3956 = vmatmul.bf16.gmra.mxu0 %v1430
    %v3957 = vpop.f32.mrf.mxu0
    %v3958 = vadd.f32 %v3834, %v3957
    %v3959 = vpop.f32.mrf.mxu0
    %v3960 = vadd.f32 %v3836, %v3959
    %3961 = vmatmul.bf16.gmra.mxu0 %v1432
    %v3962 = vpop.f32.mrf.mxu0
    %v3963 = vadd.f32 %v3839, %v3962
    %v3964 = vpop.f32.mrf.mxu0
    %v3965 = vadd.f32 %v3841, %v3964
    %3966 = vmatmul.bf16.gmra.mxu0 %v1434
    %v3967 = vpop.f32.mrf.mxu0
    %v3968 = vadd.f32 %v3844, %v3967
    %v3969 = vpop.f32.mrf.mxu0
    %v3970 = vadd.f32 %v3846, %v3969
    %3971 = vmatmul.bf16.gmra.mxu0 %v1436
    %v3972 = vpop.f32.mrf.mxu0
    %v3973 = vadd.f32 %v3849, %v3972
    %v3974 = vpop.f32.mrf.mxu0
    %v3975 = vadd.f32 %v3851, %v3974
    %3976 = vmatmul.bf16.gmra.mxu0 %v1438
    %v3977 = vpop.f32.mrf.mxu0
    %v3978 = vadd.f32 %v3854, %v3977
    %v3979 = vpop.f32.mrf.mxu0
    %v3980 = vadd.f32 %v3856, %v3979
    %3981 = vmatmul.bf16.gmra.mxu0 %v1440
    %v3982 = vpop.f32.mrf.mxu0
    %v3983 = vadd.f32 %v3859, %v3982
    %v3984 = vpop.f32.mrf.mxu0
    %v3985 = vadd.f32 %v3861, %v3984
    %3986 = vmatmul.bf16.gmra.mxu0 %v1442
    %v3987 = vpop.f32.mrf.mxu0
    %v3988 = vadd.f32 %v3864, %v3987
    %v3989 = vpop.f32.mrf.mxu0
    %v3990 = vadd.f32 %v3866, %v3989
    %3991 = vmatmul.bf16.gmra.mxu0 %v1444
    %v3992 = vpop.f32.mrf.mxu0
    %v3993 = vadd.f32 %v3869, %v3992
    %v3994 = vpop.f32.mrf.mxu0
    %v3995 = vadd.f32 %v3871, %v3994
    %3996 = vmatmul.bf16.gmra.mxu0 %v1446
    %v3997 = vpop.f32.mrf.mxu0
    %v3998 = vadd.f32 %v3874, %v3997
    %v3999 = vpop.f32.mrf.mxu0
    %v4000 = vadd.f32 %v3876, %v3999
    %4001 = vmatmul.bf16.gmra.mxu0 %v1448
    %v4002 = vpop.f32.mrf.mxu0
    %v4003 = vadd.f32 %v3879, %v4002
    %v4004 = vpop.f32.mrf.mxu0
    %v4005 = vadd.f32 %v3881, %v4004
    %4006 = vmatmul.bf16.gmra.mxu0 %v1450
    %v4007 = vpop.f32.mrf.mxu0
    %v4008 = vadd.f32 %v3884, %v4007
    %v4009 = vpop.f32.mrf.mxu0
    %v4010 = vadd.f32 %v3886, %v4009
    %4011 = vmatmul.bf16.gmra.mxu0 %v1452
    %v4012 = vpop.f32.mrf.mxu0
    %v4013 = vadd.f32 %v3889, %v4012
    %v4014 = vpop.f32.mrf.mxu0
    %v4015 = vadd.f32 %v3891, %v4014
    %4016 = vmatmul.bf16.gmra.mxu0 %v1454
    %v4017 = vpop.f32.mrf.mxu0
    %v4018 = vadd.f32 %v3894, %v4017
    %v4019 = vpop.f32.mrf.mxu0
    %v4020 = vadd.f32 %v3896, %v4019
    %4021 = vmatmul.bf16.gmra.mxu0 %v1456
    %v4022 = vpop.f32.mrf.mxu0
    %v4023 = vadd.f32 %v3899, %v4022
    %v4024 = vpop.f32.mrf.mxu0
    %v4025 = vadd.f32 %v3901, %v4024
    %4026 = vdwg.mxu0
    %4027 = vmatpush.bf16.msra.mxu0 %v2130
    %4028 = vmatpush.bf16.msra.mxu0 %v2126
    %4029 = vmatpush.bf16.msra.mxu0 %v2122
    %4030 = vmatpush.bf16.msra.mxu0 %v2118
    %4031 = vmatpush.bf16.msra.mxu0 %v2114
    %4032 = vmatpush.bf16.msra.mxu0 %v2110
    %4033 = vmatpush.bf16.msra.mxu0 %v2106
    %4034 = vmatpush.bf16.msra.mxu0 %v2102
    %4035 = vmatmul.bf16.gmra.mxu0 %v1413
    %v4036 = vpop.f32.mrf.mxu0
    %v4037 = vadd.f32 %v3913, %v4036
    %v4038 = vpop.f32.mrf.mxu0
    %v4039 = vadd.f32 %v3915, %v4038
    %4040 = vmatmul.bf16.gmra.mxu0 %v1415
    %v4041 = vpop.f32.mrf.mxu0
    %v4042 = vadd.f32 %v3918, %v4041
    %v4043 = vpop.f32.mrf.mxu0
    %v4044 = vadd.f32 %v3920, %v4043
    %4045 = vmatmul.bf16.gmra.mxu0 %v1417
    %v4046 = vpop.f32.mrf.mxu0
    %v4047 = vadd.f32 %v3923, %v4046
    %v4048 = vpop.f32.mrf.mxu0
    %v4049 = vadd.f32 %v3925, %v4048
    %4050 = vmatmul.bf16.gmra.mxu0 %v1419
    %v4051 = vpop.f32.mrf.mxu0
    %v4052 = vadd.f32 %v3928, %v4051
    %v4053 = vpop.f32.mrf.mxu0
    %v4054 = vadd.f32 %v3930, %v4053
    %4055 = vmatmul.bf16.gmra.mxu0 %v1421
    %v4056 = vpop.f32.mrf.mxu0
    %v4057 = vadd.f32 %v3933, %v4056
    %v4058 = vpop.f32.mrf.mxu0
    %v4059 = vadd.f32 %v3935, %v4058
    %4060 = vmatmul.bf16.gmra.mxu0 %v1423
    %v4061 = vpop.f32.mrf.mxu0
    %v4062 = vadd.f32 %v3938, %v4061
    %v4063 = vpop.f32.mrf.mxu0
    %v4064 = vadd.f32 %v3940, %v4063
    %4065 = vmatmul.bf16.gmra.mxu0 %v1425
    %v4066 = vpop.f32.mrf.mxu0
    %v4067 = vadd.f32 %v3943, %v4066
    %v4068 = vpop.f32.mrf.mxu0
    %v4069 = vadd.f32 %v3945, %v4068
    %4070 = vmatmul.bf16.gmra.mxu0 %v1427
    %v4071 = vpop.f32.mrf.mxu0
    %v4072 = vadd.f32 %v3948, %v4071
    %v4073 = vpop.f32.mrf.mxu0
    %v4074 = vadd.f32 %v3950, %v4073
    %4075 = vmatmul.bf16.gmra.mxu0 %v1429
    %v4076 = vpop.f32.mrf.mxu0
    %v4077 = vadd.f32 %v3953, %v4076
    %v4078 = vpop.f32.mrf.mxu0
    %v4079 = vadd.f32 %v3955, %v4078
    %4080 = vmatmul.bf16.gmra.mxu0 %v1431
    %v4081 = vpop.f32.mrf.mxu0
    %v4082 = vadd.f32 %v3958, %v4081
    %v4083 = vpop.f32.mrf.mxu0
    %v4084 = vadd.f32 %v3960, %v4083
    %4085 = vmatmul.bf16.gmra.mxu0 %v1433
    %v4086 = vpop.f32.mrf.mxu0
    %v4087 = vadd.f32 %v3963, %v4086
    %v4088 = vpop.f32.mrf.mxu0
    %v4089 = vadd.f32 %v3965, %v4088
    %4090 = vmatmul.bf16.gmra.mxu0 %v1435
    %v4091 = vpop.f32.mrf.mxu0
    %v4092 = vadd.f32 %v3968, %v4091
    %v4093 = vpop.f32.mrf.mxu0
    %v4094 = vadd.f32 %v3970, %v4093
    %4095 = vmatmul.bf16.gmra.mxu0 %v1437
    %v4096 = vpop.f32.mrf.mxu0
    %v4097 = vadd.f32 %v3973, %v4096
    %v4098 = vpop.f32.mrf.mxu0
    %v4099 = vadd.f32 %v3975, %v4098
    %4100 = vmatmul.bf16.gmra.mxu0 %v1439
    %v4101 = vpop.f32.mrf.mxu0
    %v4102 = vadd.f32 %v3978, %v4101
    %v4103 = vpop.f32.mrf.mxu0
    %v4104 = vadd.f32 %v3980, %v4103
    %4105 = vmatmul.bf16.gmra.mxu0 %v1441
    %v4106 = vpop.f32.mrf.mxu0
    %v4107 = vadd.f32 %v3983, %v4106
    %v4108 = vpop.f32.mrf.mxu0
    %v4109 = vadd.f32 %v3985, %v4108
    %4110 = vmatmul.bf16.gmra.mxu0 %v1443
    %v4111 = vpop.f32.mrf.mxu0
    %v4112 = vadd.f32 %v3988, %v4111
    %v4113 = vpop.f32.mrf.mxu0
    %v4114 = vadd.f32 %v3990, %v4113
    %4115 = vmatmul.bf16.gmra.mxu0 %v1445
    %v4116 = vpop.f32.mrf.mxu0
    %v4117 = vadd.f32 %v3993, %v4116
    %v4118 = vpop.f32.mrf.mxu0
    %v4119 = vadd.f32 %v3995, %v4118
    %4120 = vmatmul.bf16.gmra.mxu0 %v1447
    %v4121 = vpop.f32.mrf.mxu0
    %v4122 = vadd.f32 %v3998, %v4121
    %v4123 = vpop.f32.mrf.mxu0
    %v4124 = vadd.f32 %v4000, %v4123
    %4125 = vmatmul.bf16.gmra.mxu0 %v1449
    %v4126 = vpop.f32.mrf.mxu0
    %v4127 = vadd.f32 %v4003, %v4126
    %v4128 = vpop.f32.mrf.mxu0
    %v4129 = vadd.f32 %v4005, %v4128
    %4130 = vmatmul.bf16.gmra.mxu0 %v1451
    %v4131 = vpop.f32.mrf.mxu0
    %v4132 = vadd.f32 %v4008, %v4131
    %v4133 = vpop.f32.mrf.mxu0
    %v4134 = vadd.f32 %v4010, %v4133
    %4135 = vmatmul.bf16.gmra.mxu0 %v1453
    %v4136 = vpop.f32.mrf.mxu0
    %v4137 = vadd.f32 %v4013, %v4136
    %v4138 = vpop.f32.mrf.mxu0
    %v4139 = vadd.f32 %v4015, %v4138
    %4140 = vmatmul.bf16.gmra.mxu0 %v1455
    %v4141 = vpop.f32.mrf.mxu0
    %v4142 = vadd.f32 %v4018, %v4141
    %v4143 = vpop.f32.mrf.mxu0
    %v4144 = vadd.f32 %v4020, %v4143
    %4145 = vmatmul.bf16.gmra.mxu0 %v1509
    %v4146 = vpop.f32.mrf.mxu0
    %v4147 = vadd.f32 %v4023, %v4146
    %v4148 = vpop.f32.mrf.mxu0
    %v4149 = vadd.f32 %v4025, %v4148
    %4150 = vdwg.mxu0
    %4151 = vmatpush.bf16.msra.mxu0 %v2162
    %4152 = vmatpush.bf16.msra.mxu0 %v2158
    %4153 = vmatpush.bf16.msra.mxu0 %v2154
    %4154 = vmatpush.bf16.msra.mxu0 %v2150
    %4155 = vmatpush.bf16.msra.mxu0 %v2146
    %4156 = vmatpush.bf16.msra.mxu0 %v2142
    %4157 = vmatpush.bf16.msra.mxu0 %v2138
    %4158 = vmatpush.bf16.msra.mxu0 %v2134
    %4159 = vmatmul.bf16.gmra.mxu0 %v1414
    %v4160 = vpop.f32.mrf.mxu0
    %v4161 = vadd.f32 %v4037, %v4160
    %v4162 = vpop.f32.mrf.mxu0
    %v4163 = vadd.f32 %v4039, %v4162
    %4164 = vmatmul.bf16.gmra.mxu0 %v1416
    %v4165 = vpop.f32.mrf.mxu0
    %v4166 = vadd.f32 %v4042, %v4165
    %v4167 = vpop.f32.mrf.mxu0
    %v4168 = vadd.f32 %v4044, %v4167
    %4169 = vmatmul.bf16.gmra.mxu0 %v1418
    %v4170 = vpop.f32.mrf.mxu0
    %v4171 = vadd.f32 %v4047, %v4170
    %v4172 = vpop.f32.mrf.mxu0
    %v4173 = vadd.f32 %v4049, %v4172
    %4174 = vmatmul.bf16.gmra.mxu0 %v1420
    %v4175 = vpop.f32.mrf.mxu0
    %v4176 = vadd.f32 %v4052, %v4175
    %v4177 = vpop.f32.mrf.mxu0
    %v4178 = vadd.f32 %v4054, %v4177
    %4179 = vmatmul.bf16.gmra.mxu0 %v1422
    %v4180 = vpop.f32.mrf.mxu0
    %v4181 = vadd.f32 %v4057, %v4180
    %v4182 = vpop.f32.mrf.mxu0
    %v4183 = vadd.f32 %v4059, %v4182
    %4184 = vmatmul.bf16.gmra.mxu0 %v1424
    %v4185 = vpop.f32.mrf.mxu0
    %v4186 = vadd.f32 %v4062, %v4185
    %v4187 = vpop.f32.mrf.mxu0
    %v4188 = vadd.f32 %v4064, %v4187
    %4189 = vmatmul.bf16.gmra.mxu0 %v1426
    %v4190 = vpop.f32.mrf.mxu0
    %v4191 = vadd.f32 %v4067, %v4190
    %v4192 = vpop.f32.mrf.mxu0
    %v4193 = vadd.f32 %v4069, %v4192
    %4194 = vmatmul.bf16.gmra.mxu0 %v1428
    %v4195 = vpop.f32.mrf.mxu0
    %v4196 = vadd.f32 %v4072, %v4195
    %v4197 = vpop.f32.mrf.mxu0
    %v4198 = vadd.f32 %v4074, %v4197
    %4199 = vmatmul.bf16.gmra.mxu0 %v1430
    %v4200 = vpop.f32.mrf.mxu0
    %v4201 = vadd.f32 %v4077, %v4200
    %v4202 = vpop.f32.mrf.mxu0
    %v4203 = vadd.f32 %v4079, %v4202
    %4204 = vmatmul.bf16.gmra.mxu0 %v1432
    %v4205 = vpop.f32.mrf.mxu0
    %v4206 = vadd.f32 %v4082, %v4205
    %v4207 = vpop.f32.mrf.mxu0
    %v4208 = vadd.f32 %v4084, %v4207
    %4209 = vmatmul.bf16.gmra.mxu0 %v1434
    %v4210 = vpop.f32.mrf.mxu0
    %v4211 = vadd.f32 %v4087, %v4210
    %v4212 = vpop.f32.mrf.mxu0
    %v4213 = vadd.f32 %v4089, %v4212
    %4214 = vmatmul.bf16.gmra.mxu0 %v1436
    %v4215 = vpop.f32.mrf.mxu0
    %v4216 = vadd.f32 %v4092, %v4215
    %v4217 = vpop.f32.mrf.mxu0
    %v4218 = vadd.f32 %v4094, %v4217
    %4219 = vmatmul.bf16.gmra.mxu0 %v1438
    %v4220 = vpop.f32.mrf.mxu0
    %v4221 = vadd.f32 %v4097, %v4220
    %v4222 = vpop.f32.mrf.mxu0
    %v4223 = vadd.f32 %v4099, %v4222
    %4224 = vmatmul.bf16.gmra.mxu0 %v1440
    %v4225 = vpop.f32.mrf.mxu0
    %v4226 = vadd.f32 %v4102, %v4225
    %v4227 = vpop.f32.mrf.mxu0
    %v4228 = vadd.f32 %v4104, %v4227
    %4229 = vmatmul.bf16.gmra.mxu0 %v1442
    %v4230 = vpop.f32.mrf.mxu0
    %v4231 = vadd.f32 %v4107, %v4230
    %v4232 = vpop.f32.mrf.mxu0
    %v4233 = vadd.f32 %v4109, %v4232
    %4234 = vmatmul.bf16.gmra.mxu0 %v1444
    %v4235 = vpop.f32.mrf.mxu0
    %v4236 = vadd.f32 %v4112, %v4235
    %v4237 = vpop.f32.mrf.mxu0
    %v4238 = vadd.f32 %v4114, %v4237
    %4239 = vmatmul.bf16.gmra.mxu0 %v1446
    %v4240 = vpop.f32.mrf.mxu0
    %v4241 = vadd.f32 %v4117, %v4240
    %v4242 = vpop.f32.mrf.mxu0
    %v4243 = vadd.f32 %v4119, %v4242
    %4244 = vmatmul.bf16.gmra.mxu0 %v1448
    %v4245 = vpop.f32.mrf.mxu0
    %v4246 = vadd.f32 %v4122, %v4245
    %v4247 = vpop.f32.mrf.mxu0
    %v4248 = vadd.f32 %v4124, %v4247
    %4249 = vmatmul.bf16.gmra.mxu0 %v1450
    %v4250 = vpop.f32.mrf.mxu0
    %v4251 = vadd.f32 %v4127, %v4250
    %v4252 = vpop.f32.mrf.mxu0
    %v4253 = vadd.f32 %v4129, %v4252
    %4254 = vmatmul.bf16.gmra.mxu0 %v1452
    %v4255 = vpop.f32.mrf.mxu0
    %v4256 = vadd.f32 %v4132, %v4255
    %v4257 = vpop.f32.mrf.mxu0
    %v4258 = vadd.f32 %v4134, %v4257
    %4259 = vmatmul.bf16.gmra.mxu0 %v1454
    %v4260 = vpop.f32.mrf.mxu0
    %v4261 = vadd.f32 %v4137, %v4260
    %v4262 = vpop.f32.mrf.mxu0
    %v4263 = vadd.f32 %v4139, %v4262
    %4264 = vmatmul.bf16.gmra.mxu0 %v1456
    %v4265 = vpop.f32.mrf.mxu0
    %v4266 = vadd.f32 %v4142, %v4265
    %v4267 = vpop.f32.mrf.mxu0
    %v4268 = vadd.f32 %v4144, %v4267
    %4269 = vmatmul.bf16.gmra.mxu0 %v1510
    %v4270 = vpop.f32.mrf.mxu0
    %v4271 = vadd.f32 %v4147, %v4270
    %v4272 = vpop.f32.mrf.mxu0
    %v4273 = vadd.f32 %v4149, %v4272
    %4274 = vdwg.mxu0
    %v4275 = vmax.f32 %v2673, 0.0
    %v4276 = vmax.f32 %v3169, 0.0
    %v4277 = vmax.f32 %v3665, 0.0
    %v4278 = vmax.f32 %v4161, 0.0
    %v4279 = vmax.f32 %v2675, 0.0
    %v4280 = vmax.f32 %v3171, 0.0
    %v4281 = vmax.f32 %v3667, 0.0
    %v4282 = vmax.f32 %v4163, 0.0
    %v4283 = vmax.f32 %v2678, 0.0
    %v4284 = vmax.f32 %v3174, 0.0
    %v4285 = vmax.f32 %v3670, 0.0
    %v4286 = vmax.f32 %v4166, 0.0
    %v4287 = vmax.f32 %v2680, 0.0
    %v4288 = vmax.f32 %v3176, 0.0
    %v4289 = vmax.f32 %v3672, 0.0
    %v4290 = vmax.f32 %v4168, 0.0
    %v4291 = vmax.f32 %v2683, 0.0
    %v4292 = vmax.f32 %v3179, 0.0
    %v4293 = vmax.f32 %v3675, 0.0
    %v4294 = vmax.f32 %v4171, 0.0
    %v4295 = vmax.f32 %v2685, 0.0
    %v4296 = vmax.f32 %v3181, 0.0
    %v4297 = vmax.f32 %v3677, 0.0
    %v4298 = vmax.f32 %v4173, 0.0
    %v4299 = vmax.f32 %v2688, 0.0
    %v4300 = vmax.f32 %v3184, 0.0
    %v4301 = vmax.f32 %v3680, 0.0
    %v4302 = vmax.f32 %v4176, 0.0
    %v4303 = vmax.f32 %v2690, 0.0
    %v4304 = vmax.f32 %v3186, 0.0
    %v4305 = vmax.f32 %v3682, 0.0
    %v4306 = vmax.f32 %v4178, 0.0
    %v4307 = vmax.f32 %v2693, 0.0
    %v4308 = vmax.f32 %v3189, 0.0
    %v4309 = vmax.f32 %v3685, 0.0
    %v4310 = vmax.f32 %v4181, 0.0
    %v4311 = vmax.f32 %v2695, 0.0
    %v4312 = vmax.f32 %v3191, 0.0
    %v4313 = vmax.f32 %v3687, 0.0
    %v4314 = vmax.f32 %v4183, 0.0
    %v4315 = vmax.f32 %v2698, 0.0
    %v4316 = vmax.f32 %v3194, 0.0
    %v4317 = vmax.f32 %v3690, 0.0
    %v4318 = vmax.f32 %v4186, 0.0
    %v4319 = vmax.f32 %v2700, 0.0
    %v4320 = vmax.f32 %v3196, 0.0
    %v4321 = vmax.f32 %v3692, 0.0
    %v4322 = vmax.f32 %v4188, 0.0
    %v4323 = vmax.f32 %v2703, 0.0
    %v4324 = vmax.f32 %v3199, 0.0
    %v4325 = vmax.f32 %v3695, 0.0
    %v4326 = vmax.f32 %v4191, 0.0
    %v4327 = vmax.f32 %v2705, 0.0
    %v4328 = vmax.f32 %v3201, 0.0
    %v4329 = vmax.f32 %v3697, 0.0
    %v4330 = vmax.f32 %v4193, 0.0
    %v4331 = vmax.f32 %v2708, 0.0
    %v4332 = vmax.f32 %v3204, 0.0
    %v4333 = vmax.f32 %v3700, 0.0
    %v4334 = vmax.f32 %v4196, 0.0
    %v4335 = vmax.f32 %v2710, 0.0
    %v4336 = vmax.f32 %v3206, 0.0
    %v4337 = vmax.f32 %v3702, 0.0
    %v4338 = vmax.f32 %v4198, 0.0
    %v4339 = vmax.f32 %v2713, 0.0
    %v4340 = vmax.f32 %v3209, 0.0
    %v4341 = vmax.f32 %v3705, 0.0
    %v4342 = vmax.f32 %v4201, 0.0
    %v4343 = vmax.f32 %v2715, 0.0
    %v4344 = vmax.f32 %v3211, 0.0
    %v4345 = vmax.f32 %v3707, 0.0
    %v4346 = vmax.f32 %v4203, 0.0
    %v4347 = vmax.f32 %v2718, 0.0
    %v4348 = vmax.f32 %v3214, 0.0
    %v4349 = vmax.f32 %v3710, 0.0
    %v4350 = vmax.f32 %v4206, 0.0
    %v4351 = vmax.f32 %v2720, 0.0
    %v4352 = vmax.f32 %v3216, 0.0
    %v4353 = vmax.f32 %v3712, 0.0
    %v4354 = vmax.f32 %v4208, 0.0
    %v4355 = vmax.f32 %v2723, 0.0
    %v4356 = vmax.f32 %v3219, 0.0
    %v4357 = vmax.f32 %v3715, 0.0
    %v4358 = vmax.f32 %v4211, 0.0
    %v4359 = vmax.f32 %v2725, 0.0
    %v4360 = vmax.f32 %v3221, 0.0
    %v4361 = vmax.f32 %v3717, 0.0
    %v4362 = vmax.f32 %v4213, 0.0
    %v4363 = vmax.f32 %v2728, 0.0
    %v4364 = vmax.f32 %v3224, 0.0
    %v4365 = vmax.f32 %v3720, 0.0
    %v4366 = vmax.f32 %v4216, 0.0
    %v4367 = vmax.f32 %v2730, 0.0
    %v4368 = vmax.f32 %v3226, 0.0
    %v4369 = vmax.f32 %v3722, 0.0
    %v4370 = vmax.f32 %v4218, 0.0
    %v4371 = vmax.f32 %v2733, 0.0
    %v4372 = vmax.f32 %v3229, 0.0
    %v4373 = vmax.f32 %v3725, 0.0
    %v4374 = vmax.f32 %v4221, 0.0
    %v4375 = vmax.f32 %v2735, 0.0
    %v4376 = vmax.f32 %v3231, 0.0
    %v4377 = vmax.f32 %v3727, 0.0
    %v4378 = vmax.f32 %v4223, 0.0
    %v4379 = vmax.f32 %v2738, 0.0
    %v4380 = vmax.f32 %v3234, 0.0
    %v4381 = vmax.f32 %v3730, 0.0
    %v4382 = vmax.f32 %v4226, 0.0
    %v4383 = vmax.f32 %v2740, 0.0
    %v4384 = vmax.f32 %v3236, 0.0
    %v4385 = vmax.f32 %v3732, 0.0
    %v4386 = vmax.f32 %v4228, 0.0
    %v4387 = vmax.f32 %v2743, 0.0
    %v4388 = vmax.f32 %v3239, 0.0
    %v4389 = vmax.f32 %v3735, 0.0
    %v4390 = vmax.f32 %v4231, 0.0
    %v4391 = vmax.f32 %v2745, 0.0
    %v4392 = vmax.f32 %v3241, 0.0
    %v4393 = vmax.f32 %v3737, 0.0
    %v4394 = vmax.f32 %v4233, 0.0
    %v4395 = vmax.f32 %v2748, 0.0
    %v4396 = vmax.f32 %v3244, 0.0
    %v4397 = vmax.f32 %v3740, 0.0
    %v4398 = vmax.f32 %v4236, 0.0
    %v4399 = vmax.f32 %v2750, 0.0
    %v4400 = vmax.f32 %v3246, 0.0
    %v4401 = vmax.f32 %v3742, 0.0
    %v4402 = vmax.f32 %v4238, 0.0
    %v4403 = vmax.f32 %v2753, 0.0
    %v4404 = vmax.f32 %v3249, 0.0
    %v4405 = vmax.f32 %v3745, 0.0
    %v4406 = vmax.f32 %v4241, 0.0
    %v4407 = vmax.f32 %v2755, 0.0
    %v4408 = vmax.f32 %v3251, 0.0
    %v4409 = vmax.f32 %v3747, 0.0
    %v4410 = vmax.f32 %v4243, 0.0
    %v4411 = vmax.f32 %v2758, 0.0
    %v4412 = vmax.f32 %v3254, 0.0
    %v4413 = vmax.f32 %v3750, 0.0
    %v4414 = vmax.f32 %v4246, 0.0
    %v4415 = vmax.f32 %v2760, 0.0
    %v4416 = vmax.f32 %v3256, 0.0
    %v4417 = vmax.f32 %v3752, 0.0
    %v4418 = vmax.f32 %v4248, 0.0
    %v4419 = vmax.f32 %v2763, 0.0
    %v4420 = vmax.f32 %v3259, 0.0
    %v4421 = vmax.f32 %v3755, 0.0
    %v4422 = vmax.f32 %v4251, 0.0
    %v4423 = vmax.f32 %v2765, 0.0
    %v4424 = vmax.f32 %v3261, 0.0
    %v4425 = vmax.f32 %v3757, 0.0
    %v4426 = vmax.f32 %v4253, 0.0
    %v4427 = vmax.f32 %v2768, 0.0
    %v4428 = vmax.f32 %v3264, 0.0
    %v4429 = vmax.f32 %v3760, 0.0
    %v4430 = vmax.f32 %v4256, 0.0
    %v4431 = vmax.f32 %v2770, 0.0
    %v4432 = vmax.f32 %v3266, 0.0
    %v4433 = vmax.f32 %v3762, 0.0
    %v4434 = vmax.f32 %v4258, 0.0
    %v4435 = vmax.f32 %v2773, 0.0
    %v4436 = vmax.f32 %v3269, 0.0
    %v4437 = vmax.f32 %v3765, 0.0
    %v4438 = vmax.f32 %v4261, 0.0
    %v4439 = vmax.f32 %v2775, 0.0
    %v4440 = vmax.f32 %v3271, 0.0
    %v4441 = vmax.f32 %v3767, 0.0
    %v4442 = vmax.f32 %v4263, 0.0
    %v4443 = vmax.f32 %v2778, 0.0
    %v4444 = vmax.f32 %v3274, 0.0
    %v4445 = vmax.f32 %v3770, 0.0
    %v4446 = vmax.f32 %v4266, 0.0
    %v4447 = vmax.f32 %v2780, 0.0
    %v4448 = vmax.f32 %v3276, 0.0
    %v4449 = vmax.f32 %v3772, 0.0
    %v4450 = vmax.f32 %v4268, 0.0
    %v4451 = vmax.f32 %v2783, 0.0
    %v4452 = vmax.f32 %v3279, 0.0
    %v4453 = vmax.f32 %v3775, 0.0
    %v4454 = vmax.f32 %v4271, 0.0
    %v4455 = vmax.f32 %v2785, 0.0
    %v4456 = vmax.f32 %v3281, 0.0
    %v4457 = vmax.f32 %v3777, 0.0
    %v4458 = vmax.f32 %v4273, 0.0
    %v4459 = vmax.f32 %v4275, %v4277
    %v4460 = vmax.f32 %v4276, %v4278
    %v4461 = vmax.f32 %v4279, %v4281
    %v4462 = vmax.f32 %v4280, %v4282
    %v4463 = vmax.f32 %v4283, %v4285
    %v4464 = vmax.f32 %v4284, %v4286
    %v4465 = vmax.f32 %v4287, %v4289
    %v4466 = vmax.f32 %v4288, %v4290
    %v4467 = vmax.f32 %v4291, %v4293
    %v4468 = vmax.f32 %v4292, %v4294
    %v4469 = vmax.f32 %v4295, %v4297
    %v4470 = vmax.f32 %v4296, %v4298
    %v4471 = vmax.f32 %v4299, %v4301
    %v4472 = vmax.f32 %v4300, %v4302
    %v4473 = vmax.f32 %v4303, %v4305
    %v4474 = vmax.f32 %v4304, %v4306
    %v4475 = vmax.f32 %v4307, %v4309
    %v4476 = vmax.f32 %v4308, %v4310
    %v4477 = vmax.f32 %v4311, %v4313
    %v4478 = vmax.f32 %v4312, %v4314
    %v4479 = vmax.f32 %v4315, %v4317
    %v4480 = vmax.f32 %v4316, %v4318
    %v4481 = vmax.f32 %v4319, %v4321
    %v4482 = vmax.f32 %v4320, %v4322
    %v4483 = vmax.f32 %v4323, %v4325
    %v4484 = vmax.f32 %v4324, %v4326
    %v4485 = vmax.f32 %v4327, %v4329
    %v4486 = vmax.f32 %v4328, %v4330
    %v4487 = vmax.f32 %v4331, %v4333
    %v4488 = vmax.f32 %v4332, %v4334
    %v4489 = vmax.f32 %v4335, %v4337
    %v4490 = vmax.f32 %v4336, %v4338
    %v4491 = vmax.f32 %v4339, %v4341
    %v4492 = vmax.f32 %v4340, %v4342
    %v4493 = vmax.f32 %v4343, %v4345
    %v4494 = vmax.f32 %v4344, %v4346
    %v4495 = vmax.f32 %v4347, %v4349
    %v4496 = vmax.f32 %v4348, %v4350
    %v4497 = vmax.f32 %v4351, %v4353
    %v4498 = vmax.f32 %v4352, %v4354
    %v4499 = vmax.f32 %v4355, %v4357
    %v4500 = vmax.f32 %v4356, %v4358
    %v4501 = vmax.f32 %v4359, %v4361
    %v4502 = vmax.f32 %v4360, %v4362
    %v4503 = vmax.f32 %v4363, %v4365
    %v4504 = vmax.f32 %v4364, %v4366
    %v4505 = vmax.f32 %v4367, %v4369
    %v4506 = vmax.f32 %v4368, %v4370
    %v4507 = vmax.f32 %v4371, %v4373
    %v4508 = vmax.f32 %v4372, %v4374
    %v4509 = vmax.f32 %v4375, %v4377
    %v4510 = vmax.f32 %v4376, %v4378
    %v4511 = vmax.f32 %v4379, %v4381
    %v4512 = vmax.f32 %v4380, %v4382
    %v4513 = vmax.f32 %v4383, %v4385
    %v4514 = vmax.f32 %v4384, %v4386
    %v4515 = vmax.f32 %v4387, %v4389
    %v4516 = vmax.f32 %v4388, %v4390
    %v4517 = vmax.f32 %v4391, %v4393
    %v4518 = vmax.f32 %v4392, %v4394
    %v4519 = vmax.f32 %v4395, %v4397
    %v4520 = vmax.f32 %v4396, %v4398
    %v4521 = vmax.f32 %v4399, %v4401
    %v4522 = vmax.f32 %v4400, %v4402
    %v4523 = vmax.f32 %v4403, %v4405
    %v4524 = vmax.f32 %v4404, %v4406
    %v4525 = vmax.f32 %v4407, %v4409
    %v4526 = vmax.f32 %v4408, %v4410
    %v4527 = vmax.f32 %v4411, %v4413
    %v4528 = vmax.f32 %v4412, %v4414
    %v4529 = vmax.f32 %v4415, %v4417
    %v4530 = vmax.f32 %v4416, %v4418
    %v4531 = vmax.f32 %v4419, %v4421
    %v4532 = vmax.f32 %v4420, %v4422
    %v4533 = vmax.f32 %v4423, %v4425
    %v4534 = vmax.f32 %v4424, %v4426
    %v4535 = vmax.f32 %v4427, %v4429
    %v4536 = vmax.f32 %v4428, %v4430
    %v4537 = vmax.f32 %v4431, %v4433
    %v4538 = vmax.f32 %v4432, %v4434
    %v4539 = vmax.f32 %v4435, %v4437
    %v4540 = vmax.f32 %v4436, %v4438
    %v4541 = vmax.f32 %v4439, %v4441
    %v4542 = vmax.f32 %v4440, %v4442
    %v4543 = vmax.f32 %v4443, %v4445
    %v4544 = vmax.f32 %v4444, %v4446
    %v4545 = vmax.f32 %v4447, %v4449
    %v4546 = vmax.f32 %v4448, %v4450
    %v4547 = vmax.f32 %v4451, %v4453
    %v4548 = vmax.f32 %v4452, %v4454
    %v4549 = vmax.f32 %v4455, %v4457
    %v4550 = vmax.f32 %v4456, %v4458
    %v4551 = vpack.c.bf16 %v4460, %v4459
    %v4552 = vpack.c.bf16 %v4462, %v4461
    %v4553 = vpack.c.bf16 %v4464, %v4463
    %v4554 = vpack.c.bf16 %v4466, %v4465
    %v4555 = vpack.c.bf16 %v4468, %v4467
    %v4556 = vpack.c.bf16 %v4470, %v4469
    %v4557 = vpack.c.bf16 %v4472, %v4471
    %v4558 = vpack.c.bf16 %v4474, %v4473
    %v4559 = vpack.c.bf16 %v4476, %v4475
    %v4560 = vpack.c.bf16 %v4478, %v4477
    %v4561 = vpack.c.bf16 %v4480, %v4479
    %v4562 = vpack.c.bf16 %v4482, %v4481
    %v4563 = vpack.c.bf16 %v4484, %v4483
    %v4564 = vpack.c.bf16 %v4486, %v4485
    %v4565 = vpack.c.bf16 %v4488, %v4487
    %v4566 = vpack.c.bf16 %v4490, %v4489
    %v4567 = vpack.c.bf16 %v4492, %v4491
    %v4568 = vpack.c.bf16 %v4494, %v4493
    %v4569 = vpack.c.bf16 %v4496, %v4495
    %v4570 = vpack.c.bf16 %v4498, %v4497
    %v4571 = vpack.c.bf16 %v4500, %v4499
    %v4572 = vpack.c.bf16 %v4502, %v4501
    %v4573 = vpack.c.bf16 %v4504, %v4503
    %v4574 = vpack.c.bf16 %v4506, %v4505
    %v4575 = vpack.c.bf16 %v4508, %v4507
    %v4576 = vpack.c.bf16 %v4510, %v4509
    %v4577 = vpack.c.bf16 %v4512, %v4511
    %v4578 = vpack.c.bf16 %v4514, %v4513
    %v4579 = vpack.c.bf16 %v4516, %v4515
    %v4580 = vpack.c.bf16 %v4518, %v4517
    %v4581 = vpack.c.bf16 %v4520, %v4519
    %v4582 = vpack.c.bf16 %v4522, %v4521
    %v4583 = vpack.c.bf16 %v4524, %v4523
    %v4584 = vpack.c.bf16 %v4526, %v4525
    %v4585 = vpack.c.bf16 %v4528, %v4527
    %v4586 = vpack.c.bf16 %v4530, %v4529
    %v4587 = vpack.c.bf16 %v4532, %v4531
    %v4588 = vpack.c.bf16 %v4534, %v4533
    %v4589 = vpack.c.bf16 %v4536, %v4535
    %v4590 = vpack.c.bf16 %v4538, %v4537
    %v4591 = vpack.c.bf16 %v4540, %v4539
    %v4592 = vpack.c.bf16 %v4542, %v4541
    %v4593 = vpack.c.bf16 %v4544, %v4543
    %v4594 = vpack.c.bf16 %v4546, %v4545
    %v4595 = vpack.c.bf16 %v4548, %v4547
    %v4596 = vpack.c.bf16 %v4550, %v4549
    %v4597 = vld [vmem:[%s5] sm:$0xf]
    %v4598 = vld [vmem:[%s5 + $0x4] sm:$0xf]
    %v4599 = vld [vmem:[%s5 + $0x8] sm:$0xf]
    %v4600 = vld [vmem:[%s5 + $0xc] sm:$0xf]
    %v4601 = vld [vmem:[%s5 + $0x10] sm:$0xf]
    %v4602 = vld [vmem:[%s5 + $0x14] sm:$0xf]
    %v4603 = vld [vmem:[%s5 + $0x18] sm:$0xf]
    %v4604 = vld [vmem:[%s5 + $0x1c] sm:$0xf]
    %v4605 = vld [vmem:[%s5 + $0x20] sm:$0xf]
    %v4606 = vld [vmem:[%s5 + $0x24] sm:$0xf]
    %v4607 = vld [vmem:[%s5 + $0x28] sm:$0xf]
    %v4608 = vld [vmem:[%s5 + $0x2c] sm:$0xf]
    %v4609 = vld [vmem:[%s5 + $0x30] sm:$0xf]
    %v4610 = vld [vmem:[%s5 + $0x34] sm:$0xf]
    %v4611 = vld [vmem:[%s5 + $0x38] sm:$0xf]
    %v4612 = vld [vmem:[%s5 + $0x3c] sm:$0xf]
    %v4613 = vld [vmem:[%s5 + $0x40] sm:$0xf]
    %v4614 = vld [vmem:[%s5 + $0x44] sm:$0xf]
    %v4615 = vld [vmem:[%s5 + $0x48] sm:$0xf]
    %v4616 = vld [vmem:[%s5 + $0x4c] sm:$0xf]
    %v4617 = vld [vmem:[%s5 + $0x50] sm:$0xf]
    %v4618 = vld [vmem:[%s5 + $0x54] sm:$0xf]
    %v4619 = vld [vmem:[%s5 + $0x58] sm:$0xf]
    %v4620 = vld [vmem:[%s5 + $0x5c] sm:$0xf]
    %v4621 = vld [vmem:[%s5 + $0x60] sm:$0xf]
    %v4622 = vld [vmem:[%s5 + $0x64] sm:$0xf]
    %v4623 = vld [vmem:[%s5 + $0x68] sm:$0xf]
    %v4624 = vld [vmem:[%s5 + $0x6c] sm:$0xf]
    %v4625 = vld [vmem:[%s5 + $0x70] sm:$0xf]
    %v4626 = vld [vmem:[%s5 + $0x74] sm:$0xf]
    %v4627 = vld [vmem:[%s5 + $0x78] sm:$0xf]
    %v4628 = vld [vmem:[%s5 + $0x7c] sm:$0xf]
    %s4629 = scalar_lea.vmem %s5, 128
    %v4630 = vld [vmem:[%s4629] sm:$0xf]
    %v4631 = vld [vmem:[%s4629 + $0x4] sm:$0xf]
    %v4632 = vld [vmem:[%s4629 + $0x8] sm:$0xf]
    %v4633 = vld [vmem:[%s4629 + $0xc] sm:$0xf]
    %v4634 = vld [vmem:[%s4629 + $0x10] sm:$0xf]
    %v4635 = vld [vmem:[%s4629 + $0x14] sm:$0xf]
    %v4636 = vld [vmem:[%s4629 + $0x18] sm:$0xf]
    %v4637 = vld [vmem:[%s4629 + $0x1c] sm:$0xf]
    %v4638 = vld [vmem:[%s4629 + $0x20] sm:$0xf]
    %v4639 = vld [vmem:[%s4629 + $0x24] sm:$0xf]
    %v4640 = vld [vmem:[%s4629 + $0x28] sm:$0xf]
    %v4641 = vld [vmem:[%s4629 + $0x2c] sm:$0xf]
    %v4642 = vld [vmem:[%s4629 + $0x30] sm:$0xf]
    %v4643 = vld [vmem:[%s4629 + $0x34] sm:$0xf]
    %v4644 = vld [vmem:[%s4629 + $0x38] sm:$0xf]
    %v4645 = vld [vmem:[%s4629 + $0x3c] sm:$0xf]
    %v4646 = vld [vmem:[%s4629 + $0x40] sm:$0xf]
    %v4647 = vld [vmem:[%s4629 + $0x44] sm:$0xf]
    %v4648 = vld [vmem:[%s4629 + $0x48] sm:$0xf]
    %v4649 = vld [vmem:[%s4629 + $0x4c] sm:$0xf]
    %v4650 = vld [vmem:[%s4629 + $0x50] sm:$0xf]
    %v4651 = vld [vmem:[%s4629 + $0x54] sm:$0xf]
    %v4652 = vld [vmem:[%s4629 + $0x58] sm:$0xf]
    %v4653 = vld [vmem:[%s4629 + $0x5c] sm:$0xf]
    %v4654 = vld [vmem:[%s4629 + $0x60] sm:$0xf]
    %v4655 = vld [vmem:[%s4629 + $0x64] sm:$0xf]
    %v4656 = vld [vmem:[%s4629 + $0x68] sm:$0xf]
    %v4657 = vld [vmem:[%s4629 + $0x6c] sm:$0xf]
    %v4658 = vld [vmem:[%s4629 + $0x70] sm:$0xf]
    %v4659 = vld [vmem:[%s4629 + $0x74] sm:$0xf]
    %v4660 = vld [vmem:[%s4629 + $0x78] sm:$0xf]
    %v4661 = vld [vmem:[%s4629 + $0x7c] sm:$0xf]
    %v4664 = vunpack.c.l.b16 %v4553
    %v4665 = vunpack.c.h.b16 %v4553
    %v4666 = vunpack.c.l.b16 %v4554
    %v4667 = vunpack.c.h.b16 %v4554
    %v4668 = vpack.c.b16 %v4666, %v4664
    %v4669 = vpack.c.b16 %v4667, %v4665
    %v4704 = vunpack.c.l.b16 %v4630
    %v4705 = vunpack.c.l.b16 %v4631
    %v4706 = vunpack.c.l.b16 %v4632
    %v4707 = vunpack.c.l.b16 %v4633
    %v4708 = vunpack.c.l.b16 %v4634
    %v4709 = vunpack.c.l.b16 %v4635
    %v4710 = vunpack.c.l.b16 %v4636
    %v4711 = vunpack.c.l.b16 %v4637
    %v4712 = vunpack.c.l.b16 %v4638
    %v4713 = vunpack.c.l.b16 %v4639
    %v4714 = vunpack.c.l.b16 %v4640
    %v4715 = vunpack.c.l.b16 %v4641
    %v4716 = vunpack.c.l.b16 %v4642
    %v4717 = vunpack.c.l.b16 %v4643
    %v4718 = vunpack.c.l.b16 %v4644
    %v4719 = vunpack.c.l.b16 %v4645
    %v4720 = vunpack.c.l.b16 %v4646
    %v4721 = vunpack.c.l.b16 %v4647
    %v4722 = vunpack.c.l.b16 %v4648
    %v4723 = vunpack.c.l.b16 %v4649
    %v4724 = vunpack.c.l.b16 %v4650
    %v4725 = vunpack.c.l.b16 %v4651
    %v4726 = vunpack.c.l.b16 %v4652
    %v4727 = vunpack.c.l.b16 %v4653
    %v4728 = vunpack.c.l.b16 %v4654
    %v4729 = vunpack.c.l.b16 %v4655
    %v4730 = vunpack.c.l.b16 %v4656
    %v4731 = vunpack.c.l.b16 %v4657
    %v4732 = vunpack.c.l.b16 %v4658
    %v4733 = vunpack.c.l.b16 %v4659
    %v4734 = vunpack.c.l.b16 %v4660
    %v4735 = vunpack.c.l.b16 %v4661
    %v4736 = vpack.c.b16 %v4705, %v4704
    %v4737 = vpack.c.b16 %v4707, %v4706
    %v4738 = vpack.c.b16 %v4709, %v4708
    %v4739 = vpack.c.b16 %v4711, %v4710
    %v4740 = vpack.c.b16 %v4713, %v4712
    %v4741 = vpack.c.b16 %v4715, %v4714
    %v4742 = vpack.c.b16 %v4717, %v4716
    %v4743 = vpack.c.b16 %v4719, %v4718
    %v4744 = vpack.c.b16 %v4721, %v4720
    %v4745 = vpack.c.b16 %v4723, %v4722
    %v4746 = vpack.c.b16 %v4725, %v4724
    %v4747 = vpack.c.b16 %v4727, %v4726
    %v4748 = vpack.c.b16 %v4729, %v4728
    %v4749 = vpack.c.b16 %v4731, %v4730
    %v4750 = vpack.c.b16 %v4733, %v4732
    %v4751 = vpack.c.b16 %v4735, %v4734
    %4768 = vmatpush.bf16.msra.mxu0 %v4743
    %4769 = vmatpush.bf16.msra.mxu0 %v4742
    %4770 = vmatpush.bf16.msra.mxu0 %v4741
    %4771 = vmatpush.bf16.msra.mxu0 %v4740
    %4772 = vmatpush.bf16.msra.mxu0 %v4739
    %4773 = vmatpush.bf16.msra.mxu0 %v4738
    %4774 = vmatpush.bf16.msra.mxu0 %v4737
    %4775 = vmatpush.bf16.msra.mxu0 %v4736
    %4776 = vmatmul.bf16.gmra.mxu0 %v4668
    %v4777 = vpop.f32.mrf.mxu0
    %v4778 = vadd.f32 0.0, %v4777
    %v4779 = vpop.f32.mrf.mxu0
    %v4780 = vadd.f32 0.0, %v4779
    %4781 = vdwg.mxu0
    %4782 = vmatpush.bf16.msra.mxu0 %v4751
    %4783 = vmatpush.bf16.msra.mxu0 %v4750
    %4784 = vmatpush.bf16.msra.mxu0 %v4749
    %4785 = vmatpush.bf16.msra.mxu0 %v4748
    %4786 = vmatpush.bf16.msra.mxu0 %v4747
    %4787 = vmatpush.bf16.msra.mxu0 %v4746
    %4788 = vmatpush.bf16.msra.mxu0 %v4745
    %4789 = vmatpush.bf16.msra.mxu0 %v4744
    %4790 = vmatmul.bf16.gmra.mxu0 %v4669
    %v4791 = vpop.f32.mrf.mxu0
    %v4792 = vadd.f32 %v4778, %v4791
    %v4793 = vpop.f32.mrf.mxu0
    %v4794 = vadd.f32 %v4780, %v4793
    %4795 = vdwg.mxu0
    %v4798 = vunpack.c.l.b16 %v4551
    %v4799 = vunpack.c.h.b16 %v4551
    %v4800 = vunpack.c.l.b16 %v4552
    %v4801 = vunpack.c.h.b16 %v4552
    %v4802 = vpack.c.b16 %v4800, %v4798
    %v4803 = vpack.c.b16 %v4801, %v4799
    %v4838 = vunpack.c.l.b16 %v4597
    %v4839 = vunpack.c.l.b16 %v4598
    %v4840 = vunpack.c.l.b16 %v4599
    %v4841 = vunpack.c.l.b16 %v4600
    %v4842 = vunpack.c.l.b16 %v4601
    %v4843 = vunpack.c.l.b16 %v4602
    %v4844 = vunpack.c.l.b16 %v4603
    %v4845 = vunpack.c.l.b16 %v4604
    %v4846 = vunpack.c.l.b16 %v4605
    %v4847 = vunpack.c.l.b16 %v4606
    %v4848 = vunpack.c.l.b16 %v4607
    %v4849 = vunpack.c.l.b16 %v4608
    %v4850 = vunpack.c.l.b16 %v4609
    %v4851 = vunpack.c.l.b16 %v4610
    %v4852 = vunpack.c.l.b16 %v4611
    %v4853 = vunpack.c.l.b16 %v4612
    %v4854 = vunpack.c.l.b16 %v4613
    %v4855 = vunpack.c.l.b16 %v4614
    %v4856 = vunpack.c.l.b16 %v4615
    %v4857 = vunpack.c.l.b16 %v4616
    %v4858 = vunpack.c.l.b16 %v4617
    %v4859 = vunpack.c.l.b16 %v4618
    %v4860 = vunpack.c.l.b16 %v4619
    %v4861 = vunpack.c.l.b16 %v4620
    %v4862 = vunpack.c.l.b16 %v4621
    %v4863 = vunpack.c.l.b16 %v4622
    %v4864 = vunpack.c.l.b16 %v4623
    %v4865 = vunpack.c.l.b16 %v4624
    %v4866 = vunpack.c.l.b16 %v4625
    %v4867 = vunpack.c.l.b16 %v4626
    %v4868 = vunpack.c.l.b16 %v4627
    %v4869 = vunpack.c.l.b16 %v4628
    %v4870 = vpack.c.b16 %v4839, %v4838
    %v4871 = vpack.c.b16 %v4841, %v4840
    %v4872 = vpack.c.b16 %v4843, %v4842
    %v4873 = vpack.c.b16 %v4845, %v4844
    %v4874 = vpack.c.b16 %v4847, %v4846
    %v4875 = vpack.c.b16 %v4849, %v4848
    %v4876 = vpack.c.b16 %v4851, %v4850
    %v4877 = vpack.c.b16 %v4853, %v4852
    %v4878 = vpack.c.b16 %v4855, %v4854
    %v4879 = vpack.c.b16 %v4857, %v4856
    %v4880 = vpack.c.b16 %v4859, %v4858
    %v4881 = vpack.c.b16 %v4861, %v4860
    %v4882 = vpack.c.b16 %v4863, %v4862
    %v4883 = vpack.c.b16 %v4865, %v4864
    %v4884 = vpack.c.b16 %v4867, %v4866
    %v4885 = vpack.c.b16 %v4869, %v4868
    %4902 = vmatpush.bf16.msra.mxu0 %v4877
    %4903 = vmatpush.bf16.msra.mxu0 %v4876
    %4904 = vmatpush.bf16.msra.mxu0 %v4875
    %4905 = vmatpush.bf16.msra.mxu0 %v4874
    %4906 = vmatpush.bf16.msra.mxu0 %v4873
    %4907 = vmatpush.bf16.msra.mxu0 %v4872
    %4908 = vmatpush.bf16.msra.mxu0 %v4871
    %4909 = vmatpush.bf16.msra.mxu0 %v4870
    %4910 = vmatmul.bf16.gmra.mxu0 %v4802
    %v4911 = vpop.f32.mrf.mxu0
    %v4912 = vadd.f32 %v4792, %v4911
    %v4913 = vpop.f32.mrf.mxu0
    %v4914 = vadd.f32 %v4794, %v4913
    %4915 = vdwg.mxu0
    %4916 = vmatpush.bf16.msra.mxu0 %v4885
    %4917 = vmatpush.bf16.msra.mxu0 %v4884
    %4918 = vmatpush.bf16.msra.mxu0 %v4883
    %4919 = vmatpush.bf16.msra.mxu0 %v4882
    %4920 = vmatpush.bf16.msra.mxu0 %v4881
    %4921 = vmatpush.bf16.msra.mxu0 %v4880
    %4922 = vmatpush.bf16.msra.mxu0 %v4879
    %4923 = vmatpush.bf16.msra.mxu0 %v4878
    %4924 = vmatmul.bf16.gmra.mxu0 %v4803
    %v4925 = vpop.f32.mrf.mxu0
    %v4926 = vadd.f32 %v4912, %v4925
    %v4927 = vpop.f32.mrf.mxu0
    %v4928 = vadd.f32 %v4914, %v4927
    %4929 = vdwg.mxu0
    %s4930 = scalar_lea.vmem %s5, 256
    %v4931 = vld [vmem:[%s4930] sm:$0xf]
    %v4932 = vld [vmem:[%s4930 + $0x4] sm:$0xf]
    %v4933 = vld [vmem:[%s4930 + $0x8] sm:$0xf]
    %v4934 = vld [vmem:[%s4930 + $0xc] sm:$0xf]
    %v4935 = vld [vmem:[%s4930 + $0x10] sm:$0xf]
    %v4936 = vld [vmem:[%s4930 + $0x14] sm:$0xf]
    %v4937 = vld [vmem:[%s4930 + $0x18] sm:$0xf]
    %v4938 = vld [vmem:[%s4930 + $0x1c] sm:$0xf]
    %v4939 = vld [vmem:[%s4930 + $0x20] sm:$0xf]
    %v4940 = vld [vmem:[%s4930 + $0x24] sm:$0xf]
    %v4941 = vld [vmem:[%s4930 + $0x28] sm:$0xf]
    %v4942 = vld [vmem:[%s4930 + $0x2c] sm:$0xf]
    %v4943 = vld [vmem:[%s4930 + $0x30] sm:$0xf]
    %v4944 = vld [vmem:[%s4930 + $0x34] sm:$0xf]
    %v4945 = vld [vmem:[%s4930 + $0x38] sm:$0xf]
    %v4946 = vld [vmem:[%s4930 + $0x3c] sm:$0xf]
    %v4947 = vld [vmem:[%s4930 + $0x40] sm:$0xf]
    %v4948 = vld [vmem:[%s4930 + $0x44] sm:$0xf]
    %v4949 = vld [vmem:[%s4930 + $0x48] sm:$0xf]
    %v4950 = vld [vmem:[%s4930 + $0x4c] sm:$0xf]
    %v4951 = vld [vmem:[%s4930 + $0x50] sm:$0xf]
    %v4952 = vld [vmem:[%s4930 + $0x54] sm:$0xf]
    %v4953 = vld [vmem:[%s4930 + $0x58] sm:$0xf]
    %v4954 = vld [vmem:[%s4930 + $0x5c] sm:$0xf]
    %v4955 = vld [vmem:[%s4930 + $0x60] sm:$0xf]
    %v4956 = vld [vmem:[%s4930 + $0x64] sm:$0xf]
    %v4957 = vld [vmem:[%s4930 + $0x68] sm:$0xf]
    %v4958 = vld [vmem:[%s4930 + $0x6c] sm:$0xf]
    %v4959 = vld [vmem:[%s4930 + $0x70] sm:$0xf]
    %v4960 = vld [vmem:[%s4930 + $0x74] sm:$0xf]
    %v4961 = vld [vmem:[%s4930 + $0x78] sm:$0xf]
    %v4962 = vld [vmem:[%s4930 + $0x7c] sm:$0xf]
    %v4965 = vunpack.c.l.b16 %v4555
    %v4966 = vunpack.c.h.b16 %v4555
    %v4967 = vunpack.c.l.b16 %v4556
    %v4968 = vunpack.c.h.b16 %v4556
    %v4969 = vpack.c.b16 %v4967, %v4965
    %v4970 = vpack.c.b16 %v4968, %v4966
    %v5005 = vunpack.c.l.b16 %v4931
    %v5006 = vunpack.c.l.b16 %v4932
    %v5007 = vunpack.c.l.b16 %v4933
    %v5008 = vunpack.c.l.b16 %v4934
    %v5009 = vunpack.c.l.b16 %v4935
    %v5010 = vunpack.c.l.b16 %v4936
    %v5011 = vunpack.c.l.b16 %v4937
    %v5012 = vunpack.c.l.b16 %v4938
    %v5013 = vunpack.c.l.b16 %v4939
    %v5014 = vunpack.c.l.b16 %v4940
    %v5015 = vunpack.c.l.b16 %v4941
    %v5016 = vunpack.c.l.b16 %v4942
    %v5017 = vunpack.c.l.b16 %v4943
    %v5018 = vunpack.c.l.b16 %v4944
    %v5019 = vunpack.c.l.b16 %v4945
    %v5020 = vunpack.c.l.b16 %v4946
    %v5021 = vunpack.c.l.b16 %v4947
    %v5022 = vunpack.c.l.b16 %v4948
    %v5023 = vunpack.c.l.b16 %v4949
    %v5024 = vunpack.c.l.b16 %v4950
    %v5025 = vunpack.c.l.b16 %v4951
    %v5026 = vunpack.c.l.b16 %v4952
    %v5027 = vunpack.c.l.b16 %v4953
    %v5028 = vunpack.c.l.b16 %v4954
    %v5029 = vunpack.c.l.b16 %v4955
    %v5030 = vunpack.c.l.b16 %v4956
    %v5031 = vunpack.c.l.b16 %v4957
    %v5032 = vunpack.c.l.b16 %v4958
    %v5033 = vunpack.c.l.b16 %v4959
    %v5034 = vunpack.c.l.b16 %v4960
    %v5035 = vunpack.c.l.b16 %v4961
    %v5036 = vunpack.c.l.b16 %v4962
    %v5037 = vpack.c.b16 %v5006, %v5005
    %v5038 = vpack.c.b16 %v5008, %v5007
    %v5039 = vpack.c.b16 %v5010, %v5009
    %v5040 = vpack.c.b16 %v5012, %v5011
    %v5041 = vpack.c.b16 %v5014, %v5013
    %v5042 = vpack.c.b16 %v5016, %v5015
    %v5043 = vpack.c.b16 %v5018, %v5017
    %v5044 = vpack.c.b16 %v5020, %v5019
    %v5045 = vpack.c.b16 %v5022, %v5021
    %v5046 = vpack.c.b16 %v5024, %v5023
    %v5047 = vpack.c.b16 %v5026, %v5025
    %v5048 = vpack.c.b16 %v5028, %v5027
    %v5049 = vpack.c.b16 %v5030, %v5029
    %v5050 = vpack.c.b16 %v5032, %v5031
    %v5051 = vpack.c.b16 %v5034, %v5033
    %v5052 = vpack.c.b16 %v5036, %v5035
    %5069 = vmatpush.bf16.msra.mxu0 %v5044
    %5070 = vmatpush.bf16.msra.mxu0 %v5043
    %5071 = vmatpush.bf16.msra.mxu0 %v5042
    %5072 = vmatpush.bf16.msra.mxu0 %v5041
    %5073 = vmatpush.bf16.msra.mxu0 %v5040
    %5074 = vmatpush.bf16.msra.mxu0 %v5039
    %5075 = vmatpush.bf16.msra.mxu0 %v5038
    %5076 = vmatpush.bf16.msra.mxu0 %v5037
    %5077 = vmatmul.bf16.gmra.mxu0 %v4969
    %v5078 = vpop.f32.mrf.mxu0
    %v5079 = vadd.f32 0.0, %v5078
    %v5080 = vpop.f32.mrf.mxu0
    %v5081 = vadd.f32 0.0, %v5080
    %5082 = vdwg.mxu0
    %5083 = vmatpush.bf16.msra.mxu0 %v5052
    %5084 = vmatpush.bf16.msra.mxu0 %v5051
    %5085 = vmatpush.bf16.msra.mxu0 %v5050
    %5086 = vmatpush.bf16.msra.mxu0 %v5049
    %5087 = vmatpush.bf16.msra.mxu0 %v5048
    %5088 = vmatpush.bf16.msra.mxu0 %v5047
    %5089 = vmatpush.bf16.msra.mxu0 %v5046
    %5090 = vmatpush.bf16.msra.mxu0 %v5045
    %5091 = vmatmul.bf16.gmra.mxu0 %v4970
    %v5092 = vpop.f32.mrf.mxu0
    %v5093 = vadd.f32 %v5079, %v5092
    %v5094 = vpop.f32.mrf.mxu0
    %v5095 = vadd.f32 %v5081, %v5094
    %5096 = vdwg.mxu0
    %v5097 = vadd.f32 %v4926, %v5093
    %v5098 = vadd.f32 %v4928, %v5095
    %s5099 = scalar_lea.vmem %s5, 384
    %v5100 = vld [vmem:[%s5099] sm:$0xf]
    %v5101 = vld [vmem:[%s5099 + $0x4] sm:$0xf]
    %v5102 = vld [vmem:[%s5099 + $0x8] sm:$0xf]
    %v5103 = vld [vmem:[%s5099 + $0xc] sm:$0xf]
    %v5104 = vld [vmem:[%s5099 + $0x10] sm:$0xf]
    %v5105 = vld [vmem:[%s5099 + $0x14] sm:$0xf]
    %v5106 = vld [vmem:[%s5099 + $0x18] sm:$0xf]
    %v5107 = vld [vmem:[%s5099 + $0x1c] sm:$0xf]
    %v5108 = vld [vmem:[%s5099 + $0x20] sm:$0xf]
    %v5109 = vld [vmem:[%s5099 + $0x24] sm:$0xf]
    %v5110 = vld [vmem:[%s5099 + $0x28] sm:$0xf]
    %v5111 = vld [vmem:[%s5099 + $0x2c] sm:$0xf]
    %v5112 = vld [vmem:[%s5099 + $0x30] sm:$0xf]
    %v5113 = vld [vmem:[%s5099 + $0x34] sm:$0xf]
    %v5114 = vld [vmem:[%s5099 + $0x38] sm:$0xf]
    %v5115 = vld [vmem:[%s5099 + $0x3c] sm:$0xf]
    %v5116 = vld [vmem:[%s5099 + $0x40] sm:$0xf]
    %v5117 = vld [vmem:[%s5099 + $0x44] sm:$0xf]
    %v5118 = vld [vmem:[%s5099 + $0x48] sm:$0xf]
    %v5119 = vld [vmem:[%s5099 + $0x4c] sm:$0xf]
    %v5120 = vld [vmem:[%s5099 + $0x50] sm:$0xf]
    %v5121 = vld [vmem:[%s5099 + $0x54] sm:$0xf]
    %v5122 = vld [vmem:[%s5099 + $0x58] sm:$0xf]
    %v5123 = vld [vmem:[%s5099 + $0x5c] sm:$0xf]
    %v5124 = vld [vmem:[%s5099 + $0x60] sm:$0xf]
    %v5125 = vld [vmem:[%s5099 + $0x64] sm:$0xf]
    %v5126 = vld [vmem:[%s5099 + $0x68] sm:$0xf]
    %v5127 = vld [vmem:[%s5099 + $0x6c] sm:$0xf]
    %v5128 = vld [vmem:[%s5099 + $0x70] sm:$0xf]
    %v5129 = vld [vmem:[%s5099 + $0x74] sm:$0xf]
    %v5130 = vld [vmem:[%s5099 + $0x78] sm:$0xf]
    %v5131 = vld [vmem:[%s5099 + $0x7c] sm:$0xf]
    %v5134 = vunpack.c.l.b16 %v4557
    %v5135 = vunpack.c.h.b16 %v4557
    %v5136 = vunpack.c.l.b16 %v4558
    %v5137 = vunpack.c.h.b16 %v4558
    %v5138 = vpack.c.b16 %v5136, %v5134
    %v5139 = vpack.c.b16 %v5137, %v5135
    %v5174 = vunpack.c.l.b16 %v5100
    %v5175 = vunpack.c.l.b16 %v5101
    %v5176 = vunpack.c.l.b16 %v5102
    %v5177 = vunpack.c.l.b16 %v5103
    %v5178 = vunpack.c.l.b16 %v5104
    %v5179 = vunpack.c.l.b16 %v5105
    %v5180 = vunpack.c.l.b16 %v5106
    %v5181 = vunpack.c.l.b16 %v5107
    %v5182 = vunpack.c.l.b16 %v5108
    %v5183 = vunpack.c.l.b16 %v5109
    %v5184 = vunpack.c.l.b16 %v5110
    %v5185 = vunpack.c.l.b16 %v5111
    %v5186 = vunpack.c.l.b16 %v5112
    %v5187 = vunpack.c.l.b16 %v5113
    %v5188 = vunpack.c.l.b16 %v5114
    %v5189 = vunpack.c.l.b16 %v5115
    %v5190 = vunpack.c.l.b16 %v5116
    %v5191 = vunpack.c.l.b16 %v5117
    %v5192 = vunpack.c.l.b16 %v5118
    %v5193 = vunpack.c.l.b16 %v5119
    %v5194 = vunpack.c.l.b16 %v5120
    %v5195 = vunpack.c.l.b16 %v5121
    %v5196 = vunpack.c.l.b16 %v5122
    %v5197 = vunpack.c.l.b16 %v5123
    %v5198 = vunpack.c.l.b16 %v5124
    %v5199 = vunpack.c.l.b16 %v5125
    %v5200 = vunpack.c.l.b16 %v5126
    %v5201 = vunpack.c.l.b16 %v5127
    %v5202 = vunpack.c.l.b16 %v5128
    %v5203 = vunpack.c.l.b16 %v5129
    %v5204 = vunpack.c.l.b16 %v5130
    %v5205 = vunpack.c.l.b16 %v5131
    %v5206 = vpack.c.b16 %v5175, %v5174
    %v5207 = vpack.c.b16 %v5177, %v5176
    %v5208 = vpack.c.b16 %v5179, %v5178
    %v5209 = vpack.c.b16 %v5181, %v5180
    %v5210 = vpack.c.b16 %v5183, %v5182
    %v5211 = vpack.c.b16 %v5185, %v5184
    %v5212 = vpack.c.b16 %v5187, %v5186
    %v5213 = vpack.c.b16 %v5189, %v5188
    %v5214 = vpack.c.b16 %v5191, %v5190
    %v5215 = vpack.c.b16 %v5193, %v5192
    %v5216 = vpack.c.b16 %v5195, %v5194
    %v5217 = vpack.c.b16 %v5197, %v5196
    %v5218 = vpack.c.b16 %v5199, %v5198
    %v5219 = vpack.c.b16 %v5201, %v5200
    %v5220 = vpack.c.b16 %v5203, %v5202
    %v5221 = vpack.c.b16 %v5205, %v5204
    %5238 = vmatpush.bf16.msra.mxu0 %v5213
    %5239 = vmatpush.bf16.msra.mxu0 %v5212
    %5240 = vmatpush.bf16.msra.mxu0 %v5211
    %5241 = vmatpush.bf16.msra.mxu0 %v5210
    %5242 = vmatpush.bf16.msra.mxu0 %v5209
    %5243 = vmatpush.bf16.msra.mxu0 %v5208
    %5244 = vmatpush.bf16.msra.mxu0 %v5207
    %5245 = vmatpush.bf16.msra.mxu0 %v5206
    %5246 = vmatmul.bf16.gmra.mxu0 %v5138
    %v5247 = vpop.f32.mrf.mxu0
    %v5248 = vadd.f32 0.0, %v5247
    %v5249 = vpop.f32.mrf.mxu0
    %v5250 = vadd.f32 0.0, %v5249
    %5251 = vdwg.mxu0
    %5252 = vmatpush.bf16.msra.mxu0 %v5221
    %5253 = vmatpush.bf16.msra.mxu0 %v5220
    %5254 = vmatpush.bf16.msra.mxu0 %v5219
    %5255 = vmatpush.bf16.msra.mxu0 %v5218
    %5256 = vmatpush.bf16.msra.mxu0 %v5217
    %5257 = vmatpush.bf16.msra.mxu0 %v5216
    %5258 = vmatpush.bf16.msra.mxu0 %v5215
    %5259 = vmatpush.bf16.msra.mxu0 %v5214
    %5260 = vmatmul.bf16.gmra.mxu0 %v5139
    %v5261 = vpop.f32.mrf.mxu0
    %v5262 = vadd.f32 %v5248, %v5261
    %v5263 = vpop.f32.mrf.mxu0
    %v5264 = vadd.f32 %v5250, %v5263
    %5265 = vdwg.mxu0
    %v5266 = vadd.f32 %v5097, %v5262
    %v5267 = vadd.f32 %v5098, %v5264
    %s5268 = scalar_lea.vmem %s5, 512
    %v5269 = vld [vmem:[%s5268] sm:$0xf]
    %v5270 = vld [vmem:[%s5268 + $0x4] sm:$0xf]
    %v5271 = vld [vmem:[%s5268 + $0x8] sm:$0xf]
    %v5272 = vld [vmem:[%s5268 + $0xc] sm:$0xf]
    %v5273 = vld [vmem:[%s5268 + $0x10] sm:$0xf]
    %v5274 = vld [vmem:[%s5268 + $0x14] sm:$0xf]
    %v5275 = vld [vmem:[%s5268 + $0x18] sm:$0xf]
    %v5276 = vld [vmem:[%s5268 + $0x1c] sm:$0xf]
    %v5277 = vld [vmem:[%s5268 + $0x20] sm:$0xf]
    %v5278 = vld [vmem:[%s5268 + $0x24] sm:$0xf]
    %v5279 = vld [vmem:[%s5268 + $0x28] sm:$0xf]
    %v5280 = vld [vmem:[%s5268 + $0x2c] sm:$0xf]
    %v5281 = vld [vmem:[%s5268 + $0x30] sm:$0xf]
    %v5282 = vld [vmem:[%s5268 + $0x34] sm:$0xf]
    %v5283 = vld [vmem:[%s5268 + $0x38] sm:$0xf]
    %v5284 = vld [vmem:[%s5268 + $0x3c] sm:$0xf]
    %v5285 = vld [vmem:[%s5268 + $0x40] sm:$0xf]
    %v5286 = vld [vmem:[%s5268 + $0x44] sm:$0xf]
    %v5287 = vld [vmem:[%s5268 + $0x48] sm:$0xf]
    %v5288 = vld [vmem:[%s5268 + $0x4c] sm:$0xf]
    %v5289 = vld [vmem:[%s5268 + $0x50] sm:$0xf]
    %v5290 = vld [vmem:[%s5268 + $0x54] sm:$0xf]
    %v5291 = vld [vmem:[%s5268 + $0x58] sm:$0xf]
    %v5292 = vld [vmem:[%s5268 + $0x5c] sm:$0xf]
    %v5293 = vld [vmem:[%s5268 + $0x60] sm:$0xf]
    %v5294 = vld [vmem:[%s5268 + $0x64] sm:$0xf]
    %v5295 = vld [vmem:[%s5268 + $0x68] sm:$0xf]
    %v5296 = vld [vmem:[%s5268 + $0x6c] sm:$0xf]
    %v5297 = vld [vmem:[%s5268 + $0x70] sm:$0xf]
    %v5298 = vld [vmem:[%s5268 + $0x74] sm:$0xf]
    %v5299 = vld [vmem:[%s5268 + $0x78] sm:$0xf]
    %v5300 = vld [vmem:[%s5268 + $0x7c] sm:$0xf]
    %v5303 = vunpack.c.l.b16 %v4559
    %v5304 = vunpack.c.h.b16 %v4559
    %v5305 = vunpack.c.l.b16 %v4560
    %v5306 = vunpack.c.h.b16 %v4560
    %v5307 = vpack.c.b16 %v5305, %v5303
    %v5308 = vpack.c.b16 %v5306, %v5304
    %v5343 = vunpack.c.l.b16 %v5269
    %v5344 = vunpack.c.l.b16 %v5270
    %v5345 = vunpack.c.l.b16 %v5271
    %v5346 = vunpack.c.l.b16 %v5272
    %v5347 = vunpack.c.l.b16 %v5273
    %v5348 = vunpack.c.l.b16 %v5274
    %v5349 = vunpack.c.l.b16 %v5275
    %v5350 = vunpack.c.l.b16 %v5276
    %v5351 = vunpack.c.l.b16 %v5277
    %v5352 = vunpack.c.l.b16 %v5278
    %v5353 = vunpack.c.l.b16 %v5279
    %v5354 = vunpack.c.l.b16 %v5280
    %v5355 = vunpack.c.l.b16 %v5281
    %v5356 = vunpack.c.l.b16 %v5282
    %v5357 = vunpack.c.l.b16 %v5283
    %v5358 = vunpack.c.l.b16 %v5284
    %v5359 = vunpack.c.l.b16 %v5285
    %v5360 = vunpack.c.l.b16 %v5286
    %v5361 = vunpack.c.l.b16 %v5287
    %v5362 = vunpack.c.l.b16 %v5288
    %v5363 = vunpack.c.l.b16 %v5289
    %v5364 = vunpack.c.l.b16 %v5290
    %v5365 = vunpack.c.l.b16 %v5291
    %v5366 = vunpack.c.l.b16 %v5292
    %v5367 = vunpack.c.l.b16 %v5293
    %v5368 = vunpack.c.l.b16 %v5294
    %v5369 = vunpack.c.l.b16 %v5295
    %v5370 = vunpack.c.l.b16 %v5296
    %v5371 = vunpack.c.l.b16 %v5297
    %v5372 = vunpack.c.l.b16 %v5298
    %v5373 = vunpack.c.l.b16 %v5299
    %v5374 = vunpack.c.l.b16 %v5300
    %v5375 = vpack.c.b16 %v5344, %v5343
    %v5376 = vpack.c.b16 %v5346, %v5345
    %v5377 = vpack.c.b16 %v5348, %v5347
    %v5378 = vpack.c.b16 %v5350, %v5349
    %v5379 = vpack.c.b16 %v5352, %v5351
    %v5380 = vpack.c.b16 %v5354, %v5353
    %v5381 = vpack.c.b16 %v5356, %v5355
    %v5382 = vpack.c.b16 %v5358, %v5357
    %v5383 = vpack.c.b16 %v5360, %v5359
    %v5384 = vpack.c.b16 %v5362, %v5361
    %v5385 = vpack.c.b16 %v5364, %v5363
    %v5386 = vpack.c.b16 %v5366, %v5365
    %v5387 = vpack.c.b16 %v5368, %v5367
    %v5388 = vpack.c.b16 %v5370, %v5369
    %v5389 = vpack.c.b16 %v5372, %v5371
    %v5390 = vpack.c.b16 %v5374, %v5373
    %5407 = vmatpush.bf16.msra.mxu0 %v5382
    %5408 = vmatpush.bf16.msra.mxu0 %v5381
    %5409 = vmatpush.bf16.msra.mxu0 %v5380
    %5410 = vmatpush.bf16.msra.mxu0 %v5379
    %5411 = vmatpush.bf16.msra.mxu0 %v5378
    %5412 = vmatpush.bf16.msra.mxu0 %v5377
    %5413 = vmatpush.bf16.msra.mxu0 %v5376
    %5414 = vmatpush.bf16.msra.mxu0 %v5375
    %5415 = vmatmul.bf16.gmra.mxu0 %v5307
    %v5416 = vpop.f32.mrf.mxu0
    %v5417 = vadd.f32 0.0, %v5416
    %v5418 = vpop.f32.mrf.mxu0
    %v5419 = vadd.f32 0.0, %v5418
    %5420 = vdwg.mxu0
    %5421 = vmatpush.bf16.msra.mxu0 %v5390
    %5422 = vmatpush.bf16.msra.mxu0 %v5389
    %5423 = vmatpush.bf16.msra.mxu0 %v5388
    %5424 = vmatpush.bf16.msra.mxu0 %v5387
    %5425 = vmatpush.bf16.msra.mxu0 %v5386
    %5426 = vmatpush.bf16.msra.mxu0 %v5385
    %5427 = vmatpush.bf16.msra.mxu0 %v5384
    %5428 = vmatpush.bf16.msra.mxu0 %v5383
    %5429 = vmatmul.bf16.gmra.mxu0 %v5308
    %v5430 = vpop.f32.mrf.mxu0
    %v5431 = vadd.f32 %v5417, %v5430
    %v5432 = vpop.f32.mrf.mxu0
    %v5433 = vadd.f32 %v5419, %v5432
    %5434 = vdwg.mxu0
    %v5435 = vadd.f32 %v5266, %v5431
    %v5436 = vadd.f32 %v5267, %v5433
    %s5437 = scalar_lea.vmem %s5, 640
    %v5438 = vld [vmem:[%s5437] sm:$0xf]
    %v5439 = vld [vmem:[%s5437 + $0x4] sm:$0xf]
    %v5440 = vld [vmem:[%s5437 + $0x8] sm:$0xf]
    %v5441 = vld [vmem:[%s5437 + $0xc] sm:$0xf]
    %v5442 = vld [vmem:[%s5437 + $0x10] sm:$0xf]
    %v5443 = vld [vmem:[%s5437 + $0x14] sm:$0xf]
    %v5444 = vld [vmem:[%s5437 + $0x18] sm:$0xf]
    %v5445 = vld [vmem:[%s5437 + $0x1c] sm:$0xf]
    %v5446 = vld [vmem:[%s5437 + $0x20] sm:$0xf]
    %v5447 = vld [vmem:[%s5437 + $0x24] sm:$0xf]
    %v5448 = vld [vmem:[%s5437 + $0x28] sm:$0xf]
    %v5449 = vld [vmem:[%s5437 + $0x2c] sm:$0xf]
    %v5450 = vld [vmem:[%s5437 + $0x30] sm:$0xf]
    %v5451 = vld [vmem:[%s5437 + $0x34] sm:$0xf]
    %v5452 = vld [vmem:[%s5437 + $0x38] sm:$0xf]
    %v5453 = vld [vmem:[%s5437 + $0x3c] sm:$0xf]
    %v5454 = vld [vmem:[%s5437 + $0x40] sm:$0xf]
    %v5455 = vld [vmem:[%s5437 + $0x44] sm:$0xf]
    %v5456 = vld [vmem:[%s5437 + $0x48] sm:$0xf]
    %v5457 = vld [vmem:[%s5437 + $0x4c] sm:$0xf]
    %v5458 = vld [vmem:[%s5437 + $0x50] sm:$0xf]
    %v5459 = vld [vmem:[%s5437 + $0x54] sm:$0xf]
    %v5460 = vld [vmem:[%s5437 + $0x58] sm:$0xf]
    %v5461 = vld [vmem:[%s5437 + $0x5c] sm:$0xf]
    %v5462 = vld [vmem:[%s5437 + $0x60] sm:$0xf]
    %v5463 = vld [vmem:[%s5437 + $0x64] sm:$0xf]
    %v5464 = vld [vmem:[%s5437 + $0x68] sm:$0xf]
    %v5465 = vld [vmem:[%s5437 + $0x6c] sm:$0xf]
    %v5466 = vld [vmem:[%s5437 + $0x70] sm:$0xf]
    %v5467 = vld [vmem:[%s5437 + $0x74] sm:$0xf]
    %v5468 = vld [vmem:[%s5437 + $0x78] sm:$0xf]
    %v5469 = vld [vmem:[%s5437 + $0x7c] sm:$0xf]
    %v5472 = vunpack.c.l.b16 %v4561
    %v5473 = vunpack.c.h.b16 %v4561
    %v5474 = vunpack.c.l.b16 %v4562
    %v5475 = vunpack.c.h.b16 %v4562
    %v5476 = vpack.c.b16 %v5474, %v5472
    %v5477 = vpack.c.b16 %v5475, %v5473
    %v5512 = vunpack.c.l.b16 %v5438
    %v5513 = vunpack.c.l.b16 %v5439
    %v5514 = vunpack.c.l.b16 %v5440
    %v5515 = vunpack.c.l.b16 %v5441
    %v5516 = vunpack.c.l.b16 %v5442
    %v5517 = vunpack.c.l.b16 %v5443
    %v5518 = vunpack.c.l.b16 %v5444
    %v5519 = vunpack.c.l.b16 %v5445
    %v5520 = vunpack.c.l.b16 %v5446
    %v5521 = vunpack.c.l.b16 %v5447
    %v5522 = vunpack.c.l.b16 %v5448
    %v5523 = vunpack.c.l.b16 %v5449
    %v5524 = vunpack.c.l.b16 %v5450
    %v5525 = vunpack.c.l.b16 %v5451
    %v5526 = vunpack.c.l.b16 %v5452
    %v5527 = vunpack.c.l.b16 %v5453
    %v5528 = vunpack.c.l.b16 %v5454
    %v5529 = vunpack.c.l.b16 %v5455
    %v5530 = vunpack.c.l.b16 %v5456
    %v5531 = vunpack.c.l.b16 %v5457
    %v5532 = vunpack.c.l.b16 %v5458
    %v5533 = vunpack.c.l.b16 %v5459
    %v5534 = vunpack.c.l.b16 %v5460
    %v5535 = vunpack.c.l.b16 %v5461
    %v5536 = vunpack.c.l.b16 %v5462
    %v5537 = vunpack.c.l.b16 %v5463
    %v5538 = vunpack.c.l.b16 %v5464
    %v5539 = vunpack.c.l.b16 %v5465
    %v5540 = vunpack.c.l.b16 %v5466
    %v5541 = vunpack.c.l.b16 %v5467
    %v5542 = vunpack.c.l.b16 %v5468
    %v5543 = vunpack.c.l.b16 %v5469
    %v5544 = vpack.c.b16 %v5513, %v5512
    %v5545 = vpack.c.b16 %v5515, %v5514
    %v5546 = vpack.c.b16 %v5517, %v5516
    %v5547 = vpack.c.b16 %v5519, %v5518
    %v5548 = vpack.c.b16 %v5521, %v5520
    %v5549 = vpack.c.b16 %v5523, %v5522
    %v5550 = vpack.c.b16 %v5525, %v5524
    %v5551 = vpack.c.b16 %v5527, %v5526
    %v5552 = vpack.c.b16 %v5529, %v5528
    %v5553 = vpack.c.b16 %v5531, %v5530
    %v5554 = vpack.c.b16 %v5533, %v5532
    %v5555 = vpack.c.b16 %v5535, %v5534
    %v5556 = vpack.c.b16 %v5537, %v5536
    %v5557 = vpack.c.b16 %v5539, %v5538
    %v5558 = vpack.c.b16 %v5541, %v5540
    %v5559 = vpack.c.b16 %v5543, %v5542
    %5576 = vmatpush.bf16.msra.mxu0 %v5551
    %5577 = vmatpush.bf16.msra.mxu0 %v5550
    %5578 = vmatpush.bf16.msra.mxu0 %v5549
    %5579 = vmatpush.bf16.msra.mxu0 %v5548
    %5580 = vmatpush.bf16.msra.mxu0 %v5547
    %5581 = vmatpush.bf16.msra.mxu0 %v5546
    %5582 = vmatpush.bf16.msra.mxu0 %v5545
    %5583 = vmatpush.bf16.msra.mxu0 %v5544
    %5584 = vmatmul.bf16.gmra.mxu0 %v5476
    %v5585 = vpop.f32.mrf.mxu0
    %v5586 = vadd.f32 0.0, %v5585
    %v5587 = vpop.f32.mrf.mxu0
    %v5588 = vadd.f32 0.0, %v5587
    %5589 = vdwg.mxu0
    %5590 = vmatpush.bf16.msra.mxu0 %v5559
    %5591 = vmatpush.bf16.msra.mxu0 %v5558
    %5592 = vmatpush.bf16.msra.mxu0 %v5557
    %5593 = vmatpush.bf16.msra.mxu0 %v5556
    %5594 = vmatpush.bf16.msra.mxu0 %v5555
    %5595 = vmatpush.bf16.msra.mxu0 %v5554
    %5596 = vmatpush.bf16.msra.mxu0 %v5553
    %5597 = vmatpush.bf16.msra.mxu0 %v5552
    %5598 = vmatmul.bf16.gmra.mxu0 %v5477
    %v5599 = vpop.f32.mrf.mxu0
    %v5600 = vadd.f32 %v5586, %v5599
    %v5601 = vpop.f32.mrf.mxu0
    %v5602 = vadd.f32 %v5588, %v5601
    %5603 = vdwg.mxu0
    %v5604 = vadd.f32 %v5435, %v5600
    %v5605 = vadd.f32 %v5436, %v5602
    %s5606 = scalar_lea.vmem %s5, 768
    %v5607 = vld [vmem:[%s5606] sm:$0xf]
    %v5608 = vld [vmem:[%s5606 + $0x4] sm:$0xf]
    %v5609 = vld [vmem:[%s5606 + $0x8] sm:$0xf]
    %v5610 = vld [vmem:[%s5606 + $0xc] sm:$0xf]
    %v5611 = vld [vmem:[%s5606 + $0x10] sm:$0xf]
    %v5612 = vld [vmem:[%s5606 + $0x14] sm:$0xf]
    %v5613 = vld [vmem:[%s5606 + $0x18] sm:$0xf]
    %v5614 = vld [vmem:[%s5606 + $0x1c] sm:$0xf]
    %v5615 = vld [vmem:[%s5606 + $0x20] sm:$0xf]
    %v5616 = vld [vmem:[%s5606 + $0x24] sm:$0xf]
    %v5617 = vld [vmem:[%s5606 + $0x28] sm:$0xf]
    %v5618 = vld [vmem:[%s5606 + $0x2c] sm:$0xf]
    %v5619 = vld [vmem:[%s5606 + $0x30] sm:$0xf]
    %v5620 = vld [vmem:[%s5606 + $0x34] sm:$0xf]
    %v5621 = vld [vmem:[%s5606 + $0x38] sm:$0xf]
    %v5622 = vld [vmem:[%s5606 + $0x3c] sm:$0xf]
    %v5623 = vld [vmem:[%s5606 + $0x40] sm:$0xf]
    %v5624 = vld [vmem:[%s5606 + $0x44] sm:$0xf]
    %v5625 = vld [vmem:[%s5606 + $0x48] sm:$0xf]
    %v5626 = vld [vmem:[%s5606 + $0x4c] sm:$0xf]
    %v5627 = vld [vmem:[%s5606 + $0x50] sm:$0xf]
    %v5628 = vld [vmem:[%s5606 + $0x54] sm:$0xf]
    %v5629 = vld [vmem:[%s5606 + $0x58] sm:$0xf]
    %v5630 = vld [vmem:[%s5606 + $0x5c] sm:$0xf]
    %v5631 = vld [vmem:[%s5606 + $0x60] sm:$0xf]
    %v5632 = vld [vmem:[%s5606 + $0x64] sm:$0xf]
    %v5633 = vld [vmem:[%s5606 + $0x68] sm:$0xf]
    %v5634 = vld [vmem:[%s5606 + $0x6c] sm:$0xf]
    %v5635 = vld [vmem:[%s5606 + $0x70] sm:$0xf]
    %v5636 = vld [vmem:[%s5606 + $0x74] sm:$0xf]
    %v5637 = vld [vmem:[%s5606 + $0x78] sm:$0xf]
    %v5638 = vld [vmem:[%s5606 + $0x7c] sm:$0xf]
    %v5641 = vunpack.c.l.b16 %v4563
    %v5642 = vunpack.c.h.b16 %v4563
    %v5643 = vunpack.c.l.b16 %v4564
    %v5644 = vunpack.c.h.b16 %v4564
    %v5645 = vpack.c.b16 %v5643, %v5641
    %v5646 = vpack.c.b16 %v5644, %v5642
    %v5681 = vunpack.c.l.b16 %v5607
    %v5682 = vunpack.c.l.b16 %v5608
    %v5683 = vunpack.c.l.b16 %v5609
    %v5684 = vunpack.c.l.b16 %v5610
    %v5685 = vunpack.c.l.b16 %v5611
    %v5686 = vunpack.c.l.b16 %v5612
    %v5687 = vunpack.c.l.b16 %v5613
    %v5688 = vunpack.c.l.b16 %v5614
    %v5689 = vunpack.c.l.b16 %v5615
    %v5690 = vunpack.c.l.b16 %v5616
    %v5691 = vunpack.c.l.b16 %v5617
    %v5692 = vunpack.c.l.b16 %v5618
    %v5693 = vunpack.c.l.b16 %v5619
    %v5694 = vunpack.c.l.b16 %v5620
    %v5695 = vunpack.c.l.b16 %v5621
    %v5696 = vunpack.c.l.b16 %v5622
    %v5697 = vunpack.c.l.b16 %v5623
    %v5698 = vunpack.c.l.b16 %v5624
    %v5699 = vunpack.c.l.b16 %v5625
    %v5700 = vunpack.c.l.b16 %v5626
    %v5701 = vunpack.c.l.b16 %v5627
    %v5702 = vunpack.c.l.b16 %v5628
    %v5703 = vunpack.c.l.b16 %v5629
    %v5704 = vunpack.c.l.b16 %v5630
    %v5705 = vunpack.c.l.b16 %v5631
    %v5706 = vunpack.c.l.b16 %v5632
    %v5707 = vunpack.c.l.b16 %v5633
    %v5708 = vunpack.c.l.b16 %v5634
    %v5709 = vunpack.c.l.b16 %v5635
    %v5710 = vunpack.c.l.b16 %v5636
    %v5711 = vunpack.c.l.b16 %v5637
    %v5712 = vunpack.c.l.b16 %v5638
    %v5713 = vpack.c.b16 %v5682, %v5681
    %v5714 = vpack.c.b16 %v5684, %v5683
    %v5715 = vpack.c.b16 %v5686, %v5685
    %v5716 = vpack.c.b16 %v5688, %v5687
    %v5717 = vpack.c.b16 %v5690, %v5689
    %v5718 = vpack.c.b16 %v5692, %v5691
    %v5719 = vpack.c.b16 %v5694, %v5693
    %v5720 = vpack.c.b16 %v5696, %v5695
    %v5721 = vpack.c.b16 %v5698, %v5697
    %v5722 = vpack.c.b16 %v5700, %v5699
    %v5723 = vpack.c.b16 %v5702, %v5701
    %v5724 = vpack.c.b16 %v5704, %v5703
    %v5725 = vpack.c.b16 %v5706, %v5705
    %v5726 = vpack.c.b16 %v5708, %v5707
    %v5727 = vpack.c.b16 %v5710, %v5709
    %v5728 = vpack.c.b16 %v5712, %v5711
    %5745 = vmatpush.bf16.msra.mxu0 %v5720
    %5746 = vmatpush.bf16.msra.mxu0 %v5719
    %5747 = vmatpush.bf16.msra.mxu0 %v5718
    %5748 = vmatpush.bf16.msra.mxu0 %v5717
    %5749 = vmatpush.bf16.msra.mxu0 %v5716
    %5750 = vmatpush.bf16.msra.mxu0 %v5715
    %5751 = vmatpush.bf16.msra.mxu0 %v5714
    %5752 = vmatpush.bf16.msra.mxu0 %v5713
    %5753 = vmatmul.bf16.gmra.mxu0 %v5645
    %v5754 = vpop.f32.mrf.mxu0
    %v5755 = vadd.f32 0.0, %v5754
    %v5756 = vpop.f32.mrf.mxu0
    %v5757 = vadd.f32 0.0, %v5756
    %5758 = vdwg.mxu0
    %5759 = vmatpush.bf16.msra.mxu0 %v5728
    %5760 = vmatpush.bf16.msra.mxu0 %v5727
    %5761 = vmatpush.bf16.msra.mxu0 %v5726
    %5762 = vmatpush.bf16.msra.mxu0 %v5725
    %5763 = vmatpush.bf16.msra.mxu0 %v5724
    %5764 = vmatpush.bf16.msra.mxu0 %v5723
    %5765 = vmatpush.bf16.msra.mxu0 %v5722
    %5766 = vmatpush.bf16.msra.mxu0 %v5721
    %5767 = vmatmul.bf16.gmra.mxu0 %v5646
    %v5768 = vpop.f32.mrf.mxu0
    %v5769 = vadd.f32 %v5755, %v5768
    %v5770 = vpop.f32.mrf.mxu0
    %v5771 = vadd.f32 %v5757, %v5770
    %5772 = vdwg.mxu0
    %v5773 = vadd.f32 %v5604, %v5769
    %v5774 = vadd.f32 %v5605, %v5771
    %s5775 = scalar_lea.vmem %s5, 896
    %v5776 = vld [vmem:[%s5775] sm:$0xf]
    %v5777 = vld [vmem:[%s5775 + $0x4] sm:$0xf]
    %v5778 = vld [vmem:[%s5775 + $0x8] sm:$0xf]
    %v5779 = vld [vmem:[%s5775 + $0xc] sm:$0xf]
    %v5780 = vld [vmem:[%s5775 + $0x10] sm:$0xf]
    %v5781 = vld [vmem:[%s5775 + $0x14] sm:$0xf]
    %v5782 = vld [vmem:[%s5775 + $0x18] sm:$0xf]
    %v5783 = vld [vmem:[%s5775 + $0x1c] sm:$0xf]
    %v5784 = vld [vmem:[%s5775 + $0x20] sm:$0xf]
    %v5785 = vld [vmem:[%s5775 + $0x24] sm:$0xf]
    %v5786 = vld [vmem:[%s5775 + $0x28] sm:$0xf]
    %v5787 = vld [vmem:[%s5775 + $0x2c] sm:$0xf]
    %v5788 = vld [vmem:[%s5775 + $0x30] sm:$0xf]
    %v5789 = vld [vmem:[%s5775 + $0x34] sm:$0xf]
    %v5790 = vld [vmem:[%s5775 + $0x38] sm:$0xf]
    %v5791 = vld [vmem:[%s5775 + $0x3c] sm:$0xf]
    %v5792 = vld [vmem:[%s5775 + $0x40] sm:$0xf]
    %v5793 = vld [vmem:[%s5775 + $0x44] sm:$0xf]
    %v5794 = vld [vmem:[%s5775 + $0x48] sm:$0xf]
    %v5795 = vld [vmem:[%s5775 + $0x4c] sm:$0xf]
    %v5796 = vld [vmem:[%s5775 + $0x50] sm:$0xf]
    %v5797 = vld [vmem:[%s5775 + $0x54] sm:$0xf]
    %v5798 = vld [vmem:[%s5775 + $0x58] sm:$0xf]
    %v5799 = vld [vmem:[%s5775 + $0x5c] sm:$0xf]
    %v5800 = vld [vmem:[%s5775 + $0x60] sm:$0xf]
    %v5801 = vld [vmem:[%s5775 + $0x64] sm:$0xf]
    %v5802 = vld [vmem:[%s5775 + $0x68] sm:$0xf]
    %v5803 = vld [vmem:[%s5775 + $0x6c] sm:$0xf]
    %v5804 = vld [vmem:[%s5775 + $0x70] sm:$0xf]
    %v5805 = vld [vmem:[%s5775 + $0x74] sm:$0xf]
    %v5806 = vld [vmem:[%s5775 + $0x78] sm:$0xf]
    %v5807 = vld [vmem:[%s5775 + $0x7c] sm:$0xf]
    %v5810 = vunpack.c.l.b16 %v4565
    %v5811 = vunpack.c.h.b16 %v4565
    %v5812 = vunpack.c.l.b16 %v4566
    %v5813 = vunpack.c.h.b16 %v4566
    %v5814 = vpack.c.b16 %v5812, %v5810
    %v5815 = vpack.c.b16 %v5813, %v5811
    %v5850 = vunpack.c.l.b16 %v5776
    %v5851 = vunpack.c.l.b16 %v5777
    %v5852 = vunpack.c.l.b16 %v5778
    %v5853 = vunpack.c.l.b16 %v5779
    %v5854 = vunpack.c.l.b16 %v5780
    %v5855 = vunpack.c.l.b16 %v5781
    %v5856 = vunpack.c.l.b16 %v5782
    %v5857 = vunpack.c.l.b16 %v5783
    %v5858 = vunpack.c.l.b16 %v5784
    %v5859 = vunpack.c.l.b16 %v5785
    %v5860 = vunpack.c.l.b16 %v5786
    %v5861 = vunpack.c.l.b16 %v5787
    %v5862 = vunpack.c.l.b16 %v5788
    %v5863 = vunpack.c.l.b16 %v5789
    %v5864 = vunpack.c.l.b16 %v5790
    %v5865 = vunpack.c.l.b16 %v5791
    %v5866 = vunpack.c.l.b16 %v5792
    %v5867 = vunpack.c.l.b16 %v5793
    %v5868 = vunpack.c.l.b16 %v5794
    %v5869 = vunpack.c.l.b16 %v5795
    %v5870 = vunpack.c.l.b16 %v5796
    %v5871 = vunpack.c.l.b16 %v5797
    %v5872 = vunpack.c.l.b16 %v5798
    %v5873 = vunpack.c.l.b16 %v5799
    %v5874 = vunpack.c.l.b16 %v5800
    %v5875 = vunpack.c.l.b16 %v5801
    %v5876 = vunpack.c.l.b16 %v5802
    %v5877 = vunpack.c.l.b16 %v5803
    %v5878 = vunpack.c.l.b16 %v5804
    %v5879 = vunpack.c.l.b16 %v5805
    %v5880 = vunpack.c.l.b16 %v5806
    %v5881 = vunpack.c.l.b16 %v5807
    %v5882 = vpack.c.b16 %v5851, %v5850
    %v5883 = vpack.c.b16 %v5853, %v5852
    %v5884 = vpack.c.b16 %v5855, %v5854
    %v5885 = vpack.c.b16 %v5857, %v5856
    %v5886 = vpack.c.b16 %v5859, %v5858
    %v5887 = vpack.c.b16 %v5861, %v5860
    %v5888 = vpack.c.b16 %v5863, %v5862
    %v5889 = vpack.c.b16 %v5865, %v5864
    %v5890 = vpack.c.b16 %v5867, %v5866
    %v5891 = vpack.c.b16 %v5869, %v5868
    %v5892 = vpack.c.b16 %v5871, %v5870
    %v5893 = vpack.c.b16 %v5873, %v5872
    %v5894 = vpack.c.b16 %v5875, %v5874
    %v5895 = vpack.c.b16 %v5877, %v5876
    %v5896 = vpack.c.b16 %v5879, %v5878
    %v5897 = vpack.c.b16 %v5881, %v5880
    %5914 = vmatpush.bf16.msra.mxu0 %v5889
    %5915 = vmatpush.bf16.msra.mxu0 %v5888
    %5916 = vmatpush.bf16.msra.mxu0 %v5887
    %5917 = vmatpush.bf16.msra.mxu0 %v5886
    %5918 = vmatpush.bf16.msra.mxu0 %v5885
    %5919 = vmatpush.bf16.msra.mxu0 %v5884
    %5920 = vmatpush.bf16.msra.mxu0 %v5883
    %5921 = vmatpush.bf16.msra.mxu0 %v5882
    %5922 = vmatmul.bf16.gmra.mxu0 %v5814
    %v5923 = vpop.f32.mrf.mxu0
    %v5924 = vadd.f32 0.0, %v5923
    %v5925 = vpop.f32.mrf.mxu0
    %v5926 = vadd.f32 0.0, %v5925
    %5927 = vdwg.mxu0
    %5928 = vmatpush.bf16.msra.mxu0 %v5897
    %5929 = vmatpush.bf16.msra.mxu0 %v5896
    %5930 = vmatpush.bf16.msra.mxu0 %v5895
    %5931 = vmatpush.bf16.msra.mxu0 %v5894
    %5932 = vmatpush.bf16.msra.mxu0 %v5893
    %5933 = vmatpush.bf16.msra.mxu0 %v5892
    %5934 = vmatpush.bf16.msra.mxu0 %v5891
    %5935 = vmatpush.bf16.msra.mxu0 %v5890
    %5936 = vmatmul.bf16.gmra.mxu0 %v5815
    %v5937 = vpop.f32.mrf.mxu0
    %v5938 = vadd.f32 %v5924, %v5937
    %v5939 = vpop.f32.mrf.mxu0
    %v5940 = vadd.f32 %v5926, %v5939
    %5941 = vdwg.mxu0
    %v5942 = vadd.f32 %v5773, %v5938
    %v5943 = vadd.f32 %v5774, %v5940
    %s5944 = scalar_lea.vmem %s5, 1024
    %v5945 = vld [vmem:[%s5944] sm:$0xf]
    %v5946 = vld [vmem:[%s5944 + $0x4] sm:$0xf]
    %v5947 = vld [vmem:[%s5944 + $0x8] sm:$0xf]
    %v5948 = vld [vmem:[%s5944 + $0xc] sm:$0xf]
    %v5949 = vld [vmem:[%s5944 + $0x10] sm:$0xf]
    %v5950 = vld [vmem:[%s5944 + $0x14] sm:$0xf]
    %v5951 = vld [vmem:[%s5944 + $0x18] sm:$0xf]
    %v5952 = vld [vmem:[%s5944 + $0x1c] sm:$0xf]
    %v5953 = vld [vmem:[%s5944 + $0x20] sm:$0xf]
    %v5954 = vld [vmem:[%s5944 + $0x24] sm:$0xf]
    %v5955 = vld [vmem:[%s5944 + $0x28] sm:$0xf]
    %v5956 = vld [vmem:[%s5944 + $0x2c] sm:$0xf]
    %v5957 = vld [vmem:[%s5944 + $0x30] sm:$0xf]
    %v5958 = vld [vmem:[%s5944 + $0x34] sm:$0xf]
    %v5959 = vld [vmem:[%s5944 + $0x38] sm:$0xf]
    %v5960 = vld [vmem:[%s5944 + $0x3c] sm:$0xf]
    %v5961 = vld [vmem:[%s5944 + $0x40] sm:$0xf]
    %v5962 = vld [vmem:[%s5944 + $0x44] sm:$0xf]
    %v5963 = vld [vmem:[%s5944 + $0x48] sm:$0xf]
    %v5964 = vld [vmem:[%s5944 + $0x4c] sm:$0xf]
    %v5965 = vld [vmem:[%s5944 + $0x50] sm:$0xf]
    %v5966 = vld [vmem:[%s5944 + $0x54] sm:$0xf]
    %v5967 = vld [vmem:[%s5944 + $0x58] sm:$0xf]
    %v5968 = vld [vmem:[%s5944 + $0x5c] sm:$0xf]
    %v5969 = vld [vmem:[%s5944 + $0x60] sm:$0xf]
    %v5970 = vld [vmem:[%s5944 + $0x64] sm:$0xf]
    %v5971 = vld [vmem:[%s5944 + $0x68] sm:$0xf]
    %v5972 = vld [vmem:[%s5944 + $0x6c] sm:$0xf]
    %v5973 = vld [vmem:[%s5944 + $0x70] sm:$0xf]
    %v5974 = vld [vmem:[%s5944 + $0x74] sm:$0xf]
    %v5975 = vld [vmem:[%s5944 + $0x78] sm:$0xf]
    %v5976 = vld [vmem:[%s5944 + $0x7c] sm:$0xf]
    %v5979 = vunpack.c.l.b16 %v4567
    %v5980 = vunpack.c.h.b16 %v4567
    %v5981 = vunpack.c.l.b16 %v4568
    %v5982 = vunpack.c.h.b16 %v4568
    %v5983 = vpack.c.b16 %v5981, %v5979
    %v5984 = vpack.c.b16 %v5982, %v5980
    %v6019 = vunpack.c.l.b16 %v5945
    %v6020 = vunpack.c.l.b16 %v5946
    %v6021 = vunpack.c.l.b16 %v5947
    %v6022 = vunpack.c.l.b16 %v5948
    %v6023 = vunpack.c.l.b16 %v5949
    %v6024 = vunpack.c.l.b16 %v5950
    %v6025 = vunpack.c.l.b16 %v5951
    %v6026 = vunpack.c.l.b16 %v5952
    %v6027 = vunpack.c.l.b16 %v5953
    %v6028 = vunpack.c.l.b16 %v5954
    %v6029 = vunpack.c.l.b16 %v5955
    %v6030 = vunpack.c.l.b16 %v5956
    %v6031 = vunpack.c.l.b16 %v5957
    %v6032 = vunpack.c.l.b16 %v5958
    %v6033 = vunpack.c.l.b16 %v5959
    %v6034 = vunpack.c.l.b16 %v5960
    %v6035 = vunpack.c.l.b16 %v5961
    %v6036 = vunpack.c.l.b16 %v5962
    %v6037 = vunpack.c.l.b16 %v5963
    %v6038 = vunpack.c.l.b16 %v5964
    %v6039 = vunpack.c.l.b16 %v5965
    %v6040 = vunpack.c.l.b16 %v5966
    %v6041 = vunpack.c.l.b16 %v5967
    %v6042 = vunpack.c.l.b16 %v5968
    %v6043 = vunpack.c.l.b16 %v5969
    %v6044 = vunpack.c.l.b16 %v5970
    %v6045 = vunpack.c.l.b16 %v5971
    %v6046 = vunpack.c.l.b16 %v5972
    %v6047 = vunpack.c.l.b16 %v5973
    %v6048 = vunpack.c.l.b16 %v5974
    %v6049 = vunpack.c.l.b16 %v5975
    %v6050 = vunpack.c.l.b16 %v5976
    %v6051 = vpack.c.b16 %v6020, %v6019
    %v6052 = vpack.c.b16 %v6022, %v6021
    %v6053 = vpack.c.b16 %v6024, %v6023
    %v6054 = vpack.c.b16 %v6026, %v6025
    %v6055 = vpack.c.b16 %v6028, %v6027
    %v6056 = vpack.c.b16 %v6030, %v6029
    %v6057 = vpack.c.b16 %v6032, %v6031
    %v6058 = vpack.c.b16 %v6034, %v6033
    %v6059 = vpack.c.b16 %v6036, %v6035
    %v6060 = vpack.c.b16 %v6038, %v6037
    %v6061 = vpack.c.b16 %v6040, %v6039
    %v6062 = vpack.c.b16 %v6042, %v6041
    %v6063 = vpack.c.b16 %v6044, %v6043
    %v6064 = vpack.c.b16 %v6046, %v6045
    %v6065 = vpack.c.b16 %v6048, %v6047
    %v6066 = vpack.c.b16 %v6050, %v6049
    %6083 = vmatpush.bf16.msra.mxu0 %v6058
    %6084 = vmatpush.bf16.msra.mxu0 %v6057
    %6085 = vmatpush.bf16.msra.mxu0 %v6056
    %6086 = vmatpush.bf16.msra.mxu0 %v6055
    %6087 = vmatpush.bf16.msra.mxu0 %v6054
    %6088 = vmatpush.bf16.msra.mxu0 %v6053
    %6089 = vmatpush.bf16.msra.mxu0 %v6052
    %6090 = vmatpush.bf16.msra.mxu0 %v6051
    %6091 = vmatmul.bf16.gmra.mxu0 %v5983
    %v6092 = vpop.f32.mrf.mxu0
    %v6093 = vadd.f32 0.0, %v6092
    %v6094 = vpop.f32.mrf.mxu0
    %v6095 = vadd.f32 0.0, %v6094
    %6096 = vdwg.mxu0
    %6097 = vmatpush.bf16.msra.mxu0 %v6066
    %6098 = vmatpush.bf16.msra.mxu0 %v6065
    %6099 = vmatpush.bf16.msra.mxu0 %v6064
    %6100 = vmatpush.bf16.msra.mxu0 %v6063
    %6101 = vmatpush.bf16.msra.mxu0 %v6062
    %6102 = vmatpush.bf16.msra.mxu0 %v6061
    %6103 = vmatpush.bf16.msra.mxu0 %v6060
    %6104 = vmatpush.bf16.msra.mxu0 %v6059
    %6105 = vmatmul.bf16.gmra.mxu0 %v5984
    %v6106 = vpop.f32.mrf.mxu0
    %v6107 = vadd.f32 %v6093, %v6106
    %v6108 = vpop.f32.mrf.mxu0
    %v6109 = vadd.f32 %v6095, %v6108
    %6110 = vdwg.mxu0
    %v6111 = vadd.f32 %v5942, %v6107
    %v6112 = vadd.f32 %v5943, %v6109
    %s6113 = scalar_lea.vmem %s5, 1152
    %v6114 = vld [vmem:[%s6113] sm:$0xf]
    %v6115 = vld [vmem:[%s6113 + $0x4] sm:$0xf]
    %v6116 = vld [vmem:[%s6113 + $0x8] sm:$0xf]
    %v6117 = vld [vmem:[%s6113 + $0xc] sm:$0xf]
    %v6118 = vld [vmem:[%s6113 + $0x10] sm:$0xf]
    %v6119 = vld [vmem:[%s6113 + $0x14] sm:$0xf]
    %v6120 = vld [vmem:[%s6113 + $0x18] sm:$0xf]
    %v6121 = vld [vmem:[%s6113 + $0x1c] sm:$0xf]
    %v6122 = vld [vmem:[%s6113 + $0x20] sm:$0xf]
    %v6123 = vld [vmem:[%s6113 + $0x24] sm:$0xf]
    %v6124 = vld [vmem:[%s6113 + $0x28] sm:$0xf]
    %v6125 = vld [vmem:[%s6113 + $0x2c] sm:$0xf]
    %v6126 = vld [vmem:[%s6113 + $0x30] sm:$0xf]
    %v6127 = vld [vmem:[%s6113 + $0x34] sm:$0xf]
    %v6128 = vld [vmem:[%s6113 + $0x38] sm:$0xf]
    %v6129 = vld [vmem:[%s6113 + $0x3c] sm:$0xf]
    %v6130 = vld [vmem:[%s6113 + $0x40] sm:$0xf]
    %v6131 = vld [vmem:[%s6113 + $0x44] sm:$0xf]
    %v6132 = vld [vmem:[%s6113 + $0x48] sm:$0xf]
    %v6133 = vld [vmem:[%s6113 + $0x4c] sm:$0xf]
    %v6134 = vld [vmem:[%s6113 + $0x50] sm:$0xf]
    %v6135 = vld [vmem:[%s6113 + $0x54] sm:$0xf]
    %v6136 = vld [vmem:[%s6113 + $0x58] sm:$0xf]
    %v6137 = vld [vmem:[%s6113 + $0x5c] sm:$0xf]
    %v6138 = vld [vmem:[%s6113 + $0x60] sm:$0xf]
    %v6139 = vld [vmem:[%s6113 + $0x64] sm:$0xf]
    %v6140 = vld [vmem:[%s6113 + $0x68] sm:$0xf]
    %v6141 = vld [vmem:[%s6113 + $0x6c] sm:$0xf]
    %v6142 = vld [vmem:[%s6113 + $0x70] sm:$0xf]
    %v6143 = vld [vmem:[%s6113 + $0x74] sm:$0xf]
    %v6144 = vld [vmem:[%s6113 + $0x78] sm:$0xf]
    %v6145 = vld [vmem:[%s6113 + $0x7c] sm:$0xf]
    %v6148 = vunpack.c.l.b16 %v4569
    %v6149 = vunpack.c.h.b16 %v4569
    %v6150 = vunpack.c.l.b16 %v4570
    %v6151 = vunpack.c.h.b16 %v4570
    %v6152 = vpack.c.b16 %v6150, %v6148
    %v6153 = vpack.c.b16 %v6151, %v6149
    %v6188 = vunpack.c.l.b16 %v6114
    %v6189 = vunpack.c.l.b16 %v6115
    %v6190 = vunpack.c.l.b16 %v6116
    %v6191 = vunpack.c.l.b16 %v6117
    %v6192 = vunpack.c.l.b16 %v6118
    %v6193 = vunpack.c.l.b16 %v6119
    %v6194 = vunpack.c.l.b16 %v6120
    %v6195 = vunpack.c.l.b16 %v6121
    %v6196 = vunpack.c.l.b16 %v6122
    %v6197 = vunpack.c.l.b16 %v6123
    %v6198 = vunpack.c.l.b16 %v6124
    %v6199 = vunpack.c.l.b16 %v6125
    %v6200 = vunpack.c.l.b16 %v6126
    %v6201 = vunpack.c.l.b16 %v6127
    %v6202 = vunpack.c.l.b16 %v6128
    %v6203 = vunpack.c.l.b16 %v6129
    %v6204 = vunpack.c.l.b16 %v6130
    %v6205 = vunpack.c.l.b16 %v6131
    %v6206 = vunpack.c.l.b16 %v6132
    %v6207 = vunpack.c.l.b16 %v6133
    %v6208 = vunpack.c.l.b16 %v6134
    %v6209 = vunpack.c.l.b16 %v6135
    %v6210 = vunpack.c.l.b16 %v6136
    %v6211 = vunpack.c.l.b16 %v6137
    %v6212 = vunpack.c.l.b16 %v6138
    %v6213 = vunpack.c.l.b16 %v6139
    %v6214 = vunpack.c.l.b16 %v6140
    %v6215 = vunpack.c.l.b16 %v6141
    %v6216 = vunpack.c.l.b16 %v6142
    %v6217 = vunpack.c.l.b16 %v6143
    %v6218 = vunpack.c.l.b16 %v6144
    %v6219 = vunpack.c.l.b16 %v6145
    %v6220 = vpack.c.b16 %v6189, %v6188
    %v6221 = vpack.c.b16 %v6191, %v6190
    %v6222 = vpack.c.b16 %v6193, %v6192
    %v6223 = vpack.c.b16 %v6195, %v6194
    %v6224 = vpack.c.b16 %v6197, %v6196
    %v6225 = vpack.c.b16 %v6199, %v6198
    %v6226 = vpack.c.b16 %v6201, %v6200
    %v6227 = vpack.c.b16 %v6203, %v6202
    %v6228 = vpack.c.b16 %v6205, %v6204
    %v6229 = vpack.c.b16 %v6207, %v6206
    %v6230 = vpack.c.b16 %v6209, %v6208
    %v6231 = vpack.c.b16 %v6211, %v6210
    %v6232 = vpack.c.b16 %v6213, %v6212
    %v6233 = vpack.c.b16 %v6215, %v6214
    %v6234 = vpack.c.b16 %v6217, %v6216
    %v6235 = vpack.c.b16 %v6219, %v6218
    %6252 = vmatpush.bf16.msra.mxu0 %v6227
    %6253 = vmatpush.bf16.msra.mxu0 %v6226
    %6254 = vmatpush.bf16.msra.mxu0 %v6225
    %6255 = vmatpush.bf16.msra.mxu0 %v6224
    %6256 = vmatpush.bf16.msra.mxu0 %v6223
    %6257 = vmatpush.bf16.msra.mxu0 %v6222
    %6258 = vmatpush.bf16.msra.mxu0 %v6221
    %6259 = vmatpush.bf16.msra.mxu0 %v6220
    %6260 = vmatmul.bf16.gmra.mxu0 %v6152
    %v6261 = vpop.f32.mrf.mxu0
    %v6262 = vadd.f32 0.0, %v6261
    %v6263 = vpop.f32.mrf.mxu0
    %v6264 = vadd.f32 0.0, %v6263
    %6265 = vdwg.mxu0
    %6266 = vmatpush.bf16.msra.mxu0 %v6235
    %6267 = vmatpush.bf16.msra.mxu0 %v6234
    %6268 = vmatpush.bf16.msra.mxu0 %v6233
    %6269 = vmatpush.bf16.msra.mxu0 %v6232
    %6270 = vmatpush.bf16.msra.mxu0 %v6231
    %6271 = vmatpush.bf16.msra.mxu0 %v6230
    %6272 = vmatpush.bf16.msra.mxu0 %v6229
    %6273 = vmatpush.bf16.msra.mxu0 %v6228
    %6274 = vmatmul.bf16.gmra.mxu0 %v6153
    %v6275 = vpop.f32.mrf.mxu0
    %v6276 = vadd.f32 %v6262, %v6275
    %v6277 = vpop.f32.mrf.mxu0
    %v6278 = vadd.f32 %v6264, %v6277
    %6279 = vdwg.mxu0
    %v6280 = vadd.f32 %v6111, %v6276
    %v6281 = vadd.f32 %v6112, %v6278
    %s6282 = scalar_lea.vmem %s5, 1280
    %v6283 = vld [vmem:[%s6282] sm:$0xf]
    %v6284 = vld [vmem:[%s6282 + $0x4] sm:$0xf]
    %v6285 = vld [vmem:[%s6282 + $0x8] sm:$0xf]
    %v6286 = vld [vmem:[%s6282 + $0xc] sm:$0xf]
    %v6287 = vld [vmem:[%s6282 + $0x10] sm:$0xf]
    %v6288 = vld [vmem:[%s6282 + $0x14] sm:$0xf]
    %v6289 = vld [vmem:[%s6282 + $0x18] sm:$0xf]
    %v6290 = vld [vmem:[%s6282 + $0x1c] sm:$0xf]
    %v6291 = vld [vmem:[%s6282 + $0x20] sm:$0xf]
    %v6292 = vld [vmem:[%s6282 + $0x24] sm:$0xf]
    %v6293 = vld [vmem:[%s6282 + $0x28] sm:$0xf]
    %v6294 = vld [vmem:[%s6282 + $0x2c] sm:$0xf]
    %v6295 = vld [vmem:[%s6282 + $0x30] sm:$0xf]
    %v6296 = vld [vmem:[%s6282 + $0x34] sm:$0xf]
    %v6297 = vld [vmem:[%s6282 + $0x38] sm:$0xf]
    %v6298 = vld [vmem:[%s6282 + $0x3c] sm:$0xf]
    %v6299 = vld [vmem:[%s6282 + $0x40] sm:$0xf]
    %v6300 = vld [vmem:[%s6282 + $0x44] sm:$0xf]
    %v6301 = vld [vmem:[%s6282 + $0x48] sm:$0xf]
    %v6302 = vld [vmem:[%s6282 + $0x4c] sm:$0xf]
    %v6303 = vld [vmem:[%s6282 + $0x50] sm:$0xf]
    %v6304 = vld [vmem:[%s6282 + $0x54] sm:$0xf]
    %v6305 = vld [vmem:[%s6282 + $0x58] sm:$0xf]
    %v6306 = vld [vmem:[%s6282 + $0x5c] sm:$0xf]
    %v6307 = vld [vmem:[%s6282 + $0x60] sm:$0xf]
    %v6308 = vld [vmem:[%s6282 + $0x64] sm:$0xf]
    %v6309 = vld [vmem:[%s6282 + $0x68] sm:$0xf]
    %v6310 = vld [vmem:[%s6282 + $0x6c] sm:$0xf]
    %v6311 = vld [vmem:[%s6282 + $0x70] sm:$0xf]
    %v6312 = vld [vmem:[%s6282 + $0x74] sm:$0xf]
    %v6313 = vld [vmem:[%s6282 + $0x78] sm:$0xf]
    %v6314 = vld [vmem:[%s6282 + $0x7c] sm:$0xf]
    %v6317 = vunpack.c.l.b16 %v4571
    %v6318 = vunpack.c.h.b16 %v4571
    %v6319 = vunpack.c.l.b16 %v4572
    %v6320 = vunpack.c.h.b16 %v4572
    %v6321 = vpack.c.b16 %v6319, %v6317
    %v6322 = vpack.c.b16 %v6320, %v6318
    %v6357 = vunpack.c.l.b16 %v6283
    %v6358 = vunpack.c.l.b16 %v6284
    %v6359 = vunpack.c.l.b16 %v6285
    %v6360 = vunpack.c.l.b16 %v6286
    %v6361 = vunpack.c.l.b16 %v6287
    %v6362 = vunpack.c.l.b16 %v6288
    %v6363 = vunpack.c.l.b16 %v6289
    %v6364 = vunpack.c.l.b16 %v6290
    %v6365 = vunpack.c.l.b16 %v6291
    %v6366 = vunpack.c.l.b16 %v6292
    %v6367 = vunpack.c.l.b16 %v6293
    %v6368 = vunpack.c.l.b16 %v6294
    %v6369 = vunpack.c.l.b16 %v6295
    %v6370 = vunpack.c.l.b16 %v6296
    %v6371 = vunpack.c.l.b16 %v6297
    %v6372 = vunpack.c.l.b16 %v6298
    %v6373 = vunpack.c.l.b16 %v6299
    %v6374 = vunpack.c.l.b16 %v6300
    %v6375 = vunpack.c.l.b16 %v6301
    %v6376 = vunpack.c.l.b16 %v6302
    %v6377 = vunpack.c.l.b16 %v6303
    %v6378 = vunpack.c.l.b16 %v6304
    %v6379 = vunpack.c.l.b16 %v6305
    %v6380 = vunpack.c.l.b16 %v6306
    %v6381 = vunpack.c.l.b16 %v6307
    %v6382 = vunpack.c.l.b16 %v6308
    %v6383 = vunpack.c.l.b16 %v6309
    %v6384 = vunpack.c.l.b16 %v6310
    %v6385 = vunpack.c.l.b16 %v6311
    %v6386 = vunpack.c.l.b16 %v6312
    %v6387 = vunpack.c.l.b16 %v6313
    %v6388 = vunpack.c.l.b16 %v6314
    %v6389 = vpack.c.b16 %v6358, %v6357
    %v6390 = vpack.c.b16 %v6360, %v6359
    %v6391 = vpack.c.b16 %v6362, %v6361
    %v6392 = vpack.c.b16 %v6364, %v6363
    %v6393 = vpack.c.b16 %v6366, %v6365
    %v6394 = vpack.c.b16 %v6368, %v6367
    %v6395 = vpack.c.b16 %v6370, %v6369
    %v6396 = vpack.c.b16 %v6372, %v6371
    %v6397 = vpack.c.b16 %v6374, %v6373
    %v6398 = vpack.c.b16 %v6376, %v6375
    %v6399 = vpack.c.b16 %v6378, %v6377
    %v6400 = vpack.c.b16 %v6380, %v6379
    %v6401 = vpack.c.b16 %v6382, %v6381
    %v6402 = vpack.c.b16 %v6384, %v6383
    %v6403 = vpack.c.b16 %v6386, %v6385
    %v6404 = vpack.c.b16 %v6388, %v6387
    %6421 = vmatpush.bf16.msra.mxu0 %v6396
    %6422 = vmatpush.bf16.msra.mxu0 %v6395
    %6423 = vmatpush.bf16.msra.mxu0 %v6394
    %6424 = vmatpush.bf16.msra.mxu0 %v6393
    %6425 = vmatpush.bf16.msra.mxu0 %v6392
    %6426 = vmatpush.bf16.msra.mxu0 %v6391
    %6427 = vmatpush.bf16.msra.mxu0 %v6390
    %6428 = vmatpush.bf16.msra.mxu0 %v6389
    %6429 = vmatmul.bf16.gmra.mxu0 %v6321
    %v6430 = vpop.f32.mrf.mxu0
    %v6431 = vadd.f32 0.0, %v6430
    %v6432 = vpop.f32.mrf.mxu0
    %v6433 = vadd.f32 0.0, %v6432
    %6434 = vdwg.mxu0
    %6435 = vmatpush.bf16.msra.mxu0 %v6404
    %6436 = vmatpush.bf16.msra.mxu0 %v6403
    %6437 = vmatpush.bf16.msra.mxu0 %v6402
    %6438 = vmatpush.bf16.msra.mxu0 %v6401
    %6439 = vmatpush.bf16.msra.mxu0 %v6400
    %6440 = vmatpush.bf16.msra.mxu0 %v6399
    %6441 = vmatpush.bf16.msra.mxu0 %v6398
    %6442 = vmatpush.bf16.msra.mxu0 %v6397
    %6443 = vmatmul.bf16.gmra.mxu0 %v6322
    %v6444 = vpop.f32.mrf.mxu0
    %v6445 = vadd.f32 %v6431, %v6444
    %v6446 = vpop.f32.mrf.mxu0
    %v6447 = vadd.f32 %v6433, %v6446
    %6448 = vdwg.mxu0
    %v6449 = vadd.f32 %v6280, %v6445
    %v6450 = vadd.f32 %v6281, %v6447
    %s6451 = scalar_lea.vmem %s5, 1408
    %v6452 = vld [vmem:[%s6451] sm:$0xf]
    %v6453 = vld [vmem:[%s6451 + $0x4] sm:$0xf]
    %v6454 = vld [vmem:[%s6451 + $0x8] sm:$0xf]
    %v6455 = vld [vmem:[%s6451 + $0xc] sm:$0xf]
    %v6456 = vld [vmem:[%s6451 + $0x10] sm:$0xf]
    %v6457 = vld [vmem:[%s6451 + $0x14] sm:$0xf]
    %v6458 = vld [vmem:[%s6451 + $0x18] sm:$0xf]
    %v6459 = vld [vmem:[%s6451 + $0x1c] sm:$0xf]
    %v6460 = vld [vmem:[%s6451 + $0x20] sm:$0xf]
    %v6461 = vld [vmem:[%s6451 + $0x24] sm:$0xf]
    %v6462 = vld [vmem:[%s6451 + $0x28] sm:$0xf]
    %v6463 = vld [vmem:[%s6451 + $0x2c] sm:$0xf]
    %v6464 = vld [vmem:[%s6451 + $0x30] sm:$0xf]
    %v6465 = vld [vmem:[%s6451 + $0x34] sm:$0xf]
    %v6466 = vld [vmem:[%s6451 + $0x38] sm:$0xf]
    %v6467 = vld [vmem:[%s6451 + $0x3c] sm:$0xf]
    %v6468 = vld [vmem:[%s6451 + $0x40] sm:$0xf]
    %v6469 = vld [vmem:[%s6451 + $0x44] sm:$0xf]
    %v6470 = vld [vmem:[%s6451 + $0x48] sm:$0xf]
    %v6471 = vld [vmem:[%s6451 + $0x4c] sm:$0xf]
    %v6472 = vld [vmem:[%s6451 + $0x50] sm:$0xf]
    %v6473 = vld [vmem:[%s6451 + $0x54] sm:$0xf]
    %v6474 = vld [vmem:[%s6451 + $0x58] sm:$0xf]
    %v6475 = vld [vmem:[%s6451 + $0x5c] sm:$0xf]
    %v6476 = vld [vmem:[%s6451 + $0x60] sm:$0xf]
    %v6477 = vld [vmem:[%s6451 + $0x64] sm:$0xf]
    %v6478 = vld [vmem:[%s6451 + $0x68] sm:$0xf]
    %v6479 = vld [vmem:[%s6451 + $0x6c] sm:$0xf]
    %v6480 = vld [vmem:[%s6451 + $0x70] sm:$0xf]
    %v6481 = vld [vmem:[%s6451 + $0x74] sm:$0xf]
    %v6482 = vld [vmem:[%s6451 + $0x78] sm:$0xf]
    %v6483 = vld [vmem:[%s6451 + $0x7c] sm:$0xf]
    %v6486 = vunpack.c.l.b16 %v4573
    %v6487 = vunpack.c.h.b16 %v4573
    %v6488 = vunpack.c.l.b16 %v4574
    %v6489 = vunpack.c.h.b16 %v4574
    %v6490 = vpack.c.b16 %v6488, %v6486
    %v6491 = vpack.c.b16 %v6489, %v6487
    %v6526 = vunpack.c.l.b16 %v6452
    %v6527 = vunpack.c.l.b16 %v6453
    %v6528 = vunpack.c.l.b16 %v6454
    %v6529 = vunpack.c.l.b16 %v6455
    %v6530 = vunpack.c.l.b16 %v6456
    %v6531 = vunpack.c.l.b16 %v6457
    %v6532 = vunpack.c.l.b16 %v6458
    %v6533 = vunpack.c.l.b16 %v6459
    %v6534 = vunpack.c.l.b16 %v6460
    %v6535 = vunpack.c.l.b16 %v6461
    %v6536 = vunpack.c.l.b16 %v6462
    %v6537 = vunpack.c.l.b16 %v6463
    %v6538 = vunpack.c.l.b16 %v6464
    %v6539 = vunpack.c.l.b16 %v6465
    %v6540 = vunpack.c.l.b16 %v6466
    %v6541 = vunpack.c.l.b16 %v6467
    %v6542 = vunpack.c.l.b16 %v6468
    %v6543 = vunpack.c.l.b16 %v6469
    %v6544 = vunpack.c.l.b16 %v6470
    %v6545 = vunpack.c.l.b16 %v6471
    %v6546 = vunpack.c.l.b16 %v6472
    %v6547 = vunpack.c.l.b16 %v6473
    %v6548 = vunpack.c.l.b16 %v6474
    %v6549 = vunpack.c.l.b16 %v6475
    %v6550 = vunpack.c.l.b16 %v6476
    %v6551 = vunpack.c.l.b16 %v6477
    %v6552 = vunpack.c.l.b16 %v6478
    %v6553 = vunpack.c.l.b16 %v6479
    %v6554 = vunpack.c.l.b16 %v6480
    %v6555 = vunpack.c.l.b16 %v6481
    %v6556 = vunpack.c.l.b16 %v6482
    %v6557 = vunpack.c.l.b16 %v6483
    %v6558 = vpack.c.b16 %v6527, %v6526
    %v6559 = vpack.c.b16 %v6529, %v6528
    %v6560 = vpack.c.b16 %v6531, %v6530
    %v6561 = vpack.c.b16 %v6533, %v6532
    %v6562 = vpack.c.b16 %v6535, %v6534
    %v6563 = vpack.c.b16 %v6537, %v6536
    %v6564 = vpack.c.b16 %v6539, %v6538
    %v6565 = vpack.c.b16 %v6541, %v6540
    %v6566 = vpack.c.b16 %v6543, %v6542
    %v6567 = vpack.c.b16 %v6545, %v6544
    %v6568 = vpack.c.b16 %v6547, %v6546
    %v6569 = vpack.c.b16 %v6549, %v6548
    %v6570 = vpack.c.b16 %v6551, %v6550
    %v6571 = vpack.c.b16 %v6553, %v6552
    %v6572 = vpack.c.b16 %v6555, %v6554
    %v6573 = vpack.c.b16 %v6557, %v6556
    %6590 = vmatpush.bf16.msra.mxu0 %v6565
    %6591 = vmatpush.bf16.msra.mxu0 %v6564
    %6592 = vmatpush.bf16.msra.mxu0 %v6563
    %6593 = vmatpush.bf16.msra.mxu0 %v6562
    %6594 = vmatpush.bf16.msra.mxu0 %v6561
    %6595 = vmatpush.bf16.msra.mxu0 %v6560
    %6596 = vmatpush.bf16.msra.mxu0 %v6559
    %6597 = vmatpush.bf16.msra.mxu0 %v6558
    %6598 = vmatmul.bf16.gmra.mxu0 %v6490
    %v6599 = vpop.f32.mrf.mxu0
    %v6600 = vadd.f32 0.0, %v6599
    %v6601 = vpop.f32.mrf.mxu0
    %v6602 = vadd.f32 0.0, %v6601
    %6603 = vdwg.mxu0
    %6604 = vmatpush.bf16.msra.mxu0 %v6573
    %6605 = vmatpush.bf16.msra.mxu0 %v6572
    %6606 = vmatpush.bf16.msra.mxu0 %v6571
    %6607 = vmatpush.bf16.msra.mxu0 %v6570
    %6608 = vmatpush.bf16.msra.mxu0 %v6569
    %6609 = vmatpush.bf16.msra.mxu0 %v6568
    %6610 = vmatpush.bf16.msra.mxu0 %v6567
    %6611 = vmatpush.bf16.msra.mxu0 %v6566
    %6612 = vmatmul.bf16.gmra.mxu0 %v6491
    %v6613 = vpop.f32.mrf.mxu0
    %v6614 = vadd.f32 %v6600, %v6613
    %v6615 = vpop.f32.mrf.mxu0
    %v6616 = vadd.f32 %v6602, %v6615
    %6617 = vdwg.mxu0
    %v6618 = vadd.f32 %v6449, %v6614
    %v6619 = vadd.f32 %v6450, %v6616
    %s6620 = scalar_lea.vmem %s5, 1536
    %v6621 = vld [vmem:[%s6620] sm:$0xf]
    %v6622 = vld [vmem:[%s6620 + $0x4] sm:$0xf]
    %v6623 = vld [vmem:[%s6620 + $0x8] sm:$0xf]
    %v6624 = vld [vmem:[%s6620 + $0xc] sm:$0xf]
    %v6625 = vld [vmem:[%s6620 + $0x10] sm:$0xf]
    %v6626 = vld [vmem:[%s6620 + $0x14] sm:$0xf]
    %v6627 = vld [vmem:[%s6620 + $0x18] sm:$0xf]
    %v6628 = vld [vmem:[%s6620 + $0x1c] sm:$0xf]
    %v6629 = vld [vmem:[%s6620 + $0x20] sm:$0xf]
    %v6630 = vld [vmem:[%s6620 + $0x24] sm:$0xf]
    %v6631 = vld [vmem:[%s6620 + $0x28] sm:$0xf]
    %v6632 = vld [vmem:[%s6620 + $0x2c] sm:$0xf]
    %v6633 = vld [vmem:[%s6620 + $0x30] sm:$0xf]
    %v6634 = vld [vmem:[%s6620 + $0x34] sm:$0xf]
    %v6635 = vld [vmem:[%s6620 + $0x38] sm:$0xf]
    %v6636 = vld [vmem:[%s6620 + $0x3c] sm:$0xf]
    %v6637 = vld [vmem:[%s6620 + $0x40] sm:$0xf]
    %v6638 = vld [vmem:[%s6620 + $0x44] sm:$0xf]
    %v6639 = vld [vmem:[%s6620 + $0x48] sm:$0xf]
    %v6640 = vld [vmem:[%s6620 + $0x4c] sm:$0xf]
    %v6641 = vld [vmem:[%s6620 + $0x50] sm:$0xf]
    %v6642 = vld [vmem:[%s6620 + $0x54] sm:$0xf]
    %v6643 = vld [vmem:[%s6620 + $0x58] sm:$0xf]
    %v6644 = vld [vmem:[%s6620 + $0x5c] sm:$0xf]
    %v6645 = vld [vmem:[%s6620 + $0x60] sm:$0xf]
    %v6646 = vld [vmem:[%s6620 + $0x64] sm:$0xf]
    %v6647 = vld [vmem:[%s6620 + $0x68] sm:$0xf]
    %v6648 = vld [vmem:[%s6620 + $0x6c] sm:$0xf]
    %v6649 = vld [vmem:[%s6620 + $0x70] sm:$0xf]
    %v6650 = vld [vmem:[%s6620 + $0x74] sm:$0xf]
    %v6651 = vld [vmem:[%s6620 + $0x78] sm:$0xf]
    %v6652 = vld [vmem:[%s6620 + $0x7c] sm:$0xf]
    %v6655 = vunpack.c.l.b16 %v4575
    %v6656 = vunpack.c.h.b16 %v4575
    %v6657 = vunpack.c.l.b16 %v4576
    %v6658 = vunpack.c.h.b16 %v4576
    %v6659 = vpack.c.b16 %v6657, %v6655
    %v6660 = vpack.c.b16 %v6658, %v6656
    %v6695 = vunpack.c.l.b16 %v6621
    %v6696 = vunpack.c.l.b16 %v6622
    %v6697 = vunpack.c.l.b16 %v6623
    %v6698 = vunpack.c.l.b16 %v6624
    %v6699 = vunpack.c.l.b16 %v6625
    %v6700 = vunpack.c.l.b16 %v6626
    %v6701 = vunpack.c.l.b16 %v6627
    %v6702 = vunpack.c.l.b16 %v6628
    %v6703 = vunpack.c.l.b16 %v6629
    %v6704 = vunpack.c.l.b16 %v6630
    %v6705 = vunpack.c.l.b16 %v6631
    %v6706 = vunpack.c.l.b16 %v6632
    %v6707 = vunpack.c.l.b16 %v6633
    %v6708 = vunpack.c.l.b16 %v6634
    %v6709 = vunpack.c.l.b16 %v6635
    %v6710 = vunpack.c.l.b16 %v6636
    %v6711 = vunpack.c.l.b16 %v6637
    %v6712 = vunpack.c.l.b16 %v6638
    %v6713 = vunpack.c.l.b16 %v6639
    %v6714 = vunpack.c.l.b16 %v6640
    %v6715 = vunpack.c.l.b16 %v6641
    %v6716 = vunpack.c.l.b16 %v6642
    %v6717 = vunpack.c.l.b16 %v6643
    %v6718 = vunpack.c.l.b16 %v6644
    %v6719 = vunpack.c.l.b16 %v6645
    %v6720 = vunpack.c.l.b16 %v6646
    %v6721 = vunpack.c.l.b16 %v6647
    %v6722 = vunpack.c.l.b16 %v6648
    %v6723 = vunpack.c.l.b16 %v6649
    %v6724 = vunpack.c.l.b16 %v6650
    %v6725 = vunpack.c.l.b16 %v6651
    %v6726 = vunpack.c.l.b16 %v6652
    %v6727 = vpack.c.b16 %v6696, %v6695
    %v6728 = vpack.c.b16 %v6698, %v6697
    %v6729 = vpack.c.b16 %v6700, %v6699
    %v6730 = vpack.c.b16 %v6702, %v6701
    %v6731 = vpack.c.b16 %v6704, %v6703
    %v6732 = vpack.c.b16 %v6706, %v6705
    %v6733 = vpack.c.b16 %v6708, %v6707
    %v6734 = vpack.c.b16 %v6710, %v6709
    %v6735 = vpack.c.b16 %v6712, %v6711
    %v6736 = vpack.c.b16 %v6714, %v6713
    %v6737 = vpack.c.b16 %v6716, %v6715
    %v6738 = vpack.c.b16 %v6718, %v6717
    %v6739 = vpack.c.b16 %v6720, %v6719
    %v6740 = vpack.c.b16 %v6722, %v6721
    %v6741 = vpack.c.b16 %v6724, %v6723
    %v6742 = vpack.c.b16 %v6726, %v6725
    %6759 = vmatpush.bf16.msra.mxu0 %v6734
    %6760 = vmatpush.bf16.msra.mxu0 %v6733
    %6761 = vmatpush.bf16.msra.mxu0 %v6732
    %6762 = vmatpush.bf16.msra.mxu0 %v6731
    %6763 = vmatpush.bf16.msra.mxu0 %v6730
    %6764 = vmatpush.bf16.msra.mxu0 %v6729
    %6765 = vmatpush.bf16.msra.mxu0 %v6728
    %6766 = vmatpush.bf16.msra.mxu0 %v6727
    %6767 = vmatmul.bf16.gmra.mxu0 %v6659
    %v6768 = vpop.f32.mrf.mxu0
    %v6769 = vadd.f32 0.0, %v6768
    %v6770 = vpop.f32.mrf.mxu0
    %v6771 = vadd.f32 0.0, %v6770
    %6772 = vdwg.mxu0
    %6773 = vmatpush.bf16.msra.mxu0 %v6742
    %6774 = vmatpush.bf16.msra.mxu0 %v6741
    %6775 = vmatpush.bf16.msra.mxu0 %v6740
    %6776 = vmatpush.bf16.msra.mxu0 %v6739
    %6777 = vmatpush.bf16.msra.mxu0 %v6738
    %6778 = vmatpush.bf16.msra.mxu0 %v6737
    %6779 = vmatpush.bf16.msra.mxu0 %v6736
    %6780 = vmatpush.bf16.msra.mxu0 %v6735
    %6781 = vmatmul.bf16.gmra.mxu0 %v6660
    %v6782 = vpop.f32.mrf.mxu0
    %v6783 = vadd.f32 %v6769, %v6782
    %v6784 = vpop.f32.mrf.mxu0
    %v6785 = vadd.f32 %v6771, %v6784
    %6786 = vdwg.mxu0
    %v6787 = vadd.f32 %v6618, %v6783
    %v6788 = vadd.f32 %v6619, %v6785
    %s6789 = scalar_lea.vmem %s5, 1664
    %v6790 = vld [vmem:[%s6789] sm:$0xf]
    %v6791 = vld [vmem:[%s6789 + $0x4] sm:$0xf]
    %v6792 = vld [vmem:[%s6789 + $0x8] sm:$0xf]
    %v6793 = vld [vmem:[%s6789 + $0xc] sm:$0xf]
    %v6794 = vld [vmem:[%s6789 + $0x10] sm:$0xf]
    %v6795 = vld [vmem:[%s6789 + $0x14] sm:$0xf]
    %v6796 = vld [vmem:[%s6789 + $0x18] sm:$0xf]
    %v6797 = vld [vmem:[%s6789 + $0x1c] sm:$0xf]
    %v6798 = vld [vmem:[%s6789 + $0x20] sm:$0xf]
    %v6799 = vld [vmem:[%s6789 + $0x24] sm:$0xf]
    %v6800 = vld [vmem:[%s6789 + $0x28] sm:$0xf]
    %v6801 = vld [vmem:[%s6789 + $0x2c] sm:$0xf]
    %v6802 = vld [vmem:[%s6789 + $0x30] sm:$0xf]
    %v6803 = vld [vmem:[%s6789 + $0x34] sm:$0xf]
    %v6804 = vld [vmem:[%s6789 + $0x38] sm:$0xf]
    %v6805 = vld [vmem:[%s6789 + $0x3c] sm:$0xf]
    %v6806 = vld [vmem:[%s6789 + $0x40] sm:$0xf]
    %v6807 = vld [vmem:[%s6789 + $0x44] sm:$0xf]
    %v6808 = vld [vmem:[%s6789 + $0x48] sm:$0xf]
    %v6809 = vld [vmem:[%s6789 + $0x4c] sm:$0xf]
    %v6810 = vld [vmem:[%s6789 + $0x50] sm:$0xf]
    %v6811 = vld [vmem:[%s6789 + $0x54] sm:$0xf]
    %v6812 = vld [vmem:[%s6789 + $0x58] sm:$0xf]
    %v6813 = vld [vmem:[%s6789 + $0x5c] sm:$0xf]
    %v6814 = vld [vmem:[%s6789 + $0x60] sm:$0xf]
    %v6815 = vld [vmem:[%s6789 + $0x64] sm:$0xf]
    %v6816 = vld [vmem:[%s6789 + $0x68] sm:$0xf]
    %v6817 = vld [vmem:[%s6789 + $0x6c] sm:$0xf]
    %v6818 = vld [vmem:[%s6789 + $0x70] sm:$0xf]
    %v6819 = vld [vmem:[%s6789 + $0x74] sm:$0xf]
    %v6820 = vld [vmem:[%s6789 + $0x78] sm:$0xf]
    %v6821 = vld [vmem:[%s6789 + $0x7c] sm:$0xf]
    %v6824 = vunpack.c.l.b16 %v4577
    %v6825 = vunpack.c.h.b16 %v4577
    %v6826 = vunpack.c.l.b16 %v4578
    %v6827 = vunpack.c.h.b16 %v4578
    %v6828 = vpack.c.b16 %v6826, %v6824
    %v6829 = vpack.c.b16 %v6827, %v6825
    %v6864 = vunpack.c.l.b16 %v6790
    %v6865 = vunpack.c.l.b16 %v6791
    %v6866 = vunpack.c.l.b16 %v6792
    %v6867 = vunpack.c.l.b16 %v6793
    %v6868 = vunpack.c.l.b16 %v6794
    %v6869 = vunpack.c.l.b16 %v6795
    %v6870 = vunpack.c.l.b16 %v6796
    %v6871 = vunpack.c.l.b16 %v6797
    %v6872 = vunpack.c.l.b16 %v6798
    %v6873 = vunpack.c.l.b16 %v6799
    %v6874 = vunpack.c.l.b16 %v6800
    %v6875 = vunpack.c.l.b16 %v6801
    %v6876 = vunpack.c.l.b16 %v6802
    %v6877 = vunpack.c.l.b16 %v6803
    %v6878 = vunpack.c.l.b16 %v6804
    %v6879 = vunpack.c.l.b16 %v6805
    %v6880 = vunpack.c.l.b16 %v6806
    %v6881 = vunpack.c.l.b16 %v6807
    %v6882 = vunpack.c.l.b16 %v6808
    %v6883 = vunpack.c.l.b16 %v6809
    %v6884 = vunpack.c.l.b16 %v6810
    %v6885 = vunpack.c.l.b16 %v6811
    %v6886 = vunpack.c.l.b16 %v6812
    %v6887 = vunpack.c.l.b16 %v6813
    %v6888 = vunpack.c.l.b16 %v6814
    %v6889 = vunpack.c.l.b16 %v6815
    %v6890 = vunpack.c.l.b16 %v6816
    %v6891 = vunpack.c.l.b16 %v6817
    %v6892 = vunpack.c.l.b16 %v6818
    %v6893 = vunpack.c.l.b16 %v6819
    %v6894 = vunpack.c.l.b16 %v6820
    %v6895 = vunpack.c.l.b16 %v6821
    %v6896 = vpack.c.b16 %v6865, %v6864
    %v6897 = vpack.c.b16 %v6867, %v6866
    %v6898 = vpack.c.b16 %v6869, %v6868
    %v6899 = vpack.c.b16 %v6871, %v6870
    %v6900 = vpack.c.b16 %v6873, %v6872
    %v6901 = vpack.c.b16 %v6875, %v6874
    %v6902 = vpack.c.b16 %v6877, %v6876
    %v6903 = vpack.c.b16 %v6879, %v6878
    %v6904 = vpack.c.b16 %v6881, %v6880
    %v6905 = vpack.c.b16 %v6883, %v6882
    %v6906 = vpack.c.b16 %v6885, %v6884
    %v6907 = vpack.c.b16 %v6887, %v6886
    %v6908 = vpack.c.b16 %v6889, %v6888
    %v6909 = vpack.c.b16 %v6891, %v6890
    %v6910 = vpack.c.b16 %v6893, %v6892
    %v6911 = vpack.c.b16 %v6895, %v6894
    %6928 = vmatpush.bf16.msra.mxu0 %v6903
    %6929 = vmatpush.bf16.msra.mxu0 %v6902
    %6930 = vmatpush.bf16.msra.mxu0 %v6901
    %6931 = vmatpush.bf16.msra.mxu0 %v6900
    %6932 = vmatpush.bf16.msra.mxu0 %v6899
    %6933 = vmatpush.bf16.msra.mxu0 %v6898
    %6934 = vmatpush.bf16.msra.mxu0 %v6897
    %6935 = vmatpush.bf16.msra.mxu0 %v6896
    %6936 = vmatmul.bf16.gmra.mxu0 %v6828
    %v6937 = vpop.f32.mrf.mxu0
    %v6938 = vadd.f32 0.0, %v6937
    %v6939 = vpop.f32.mrf.mxu0
    %v6940 = vadd.f32 0.0, %v6939
    %6941 = vdwg.mxu0
    %6942 = vmatpush.bf16.msra.mxu0 %v6911
    %6943 = vmatpush.bf16.msra.mxu0 %v6910
    %6944 = vmatpush.bf16.msra.mxu0 %v6909
    %6945 = vmatpush.bf16.msra.mxu0 %v6908
    %6946 = vmatpush.bf16.msra.mxu0 %v6907
    %6947 = vmatpush.bf16.msra.mxu0 %v6906
    %6948 = vmatpush.bf16.msra.mxu0 %v6905
    %6949 = vmatpush.bf16.msra.mxu0 %v6904
    %6950 = vmatmul.bf16.gmra.mxu0 %v6829
    %v6951 = vpop.f32.mrf.mxu0
    %v6952 = vadd.f32 %v6938, %v6951
    %v6953 = vpop.f32.mrf.mxu0
    %v6954 = vadd.f32 %v6940, %v6953
    %6955 = vdwg.mxu0
    %v6956 = vadd.f32 %v6787, %v6952
    %v6957 = vadd.f32 %v6788, %v6954
    %s6958 = scalar_lea.vmem %s5, 1792
    %v6959 = vld [vmem:[%s6958] sm:$0xf]
    %v6960 = vld [vmem:[%s6958 + $0x4] sm:$0xf]
    %v6961 = vld [vmem:[%s6958 + $0x8] sm:$0xf]
    %v6962 = vld [vmem:[%s6958 + $0xc] sm:$0xf]
    %v6963 = vld [vmem:[%s6958 + $0x10] sm:$0xf]
    %v6964 = vld [vmem:[%s6958 + $0x14] sm:$0xf]
    %v6965 = vld [vmem:[%s6958 + $0x18] sm:$0xf]
    %v6966 = vld [vmem:[%s6958 + $0x1c] sm:$0xf]
    %v6967 = vld [vmem:[%s6958 + $0x20] sm:$0xf]
    %v6968 = vld [vmem:[%s6958 + $0x24] sm:$0xf]
    %v6969 = vld [vmem:[%s6958 + $0x28] sm:$0xf]
    %v6970 = vld [vmem:[%s6958 + $0x2c] sm:$0xf]
    %v6971 = vld [vmem:[%s6958 + $0x30] sm:$0xf]
    %v6972 = vld [vmem:[%s6958 + $0x34] sm:$0xf]
    %v6973 = vld [vmem:[%s6958 + $0x38] sm:$0xf]
    %v6974 = vld [vmem:[%s6958 + $0x3c] sm:$0xf]
    %v6975 = vld [vmem:[%s6958 + $0x40] sm:$0xf]
    %v6976 = vld [vmem:[%s6958 + $0x44] sm:$0xf]
    %v6977 = vld [vmem:[%s6958 + $0x48] sm:$0xf]
    %v6978 = vld [vmem:[%s6958 + $0x4c] sm:$0xf]
    %v6979 = vld [vmem:[%s6958 + $0x50] sm:$0xf]
    %v6980 = vld [vmem:[%s6958 + $0x54] sm:$0xf]
    %v6981 = vld [vmem:[%s6958 + $0x58] sm:$0xf]
    %v6982 = vld [vmem:[%s6958 + $0x5c] sm:$0xf]
    %v6983 = vld [vmem:[%s6958 + $0x60] sm:$0xf]
    %v6984 = vld [vmem:[%s6958 + $0x64] sm:$0xf]
    %v6985 = vld [vmem:[%s6958 + $0x68] sm:$0xf]
    %v6986 = vld [vmem:[%s6958 + $0x6c] sm:$0xf]
    %v6987 = vld [vmem:[%s6958 + $0x70] sm:$0xf]
    %v6988 = vld [vmem:[%s6958 + $0x74] sm:$0xf]
    %v6989 = vld [vmem:[%s6958 + $0x78] sm:$0xf]
    %v6990 = vld [vmem:[%s6958 + $0x7c] sm:$0xf]
    %v6993 = vunpack.c.l.b16 %v4579
    %v6994 = vunpack.c.h.b16 %v4579
    %v6995 = vunpack.c.l.b16 %v4580
    %v6996 = vunpack.c.h.b16 %v4580
    %v6997 = vpack.c.b16 %v6995, %v6993
    %v6998 = vpack.c.b16 %v6996, %v6994
    %v7033 = vunpack.c.l.b16 %v6959
    %v7034 = vunpack.c.l.b16 %v6960
    %v7035 = vunpack.c.l.b16 %v6961
    %v7036 = vunpack.c.l.b16 %v6962
    %v7037 = vunpack.c.l.b16 %v6963
    %v7038 = vunpack.c.l.b16 %v6964
    %v7039 = vunpack.c.l.b16 %v6965
    %v7040 = vunpack.c.l.b16 %v6966
    %v7041 = vunpack.c.l.b16 %v6967
    %v7042 = vunpack.c.l.b16 %v6968
    %v7043 = vunpack.c.l.b16 %v6969
    %v7044 = vunpack.c.l.b16 %v6970
    %v7045 = vunpack.c.l.b16 %v6971
    %v7046 = vunpack.c.l.b16 %v6972
    %v7047 = vunpack.c.l.b16 %v6973
    %v7048 = vunpack.c.l.b16 %v6974
    %v7049 = vunpack.c.l.b16 %v6975
    %v7050 = vunpack.c.l.b16 %v6976
    %v7051 = vunpack.c.l.b16 %v6977
    %v7052 = vunpack.c.l.b16 %v6978
    %v7053 = vunpack.c.l.b16 %v6979
    %v7054 = vunpack.c.l.b16 %v6980
    %v7055 = vunpack.c.l.b16 %v6981
    %v7056 = vunpack.c.l.b16 %v6982
    %v7057 = vunpack.c.l.b16 %v6983
    %v7058 = vunpack.c.l.b16 %v6984
    %v7059 = vunpack.c.l.b16 %v6985
    %v7060 = vunpack.c.l.b16 %v6986
    %v7061 = vunpack.c.l.b16 %v6987
    %v7062 = vunpack.c.l.b16 %v6988
    %v7063 = vunpack.c.l.b16 %v6989
    %v7064 = vunpack.c.l.b16 %v6990
    %v7065 = vpack.c.b16 %v7034, %v7033
    %v7066 = vpack.c.b16 %v7036, %v7035
    %v7067 = vpack.c.b16 %v7038, %v7037
    %v7068 = vpack.c.b16 %v7040, %v7039
    %v7069 = vpack.c.b16 %v7042, %v7041
    %v7070 = vpack.c.b16 %v7044, %v7043
    %v7071 = vpack.c.b16 %v7046, %v7045
    %v7072 = vpack.c.b16 %v7048, %v7047
    %v7073 = vpack.c.b16 %v7050, %v7049
    %v7074 = vpack.c.b16 %v7052, %v7051
    %v7075 = vpack.c.b16 %v7054, %v7053
    %v7076 = vpack.c.b16 %v7056, %v7055
    %v7077 = vpack.c.b16 %v7058, %v7057
    %v7078 = vpack.c.b16 %v7060, %v7059
    %v7079 = vpack.c.b16 %v7062, %v7061
    %v7080 = vpack.c.b16 %v7064, %v7063
    %7097 = vmatpush.bf16.msra.mxu0 %v7072
    %7098 = vmatpush.bf16.msra.mxu0 %v7071
    %7099 = vmatpush.bf16.msra.mxu0 %v7070
    %7100 = vmatpush.bf16.msra.mxu0 %v7069
    %7101 = vmatpush.bf16.msra.mxu0 %v7068
    %7102 = vmatpush.bf16.msra.mxu0 %v7067
    %7103 = vmatpush.bf16.msra.mxu0 %v7066
    %7104 = vmatpush.bf16.msra.mxu0 %v7065
    %7105 = vmatmul.bf16.gmra.mxu0 %v6997
    %v7106 = vpop.f32.mrf.mxu0
    %v7107 = vadd.f32 0.0, %v7106
    %v7108 = vpop.f32.mrf.mxu0
    %v7109 = vadd.f32 0.0, %v7108
    %7110 = vdwg.mxu0
    %7111 = vmatpush.bf16.msra.mxu0 %v7080
    %7112 = vmatpush.bf16.msra.mxu0 %v7079
    %7113 = vmatpush.bf16.msra.mxu0 %v7078
    %7114 = vmatpush.bf16.msra.mxu0 %v7077
    %7115 = vmatpush.bf16.msra.mxu0 %v7076
    %7116 = vmatpush.bf16.msra.mxu0 %v7075
    %7117 = vmatpush.bf16.msra.mxu0 %v7074
    %7118 = vmatpush.bf16.msra.mxu0 %v7073
    %7119 = vmatmul.bf16.gmra.mxu0 %v6998
    %v7120 = vpop.f32.mrf.mxu0
    %v7121 = vadd.f32 %v7107, %v7120
    %v7122 = vpop.f32.mrf.mxu0
    %v7123 = vadd.f32 %v7109, %v7122
    %7124 = vdwg.mxu0
    %v7125 = vadd.f32 %v6956, %v7121
    %v7126 = vadd.f32 %v6957, %v7123
    %s7127 = scalar_lea.vmem %s5, 1920
    %v7128 = vld [vmem:[%s7127] sm:$0xf]
    %v7129 = vld [vmem:[%s7127 + $0x4] sm:$0xf]
    %v7130 = vld [vmem:[%s7127 + $0x8] sm:$0xf]
    %v7131 = vld [vmem:[%s7127 + $0xc] sm:$0xf]
    %v7132 = vld [vmem:[%s7127 + $0x10] sm:$0xf]
    %v7133 = vld [vmem:[%s7127 + $0x14] sm:$0xf]
    %v7134 = vld [vmem:[%s7127 + $0x18] sm:$0xf]
    %v7135 = vld [vmem:[%s7127 + $0x1c] sm:$0xf]
    %v7136 = vld [vmem:[%s7127 + $0x20] sm:$0xf]
    %v7137 = vld [vmem:[%s7127 + $0x24] sm:$0xf]
    %v7138 = vld [vmem:[%s7127 + $0x28] sm:$0xf]
    %v7139 = vld [vmem:[%s7127 + $0x2c] sm:$0xf]
    %v7140 = vld [vmem:[%s7127 + $0x30] sm:$0xf]
    %v7141 = vld [vmem:[%s7127 + $0x34] sm:$0xf]
    %v7142 = vld [vmem:[%s7127 + $0x38] sm:$0xf]
    %v7143 = vld [vmem:[%s7127 + $0x3c] sm:$0xf]
    %v7144 = vld [vmem:[%s7127 + $0x40] sm:$0xf]
    %v7145 = vld [vmem:[%s7127 + $0x44] sm:$0xf]
    %v7146 = vld [vmem:[%s7127 + $0x48] sm:$0xf]
    %v7147 = vld [vmem:[%s7127 + $0x4c] sm:$0xf]
    %v7148 = vld [vmem:[%s7127 + $0x50] sm:$0xf]
    %v7149 = vld [vmem:[%s7127 + $0x54] sm:$0xf]
    %v7150 = vld [vmem:[%s7127 + $0x58] sm:$0xf]
    %v7151 = vld [vmem:[%s7127 + $0x5c] sm:$0xf]
    %v7152 = vld [vmem:[%s7127 + $0x60] sm:$0xf]
    %v7153 = vld [vmem:[%s7127 + $0x64] sm:$0xf]
    %v7154 = vld [vmem:[%s7127 + $0x68] sm:$0xf]
    %v7155 = vld [vmem:[%s7127 + $0x6c] sm:$0xf]
    %v7156 = vld [vmem:[%s7127 + $0x70] sm:$0xf]
    %v7157 = vld [vmem:[%s7127 + $0x74] sm:$0xf]
    %v7158 = vld [vmem:[%s7127 + $0x78] sm:$0xf]
    %v7159 = vld [vmem:[%s7127 + $0x7c] sm:$0xf]
    %v7162 = vunpack.c.l.b16 %v4581
    %v7163 = vunpack.c.h.b16 %v4581
    %v7164 = vunpack.c.l.b16 %v4582
    %v7165 = vunpack.c.h.b16 %v4582
    %v7166 = vpack.c.b16 %v7164, %v7162
    %v7167 = vpack.c.b16 %v7165, %v7163
    %v7202 = vunpack.c.l.b16 %v7128
    %v7203 = vunpack.c.l.b16 %v7129
    %v7204 = vunpack.c.l.b16 %v7130
    %v7205 = vunpack.c.l.b16 %v7131
    %v7206 = vunpack.c.l.b16 %v7132
    %v7207 = vunpack.c.l.b16 %v7133
    %v7208 = vunpack.c.l.b16 %v7134
    %v7209 = vunpack.c.l.b16 %v7135
    %v7210 = vunpack.c.l.b16 %v7136
    %v7211 = vunpack.c.l.b16 %v7137
    %v7212 = vunpack.c.l.b16 %v7138
    %v7213 = vunpack.c.l.b16 %v7139
    %v7214 = vunpack.c.l.b16 %v7140
    %v7215 = vunpack.c.l.b16 %v7141
    %v7216 = vunpack.c.l.b16 %v7142
    %v7217 = vunpack.c.l.b16 %v7143
    %v7218 = vunpack.c.l.b16 %v7144
    %v7219 = vunpack.c.l.b16 %v7145
    %v7220 = vunpack.c.l.b16 %v7146
    %v7221 = vunpack.c.l.b16 %v7147
    %v7222 = vunpack.c.l.b16 %v7148
    %v7223 = vunpack.c.l.b16 %v7149
    %v7224 = vunpack.c.l.b16 %v7150
    %v7225 = vunpack.c.l.b16 %v7151
    %v7226 = vunpack.c.l.b16 %v7152
    %v7227 = vunpack.c.l.b16 %v7153
    %v7228 = vunpack.c.l.b16 %v7154
    %v7229 = vunpack.c.l.b16 %v7155
    %v7230 = vunpack.c.l.b16 %v7156
    %v7231 = vunpack.c.l.b16 %v7157
    %v7232 = vunpack.c.l.b16 %v7158
    %v7233 = vunpack.c.l.b16 %v7159
    %v7234 = vpack.c.b16 %v7203, %v7202
    %v7235 = vpack.c.b16 %v7205, %v7204
    %v7236 = vpack.c.b16 %v7207, %v7206
    %v7237 = vpack.c.b16 %v7209, %v7208
    %v7238 = vpack.c.b16 %v7211, %v7210
    %v7239 = vpack.c.b16 %v7213, %v7212
    %v7240 = vpack.c.b16 %v7215, %v7214
    %v7241 = vpack.c.b16 %v7217, %v7216
    %v7242 = vpack.c.b16 %v7219, %v7218
    %v7243 = vpack.c.b16 %v7221, %v7220
    %v7244 = vpack.c.b16 %v7223, %v7222
    %v7245 = vpack.c.b16 %v7225, %v7224
    %v7246 = vpack.c.b16 %v7227, %v7226
    %v7247 = vpack.c.b16 %v7229, %v7228
    %v7248 = vpack.c.b16 %v7231, %v7230
    %v7249 = vpack.c.b16 %v7233, %v7232
    %7266 = vmatpush.bf16.msra.mxu0 %v7241
    %7267 = vmatpush.bf16.msra.mxu0 %v7240
    %7268 = vmatpush.bf16.msra.mxu0 %v7239
    %7269 = vmatpush.bf16.msra.mxu0 %v7238
    %7270 = vmatpush.bf16.msra.mxu0 %v7237
    %7271 = vmatpush.bf16.msra.mxu0 %v7236
    %7272 = vmatpush.bf16.msra.mxu0 %v7235
    %7273 = vmatpush.bf16.msra.mxu0 %v7234
    %7274 = vmatmul.bf16.gmra.mxu0 %v7166
    %v7275 = vpop.f32.mrf.mxu0
    %v7276 = vadd.f32 0.0, %v7275
    %v7277 = vpop.f32.mrf.mxu0
    %v7278 = vadd.f32 0.0, %v7277
    %7279 = vdwg.mxu0
    %7280 = vmatpush.bf16.msra.mxu0 %v7249
    %7281 = vmatpush.bf16.msra.mxu0 %v7248
    %7282 = vmatpush.bf16.msra.mxu0 %v7247
    %7283 = vmatpush.bf16.msra.mxu0 %v7246
    %7284 = vmatpush.bf16.msra.mxu0 %v7245
    %7285 = vmatpush.bf16.msra.mxu0 %v7244
    %7286 = vmatpush.bf16.msra.mxu0 %v7243
    %7287 = vmatpush.bf16.msra.mxu0 %v7242
    %7288 = vmatmul.bf16.gmra.mxu0 %v7167
    %v7289 = vpop.f32.mrf.mxu0
    %v7290 = vadd.f32 %v7276, %v7289
    %v7291 = vpop.f32.mrf.mxu0
    %v7292 = vadd.f32 %v7278, %v7291
    %7293 = vdwg.mxu0
    %v7294 = vadd.f32 %v7125, %v7290
    %v7295 = vadd.f32 %v7126, %v7292
    %s7296 = scalar_lea.vmem %s5, 2048
    %v7297 = vld [vmem:[%s7296] sm:$0xf]
    %v7298 = vld [vmem:[%s7296 + $0x4] sm:$0xf]
    %v7299 = vld [vmem:[%s7296 + $0x8] sm:$0xf]
    %v7300 = vld [vmem:[%s7296 + $0xc] sm:$0xf]
    %v7301 = vld [vmem:[%s7296 + $0x10] sm:$0xf]
    %v7302 = vld [vmem:[%s7296 + $0x14] sm:$0xf]
    %v7303 = vld [vmem:[%s7296 + $0x18] sm:$0xf]
    %v7304 = vld [vmem:[%s7296 + $0x1c] sm:$0xf]
    %v7305 = vld [vmem:[%s7296 + $0x20] sm:$0xf]
    %v7306 = vld [vmem:[%s7296 + $0x24] sm:$0xf]
    %v7307 = vld [vmem:[%s7296 + $0x28] sm:$0xf]
    %v7308 = vld [vmem:[%s7296 + $0x2c] sm:$0xf]
    %v7309 = vld [vmem:[%s7296 + $0x30] sm:$0xf]
    %v7310 = vld [vmem:[%s7296 + $0x34] sm:$0xf]
    %v7311 = vld [vmem:[%s7296 + $0x38] sm:$0xf]
    %v7312 = vld [vmem:[%s7296 + $0x3c] sm:$0xf]
    %v7313 = vld [vmem:[%s7296 + $0x40] sm:$0xf]
    %v7314 = vld [vmem:[%s7296 + $0x44] sm:$0xf]
    %v7315 = vld [vmem:[%s7296 + $0x48] sm:$0xf]
    %v7316 = vld [vmem:[%s7296 + $0x4c] sm:$0xf]
    %v7317 = vld [vmem:[%s7296 + $0x50] sm:$0xf]
    %v7318 = vld [vmem:[%s7296 + $0x54] sm:$0xf]
    %v7319 = vld [vmem:[%s7296 + $0x58] sm:$0xf]
    %v7320 = vld [vmem:[%s7296 + $0x5c] sm:$0xf]
    %v7321 = vld [vmem:[%s7296 + $0x60] sm:$0xf]
    %v7322 = vld [vmem:[%s7296 + $0x64] sm:$0xf]
    %v7323 = vld [vmem:[%s7296 + $0x68] sm:$0xf]
    %v7324 = vld [vmem:[%s7296 + $0x6c] sm:$0xf]
    %v7325 = vld [vmem:[%s7296 + $0x70] sm:$0xf]
    %v7326 = vld [vmem:[%s7296 + $0x74] sm:$0xf]
    %v7327 = vld [vmem:[%s7296 + $0x78] sm:$0xf]
    %v7328 = vld [vmem:[%s7296 + $0x7c] sm:$0xf]
    %v7331 = vunpack.c.l.b16 %v4583
    %v7332 = vunpack.c.h.b16 %v4583
    %v7333 = vunpack.c.l.b16 %v4584
    %v7334 = vunpack.c.h.b16 %v4584
    %v7335 = vpack.c.b16 %v7333, %v7331
    %v7336 = vpack.c.b16 %v7334, %v7332
    %v7371 = vunpack.c.l.b16 %v7297
    %v7372 = vunpack.c.l.b16 %v7298
    %v7373 = vunpack.c.l.b16 %v7299
    %v7374 = vunpack.c.l.b16 %v7300
    %v7375 = vunpack.c.l.b16 %v7301
    %v7376 = vunpack.c.l.b16 %v7302
    %v7377 = vunpack.c.l.b16 %v7303
    %v7378 = vunpack.c.l.b16 %v7304
    %v7379 = vunpack.c.l.b16 %v7305
    %v7380 = vunpack.c.l.b16 %v7306
    %v7381 = vunpack.c.l.b16 %v7307
    %v7382 = vunpack.c.l.b16 %v7308
    %v7383 = vunpack.c.l.b16 %v7309
    %v7384 = vunpack.c.l.b16 %v7310
    %v7385 = vunpack.c.l.b16 %v7311
    %v7386 = vunpack.c.l.b16 %v7312
    %v7387 = vunpack.c.l.b16 %v7313
    %v7388 = vunpack.c.l.b16 %v7314
    %v7389 = vunpack.c.l.b16 %v7315
    %v7390 = vunpack.c.l.b16 %v7316
    %v7391 = vunpack.c.l.b16 %v7317
    %v7392 = vunpack.c.l.b16 %v7318
    %v7393 = vunpack.c.l.b16 %v7319
    %v7394 = vunpack.c.l.b16 %v7320
    %v7395 = vunpack.c.l.b16 %v7321
    %v7396 = vunpack.c.l.b16 %v7322
    %v7397 = vunpack.c.l.b16 %v7323
    %v7398 = vunpack.c.l.b16 %v7324
    %v7399 = vunpack.c.l.b16 %v7325
    %v7400 = vunpack.c.l.b16 %v7326
    %v7401 = vunpack.c.l.b16 %v7327
    %v7402 = vunpack.c.l.b16 %v7328
    %v7403 = vpack.c.b16 %v7372, %v7371
    %v7404 = vpack.c.b16 %v7374, %v7373
    %v7405 = vpack.c.b16 %v7376, %v7375
    %v7406 = vpack.c.b16 %v7378, %v7377
    %v7407 = vpack.c.b16 %v7380, %v7379
    %v7408 = vpack.c.b16 %v7382, %v7381
    %v7409 = vpack.c.b16 %v7384, %v7383
    %v7410 = vpack.c.b16 %v7386, %v7385
    %v7411 = vpack.c.b16 %v7388, %v7387
    %v7412 = vpack.c.b16 %v7390, %v7389
    %v7413 = vpack.c.b16 %v7392, %v7391
    %v7414 = vpack.c.b16 %v7394, %v7393
    %v7415 = vpack.c.b16 %v7396, %v7395
    %v7416 = vpack.c.b16 %v7398, %v7397
    %v7417 = vpack.c.b16 %v7400, %v7399
    %v7418 = vpack.c.b16 %v7402, %v7401
    %7435 = vmatpush.bf16.msra.mxu0 %v7410
    %7436 = vmatpush.bf16.msra.mxu0 %v7409
    %7437 = vmatpush.bf16.msra.mxu0 %v7408
    %7438 = vmatpush.bf16.msra.mxu0 %v7407
    %7439 = vmatpush.bf16.msra.mxu0 %v7406
    %7440 = vmatpush.bf16.msra.mxu0 %v7405
    %7441 = vmatpush.bf16.msra.mxu0 %v7404
    %7442 = vmatpush.bf16.msra.mxu0 %v7403
    %7443 = vmatmul.bf16.gmra.mxu0 %v7335
    %v7444 = vpop.f32.mrf.mxu0
    %v7445 = vadd.f32 0.0, %v7444
    %v7446 = vpop.f32.mrf.mxu0
    %v7447 = vadd.f32 0.0, %v7446
    %7448 = vdwg.mxu0
    %7449 = vmatpush.bf16.msra.mxu0 %v7418
    %7450 = vmatpush.bf16.msra.mxu0 %v7417
    %7451 = vmatpush.bf16.msra.mxu0 %v7416
    %7452 = vmatpush.bf16.msra.mxu0 %v7415
    %7453 = vmatpush.bf16.msra.mxu0 %v7414
    %7454 = vmatpush.bf16.msra.mxu0 %v7413
    %7455 = vmatpush.bf16.msra.mxu0 %v7412
    %7456 = vmatpush.bf16.msra.mxu0 %v7411
    %7457 = vmatmul.bf16.gmra.mxu0 %v7336
    %v7458 = vpop.f32.mrf.mxu0
    %v7459 = vadd.f32 %v7445, %v7458
    %v7460 = vpop.f32.mrf.mxu0
    %v7461 = vadd.f32 %v7447, %v7460
    %7462 = vdwg.mxu0
    %v7463 = vadd.f32 %v7294, %v7459
    %v7464 = vadd.f32 %v7295, %v7461
    %s7465 = scalar_lea.vmem %s5, 2176
    %v7466 = vld [vmem:[%s7465] sm:$0xf]
    %v7467 = vld [vmem:[%s7465 + $0x4] sm:$0xf]
    %v7468 = vld [vmem:[%s7465 + $0x8] sm:$0xf]
    %v7469 = vld [vmem:[%s7465 + $0xc] sm:$0xf]
    %v7470 = vld [vmem:[%s7465 + $0x10] sm:$0xf]
    %v7471 = vld [vmem:[%s7465 + $0x14] sm:$0xf]
    %v7472 = vld [vmem:[%s7465 + $0x18] sm:$0xf]
    %v7473 = vld [vmem:[%s7465 + $0x1c] sm:$0xf]
    %v7474 = vld [vmem:[%s7465 + $0x20] sm:$0xf]
    %v7475 = vld [vmem:[%s7465 + $0x24] sm:$0xf]
    %v7476 = vld [vmem:[%s7465 + $0x28] sm:$0xf]
    %v7477 = vld [vmem:[%s7465 + $0x2c] sm:$0xf]
    %v7478 = vld [vmem:[%s7465 + $0x30] sm:$0xf]
    %v7479 = vld [vmem:[%s7465 + $0x34] sm:$0xf]
    %v7480 = vld [vmem:[%s7465 + $0x38] sm:$0xf]
    %v7481 = vld [vmem:[%s7465 + $0x3c] sm:$0xf]
    %v7482 = vld [vmem:[%s7465 + $0x40] sm:$0xf]
    %v7483 = vld [vmem:[%s7465 + $0x44] sm:$0xf]
    %v7484 = vld [vmem:[%s7465 + $0x48] sm:$0xf]
    %v7485 = vld [vmem:[%s7465 + $0x4c] sm:$0xf]
    %v7486 = vld [vmem:[%s7465 + $0x50] sm:$0xf]
    %v7487 = vld [vmem:[%s7465 + $0x54] sm:$0xf]
    %v7488 = vld [vmem:[%s7465 + $0x58] sm:$0xf]
    %v7489 = vld [vmem:[%s7465 + $0x5c] sm:$0xf]
    %v7490 = vld [vmem:[%s7465 + $0x60] sm:$0xf]
    %v7491 = vld [vmem:[%s7465 + $0x64] sm:$0xf]
    %v7492 = vld [vmem:[%s7465 + $0x68] sm:$0xf]
    %v7493 = vld [vmem:[%s7465 + $0x6c] sm:$0xf]
    %v7494 = vld [vmem:[%s7465 + $0x70] sm:$0xf]
    %v7495 = vld [vmem:[%s7465 + $0x74] sm:$0xf]
    %v7496 = vld [vmem:[%s7465 + $0x78] sm:$0xf]
    %v7497 = vld [vmem:[%s7465 + $0x7c] sm:$0xf]
    %v7500 = vunpack.c.l.b16 %v4585
    %v7501 = vunpack.c.h.b16 %v4585
    %v7502 = vunpack.c.l.b16 %v4586
    %v7503 = vunpack.c.h.b16 %v4586
    %v7504 = vpack.c.b16 %v7502, %v7500
    %v7505 = vpack.c.b16 %v7503, %v7501
    %v7540 = vunpack.c.l.b16 %v7466
    %v7541 = vunpack.c.l.b16 %v7467
    %v7542 = vunpack.c.l.b16 %v7468
    %v7543 = vunpack.c.l.b16 %v7469
    %v7544 = vunpack.c.l.b16 %v7470
    %v7545 = vunpack.c.l.b16 %v7471
    %v7546 = vunpack.c.l.b16 %v7472
    %v7547 = vunpack.c.l.b16 %v7473
    %v7548 = vunpack.c.l.b16 %v7474
    %v7549 = vunpack.c.l.b16 %v7475
    %v7550 = vunpack.c.l.b16 %v7476
    %v7551 = vunpack.c.l.b16 %v7477
    %v7552 = vunpack.c.l.b16 %v7478
    %v7553 = vunpack.c.l.b16 %v7479
    %v7554 = vunpack.c.l.b16 %v7480
    %v7555 = vunpack.c.l.b16 %v7481
    %v7556 = vunpack.c.l.b16 %v7482
    %v7557 = vunpack.c.l.b16 %v7483
    %v7558 = vunpack.c.l.b16 %v7484
    %v7559 = vunpack.c.l.b16 %v7485
    %v7560 = vunpack.c.l.b16 %v7486
    %v7561 = vunpack.c.l.b16 %v7487
    %v7562 = vunpack.c.l.b16 %v7488
    %v7563 = vunpack.c.l.b16 %v7489
    %v7564 = vunpack.c.l.b16 %v7490
    %v7565 = vunpack.c.l.b16 %v7491
    %v7566 = vunpack.c.l.b16 %v7492
    %v7567 = vunpack.c.l.b16 %v7493
    %v7568 = vunpack.c.l.b16 %v7494
    %v7569 = vunpack.c.l.b16 %v7495
    %v7570 = vunpack.c.l.b16 %v7496
    %v7571 = vunpack.c.l.b16 %v7497
    %v7572 = vpack.c.b16 %v7541, %v7540
    %v7573 = vpack.c.b16 %v7543, %v7542
    %v7574 = vpack.c.b16 %v7545, %v7544
    %v7575 = vpack.c.b16 %v7547, %v7546
    %v7576 = vpack.c.b16 %v7549, %v7548
    %v7577 = vpack.c.b16 %v7551, %v7550
    %v7578 = vpack.c.b16 %v7553, %v7552
    %v7579 = vpack.c.b16 %v7555, %v7554
    %v7580 = vpack.c.b16 %v7557, %v7556
    %v7581 = vpack.c.b16 %v7559, %v7558
    %v7582 = vpack.c.b16 %v7561, %v7560
    %v7583 = vpack.c.b16 %v7563, %v7562
    %v7584 = vpack.c.b16 %v7565, %v7564
    %v7585 = vpack.c.b16 %v7567, %v7566
    %v7586 = vpack.c.b16 %v7569, %v7568
    %v7587 = vpack.c.b16 %v7571, %v7570
    %7604 = vmatpush.bf16.msra.mxu0 %v7579
    %7605 = vmatpush.bf16.msra.mxu0 %v7578
    %7606 = vmatpush.bf16.msra.mxu0 %v7577
    %7607 = vmatpush.bf16.msra.mxu0 %v7576
    %7608 = vmatpush.bf16.msra.mxu0 %v7575
    %7609 = vmatpush.bf16.msra.mxu0 %v7574
    %7610 = vmatpush.bf16.msra.mxu0 %v7573
    %7611 = vmatpush.bf16.msra.mxu0 %v7572
    %7612 = vmatmul.bf16.gmra.mxu0 %v7504
    %v7613 = vpop.f32.mrf.mxu0
    %v7614 = vadd.f32 0.0, %v7613
    %v7615 = vpop.f32.mrf.mxu0
    %v7616 = vadd.f32 0.0, %v7615
    %7617 = vdwg.mxu0
    %7618 = vmatpush.bf16.msra.mxu0 %v7587
    %7619 = vmatpush.bf16.msra.mxu0 %v7586
    %7620 = vmatpush.bf16.msra.mxu0 %v7585
    %7621 = vmatpush.bf16.msra.mxu0 %v7584
    %7622 = vmatpush.bf16.msra.mxu0 %v7583
    %7623 = vmatpush.bf16.msra.mxu0 %v7582
    %7624 = vmatpush.bf16.msra.mxu0 %v7581
    %7625 = vmatpush.bf16.msra.mxu0 %v7580
    %7626 = vmatmul.bf16.gmra.mxu0 %v7505
    %v7627 = vpop.f32.mrf.mxu0
    %v7628 = vadd.f32 %v7614, %v7627
    %v7629 = vpop.f32.mrf.mxu0
    %v7630 = vadd.f32 %v7616, %v7629
    %7631 = vdwg.mxu0
    %v7632 = vadd.f32 %v7463, %v7628
    %v7633 = vadd.f32 %v7464, %v7630
    %s7634 = scalar_lea.vmem %s5, 2304
    %v7635 = vld [vmem:[%s7634] sm:$0xf]
    %v7636 = vld [vmem:[%s7634 + $0x4] sm:$0xf]
    %v7637 = vld [vmem:[%s7634 + $0x8] sm:$0xf]
    %v7638 = vld [vmem:[%s7634 + $0xc] sm:$0xf]
    %v7639 = vld [vmem:[%s7634 + $0x10] sm:$0xf]
    %v7640 = vld [vmem:[%s7634 + $0x14] sm:$0xf]
    %v7641 = vld [vmem:[%s7634 + $0x18] sm:$0xf]
    %v7642 = vld [vmem:[%s7634 + $0x1c] sm:$0xf]
    %v7643 = vld [vmem:[%s7634 + $0x20] sm:$0xf]
    %v7644 = vld [vmem:[%s7634 + $0x24] sm:$0xf]
    %v7645 = vld [vmem:[%s7634 + $0x28] sm:$0xf]
    %v7646 = vld [vmem:[%s7634 + $0x2c] sm:$0xf]
    %v7647 = vld [vmem:[%s7634 + $0x30] sm:$0xf]
    %v7648 = vld [vmem:[%s7634 + $0x34] sm:$0xf]
    %v7649 = vld [vmem:[%s7634 + $0x38] sm:$0xf]
    %v7650 = vld [vmem:[%s7634 + $0x3c] sm:$0xf]
    %v7651 = vld [vmem:[%s7634 + $0x40] sm:$0xf]
    %v7652 = vld [vmem:[%s7634 + $0x44] sm:$0xf]
    %v7653 = vld [vmem:[%s7634 + $0x48] sm:$0xf]
    %v7654 = vld [vmem:[%s7634 + $0x4c] sm:$0xf]
    %v7655 = vld [vmem:[%s7634 + $0x50] sm:$0xf]
    %v7656 = vld [vmem:[%s7634 + $0x54] sm:$0xf]
    %v7657 = vld [vmem:[%s7634 + $0x58] sm:$0xf]
    %v7658 = vld [vmem:[%s7634 + $0x5c] sm:$0xf]
    %v7659 = vld [vmem:[%s7634 + $0x60] sm:$0xf]
    %v7660 = vld [vmem:[%s7634 + $0x64] sm:$0xf]
    %v7661 = vld [vmem:[%s7634 + $0x68] sm:$0xf]
    %v7662 = vld [vmem:[%s7634 + $0x6c] sm:$0xf]
    %v7663 = vld [vmem:[%s7634 + $0x70] sm:$0xf]
    %v7664 = vld [vmem:[%s7634 + $0x74] sm:$0xf]
    %v7665 = vld [vmem:[%s7634 + $0x78] sm:$0xf]
    %v7666 = vld [vmem:[%s7634 + $0x7c] sm:$0xf]
    %v7669 = vunpack.c.l.b16 %v4587
    %v7670 = vunpack.c.h.b16 %v4587
    %v7671 = vunpack.c.l.b16 %v4588
    %v7672 = vunpack.c.h.b16 %v4588
    %v7673 = vpack.c.b16 %v7671, %v7669
    %v7674 = vpack.c.b16 %v7672, %v7670
    %v7709 = vunpack.c.l.b16 %v7635
    %v7710 = vunpack.c.l.b16 %v7636
    %v7711 = vunpack.c.l.b16 %v7637
    %v7712 = vunpack.c.l.b16 %v7638
    %v7713 = vunpack.c.l.b16 %v7639
    %v7714 = vunpack.c.l.b16 %v7640
    %v7715 = vunpack.c.l.b16 %v7641
    %v7716 = vunpack.c.l.b16 %v7642
    %v7717 = vunpack.c.l.b16 %v7643
    %v7718 = vunpack.c.l.b16 %v7644
    %v7719 = vunpack.c.l.b16 %v7645
    %v7720 = vunpack.c.l.b16 %v7646
    %v7721 = vunpack.c.l.b16 %v7647
    %v7722 = vunpack.c.l.b16 %v7648
    %v7723 = vunpack.c.l.b16 %v7649
    %v7724 = vunpack.c.l.b16 %v7650
    %v7725 = vunpack.c.l.b16 %v7651
    %v7726 = vunpack.c.l.b16 %v7652
    %v7727 = vunpack.c.l.b16 %v7653
    %v7728 = vunpack.c.l.b16 %v7654
    %v7729 = vunpack.c.l.b16 %v7655
    %v7730 = vunpack.c.l.b16 %v7656
    %v7731 = vunpack.c.l.b16 %v7657
    %v7732 = vunpack.c.l.b16 %v7658
    %v7733 = vunpack.c.l.b16 %v7659
    %v7734 = vunpack.c.l.b16 %v7660
    %v7735 = vunpack.c.l.b16 %v7661
    %v7736 = vunpack.c.l.b16 %v7662
    %v7737 = vunpack.c.l.b16 %v7663
    %v7738 = vunpack.c.l.b16 %v7664
    %v7739 = vunpack.c.l.b16 %v7665
    %v7740 = vunpack.c.l.b16 %v7666
    %v7741 = vpack.c.b16 %v7710, %v7709
    %v7742 = vpack.c.b16 %v7712, %v7711
    %v7743 = vpack.c.b16 %v7714, %v7713
    %v7744 = vpack.c.b16 %v7716, %v7715
    %v7745 = vpack.c.b16 %v7718, %v7717
    %v7746 = vpack.c.b16 %v7720, %v7719
    %v7747 = vpack.c.b16 %v7722, %v7721
    %v7748 = vpack.c.b16 %v7724, %v7723
    %v7749 = vpack.c.b16 %v7726, %v7725
    %v7750 = vpack.c.b16 %v7728, %v7727
    %v7751 = vpack.c.b16 %v7730, %v7729
    %v7752 = vpack.c.b16 %v7732, %v7731
    %v7753 = vpack.c.b16 %v7734, %v7733
    %v7754 = vpack.c.b16 %v7736, %v7735
    %v7755 = vpack.c.b16 %v7738, %v7737
    %v7756 = vpack.c.b16 %v7740, %v7739
    %7773 = vmatpush.bf16.msra.mxu0 %v7748
    %7774 = vmatpush.bf16.msra.mxu0 %v7747
    %7775 = vmatpush.bf16.msra.mxu0 %v7746
    %7776 = vmatpush.bf16.msra.mxu0 %v7745
    %7777 = vmatpush.bf16.msra.mxu0 %v7744
    %7778 = vmatpush.bf16.msra.mxu0 %v7743
    %7779 = vmatpush.bf16.msra.mxu0 %v7742
    %7780 = vmatpush.bf16.msra.mxu0 %v7741
    %7781 = vmatmul.bf16.gmra.mxu0 %v7673
    %v7782 = vpop.f32.mrf.mxu0
    %v7783 = vadd.f32 0.0, %v7782
    %v7784 = vpop.f32.mrf.mxu0
    %v7785 = vadd.f32 0.0, %v7784
    %7786 = vdwg.mxu0
    %7787 = vmatpush.bf16.msra.mxu0 %v7756
    %7788 = vmatpush.bf16.msra.mxu0 %v7755
    %7789 = vmatpush.bf16.msra.mxu0 %v7754
    %7790 = vmatpush.bf16.msra.mxu0 %v7753
    %7791 = vmatpush.bf16.msra.mxu0 %v7752
    %7792 = vmatpush.bf16.msra.mxu0 %v7751
    %7793 = vmatpush.bf16.msra.mxu0 %v7750
    %7794 = vmatpush.bf16.msra.mxu0 %v7749
    %7795 = vmatmul.bf16.gmra.mxu0 %v7674
    %v7796 = vpop.f32.mrf.mxu0
    %v7797 = vadd.f32 %v7783, %v7796
    %v7798 = vpop.f32.mrf.mxu0
    %v7799 = vadd.f32 %v7785, %v7798
    %7800 = vdwg.mxu0
    %v7801 = vadd.f32 %v7632, %v7797
    %v7802 = vadd.f32 %v7633, %v7799
    %s7803 = scalar_lea.vmem %s5, 2432
    %v7804 = vld [vmem:[%s7803] sm:$0xf]
    %v7805 = vld [vmem:[%s7803 + $0x4] sm:$0xf]
    %v7806 = vld [vmem:[%s7803 + $0x8] sm:$0xf]
    %v7807 = vld [vmem:[%s7803 + $0xc] sm:$0xf]
    %v7808 = vld [vmem:[%s7803 + $0x10] sm:$0xf]
    %v7809 = vld [vmem:[%s7803 + $0x14] sm:$0xf]
    %v7810 = vld [vmem:[%s7803 + $0x18] sm:$0xf]
    %v7811 = vld [vmem:[%s7803 + $0x1c] sm:$0xf]
    %v7812 = vld [vmem:[%s7803 + $0x20] sm:$0xf]
    %v7813 = vld [vmem:[%s7803 + $0x24] sm:$0xf]
    %v7814 = vld [vmem:[%s7803 + $0x28] sm:$0xf]
    %v7815 = vld [vmem:[%s7803 + $0x2c] sm:$0xf]
    %v7816 = vld [vmem:[%s7803 + $0x30] sm:$0xf]
    %v7817 = vld [vmem:[%s7803 + $0x34] sm:$0xf]
    %v7818 = vld [vmem:[%s7803 + $0x38] sm:$0xf]
    %v7819 = vld [vmem:[%s7803 + $0x3c] sm:$0xf]
    %v7820 = vld [vmem:[%s7803 + $0x40] sm:$0xf]
    %v7821 = vld [vmem:[%s7803 + $0x44] sm:$0xf]
    %v7822 = vld [vmem:[%s7803 + $0x48] sm:$0xf]
    %v7823 = vld [vmem:[%s7803 + $0x4c] sm:$0xf]
    %v7824 = vld [vmem:[%s7803 + $0x50] sm:$0xf]
    %v7825 = vld [vmem:[%s7803 + $0x54] sm:$0xf]
    %v7826 = vld [vmem:[%s7803 + $0x58] sm:$0xf]
    %v7827 = vld [vmem:[%s7803 + $0x5c] sm:$0xf]
    %v7828 = vld [vmem:[%s7803 + $0x60] sm:$0xf]
    %v7829 = vld [vmem:[%s7803 + $0x64] sm:$0xf]
    %v7830 = vld [vmem:[%s7803 + $0x68] sm:$0xf]
    %v7831 = vld [vmem:[%s7803 + $0x6c] sm:$0xf]
    %v7832 = vld [vmem:[%s7803 + $0x70] sm:$0xf]
    %v7833 = vld [vmem:[%s7803 + $0x74] sm:$0xf]
    %v7834 = vld [vmem:[%s7803 + $0x78] sm:$0xf]
    %v7835 = vld [vmem:[%s7803 + $0x7c] sm:$0xf]
    %v7838 = vunpack.c.l.b16 %v4589
    %v7839 = vunpack.c.h.b16 %v4589
    %v7840 = vunpack.c.l.b16 %v4590
    %v7841 = vunpack.c.h.b16 %v4590
    %v7842 = vpack.c.b16 %v7840, %v7838
    %v7843 = vpack.c.b16 %v7841, %v7839
    %v7878 = vunpack.c.l.b16 %v7804
    %v7879 = vunpack.c.l.b16 %v7805
    %v7880 = vunpack.c.l.b16 %v7806
    %v7881 = vunpack.c.l.b16 %v7807
    %v7882 = vunpack.c.l.b16 %v7808
    %v7883 = vunpack.c.l.b16 %v7809
    %v7884 = vunpack.c.l.b16 %v7810
    %v7885 = vunpack.c.l.b16 %v7811
    %v7886 = vunpack.c.l.b16 %v7812
    %v7887 = vunpack.c.l.b16 %v7813
    %v7888 = vunpack.c.l.b16 %v7814
    %v7889 = vunpack.c.l.b16 %v7815
    %v7890 = vunpack.c.l.b16 %v7816
    %v7891 = vunpack.c.l.b16 %v7817
    %v7892 = vunpack.c.l.b16 %v7818
    %v7893 = vunpack.c.l.b16 %v7819
    %v7894 = vunpack.c.l.b16 %v7820
    %v7895 = vunpack.c.l.b16 %v7821
    %v7896 = vunpack.c.l.b16 %v7822
    %v7897 = vunpack.c.l.b16 %v7823
    %v7898 = vunpack.c.l.b16 %v7824
    %v7899 = vunpack.c.l.b16 %v7825
    %v7900 = vunpack.c.l.b16 %v7826
    %v7901 = vunpack.c.l.b16 %v7827
    %v7902 = vunpack.c.l.b16 %v7828
    %v7903 = vunpack.c.l.b16 %v7829
    %v7904 = vunpack.c.l.b16 %v7830
    %v7905 = vunpack.c.l.b16 %v7831
    %v7906 = vunpack.c.l.b16 %v7832
    %v7907 = vunpack.c.l.b16 %v7833
    %v7908 = vunpack.c.l.b16 %v7834
    %v7909 = vunpack.c.l.b16 %v7835
    %v7910 = vpack.c.b16 %v7879, %v7878
    %v7911 = vpack.c.b16 %v7881, %v7880
    %v7912 = vpack.c.b16 %v7883, %v7882
    %v7913 = vpack.c.b16 %v7885, %v7884
    %v7914 = vpack.c.b16 %v7887, %v7886
    %v7915 = vpack.c.b16 %v7889, %v7888
    %v7916 = vpack.c.b16 %v7891, %v7890
    %v7917 = vpack.c.b16 %v7893, %v7892
    %v7918 = vpack.c.b16 %v7895, %v7894
    %v7919 = vpack.c.b16 %v7897, %v7896
    %v7920 = vpack.c.b16 %v7899, %v7898
    %v7921 = vpack.c.b16 %v7901, %v7900
    %v7922 = vpack.c.b16 %v7903, %v7902
    %v7923 = vpack.c.b16 %v7905, %v7904
    %v7924 = vpack.c.b16 %v7907, %v7906
    %v7925 = vpack.c.b16 %v7909, %v7908
    %7942 = vmatpush.bf16.msra.mxu0 %v7917
    %7943 = vmatpush.bf16.msra.mxu0 %v7916
    %7944 = vmatpush.bf16.msra.mxu0 %v7915
    %7945 = vmatpush.bf16.msra.mxu0 %v7914
    %7946 = vmatpush.bf16.msra.mxu0 %v7913
    %7947 = vmatpush.bf16.msra.mxu0 %v7912
    %7948 = vmatpush.bf16.msra.mxu0 %v7911
    %7949 = vmatpush.bf16.msra.mxu0 %v7910
    %7950 = vmatmul.bf16.gmra.mxu0 %v7842
    %v7951 = vpop.f32.mrf.mxu0
    %v7952 = vadd.f32 0.0, %v7951
    %v7953 = vpop.f32.mrf.mxu0
    %v7954 = vadd.f32 0.0, %v7953
    %7955 = vdwg.mxu0
    %7956 = vmatpush.bf16.msra.mxu0 %v7925
    %7957 = vmatpush.bf16.msra.mxu0 %v7924
    %7958 = vmatpush.bf16.msra.mxu0 %v7923
    %7959 = vmatpush.bf16.msra.mxu0 %v7922
    %7960 = vmatpush.bf16.msra.mxu0 %v7921
    %7961 = vmatpush.bf16.msra.mxu0 %v7920
    %7962 = vmatpush.bf16.msra.mxu0 %v7919
    %7963 = vmatpush.bf16.msra.mxu0 %v7918
    %7964 = vmatmul.bf16.gmra.mxu0 %v7843
    %v7965 = vpop.f32.mrf.mxu0
    %v7966 = vadd.f32 %v7952, %v7965
    %v7967 = vpop.f32.mrf.mxu0
    %v7968 = vadd.f32 %v7954, %v7967
    %7969 = vdwg.mxu0
    %v7970 = vadd.f32 %v7801, %v7966
    %v7971 = vadd.f32 %v7802, %v7968
    %s7972 = scalar_lea.vmem %s5, 2560
    %v7973 = vld [vmem:[%s7972] sm:$0xf]
    %v7974 = vld [vmem:[%s7972 + $0x4] sm:$0xf]
    %v7975 = vld [vmem:[%s7972 + $0x8] sm:$0xf]
    %v7976 = vld [vmem:[%s7972 + $0xc] sm:$0xf]
    %v7977 = vld [vmem:[%s7972 + $0x10] sm:$0xf]
    %v7978 = vld [vmem:[%s7972 + $0x14] sm:$0xf]
    %v7979 = vld [vmem:[%s7972 + $0x18] sm:$0xf]
    %v7980 = vld [vmem:[%s7972 + $0x1c] sm:$0xf]
    %v7981 = vld [vmem:[%s7972 + $0x20] sm:$0xf]
    %v7982 = vld [vmem:[%s7972 + $0x24] sm:$0xf]
    %v7983 = vld [vmem:[%s7972 + $0x28] sm:$0xf]
    %v7984 = vld [vmem:[%s7972 + $0x2c] sm:$0xf]
    %v7985 = vld [vmem:[%s7972 + $0x30] sm:$0xf]
    %v7986 = vld [vmem:[%s7972 + $0x34] sm:$0xf]
    %v7987 = vld [vmem:[%s7972 + $0x38] sm:$0xf]
    %v7988 = vld [vmem:[%s7972 + $0x3c] sm:$0xf]
    %v7989 = vld [vmem:[%s7972 + $0x40] sm:$0xf]
    %v7990 = vld [vmem:[%s7972 + $0x44] sm:$0xf]
    %v7991 = vld [vmem:[%s7972 + $0x48] sm:$0xf]
    %v7992 = vld [vmem:[%s7972 + $0x4c] sm:$0xf]
    %v7993 = vld [vmem:[%s7972 + $0x50] sm:$0xf]
    %v7994 = vld [vmem:[%s7972 + $0x54] sm:$0xf]
    %v7995 = vld [vmem:[%s7972 + $0x58] sm:$0xf]
    %v7996 = vld [vmem:[%s7972 + $0x5c] sm:$0xf]
    %v7997 = vld [vmem:[%s7972 + $0x60] sm:$0xf]
    %v7998 = vld [vmem:[%s7972 + $0x64] sm:$0xf]
    %v7999 = vld [vmem:[%s7972 + $0x68] sm:$0xf]
    %v8000 = vld [vmem:[%s7972 + $0x6c] sm:$0xf]
    %v8001 = vld [vmem:[%s7972 + $0x70] sm:$0xf]
    %v8002 = vld [vmem:[%s7972 + $0x74] sm:$0xf]
    %v8003 = vld [vmem:[%s7972 + $0x78] sm:$0xf]
    %v8004 = vld [vmem:[%s7972 + $0x7c] sm:$0xf]
    %v8007 = vunpack.c.l.b16 %v4591
    %v8008 = vunpack.c.h.b16 %v4591
    %v8009 = vunpack.c.l.b16 %v4592
    %v8010 = vunpack.c.h.b16 %v4592
    %v8011 = vpack.c.b16 %v8009, %v8007
    %v8012 = vpack.c.b16 %v8010, %v8008
    %v8047 = vunpack.c.l.b16 %v7973
    %v8048 = vunpack.c.l.b16 %v7974
    %v8049 = vunpack.c.l.b16 %v7975
    %v8050 = vunpack.c.l.b16 %v7976
    %v8051 = vunpack.c.l.b16 %v7977
    %v8052 = vunpack.c.l.b16 %v7978
    %v8053 = vunpack.c.l.b16 %v7979
    %v8054 = vunpack.c.l.b16 %v7980
    %v8055 = vunpack.c.l.b16 %v7981
    %v8056 = vunpack.c.l.b16 %v7982
    %v8057 = vunpack.c.l.b16 %v7983
    %v8058 = vunpack.c.l.b16 %v7984
    %v8059 = vunpack.c.l.b16 %v7985
    %v8060 = vunpack.c.l.b16 %v7986
    %v8061 = vunpack.c.l.b16 %v7987
    %v8062 = vunpack.c.l.b16 %v7988
    %v8063 = vunpack.c.l.b16 %v7989
    %v8064 = vunpack.c.l.b16 %v7990
    %v8065 = vunpack.c.l.b16 %v7991
    %v8066 = vunpack.c.l.b16 %v7992
    %v8067 = vunpack.c.l.b16 %v7993
    %v8068 = vunpack.c.l.b16 %v7994
    %v8069 = vunpack.c.l.b16 %v7995
    %v8070 = vunpack.c.l.b16 %v7996
    %v8071 = vunpack.c.l.b16 %v7997
    %v8072 = vunpack.c.l.b16 %v7998
    %v8073 = vunpack.c.l.b16 %v7999
    %v8074 = vunpack.c.l.b16 %v8000
    %v8075 = vunpack.c.l.b16 %v8001
    %v8076 = vunpack.c.l.b16 %v8002
    %v8077 = vunpack.c.l.b16 %v8003
    %v8078 = vunpack.c.l.b16 %v8004
    %v8079 = vpack.c.b16 %v8048, %v8047
    %v8080 = vpack.c.b16 %v8050, %v8049
    %v8081 = vpack.c.b16 %v8052, %v8051
    %v8082 = vpack.c.b16 %v8054, %v8053
    %v8083 = vpack.c.b16 %v8056, %v8055
    %v8084 = vpack.c.b16 %v8058, %v8057
    %v8085 = vpack.c.b16 %v8060, %v8059
    %v8086 = vpack.c.b16 %v8062, %v8061
    %v8087 = vpack.c.b16 %v8064, %v8063
    %v8088 = vpack.c.b16 %v8066, %v8065
    %v8089 = vpack.c.b16 %v8068, %v8067
    %v8090 = vpack.c.b16 %v8070, %v8069
    %v8091 = vpack.c.b16 %v8072, %v8071
    %v8092 = vpack.c.b16 %v8074, %v8073
    %v8093 = vpack.c.b16 %v8076, %v8075
    %v8094 = vpack.c.b16 %v8078, %v8077
    %8111 = vmatpush.bf16.msra.mxu0 %v8086
    %8112 = vmatpush.bf16.msra.mxu0 %v8085
    %8113 = vmatpush.bf16.msra.mxu0 %v8084
    %8114 = vmatpush.bf16.msra.mxu0 %v8083
    %8115 = vmatpush.bf16.msra.mxu0 %v8082
    %8116 = vmatpush.bf16.msra.mxu0 %v8081
    %8117 = vmatpush.bf16.msra.mxu0 %v8080
    %8118 = vmatpush.bf16.msra.mxu0 %v8079
    %8119 = vmatmul.bf16.gmra.mxu0 %v8011
    %v8120 = vpop.f32.mrf.mxu0
    %v8121 = vadd.f32 0.0, %v8120
    %v8122 = vpop.f32.mrf.mxu0
    %v8123 = vadd.f32 0.0, %v8122
    %8124 = vdwg.mxu0
    %8125 = vmatpush.bf16.msra.mxu0 %v8094
    %8126 = vmatpush.bf16.msra.mxu0 %v8093
    %8127 = vmatpush.bf16.msra.mxu0 %v8092
    %8128 = vmatpush.bf16.msra.mxu0 %v8091
    %8129 = vmatpush.bf16.msra.mxu0 %v8090
    %8130 = vmatpush.bf16.msra.mxu0 %v8089
    %8131 = vmatpush.bf16.msra.mxu0 %v8088
    %8132 = vmatpush.bf16.msra.mxu0 %v8087
    %8133 = vmatmul.bf16.gmra.mxu0 %v8012
    %v8134 = vpop.f32.mrf.mxu0
    %v8135 = vadd.f32 %v8121, %v8134
    %v8136 = vpop.f32.mrf.mxu0
    %v8137 = vadd.f32 %v8123, %v8136
    %8138 = vdwg.mxu0
    %v8139 = vadd.f32 %v7970, %v8135
    %v8140 = vadd.f32 %v7971, %v8137
    %s8141 = scalar_lea.vmem %s5, 2688
    %v8142 = vld [vmem:[%s8141] sm:$0xf]
    %v8143 = vld [vmem:[%s8141 + $0x4] sm:$0xf]
    %v8144 = vld [vmem:[%s8141 + $0x8] sm:$0xf]
    %v8145 = vld [vmem:[%s8141 + $0xc] sm:$0xf]
    %v8146 = vld [vmem:[%s8141 + $0x10] sm:$0xf]
    %v8147 = vld [vmem:[%s8141 + $0x14] sm:$0xf]
    %v8148 = vld [vmem:[%s8141 + $0x18] sm:$0xf]
    %v8149 = vld [vmem:[%s8141 + $0x1c] sm:$0xf]
    %v8150 = vld [vmem:[%s8141 + $0x20] sm:$0xf]
    %v8151 = vld [vmem:[%s8141 + $0x24] sm:$0xf]
    %v8152 = vld [vmem:[%s8141 + $0x28] sm:$0xf]
    %v8153 = vld [vmem:[%s8141 + $0x2c] sm:$0xf]
    %v8154 = vld [vmem:[%s8141 + $0x30] sm:$0xf]
    %v8155 = vld [vmem:[%s8141 + $0x34] sm:$0xf]
    %v8156 = vld [vmem:[%s8141 + $0x38] sm:$0xf]
    %v8157 = vld [vmem:[%s8141 + $0x3c] sm:$0xf]
    %v8158 = vld [vmem:[%s8141 + $0x40] sm:$0xf]
    %v8159 = vld [vmem:[%s8141 + $0x44] sm:$0xf]
    %v8160 = vld [vmem:[%s8141 + $0x48] sm:$0xf]
    %v8161 = vld [vmem:[%s8141 + $0x4c] sm:$0xf]
    %v8162 = vld [vmem:[%s8141 + $0x50] sm:$0xf]
    %v8163 = vld [vmem:[%s8141 + $0x54] sm:$0xf]
    %v8164 = vld [vmem:[%s8141 + $0x58] sm:$0xf]
    %v8165 = vld [vmem:[%s8141 + $0x5c] sm:$0xf]
    %v8166 = vld [vmem:[%s8141 + $0x60] sm:$0xf]
    %v8167 = vld [vmem:[%s8141 + $0x64] sm:$0xf]
    %v8168 = vld [vmem:[%s8141 + $0x68] sm:$0xf]
    %v8169 = vld [vmem:[%s8141 + $0x6c] sm:$0xf]
    %v8170 = vld [vmem:[%s8141 + $0x70] sm:$0xf]
    %v8171 = vld [vmem:[%s8141 + $0x74] sm:$0xf]
    %v8172 = vld [vmem:[%s8141 + $0x78] sm:$0xf]
    %v8173 = vld [vmem:[%s8141 + $0x7c] sm:$0xf]
    %v8176 = vunpack.c.l.b16 %v4593
    %v8177 = vunpack.c.h.b16 %v4593
    %v8178 = vunpack.c.l.b16 %v4594
    %v8179 = vunpack.c.h.b16 %v4594
    %v8180 = vpack.c.b16 %v8178, %v8176
    %v8181 = vpack.c.b16 %v8179, %v8177
    %v8216 = vunpack.c.l.b16 %v8142
    %v8217 = vunpack.c.l.b16 %v8143
    %v8218 = vunpack.c.l.b16 %v8144
    %v8219 = vunpack.c.l.b16 %v8145
    %v8220 = vunpack.c.l.b16 %v8146
    %v8221 = vunpack.c.l.b16 %v8147
    %v8222 = vunpack.c.l.b16 %v8148
    %v8223 = vunpack.c.l.b16 %v8149
    %v8224 = vunpack.c.l.b16 %v8150
    %v8225 = vunpack.c.l.b16 %v8151
    %v8226 = vunpack.c.l.b16 %v8152
    %v8227 = vunpack.c.l.b16 %v8153
    %v8228 = vunpack.c.l.b16 %v8154
    %v8229 = vunpack.c.l.b16 %v8155
    %v8230 = vunpack.c.l.b16 %v8156
    %v8231 = vunpack.c.l.b16 %v8157
    %v8232 = vunpack.c.l.b16 %v8158
    %v8233 = vunpack.c.l.b16 %v8159
    %v8234 = vunpack.c.l.b16 %v8160
    %v8235 = vunpack.c.l.b16 %v8161
    %v8236 = vunpack.c.l.b16 %v8162
    %v8237 = vunpack.c.l.b16 %v8163
    %v8238 = vunpack.c.l.b16 %v8164
    %v8239 = vunpack.c.l.b16 %v8165
    %v8240 = vunpack.c.l.b16 %v8166
    %v8241 = vunpack.c.l.b16 %v8167
    %v8242 = vunpack.c.l.b16 %v8168
    %v8243 = vunpack.c.l.b16 %v8169
    %v8244 = vunpack.c.l.b16 %v8170
    %v8245 = vunpack.c.l.b16 %v8171
    %v8246 = vunpack.c.l.b16 %v8172
    %v8247 = vunpack.c.l.b16 %v8173
    %v8248 = vpack.c.b16 %v8217, %v8216
    %v8249 = vpack.c.b16 %v8219, %v8218
    %v8250 = vpack.c.b16 %v8221, %v8220
    %v8251 = vpack.c.b16 %v8223, %v8222
    %v8252 = vpack.c.b16 %v8225, %v8224
    %v8253 = vpack.c.b16 %v8227, %v8226
    %v8254 = vpack.c.b16 %v8229, %v8228
    %v8255 = vpack.c.b16 %v8231, %v8230
    %v8256 = vpack.c.b16 %v8233, %v8232
    %v8257 = vpack.c.b16 %v8235, %v8234
    %v8258 = vpack.c.b16 %v8237, %v8236
    %v8259 = vpack.c.b16 %v8239, %v8238
    %v8260 = vpack.c.b16 %v8241, %v8240
    %v8261 = vpack.c.b16 %v8243, %v8242
    %v8262 = vpack.c.b16 %v8245, %v8244
    %v8263 = vpack.c.b16 %v8247, %v8246
    %8280 = vmatpush.bf16.msra.mxu0 %v8255
    %8281 = vmatpush.bf16.msra.mxu0 %v8254
    %8282 = vmatpush.bf16.msra.mxu0 %v8253
    %8283 = vmatpush.bf16.msra.mxu0 %v8252
    %8284 = vmatpush.bf16.msra.mxu0 %v8251
    %8285 = vmatpush.bf16.msra.mxu0 %v8250
    %8286 = vmatpush.bf16.msra.mxu0 %v8249
    %8287 = vmatpush.bf16.msra.mxu0 %v8248
    %8288 = vmatmul.bf16.gmra.mxu0 %v8180
    %v8289 = vpop.f32.mrf.mxu0
    %v8290 = vadd.f32 0.0, %v8289
    %v8291 = vpop.f32.mrf.mxu0
    %v8292 = vadd.f32 0.0, %v8291
    %8293 = vdwg.mxu0
    %8294 = vmatpush.bf16.msra.mxu0 %v8263
    %8295 = vmatpush.bf16.msra.mxu0 %v8262
    %8296 = vmatpush.bf16.msra.mxu0 %v8261
    %8297 = vmatpush.bf16.msra.mxu0 %v8260
    %8298 = vmatpush.bf16.msra.mxu0 %v8259
    %8299 = vmatpush.bf16.msra.mxu0 %v8258
    %8300 = vmatpush.bf16.msra.mxu0 %v8257
    %8301 = vmatpush.bf16.msra.mxu0 %v8256
    %8302 = vmatmul.bf16.gmra.mxu0 %v8181
    %v8303 = vpop.f32.mrf.mxu0
    %v8304 = vadd.f32 %v8290, %v8303
    %v8305 = vpop.f32.mrf.mxu0
    %v8306 = vadd.f32 %v8292, %v8305
    %8307 = vdwg.mxu0
    %v8308 = vadd.f32 %v8139, %v8304
    %v8309 = vadd.f32 %v8140, %v8306
    %s8310 = scalar_lea.vmem %s5, 2816
    %v8311 = vld [vmem:[%s8310] sm:$0xf]
    %v8312 = vld [vmem:[%s8310 + $0x4] sm:$0xf]
    %v8313 = vld [vmem:[%s8310 + $0x8] sm:$0xf]
    %v8314 = vld [vmem:[%s8310 + $0xc] sm:$0xf]
    %v8315 = vld [vmem:[%s8310 + $0x10] sm:$0xf]
    %v8316 = vld [vmem:[%s8310 + $0x14] sm:$0xf]
    %v8317 = vld [vmem:[%s8310 + $0x18] sm:$0xf]
    %v8318 = vld [vmem:[%s8310 + $0x1c] sm:$0xf]
    %v8319 = vld [vmem:[%s8310 + $0x20] sm:$0xf]
    %v8320 = vld [vmem:[%s8310 + $0x24] sm:$0xf]
    %v8321 = vld [vmem:[%s8310 + $0x28] sm:$0xf]
    %v8322 = vld [vmem:[%s8310 + $0x2c] sm:$0xf]
    %v8323 = vld [vmem:[%s8310 + $0x30] sm:$0xf]
    %v8324 = vld [vmem:[%s8310 + $0x34] sm:$0xf]
    %v8325 = vld [vmem:[%s8310 + $0x38] sm:$0xf]
    %v8326 = vld [vmem:[%s8310 + $0x3c] sm:$0xf]
    %v8327 = vld [vmem:[%s8310 + $0x40] sm:$0xf]
    %v8328 = vld [vmem:[%s8310 + $0x44] sm:$0xf]
    %v8329 = vld [vmem:[%s8310 + $0x48] sm:$0xf]
    %v8330 = vld [vmem:[%s8310 + $0x4c] sm:$0xf]
    %v8331 = vld [vmem:[%s8310 + $0x50] sm:$0xf]
    %v8332 = vld [vmem:[%s8310 + $0x54] sm:$0xf]
    %v8333 = vld [vmem:[%s8310 + $0x58] sm:$0xf]
    %v8334 = vld [vmem:[%s8310 + $0x5c] sm:$0xf]
    %v8335 = vld [vmem:[%s8310 + $0x60] sm:$0xf]
    %v8336 = vld [vmem:[%s8310 + $0x64] sm:$0xf]
    %v8337 = vld [vmem:[%s8310 + $0x68] sm:$0xf]
    %v8338 = vld [vmem:[%s8310 + $0x6c] sm:$0xf]
    %v8339 = vld [vmem:[%s8310 + $0x70] sm:$0xf]
    %v8340 = vld [vmem:[%s8310 + $0x74] sm:$0xf]
    %v8341 = vld [vmem:[%s8310 + $0x78] sm:$0xf]
    %v8342 = vld [vmem:[%s8310 + $0x7c] sm:$0xf]
    %v8345 = vunpack.c.l.b16 %v4595
    %v8346 = vunpack.c.h.b16 %v4595
    %v8347 = vunpack.c.l.b16 %v4596
    %v8348 = vunpack.c.h.b16 %v4596
    %v8349 = vpack.c.b16 %v8347, %v8345
    %v8350 = vpack.c.b16 %v8348, %v8346
    %v8385 = vunpack.c.l.b16 %v8311
    %v8386 = vunpack.c.l.b16 %v8312
    %v8387 = vunpack.c.l.b16 %v8313
    %v8388 = vunpack.c.l.b16 %v8314
    %v8389 = vunpack.c.l.b16 %v8315
    %v8390 = vunpack.c.l.b16 %v8316
    %v8391 = vunpack.c.l.b16 %v8317
    %v8392 = vunpack.c.l.b16 %v8318
    %v8393 = vunpack.c.l.b16 %v8319
    %v8394 = vunpack.c.l.b16 %v8320
    %v8395 = vunpack.c.l.b16 %v8321
    %v8396 = vunpack.c.l.b16 %v8322
    %v8397 = vunpack.c.l.b16 %v8323
    %v8398 = vunpack.c.l.b16 %v8324
    %v8399 = vunpack.c.l.b16 %v8325
    %v8400 = vunpack.c.l.b16 %v8326
    %v8401 = vunpack.c.l.b16 %v8327
    %v8402 = vunpack.c.l.b16 %v8328
    %v8403 = vunpack.c.l.b16 %v8329
    %v8404 = vunpack.c.l.b16 %v8330
    %v8405 = vunpack.c.l.b16 %v8331
    %v8406 = vunpack.c.l.b16 %v8332
    %v8407 = vunpack.c.l.b16 %v8333
    %v8408 = vunpack.c.l.b16 %v8334
    %v8409 = vunpack.c.l.b16 %v8335
    %v8410 = vunpack.c.l.b16 %v8336
    %v8411 = vunpack.c.l.b16 %v8337
    %v8412 = vunpack.c.l.b16 %v8338
    %v8413 = vunpack.c.l.b16 %v8339
    %v8414 = vunpack.c.l.b16 %v8340
    %v8415 = vunpack.c.l.b16 %v8341
    %v8416 = vunpack.c.l.b16 %v8342
    %v8417 = vpack.c.b16 %v8386, %v8385
    %v8418 = vpack.c.b16 %v8388, %v8387
    %v8419 = vpack.c.b16 %v8390, %v8389
    %v8420 = vpack.c.b16 %v8392, %v8391
    %v8421 = vpack.c.b16 %v8394, %v8393
    %v8422 = vpack.c.b16 %v8396, %v8395
    %v8423 = vpack.c.b16 %v8398, %v8397
    %v8424 = vpack.c.b16 %v8400, %v8399
    %v8425 = vpack.c.b16 %v8402, %v8401
    %v8426 = vpack.c.b16 %v8404, %v8403
    %v8427 = vpack.c.b16 %v8406, %v8405
    %v8428 = vpack.c.b16 %v8408, %v8407
    %v8429 = vpack.c.b16 %v8410, %v8409
    %v8430 = vpack.c.b16 %v8412, %v8411
    %v8431 = vpack.c.b16 %v8414, %v8413
    %v8432 = vpack.c.b16 %v8416, %v8415
    %8449 = vmatpush.bf16.msra.mxu0 %v8424
    %8450 = vmatpush.bf16.msra.mxu0 %v8423
    %8451 = vmatpush.bf16.msra.mxu0 %v8422
    %8452 = vmatpush.bf16.msra.mxu0 %v8421
    %8453 = vmatpush.bf16.msra.mxu0 %v8420
    %8454 = vmatpush.bf16.msra.mxu0 %v8419
    %8455 = vmatpush.bf16.msra.mxu0 %v8418
    %8456 = vmatpush.bf16.msra.mxu0 %v8417
    %8457 = vmatmul.bf16.gmra.mxu0 %v8349
    %v8458 = vpop.f32.mrf.mxu0
    %v8459 = vadd.f32 0.0, %v8458
    %v8460 = vpop.f32.mrf.mxu0
    %v8461 = vadd.f32 0.0, %v8460
    %8462 = vdwg.mxu0
    %8463 = vmatpush.bf16.msra.mxu0 %v8432
    %8464 = vmatpush.bf16.msra.mxu0 %v8431
    %8465 = vmatpush.bf16.msra.mxu0 %v8430
    %8466 = vmatpush.bf16.msra.mxu0 %v8429
    %8467 = vmatpush.bf16.msra.mxu0 %v8428
    %8468 = vmatpush.bf16.msra.mxu0 %v8427
    %8469 = vmatpush.bf16.msra.mxu0 %v8426
    %8470 = vmatpush.bf16.msra.mxu0 %v8425
    %8471 = vmatmul.bf16.gmra.mxu0 %v8350
    %v8472 = vpop.f32.mrf.mxu0
    %v8473 = vadd.f32 %v8459, %v8472
    %v8474 = vpop.f32.mrf.mxu0
    %v8475 = vadd.f32 %v8461, %v8474
    %8476 = vdwg.mxu0
    %v8477 = vadd.f32 %v8308, %v8473
    %v8478 = vadd.f32 %v8309, %v8475
    %v8479 = vld [vmem:[%s6] sm:$0x1]
    %v8481 = vperm.slane %v8479, 0
    %v8483 = vadd.f32 %v8477, %v8481
    %v8484 = vadd.f32 %v8478, %v8481
    %v8485 = vmax.f32 %v8483, 0.0
    %v8486 = vmax.f32 %v8484, 0.0
    %v8487 = vld [vmem:[%s7] sm:$0xff]
    %v8488 = vld [vmem:[%s7 + $0x8] sm:$0xff]
    %v8489 = vld [vmem:[%s7 + $0x10] sm:$0xff]
    %v8490 = vld [vmem:[%s7 + $0x18] sm:$0xff]
    %v8491 = vld [vmem:[%s7 + $0x20] sm:$0xff]
    %v8492 = vld [vmem:[%s7 + $0x28] sm:$0xff]
    %v8493 = vld [vmem:[%s7 + $0x30] sm:$0xff]
    %v8494 = vld [vmem:[%s7 + $0x38] sm:$0xff]
    %v8495 = vld [vmem:[%s7 + $0x40] sm:$0xff]
    %v8496 = vld [vmem:[%s7 + $0x48] sm:$0xff]
    %v8497 = vld [vmem:[%s7 + $0x50] sm:$0xff]
    %v8498 = vld [vmem:[%s7 + $0x58] sm:$0xff]
    %v8499 = vld [vmem:[%s7 + $0x60] sm:$0xff]
    %v8500 = vld [vmem:[%s7 + $0x68] sm:$0xff]
    %v8501 = vld [vmem:[%s7 + $0x70] sm:$0xff]
    %v8502 = vld [vmem:[%s7 + $0x78] sm:$0xff]
    %v8503 = vld [vmem:[%s8] sm:$0x1]
    %v8505 = vperm.slane %v8503, 0
    %8507 = vmatpush.msra.mxu0 %v8502
    %8508 = vmatpush.msra.mxu0 %v8501
    %8509 = vmatpush.msra.mxu0 %v8500
    %8510 = vmatpush.msra.mxu0 %v8499
    %8511 = vmatpush.msra.mxu0 %v8498
    %8512 = vmatpush.msra.mxu0 %v8497
    %8513 = vmatpush.msra.mxu0 %v8496
    %8514 = vmatpush.msra.mxu0 %v8495
    %8515 = vmatpush.msra.mxu0 %v8494
    %8516 = vmatpush.msra.mxu0 %v8493
    %8517 = vmatpush.msra.mxu0 %v8492
    %8518 = vmatpush.msra.mxu0 %v8491
    %8519 = vmatpush.msra.mxu0 %v8490
    %8520 = vmatpush.msra.mxu0 %v8489
    %8521 = vmatpush.msra.mxu0 %v8488
    %8522 = vmatpush.msra.mxu0 %v8487
    %8523 = vmatmul.f32.gmra.mxu0 %v8485
    %v8524 = vpop.f32.mrf.mxu0
    %v8525 = vadd.f32 %v8505, %v8524
    %8526 = vmatmul.f32.gmra.mxu0 %v8486
    %v8527 = vpop.f32.mrf.mxu0
    %v8528 = vadd.f32 %v8505, %v8527
    %8529 = vdwg.mxu0
    %vm8530 = vcmask 23552
    %8531 = vst.msk [vmem:[%s9] sm:$0xff] %vm8530, %v8525
    %8532 = vst.msk [vmem:[%s9 + $0x8] sm:$0xff] %vm8530, %v8528
    // Predicated region
    $region42: #{simple_cnn_forward.1} parent=1 // pred_check
      _
    $region43: #{simple_cnn_forward.1} parent=1 // pred_check_branch
      %8534 = sbr.rel (0) target = $region45
    $region44: #{simple_cnn_forward.1} parent=1 // pred_region
      _
    $region45: #{simple_cnn_forward.1} parent=1 // pred_fallthru
      _
    // Predicated region
    $region46: #{simple_cnn_forward.1} parent=1 // pred_check
      _
    $region47: #{simple_cnn_forward.1} parent=1 // pred_check_branch
      %8536 = sbr.rel (0) target = $region49
    $region48: #{simple_cnn_forward.1} parent=1 // pred_region
      _
    $region49: #{simple_cnn_forward.1} parent=1 // pred_fallthru
      _
    %8537 = vsyncpa [#allocation3], 1

</llo_original>
